<compile_context>
chip_gen: v6e
topology: v6e:2x2x1
jax: 0.10.0
libtpu: 0.0.40
codegen_flags: <defaults>
</compile_context>

<pallas_src>
import jax
import jax.numpy as jnp
from jax.experimental import pallas as pl
from jax.experimental.pallas import tpu as pltpu


def _vmem_limit_bytes():
    # Generation-aware VMEM request: ~85% of the physical per-TensorCore VMEM
    # (leaves headroom for compiler-internal scratch / implicit buffers).
    try:
        return int(pltpu.get_tpu_info().vmem_capacity_bytes * 0.85)
    except Exception:
        return 48 * 1024 * 1024  # conservative fallback (safe on v7x too)


def _make_kernel(H, W, Cin, Cout, eps=1e-5, has_res=True):
    HW = H * W

    def silu(x):
        # x * sigmoid(x); sigmoid = 0.5*tanh(0.5*x)+0.5 -> single EUP push.
        return x * (0.5 * jnp.tanh(0.5 * x) + 0.5)

    def gn_silu(xf, gamma, beta, mask_scaled):
        # xf: (HW, C) f32. mask_scaled: (C, C) f32 = same-group / (HW * gs),
        # precomputed in the wrapper (hoisted out of the per-step path).
        s = jnp.sum(xf, axis=0, keepdims=True)            # (1, C)
        sq = jnp.sum(xf * xf, axis=0, keepdims=True)      # (1, C)
        mean = jnp.dot(s, mask_scaled, preferred_element_type=jnp.float32)
        msq = jnp.dot(sq, mask_scaled, preferred_element_type=jnp.float32)
        var = jnp.maximum(msq - mean * mean, 0.0)
        inv = jax.lax.rsqrt(var + eps)
        return silu((xf - mean) * (inv * gamma) + beta)

    def conv3x3(buf, hf, w_ref, bias, first_col, last_col, Ci, Co):
        # hf: (HW, Ci) f32 activations (row-major over (H, W)).
        # buf: ((H+2)*W, 3*Ci) bf16 scratch; interior row W+m holds the three
        # kx-shifted copies [left | center | right] of hf side by side on
        # lanes, halo rows (top/bottom W rows) are zero, so each ky tap is one
        # contiguous, sublane-aligned (HW, 3*Ci) window feeding one matmul.
        left = jnp.where(first_col, 0.0, pltpu.roll(hf, 1, axis=0))       # x[.., w-1]
        right = jnp.where(last_col, 0.0, pltpu.roll(hf, HW - 1, axis=0))  # x[.., w+1]
        bf = jnp.bfloat16
        fused = jnp.concatenate(
            [left.astype(bf), hf.astype(bf), right.astype(bf)], axis=-1)
        # Halo zeroing kept per-step (cheap) for megacore-split correctness;
        # see header comment.
        halo = jnp.zeros((W, 3 * Ci), bf)
        buf[0:W, :] = halo                                  # top halo
        buf[(H + 1) * W:(H + 2) * W, :] = halo              # bottom halo
        buf[W:W + HW, :] = fused                            # interior
        acc = jnp.zeros((HW, Co), jnp.float32)
        for ky in range(3):
            acc = acc + jnp.dot(buf[ky * W:ky * W + HW, :], w_ref[ky],
                                preferred_element_type=jnp.float32)
        return acc + bias

    def kernel(m1_ref, m2_ref, x_ref, g1_ref, b1_ref, w1_ref, bc1_ref,
               g2_ref, b2_ref, w2_ref, bc2_ref, *rest):
        if has_res:
            wr_ref, br_ref, o_ref, buf1, buf2 = rest
        else:
            o_ref, buf1, buf2 = rest

        x = x_ref[0].astype(jnp.float32)                    # (HW, Cin)

        # Column-boundary masks for the 3x3 conv, computed once per step.
        col = jax.lax.broadcasted_iota(jnp.int32, (HW, 1), 0) % W
        first_col = col == 0
        last_col = col == W - 1

        h = gn_silu(x, g1_ref[...], b1_ref[...], m1_ref[...])
        h = conv3x3(buf1, h, w1_ref, bc1_ref[...], first_col, last_col,
                    Cin, Cout)
        h = gn_silu(h, g2_ref[...], b2_ref[...], m2_ref[...])
        h = conv3x3(buf2, h, w2_ref, bc2_ref[...], first_col, last_col,
                    Cout, Cout)

        if has_res:
            res = jnp.dot(x.astype(jnp.bfloat16), wr_ref[...],
                          preferred_element_type=jnp.float32) + br_ref[...]
        else:
            res = x

        o_ref[0] = (h + res).astype(o_ref.dtype)

    return kernel


def residual_block(x, params, groups=32):
    """x: (N, H, W, Cin) float32 NHWC; params: dict of f32 HWIO/(Cin,Cout) weights."""
    N, H, W, Cin = x.shape
    Cout = params["w1"].shape[-1]
    has_res = Cin != Cout
    HW = H * W
    bf16 = jnp.bfloat16

    def scaled_group_mask(C):
        gs = C // groups
        gid = jnp.arange(C, dtype=jnp.int32) // gs
        m = (gid[:, None] == gid[None, :]).astype(jnp.float32)
        return m / float(HW * gs)

    # kx taps folded into the contraction dim: (ky, kx, ci, co) -> (ky, kx*Ci+ci, co).
    w1f = params["w1"].reshape(3, 3 * Cin, Cout).astype(bf16)
    w2f = params["w2"].reshape(3, 3 * Cout, Cout).astype(bf16)

    # bf16 I/O at the pallas_call boundary; GN stats are recomputed in f32 inside.
    xb = x.reshape(N, HW, Cin).astype(bf16)

    args = [scaled_group_mask(Cin), scaled_group_mask(Cout), xb,
            params["g1"], params["b1"], w1f, params["bc1"],
            params["g2"], params["b2"], w2f, params["bc2"]]

    once = pl.Buffered(1)   # grid-invariant inputs: single buffer, DMA'd once
    in_specs = [
        pl.BlockSpec((Cin, Cin), lambda n: (0, 0), pipeline_mode=once),
        pl.BlockSpec((Cout, Cout), lambda n: (0, 0), pipeline_mode=once),
        pl.BlockSpec((1, HW, Cin), lambda n: (n, 0, 0)),
        pl.BlockSpec((1, Cin), lambda n: (0, 0), pipeline_mode=once),
        pl.BlockSpec((1, Cin), lambda n: (0, 0), pipeline_mode=once),
        pl.BlockSpec((3, 3 * Cin, Cout), lambda n: (0, 0, 0), pipeline_mode=once),
        pl.BlockSpec((1, Cout), lambda n: (0, 0), pipeline_mode=once),
        pl.BlockSpec((1, Cout), lambda n: (0, 0), pipeline_mode=once),
        pl.BlockSpec((1, Cout), lambda n: (0, 0), pipeline_mode=once),
        pl.BlockSpec((3, 3 * Cout, Cout), lambda n: (0, 0, 0), pipeline_mode=once),
        pl.BlockSpec((1, Cout), lambda n: (0, 0), pipeline_mode=once),
    ]
    if has_res:
        args += [params["wres"].astype(bf16), params["bres"]]
        in_specs += [
            pl.BlockSpec((Cin, Cout), lambda n: (0, 0), pipeline_mode=once),
            pl.BlockSpec((1, Cout), lambda n: (0, 0), pipeline_mode=once),
        ]

    out = pl.pallas_call(
        _make_kernel(H, W, Cin, Cout, has_res=has_res),
        out_shape=jax.ShapeDtypeStruct((N, HW, Cout), bf16),
        grid=(N,),
        in_specs=in_specs,
        out_specs=pl.BlockSpec((1, HW, Cout), lambda n: (n, 0, 0)),
        scratch_shapes=[
            pltpu.VMEM(((H + 2) * W, 3 * Cin), bf16),
            pltpu.VMEM(((H + 2) * W, 3 * Cout), bf16),
        ],
        compiler_params=pltpu.CompilerParams(
            dimension_semantics=("parallel",),
            vmem_limit_bytes=_vmem_limit_bytes()),
    )(*args)
    return out.reshape(N, H, W, Cout).astype(x.dtype)


def reference(x, p, groups=32, eps=1e-5):
    """Plain-JAX f32 reference (matches the PyTorch ResidualBlock, in NHWC)."""
    def gn(v, gamma, beta):
        N, H, W, C = v.shape
        gs = C // groups
        vr = v.reshape(N, H, W, groups, gs)
        mean = vr.mean(axis=(1, 2, 4), keepdims=True)
        var = ((vr - mean) ** 2).mean(axis=(1, 2, 4), keepdims=True)
        vn = ((vr - mean) / jnp.sqrt(var + eps)).reshape(N, H, W, C)
        return vn * gamma.reshape(1, 1, 1, C) + beta.reshape(1, 1, 1, C)

    def silu(v):
        return v * (1.0 / (1.0 + jnp.exp(-v)))

    def conv(v, w, b):
        y = jax.lax.conv_general_dilated(
            v, w, window_strides=(1, 1), padding="SAME",
            dimension_numbers=("NHWC", "HWIO", "NHWC"))
        return y + b.reshape(1, 1, 1, -1)

    h = conv(silu(gn(x, p["g1"], p["b1"])), p["w1"], p["bc1"])
    h = conv(silu(gn(h, p["g2"], p["b2"])), p["w2"], p["bc2"])
    if "wres" in p:
        res = jnp.einsum("nhwc,co->nhwo", x, p["wres"]) + p["bres"].reshape(1, 1, 1, -1)
    else:
        res = x
    return h + res


def init_params(key, Cin, Cout):
    ks = jax.random.split(key, 10)
    p = {
        "g1": 1.0 + 0.1 * jax.random.normal(ks[0], (1, Cin), jnp.float32),
        "b1": 0.1 * jax.random.normal(ks[1], (1, Cin), jnp.float32),
        "w1": 0.05 * jax.random.normal(ks[2], (3, 3, Cin, Cout), jnp.float32),
        "bc1": 0.1 * jax.random.normal(ks[3], (1, Cout), jnp.float32),
        "g2": 1.0 + 0.1 * jax.random.normal(ks[4], (1, Cout), jnp.float32),
        "b2": 0.1 * jax.random.normal(ks[5], (1, Cout), jnp.float32),
        "w2": 0.05 * jax.random.normal(ks[6], (3, 3, Cout, Cout), jnp.float32),
        "bc2": 0.1 * jax.random.normal(ks[7], (1, Cout), jnp.float32),
    }
    if Cin != Cout:
        p["wres"] = 0.05 * jax.random.normal(ks[8], (Cin, Cout), jnp.float32)
        p["bres"] = 0.1 * jax.random.normal(ks[9], (1, Cout), jnp.float32)
    return p


if __name__ == "__main__":
    # GroupNorm(32, C) needs C % 32 == 0.  Small but lane/MXU-friendly shapes:
    # HW = 256 rows, Cout = 128 lanes (lane-dense output), W % 16 == 0 so the
    # bf16 scratch row windows are sublane-aligned, and N = 4 grid steps give
    # the software pipeline (and a v7x megacore split) something to overlap.
    N, H, W, Cin, Cout = 4, 16, 16, 64, 128

    key = jax.random.PRNGKey(0)
    k_x, k_p = jax.random.split(key)
    x = jax.random.normal(k_x, (N, H, W, Cin), jnp.float32)
    params = init_params(k_p, Cin, Cout)

    out = jax.block_until_ready(residual_block(x, params))
    ref = jax.block_until_ready(reference(x, params))

    assert out.shape == (N, H, W, Cout), out.shape
    # Matmuls run with bf16 operands (f32 accumulation) and x/out cross HBM in
    # bf16, so compare against the f32 reference with a bf16-appropriate tol.
    max_err = float(jnp.max(jnp.abs(out - ref)))
    assert bool(jnp.allclose(out, ref, rtol=5e-2, atol=5e-2)), max_err
    print("KERNEL_OK")
</pallas_src>

<mosaic_0001>
module attributes {stable_mosaic.version = 11 : i64} {
  func.func @kernel(%arg0: i32, %arg1: memref<64x64xf32, #tpu.memory_space<vmem>>, %arg2: memref<128x128xf32, #tpu.memory_space<vmem>>, %arg3: memref<1x256x64xbf16, #tpu.memory_space<vmem>>, %arg4: memref<1x64xf32, #tpu.memory_space<vmem>>, %arg5: memref<1x64xf32, #tpu.memory_space<vmem>>, %arg6: memref<3x192x128xbf16, #tpu.memory_space<vmem>>, %arg7: memref<1x128xf32, #tpu.memory_space<vmem>>, %arg8: memref<1x128xf32, #tpu.memory_space<vmem>>, %arg9: memref<1x128xf32, #tpu.memory_space<vmem>>, %arg10: memref<3x384x128xbf16, #tpu.memory_space<vmem>>, %arg11: memref<1x128xf32, #tpu.memory_space<vmem>>, %arg12: memref<64x128xbf16, #tpu.memory_space<vmem>>, %arg13: memref<1x128xf32, #tpu.memory_space<vmem>>, %arg14: memref<1x256x128xbf16, #tpu.memory_space<vmem>>, %arg15: memref<288x192xbf16, #tpu.memory_space<vmem>>, %arg16: memref<288x384xbf16, #tpu.memory_space<vmem>>) attributes {dimension_semantics = [#tpu.dimension_semantics<parallel>], iteration_bounds = array<i64: 4>, scalar_prefetch = 0 : i64, scratch_operands = 2 : i64, tpu.core_type = #tpu.core_type<tc>, window_params = [{pipeline_mode = #tpu.pipeline_mode<synchronous>, transform_indices = @transform_0, window_bounds = array<i64: 64, 64>}, {pipeline_mode = #tpu.pipeline_mode<synchronous>, transform_indices = @transform_1, window_bounds = array<i64: 128, 128>}, {transform_indices = @transform_2, window_bounds = array<i64: 1, 256, 64>}, {pipeline_mode = #tpu.pipeline_mode<synchronous>, transform_indices = @transform_3, window_bounds = array<i64: 1, 64>}, {pipeline_mode = #tpu.pipeline_mode<synchronous>, transform_indices = @transform_4, window_bounds = array<i64: 1, 64>}, {pipeline_mode = #tpu.pipeline_mode<synchronous>, transform_indices = @transform_5, window_bounds = array<i64: 3, 192, 128>}, {pipeline_mode = #tpu.pipeline_mode<synchronous>, transform_indices = @transform_6, window_bounds = array<i64: 1, 128>}, {pipeline_mode = #tpu.pipeline_mode<synchronous>, transform_indices = @transform_7, window_bounds = array<i64: 1, 128>}, {pipeline_mode = #tpu.pipeline_mode<synchronous>, transform_indices = @transform_8, window_bounds = array<i64: 1, 128>}, {pipeline_mode = #tpu.pipeline_mode<synchronous>, transform_indices = @transform_9, window_bounds = array<i64: 3, 384, 128>}, {pipeline_mode = #tpu.pipeline_mode<synchronous>, transform_indices = @transform_10, window_bounds = array<i64: 1, 128>}, {pipeline_mode = #tpu.pipeline_mode<synchronous>, transform_indices = @transform_11, window_bounds = array<i64: 64, 128>}, {pipeline_mode = #tpu.pipeline_mode<synchronous>, transform_indices = @transform_12, window_bounds = array<i64: 1, 128>}, {transform_indices = @transform_13, window_bounds = array<i64: 1, 256, 128>}]} {
    %c0 = arith.constant 0 : index
    %c0_0 = arith.constant 0 : index
    %c0_1 = arith.constant 0 : index
    %0 = vector.load %arg3[%c0, %c0_0, %c0_1] : memref<1x256x64xbf16, #tpu.memory_space<vmem>>, vector<1x256x64xbf16>
    %1 = vector.shape_cast %0 : vector<1x256x64xbf16> to vector<256x64xbf16>
    %2 = arith.extf %1 : vector<256x64xbf16> to vector<256x64xf32>
    %3 = tpu.iota {dimensions = array<i32: 0>} : vector<256x1xi32>
    %c16_i32 = arith.constant 16 : i32
    %c0_i32 = arith.constant 0 : i32
    %4 = arith.cmpi eq, %c16_i32, %c0_i32 : i32
    %c1_i32 = arith.constant 1 : i32
    %5 = arith.select %4, %c1_i32, %c16_i32 : i32
    %6 = vector.broadcast %5 : i32 to vector<256x1xi32>
    %7 = arith.remsi %3, %6 : vector<256x1xi32>
    %c0_i32_2 = arith.constant 0 : i32
    %8 = vector.broadcast %c0_i32_2 : i32 to vector<256x1xi32>
    %9 = arith.cmpi ne, %7, %8 : vector<256x1xi32>
    %c0_i32_3 = arith.constant 0 : i32
    %10 = vector.broadcast %c0_i32_3 : i32 to vector<256x1xi32>
    %11 = arith.cmpi slt, %7, %10 : vector<256x1xi32>
    %c0_i32_4 = arith.constant 0 : i32
    %12 = arith.cmpi slt, %5, %c0_i32_4 : i32
    %13 = vector.broadcast %12 : i1 to vector<256x1xi1>
    %14 = vector.broadcast %13 : vector<256x1xi1> to vector<256x1xi1>
    %15 = arith.xori %11, %14 : vector<256x1xi1>
    %16 = arith.andi %15, %9 : vector<256x1xi1>
    %17 = vector.broadcast %5 : i32 to vector<256x1xi32>
    %18 = arith.addi %7, %17 : vector<256x1xi32>
    %19 = arith.select %16, %18, %7 : vector<256x1xi1>, vector<256x1xi32>
    %c0_i32_5 = arith.constant 0 : i32
    %20 = vector.broadcast %c0_i32_5 : i32 to vector<256x1xi32>
    %21 = arith.cmpi eq, %19, %20 : vector<256x1xi32>
    %c15_i32 = arith.constant 15 : i32
    %22 = vector.broadcast %c15_i32 : i32 to vector<256x1xi32>
    %23 = arith.cmpi eq, %19, %22 : vector<256x1xi32>
    %c0_6 = arith.constant 0 : index
    %c0_7 = arith.constant 0 : index
    %24 = vector.load %arg4[%c0_6, %c0_7] : memref<1x64xf32, #tpu.memory_space<vmem>>, vector<1x64xf32>
    %c0_8 = arith.constant 0 : index
    %c0_9 = arith.constant 0 : index
    %25 = vector.load %arg5[%c0_8, %c0_9] : memref<1x64xf32, #tpu.memory_space<vmem>>, vector<1x64xf32>
    %c0_10 = arith.constant 0 : index
    %c0_11 = arith.constant 0 : index
    %26 = vector.load %arg1[%c0_10, %c0_11] : memref<64x64xf32, #tpu.memory_space<vmem>>, vector<64x64xf32>
    %cst = arith.constant dense<0.000000e+00> : vector<64xf32>
    %27 = vector.multi_reduction <add>, %2, %cst [0] : vector<256x64xf32> to vector<64xf32>
    %28 = vector.shape_cast %27 : vector<64xf32> to vector<1x64xf32>
    %29 = arith.mulf %2, %2 : vector<256x64xf32>
    %cst_12 = arith.constant dense<0.000000e+00> : vector<64xf32>
    %30 = vector.multi_reduction <add>, %29, %cst_12 [0] : vector<256x64xf32> to vector<64xf32>
    %31 = vector.shape_cast %30 : vector<64xf32> to vector<1x64xf32>
    %cst_13 = arith.constant dense<0.000000e+00> : vector<1x64xf32>
    %32 = tpu.matmul %28, %26, %cst_13 {dimension_numbers = #tpu.dot_dimension_numbers<[1], [0], [0], [1], [0, 0, 1, 1], [], []>} : vector<1x64xf32>, vector<64x64xf32>, vector<1x64xf32> -> vector<1x64xf32>
    %cst_14 = arith.constant dense<0.000000e+00> : vector<1x64xf32>
    %33 = tpu.matmul %31, %26, %cst_14 {dimension_numbers = #tpu.dot_dimension_numbers<[1], [0], [0], [1], [0, 0, 1, 1], [], []>} : vector<1x64xf32>, vector<64x64xf32>, vector<1x64xf32> -> vector<1x64xf32>
    %34 = arith.mulf %32, %32 : vector<1x64xf32>
    %35 = arith.subf %33, %34 : vector<1x64xf32>
    %cst_15 = arith.constant 0.000000e+00 : f32
    %36 = vector.broadcast %cst_15 : f32 to vector<1x64xf32>
    %37 = arith.maximumf %35, %36 : vector<1x64xf32>
    %cst_16 = arith.constant 9.99999974E-6 : f32
    %38 = vector.broadcast %cst_16 : f32 to vector<1x64xf32>
    %39 = arith.addf %37, %38 : vector<1x64xf32>
    %40 = math.rsqrt %39 : vector<1x64xf32>
    %41 = vector.broadcast %32 : vector<1x64xf32> to vector<256x64xf32>
    %42 = arith.subf %2, %41 : vector<256x64xf32>
    %43 = arith.mulf %40, %24 : vector<1x64xf32>
    %44 = vector.broadcast %43 : vector<1x64xf32> to vector<256x64xf32>
    %45 = arith.mulf %42, %44 : vector<256x64xf32>
    %46 = vector.broadcast %25 : vector<1x64xf32> to vector<256x64xf32>
    %47 = arith.addf %45, %46 : vector<256x64xf32>
    %cst_17 = arith.constant 5.000000e-01 : f32
    %48 = vector.broadcast %cst_17 : f32 to vector<256x64xf32>
    %49 = arith.mulf %48, %47 : vector<256x64xf32>
    %50 = math.tanh %49 : vector<256x64xf32>
    %cst_18 = arith.constant 5.000000e-01 : f32
    %51 = vector.broadcast %cst_18 : f32 to vector<256x64xf32>
    %52 = arith.mulf %51, %50 : vector<256x64xf32>
    %cst_19 = arith.constant 5.000000e-01 : f32
    %53 = vector.broadcast %cst_19 : f32 to vector<256x64xf32>
    %54 = arith.addf %52, %53 : vector<256x64xf32>
    %55 = arith.mulf %47, %54 : vector<256x64xf32>
    %c0_20 = arith.constant 0 : index
    %c0_21 = arith.constant 0 : index
    %56 = vector.load %arg7[%c0_20, %c0_21] : memref<1x128xf32, #tpu.memory_space<vmem>>, vector<1x128xf32>
    %c1_i32_22 = arith.constant 1 : i32
    %57 = tpu.dynamic_rotate %55 by %c1_i32_22 dim 0 : vector<256x64xf32>, i32 -> vector<256x64xf32>
    %cst_23 = arith.constant 0.000000e+00 : f32
    %58 = vector.shape_cast %21 : vector<256x1xi1> to vector<256x1xi1>
    %59 = vector.broadcast %58 : vector<256x1xi1> to vector<256x64xi1>
    %60 = vector.broadcast %cst_23 : f32 to vector<256x64xf32>
    %61 = arith.select %59, %60, %57 : vector<256x64xi1>, vector<256x64xf32>
    %c255_i32 = arith.constant 255 : i32
    %62 = tpu.dynamic_rotate %55 by %c255_i32 dim 0 : vector<256x64xf32>, i32 -> vector<256x64xf32>
    %cst_24 = arith.constant 0.000000e+00 : f32
    %63 = vector.shape_cast %23 : vector<256x1xi1> to vector<256x1xi1>
    %64 = vector.broadcast %63 : vector<256x1xi1> to vector<256x64xi1>
    %65 = vector.broadcast %cst_24 : f32 to vector<256x64xf32>
    %66 = arith.select %64, %65, %62 : vector<256x64xi1>, vector<256x64xf32>
    %67 = arith.truncf %61 : vector<256x64xf32> to vector<256x64xbf16>
    %68 = arith.truncf %55 : vector<256x64xf32> to vector<256x64xbf16>
    %69 = arith.truncf %66 : vector<256x64xf32> to vector<256x64xbf16>
    %70 = tpu.concatenate %67, %68, %69 in 1 : vector<256x64xbf16>, vector<256x64xbf16>, vector<256x64xbf16> -> vector<256x192xbf16>
    %cst_25 = arith.constant 0.000000e+00 : bf16
    %71 = vector.broadcast %cst_25 : bf16 to vector<16x192xbf16>
    %c0_26 = arith.constant 0 : index
    %c0_27 = arith.constant 0 : index
    %72 = vector.load %arg15[%c0_26, %c0_27] : memref<288x192xbf16, #tpu.memory_space<vmem>>, vector<16x192xbf16>
    tpu.vector_store %arg15[%c0_26, %c0_27], %71 {strides = array<i32>} : memref<288x192xbf16, #tpu.memory_space<vmem>>, vector<16x192xbf16>,
    %c272 = arith.constant 272 : index
    %c0_28 = arith.constant 0 : index
    %73 = vector.load %arg15[%c272, %c0_28] : memref<288x192xbf16, #tpu.memory_space<vmem>>, vector<16x192xbf16>
    tpu.vector_store %arg15[%c272, %c0_28], %71 {strides = array<i32>} : memref<288x192xbf16, #tpu.memory_space<vmem>>, vector<16x192xbf16>,
    %c16 = arith.constant 16 : index
    %c0_29 = arith.constant 0 : index
    %74 = vector.load %arg15[%c16, %c0_29] : memref<288x192xbf16, #tpu.memory_space<vmem>>, vector<256x192xbf16>
    tpu.vector_store %arg15[%c16, %c0_29], %70 {strides = array<i32>} : memref<288x192xbf16, #tpu.memory_space<vmem>>, vector<256x192xbf16>,
    %cst_30 = arith.constant 0.000000e+00 : f32
    %75 = vector.broadcast %cst_30 : f32 to vector<256x128xf32>
    %c0_31 = arith.constant 0 : index
    %c0_32 = arith.constant 0 : index
    %76 = vector.load %arg15[%c0_31, %c0_32] : memref<288x192xbf16, #tpu.memory_space<vmem>>, vector<256x192xbf16>
    %c0_33 = arith.constant 0 : index
    %c0_34 = arith.constant 0 : index
    %c0_35 = arith.constant 0 : index
    %77 = vector.load %arg6[%c0_33, %c0_34, %c0_35] : memref<3x192x128xbf16, #tpu.memory_space<vmem>>, vector<1x192x128xbf16>
    %78 = vector.shape_cast %77 : vector<1x192x128xbf16> to vector<192x128xbf16>
    %cst_36 = arith.constant dense<0.000000e+00> : vector<256x128xf32>
    %79 = tpu.matmul %76, %78, %cst_36 {dimension_numbers = #tpu.dot_dimension_numbers<[1], [0], [0], [1], [0, 0, 1, 1], [], []>} : vector<256x192xbf16>, vector<192x128xbf16>, vector<256x128xf32> -> vector<256x128xf32>
    %80 = arith.addf %75, %79 : vector<256x128xf32>
    %c16_37 = arith.constant 16 : index
    %c0_38 = arith.constant 0 : index
    %81 = vector.load %arg15[%c16_37, %c0_38] : memref<288x192xbf16, #tpu.memory_space<vmem>>, vector<256x192xbf16>
    %c1 = arith.constant 1 : index
    %c0_39 = arith.constant 0 : index
    %c0_40 = arith.constant 0 : index
    %82 = vector.load %arg6[%c1, %c0_39, %c0_40] : memref<3x192x128xbf16, #tpu.memory_space<vmem>>, vector<1x192x128xbf16>
    %83 = vector.shape_cast %82 : vector<1x192x128xbf16> to vector<192x128xbf16>
    %cst_41 = arith.constant dense<0.000000e+00> : vector<256x128xf32>
    %84 = tpu.matmul %81, %83, %cst_41 {dimension_numbers = #tpu.dot_dimension_numbers<[1], [0], [0], [1], [0, 0, 1, 1], [], []>} : vector<256x192xbf16>, vector<192x128xbf16>, vector<256x128xf32> -> vector<256x128xf32>
    %85 = arith.addf %80, %84 : vector<256x128xf32>
    %c32 = arith.constant 32 : index
    %c0_42 = arith.constant 0 : index
    %86 = vector.load %arg15[%c32, %c0_42] : memref<288x192xbf16, #tpu.memory_space<vmem>>, vector<256x192xbf16>
    %c2 = arith.constant 2 : index
    %c0_43 = arith.constant 0 : index
    %c0_44 = arith.constant 0 : index
    %87 = vector.load %arg6[%c2, %c0_43, %c0_44] : memref<3x192x128xbf16, #tpu.memory_space<vmem>>, vector<1x192x128xbf16>
    %88 = vector.shape_cast %87 : vector<1x192x128xbf16> to vector<192x128xbf16>
    %cst_45 = arith.constant dense<0.000000e+00> : vector<256x128xf32>
    %89 = tpu.matmul %86, %88, %cst_45 {dimension_numbers = #tpu.dot_dimension_numbers<[1], [0], [0], [1], [0, 0, 1, 1], [], []>} : vector<256x192xbf16>, vector<192x128xbf16>, vector<256x128xf32> -> vector<256x128xf32>
    %90 = arith.addf %85, %89 : vector<256x128xf32>
    %91 = vector.broadcast %56 : vector<1x128xf32> to vector<256x128xf32>
    %92 = arith.addf %90, %91 : vector<256x128xf32>
    %c0_46 = arith.constant 0 : index
    %c0_47 = arith.constant 0 : index
    %93 = vector.load %arg8[%c0_46, %c0_47] : memref<1x128xf32, #tpu.memory_space<vmem>>, vector<1x128xf32>
    %c0_48 = arith.constant 0 : index
    %c0_49 = arith.constant 0 : index
    %94 = vector.load %arg9[%c0_48, %c0_49] : memref<1x128xf32, #tpu.memory_space<vmem>>, vector<1x128xf32>
    %c0_50 = arith.constant 0 : index
    %c0_51 = arith.constant 0 : index
    %95 = vector.load %arg2[%c0_50, %c0_51] : memref<128x128xf32, #tpu.memory_space<vmem>>, vector<128x128xf32>
    %cst_52 = arith.constant dense<0.000000e+00> : vector<128xf32>
    %96 = vector.multi_reduction <add>, %92, %cst_52 [0] : vector<256x128xf32> to vector<128xf32>
    %97 = vector.shape_cast %96 : vector<128xf32> to vector<1x128xf32>
    %98 = arith.mulf %92, %92 : vector<256x128xf32>
    %cst_53 = arith.constant dense<0.000000e+00> : vector<128xf32>
    %99 = vector.multi_reduction <add>, %98, %cst_53 [0] : vector<256x128xf32> to vector<128xf32>
    %100 = vector.shape_cast %99 : vector<128xf32> to vector<1x128xf32>
    %cst_54 = arith.constant dense<0.000000e+00> : vector<1x128xf32>
    %101 = tpu.matmul %97, %95, %cst_54 {dimension_numbers = #tpu.dot_dimension_numbers<[1], [0], [0], [1], [0, 0, 1, 1], [], []>} : vector<1x128xf32>, vector<128x128xf32>, vector<1x128xf32> -> vector<1x128xf32>
    %cst_55 = arith.constant dense<0.000000e+00> : vector<1x128xf32>
    %102 = tpu.matmul %100, %95, %cst_55 {dimension_numbers = #tpu.dot_dimension_numbers<[1], [0], [0], [1], [0, 0, 1, 1], [], []>} : vector<1x128xf32>, vector<128x128xf32>, vector<1x128xf32> -> vector<1x128xf32>
    %103 = arith.mulf %101, %101 : vector<1x128xf32>
    %104 = arith.subf %102, %103 : vector<1x128xf32>
    %cst_56 = arith.constant 0.000000e+00 : f32
    %105 = vector.broadcast %cst_56 : f32 to vector<1x128xf32>
    %106 = arith.maximumf %104, %105 : vector<1x128xf32>
    %cst_57 = arith.constant 9.99999974E-6 : f32
    %107 = vector.broadcast %cst_57 : f32 to vector<1x128xf32>
    %108 = arith.addf %106, %107 : vector<1x128xf32>
    %109 = math.rsqrt %108 : vector<1x128xf32>
    %110 = vector.broadcast %101 : vector<1x128xf32> to vector<256x128xf32>
    %111 = arith.subf %92, %110 : vector<256x128xf32>
    %112 = arith.mulf %109, %93 : vector<1x128xf32>
    %113 = vector.broadcast %112 : vector<1x128xf32> to vector<256x128xf32>
    %114 = arith.mulf %111, %113 : vector<256x128xf32>
    %115 = vector.broadcast %94 : vector<1x128xf32> to vector<256x128xf32>
    %116 = arith.addf %114, %115 : vector<256x128xf32>
    %cst_58 = arith.constant 5.000000e-01 : f32
    %117 = vector.broadcast %cst_58 : f32 to vector<256x128xf32>
    %118 = arith.mulf %117, %116 : vector<256x128xf32>
    %119 = math.tanh %118 : vector<256x128xf32>
    %cst_59 = arith.constant 5.000000e-01 : f32
    %120 = vector.broadcast %cst_59 : f32 to vector<256x128xf32>
    %121 = arith.mulf %120, %119 : vector<256x128xf32>
    %cst_60 = arith.constant 5.000000e-01 : f32
    %122 = vector.broadcast %cst_60 : f32 to vector<256x128xf32>
    %123 = arith.addf %121, %122 : vector<256x128xf32>
    %124 = arith.mulf %116, %123 : vector<256x128xf32>
    %c0_61 = arith.constant 0 : index
    %c0_62 = arith.constant 0 : index
    %125 = vector.load %arg11[%c0_61, %c0_62] : memref<1x128xf32, #tpu.memory_space<vmem>>, vector<1x128xf32>
    %c1_i32_63 = arith.constant 1 : i32
    %126 = tpu.dynamic_rotate %124 by %c1_i32_63 dim 0 : vector<256x128xf32>, i32 -> vector<256x128xf32>
    %cst_64 = arith.constant 0.000000e+00 : f32
    %127 = vector.shape_cast %21 : vector<256x1xi1> to vector<256x1xi1>
    %128 = vector.broadcast %127 : vector<256x1xi1> to vector<256x128xi1>
    %129 = vector.broadcast %cst_64 : f32 to vector<256x128xf32>
    %130 = arith.select %128, %129, %126 : vector<256x128xi1>, vector<256x128xf32>
    %c255_i32_65 = arith.constant 255 : i32
    %131 = tpu.dynamic_rotate %124 by %c255_i32_65 dim 0 : vector<256x128xf32>, i32 -> vector<256x128xf32>
    %cst_66 = arith.constant 0.000000e+00 : f32
    %132 = vector.shape_cast %23 : vector<256x1xi1> to vector<256x1xi1>
    %133 = vector.broadcast %132 : vector<256x1xi1> to vector<256x128xi1>
    %134 = vector.broadcast %cst_66 : f32 to vector<256x128xf32>
    %135 = arith.select %133, %134, %131 : vector<256x128xi1>, vector<256x128xf32>
    %136 = arith.truncf %130 : vector<256x128xf32> to vector<256x128xbf16>
    %137 = arith.truncf %124 : vector<256x128xf32> to vector<256x128xbf16>
    %138 = arith.truncf %135 : vector<256x128xf32> to vector<256x128xbf16>
    %139 = tpu.concatenate %136, %137, %138 in 1 : vector<256x128xbf16>, vector<256x128xbf16>, vector<256x128xbf16> -> vector<256x384xbf16>
    %cst_67 = arith.constant 0.000000e+00 : bf16
    %140 = vector.broadcast %cst_67 : bf16 to vector<16x384xbf16>
    %c0_68 = arith.constant 0 : index
    %c0_69 = arith.constant 0 : index
    %141 = vector.load %arg16[%c0_68, %c0_69] : memref<288x384xbf16, #tpu.memory_space<vmem>>, vector<16x384xbf16>
    tpu.vector_store %arg16[%c0_68, %c0_69], %140 {strides = array<i32>} : memref<288x384xbf16, #tpu.memory_space<vmem>>, vector<16x384xbf16>,
    %c272_70 = arith.constant 272 : index
    %c0_71 = arith.constant 0 : index
    %142 = vector.load %arg16[%c272_70, %c0_71] : memref<288x384xbf16, #tpu.memory_space<vmem>>, vector<16x384xbf16>
    tpu.vector_store %arg16[%c272_70, %c0_71], %140 {strides = array<i32>} : memref<288x384xbf16, #tpu.memory_space<vmem>>, vector<16x384xbf16>,
    %c16_72 = arith.constant 16 : index
    %c0_73 = arith.constant 0 : index
    %143 = vector.load %arg16[%c16_72, %c0_73] : memref<288x384xbf16, #tpu.memory_space<vmem>>, vector<256x384xbf16>
    tpu.vector_store %arg16[%c16_72, %c0_73], %139 {strides = array<i32>} : memref<288x384xbf16, #tpu.memory_space<vmem>>, vector<256x384xbf16>,
    %cst_74 = arith.constant 0.000000e+00 : f32
    %144 = vector.broadcast %cst_74 : f32 to vector<256x128xf32>
    %c0_75 = arith.constant 0 : index
    %c0_76 = arith.constant 0 : index
    %145 = vector.load %arg16[%c0_75, %c0_76] : memref<288x384xbf16, #tpu.memory_space<vmem>>, vector<256x384xbf16>
    %c0_77 = arith.constant 0 : index
    %c0_78 = arith.constant 0 : index
    %c0_79 = arith.constant 0 : index
    %146 = vector.load %arg10[%c0_77, %c0_78, %c0_79] : memref<3x384x128xbf16, #tpu.memory_space<vmem>>, vector<1x384x128xbf16>
    %147 = vector.shape_cast %146 : vector<1x384x128xbf16> to vector<384x128xbf16>
    %cst_80 = arith.constant dense<0.000000e+00> : vector<256x128xf32>
    %148 = tpu.matmul %145, %147, %cst_80 {dimension_numbers = #tpu.dot_dimension_numbers<[1], [0], [0], [1], [0, 0, 1, 1], [], []>} : vector<256x384xbf16>, vector<384x128xbf16>, vector<256x128xf32> -> vector<256x128xf32>
    %149 = arith.addf %144, %148 : vector<256x128xf32>
    %c16_81 = arith.constant 16 : index
    %c0_82 = arith.constant 0 : index
    %150 = vector.load %arg16[%c16_81, %c0_82] : memref<288x384xbf16, #tpu.memory_space<vmem>>, vector<256x384xbf16>
    %c1_83 = arith.constant 1 : index
    %c0_84 = arith.constant 0 : index
    %c0_85 = arith.constant 0 : index
    %151 = vector.load %arg10[%c1_83, %c0_84, %c0_85] : memref<3x384x128xbf16, #tpu.memory_space<vmem>>, vector<1x384x128xbf16>
    %152 = vector.shape_cast %151 : vector<1x384x128xbf16> to vector<384x128xbf16>
    %cst_86 = arith.constant dense<0.000000e+00> : vector<256x128xf32>
    %153 = tpu.matmul %150, %152, %cst_86 {dimension_numbers = #tpu.dot_dimension_numbers<[1], [0], [0], [1], [0, 0, 1, 1], [], []>} : vector<256x384xbf16>, vector<384x128xbf16>, vector<256x128xf32> -> vector<256x128xf32>
    %154 = arith.addf %149, %153 : vector<256x128xf32>
    %c32_87 = arith.constant 32 : index
    %c0_88 = arith.constant 0 : index
    %155 = vector.load %arg16[%c32_87, %c0_88] : memref<288x384xbf16, #tpu.memory_space<vmem>>, vector<256x384xbf16>
    %c2_89 = arith.constant 2 : index
    %c0_90 = arith.constant 0 : index
    %c0_91 = arith.constant 0 : index
    %156 = vector.load %arg10[%c2_89, %c0_90, %c0_91] : memref<3x384x128xbf16, #tpu.memory_space<vmem>>, vector<1x384x128xbf16>
    %157 = vector.shape_cast %156 : vector<1x384x128xbf16> to vector<384x128xbf16>
    %cst_92 = arith.constant dense<0.000000e+00> : vector<256x128xf32>
    %158 = tpu.matmul %155, %157, %cst_92 {dimension_numbers = #tpu.dot_dimension_numbers<[1], [0], [0], [1], [0, 0, 1, 1], [], []>} : vector<256x384xbf16>, vector<384x128xbf16>, vector<256x128xf32> -> vector<256x128xf32>
    %159 = arith.addf %154, %158 : vector<256x128xf32>
    %160 = vector.broadcast %125 : vector<1x128xf32> to vector<256x128xf32>
    %161 = arith.addf %159, %160 : vector<256x128xf32>
    %162 = arith.truncf %2 : vector<256x64xf32> to vector<256x64xbf16>
    %c0_93 = arith.constant 0 : index
    %c0_94 = arith.constant 0 : index
    %163 = vector.load %arg12[%c0_93, %c0_94] : memref<64x128xbf16, #tpu.memory_space<vmem>>, vector<64x128xbf16>
    %cst_95 = arith.constant dense<0.000000e+00> : vector<256x128xf32>
    %164 = tpu.matmul %162, %163, %cst_95 {dimension_numbers = #tpu.dot_dimension_numbers<[1], [0], [0], [1], [0, 0, 1, 1], [], []>} : vector<256x64xbf16>, vector<64x128xbf16>, vector<256x128xf32> -> vector<256x128xf32>
    %c0_96 = arith.constant 0 : index
    %c0_97 = arith.constant 0 : index
    %165 = vector.load %arg13[%c0_96, %c0_97] : memref<1x128xf32, #tpu.memory_space<vmem>>, vector<1x128xf32>
    %166 = vector.broadcast %165 : vector<1x128xf32> to vector<256x128xf32>
    %167 = arith.addf %164, %166 : vector<256x128xf32>
    %168 = arith.addf %161, %167 : vector<256x128xf32>
    %169 = arith.truncf %168 : vector<256x128xf32> to vector<256x128xbf16>
    %c0_98 = arith.constant 0 : index
    %c0_99 = arith.constant 0 : index
    %c0_100 = arith.constant 0 : index
    %170 = vector.load %arg14[%c0_98, %c0_99, %c0_100] : memref<1x256x128xbf16, #tpu.memory_space<vmem>>, vector<1x256x128xbf16>
    %171 = vector.shape_cast %170 : vector<1x256x128xbf16> to vector<256x128xbf16>
    %172 = vector.shape_cast %169 : vector<256x128xbf16> to vector<1x256x128xbf16>
    tpu.vector_store %arg14[%c0_98, %c0_99, %c0_100], %172 {strides = array<i32>} : memref<1x256x128xbf16, #tpu.memory_space<vmem>>, vector<1x256x128xbf16>,
    return
  }
  func.func @transform_0(%arg0: i32) -> (i32, i32) {
    %c0_i32 = arith.constant 0 : i32
    %c0_i32_0 = arith.constant 0 : i32
    %c0_i32_1 = arith.constant 0 : i32
    return %c0_i32, %c0_i32_0 : i32, i32
  }
  func.func @transform_1(%arg0: i32) -> (i32, i32) {
    %c0_i32 = arith.constant 0 : i32
    %c0_i32_0 = arith.constant 0 : i32
    %c0_i32_1 = arith.constant 0 : i32
    return %c0_i32, %c0_i32_0 : i32, i32
  }
  func.func @transform_2(%arg0: i32) -> (i32, i32, i32) {
    %c0_i32 = arith.constant 0 : i32
    %c0_i32_0 = arith.constant 0 : i32
    %c0_i32_1 = arith.constant 0 : i32
    return %arg0, %c0_i32, %c0_i32_0 : i32, i32, i32
  }
  func.func @transform_3(%arg0: i32) -> (i32, i32) {
    %c0_i32 = arith.constant 0 : i32
    %c0_i32_0 = arith.constant 0 : i32
    %c0_i32_1 = arith.constant 0 : i32
    return %c0_i32, %c0_i32_0 : i32, i32
  }
  func.func @transform_4(%arg0: i32) -> (i32, i32) {
    %c0_i32 = arith.constant 0 : i32
    %c0_i32_0 = arith.constant 0 : i32
    %c0_i32_1 = arith.constant 0 : i32
    return %c0_i32, %c0_i32_0 : i32, i32
  }
  func.func @transform_5(%arg0: i32) -> (i32, i32, i32) {
    %c0_i32 = arith.constant 0 : i32
    %c0_i32_0 = arith.constant 0 : i32
    %c0_i32_1 = arith.constant 0 : i32
    %c0_i32_2 = arith.constant 0 : i32
    return %c0_i32, %c0_i32_0, %c0_i32_1 : i32, i32, i32
  }
  func.func @transform_6(%arg0: i32) -> (i32, i32) {
    %c0_i32 = arith.constant 0 : i32
    %c0_i32_0 = arith.constant 0 : i32
    %c0_i32_1 = arith.constant 0 : i32
    return %c0_i32, %c0_i32_0 : i32, i32
  }
  func.func @transform_7(%arg0: i32) -> (i32, i32) {
    %c0_i32 = arith.constant 0 : i32
    %c0_i32_0 = arith.constant 0 : i32
    %c0_i32_1 = arith.constant 0 : i32
    return %c0_i32, %c0_i32_0 : i32, i32
  }
  func.func @transform_8(%arg0: i32) -> (i32, i32) {
    %c0_i32 = arith.constant 0 : i32
    %c0_i32_0 = arith.constant 0 : i32
    %c0_i32_1 = arith.constant 0 : i32
    return %c0_i32, %c0_i32_0 : i32, i32
  }
  func.func @transform_9(%arg0: i32) -> (i32, i32, i32) {
    %c0_i32 = arith.constant 0 : i32
    %c0_i32_0 = arith.constant 0 : i32
    %c0_i32_1 = arith.constant 0 : i32
    %c0_i32_2 = arith.constant 0 : i32
    return %c0_i32, %c0_i32_0, %c0_i32_1 : i32, i32, i32
  }
  func.func @transform_10(%arg0: i32) -> (i32, i32) {
    %c0_i32 = arith.constant 0 : i32
    %c0_i32_0 = arith.constant 0 : i32
    %c0_i32_1 = arith.constant 0 : i32
    return %c0_i32, %c0_i32_0 : i32, i32
  }
  func.func @transform_11(%arg0: i32) -> (i32, i32) {
    %c0_i32 = arith.constant 0 : i32
    %c0_i32_0 = arith.constant 0 : i32
    %c0_i32_1 = arith.constant 0 : i32
    return %c0_i32, %c0_i32_0 : i32, i32
  }
  func.func @transform_12(%arg0: i32) -> (i32, i32) {
    %c0_i32 = arith.constant 0 : i32
    %c0_i32_0 = arith.constant 0 : i32
    %c0_i32_1 = arith.constant 0 : i32
    return %c0_i32, %c0_i32_0 : i32, i32
  }
  func.func @transform_13(%arg0: i32) -> (i32, i32, i32) {
    %c0_i32 = arith.constant 0 : i32
    %c0_i32_0 = arith.constant 0 : i32
    %c0_i32_1 = arith.constant 0 : i32
    return %arg0, %c0_i32, %c0_i32_0 : i32, i32, i32
  }
}

</mosaic_0001>

<llo_original>
// kernel: tpu_custom_call.1
$region0: #{tpu_custom_call.1}
  #allocation0 [shape = 'u32[]', space=smem, size = 0x4, offset = 0x4, fixed_abs, tag = 'smem constant byte address 0x4 - core index']
  #allocation1 [shape = 'u32[144,128]{1,0:T(1,128)}', space=vmem, size = 0x12000, scoped, tag = 'internal scratch']
  #allocation2 [shape = 'bf16[288,192]{1,0:T(8,128)(2,1)}', space=vmem, size = 0x24000, scoped, tag = 'scratch operand']
  #allocation3 [shape = 'bf16[288,384]{1,0:T(8,128)(2,1)}', space=vmem, size = 0x36000, scoped, tag = 'scratch operand']
  %s0 = inlined_call_operand.vmem [shape: f32[64,64], index: 0, kind: input, shape index: {}]
  %s1 = inlined_call_operand.vmem [shape: f32[128,128], index: 1, kind: input, shape index: {}]
  %s2 = inlined_call_operand.vmem [shape: bf16[4,256,64], index: 2, kind: input, shape index: {}]
  %s3 = inlined_call_operand.vmem [shape: f32[1,64], index: 3, kind: input, shape index: {}]
  %s4 = inlined_call_operand.vmem [shape: f32[1,64], index: 4, kind: input, shape index: {}]
  %s5 = inlined_call_operand.hbm [shape: bf16[3,192,128], index: 5, kind: input, shape index: {}]
  %s6 = inlined_call_operand.vmem [shape: f32[1,128], index: 6, kind: input, shape index: {}]
  %s7 = inlined_call_operand.vmem [shape: f32[1,128], index: 7, kind: input, shape index: {}]
  %s8 = inlined_call_operand.vmem [shape: f32[1,128], index: 8, kind: input, shape index: {}]
  %s9 = inlined_call_operand.vmem [shape: bf16[3,384,128], index: 9, kind: input, shape index: {}]
  %s10 = inlined_call_operand.vmem [shape: f32[1,128], index: 10, kind: input, shape index: {}]
  %s11 = inlined_call_operand.hbm [shape: bf16[64,128], index: 11, kind: input, shape index: {}]
  %s12 = inlined_call_operand.vmem [shape: f32[1,128], index: 12, kind: input, shape index: {}]
  %s13 = inlined_call_operand.hbm [shape: bf16[4,256,128], index: 13, kind: output, shape index: {}]
  %s14 = sld [smem:[#allocation0]]
  $region93: #{tpu_custom_call.1} parent=0
    _
  %s16 = ssub.s32 1, %s14
  %s17 = scalar_select 0, %s16, %s14
  $region1: #{tpu_custom_call.1} parent=0
    #allocation4 [shape = 'u8[147456]{0}', space=vmem, size = 0x24000, scoped, tag = 'input window, operand 5, single buffered']
    #allocation5 [shape = 's32[2]{0}', space=sflag, size = 0x8, scoped, tag = 'scoped memory for tpu_custom_call.1']
    #allocation6 [shape = 's32[2]{0}', space=sflag, size = 0x8, scoped, tag = 'scoped memory for tpu_custom_call.1']
    #allocation7 [shape = 'u8[16384]{0}', space=vmem, size = 0x4000, scoped, tag = 'input window, operand 11, single buffered']
    #allocation8 [shape = 's32[1]{0}', space=sflag, size = 0x4, scoped, tag = 'scoped memory for tpu_custom_call.1']
    #allocation9 [shape = 'u8[131072]{0}', space=vmem, size = 0x20000, scoped, tag = 'output window, operand 0']
    %18 = vsyncpa [#allocation5], 0
    %19 = vsyncpa [#allocation8], 0
    %20 = vsyncpa [#allocation6], 0
    %s21 = scalar_lea.sflag [#allocation6], 1
    %22 = vsyncpa %s21, 0
    loop: start=0, step=1, limit=6
    $region2: #{tpu_custom_call.1} parent=1 // loop_pre_header
      _
    $region3: #{tpu_custom_call.1} parent=1 // loop_header
      %s24 = sphi 0, %s28
      %p25 = scmp.ge.s32.totalorder %s24, 6
      %s32 = sphi 0, %s32
      %s34 = sphi 0, %s32
      %s35 = sphi 0, %s34
      %s49 = sphi 0, %s35
      %s53 = sphi 0, %s53
      %s55 = sphi 0, %s53
      %s56 = sphi 0, %s55
      %s70 = sphi 0, %s56
      %s76 = sphi 0, %s78
      %s79 = sphi 0, %s76
      %s80 = sphi 0, %s79
      %s96 = sphi 0, %s80
      %s100 = sphi 0, %s100
      %s102 = sphi 0, %s100
      %s103 = sphi 0, %s102
      %s117 = sphi 0, %s103
      %s121 = sphi 0, %s121
      %s123 = sphi 0, %s121
      %s124 = sphi 0, %s123
      %s138 = sphi 0, %s124
      %s142 = sphi 0, %s142
      %s144 = sphi 0, %s142
      %s145 = sphi 0, %s144
      %s159 = sphi 0, %s145
      %s163 = sphi 0, %s163
      %s165 = sphi 0, %s163
      %s166 = sphi 0, %s165
      %s180 = sphi 0, %s166
      %s184 = sphi 0, %s184
      %s186 = sphi 0, %s184
      %s187 = sphi 0, %s186
      %s201 = sphi 0, %s187
      %s205 = sphi 0, %s205
      %s207 = sphi 0, %s205
      %s208 = sphi 0, %s207
      %s222 = sphi 0, %s208
      %s226 = sphi 0, %s226
      %s228 = sphi 0, %s226
      %s229 = sphi 0, %s228
      %s243 = sphi 0, %s229
      %s247 = sphi 0, %s247
      %s249 = sphi 0, %s247
      %s250 = sphi 0, %s249
      %s264 = sphi 0, %s250
      %s268 = sphi 0, %s268
      %s270 = sphi 0, %s268
      %s271 = sphi 0, %s270
      %s285 = sphi 0, %s271
      %s289 = sphi 0, %s289
      %s291 = sphi 0, %s289
      %s292 = sphi 0, %s291
      %s306 = sphi 0, %s292
      %s312 = sphi 0, %s314
      %s315 = sphi 0, %s312
      %s316 = sphi 0, %s315
      %s332 = sphi 0, %s316
    $region4: #{tpu_custom_call.1} parent=1 // loop_header_branch
      %27 = sbr.rel (%p25) target = $region8
    $region5: #{tpu_custom_call.1} parent=1 // loop_body
      %s29 = ssub.s32 %s24, 1
      %s30 = ssub.s32 %s24, 2
      %s31 = sadd.s32 %s24, 1
      %s33 = sadd.s32 %s32, 1
      %p36 = scmp.eq.s32.totalorder %s24, 3
      %p37 = scmp.ne.s32.totalorder %s32, %s34
      %p38 = scmp.eq.s32.totalorder %s24, 0
      %p39 = por %p37, %p38
      %p40 = scmp.ne.s32.totalorder %s32, %s34
      %p41 = scmp.eq.s32.totalorder %s29, 3
      %p42 = por %p40, %p41
      %p43 = scmp.ne.s32.totalorder %s34, %s35
      %p44 = scmp.eq.s32.totalorder %s29, 0
      %p45 = por %p43, %p44
      %p46 = scmp.ne.s32.totalorder %s34, %s35
      %p47 = scmp.eq.s32.totalorder %s30, 3
      %p48 = por %p46, %p47
      %p50 = scmp.ne.s32.totalorder %s35, %s49
      %p51 = scmp.eq.s32.totalorder %s30, 0
      %p52 = por %p50, %p51
      %s54 = sadd.s32 %s53, 1
      %p57 = scmp.eq.s32.totalorder %s24, 3
      %p58 = scmp.ne.s32.totalorder %s53, %s55
      %p59 = scmp.eq.s32.totalorder %s24, 0
      %p60 = por %p58, %p59
      %p61 = scmp.ne.s32.totalorder %s53, %s55
      %p62 = scmp.eq.s32.totalorder %s29, 3
      %p63 = por %p61, %p62
      %p64 = scmp.ne.s32.totalorder %s55, %s56
      %p65 = scmp.eq.s32.totalorder %s29, 0
      %p66 = por %p64, %p65
      %p67 = scmp.ne.s32.totalorder %s55, %s56
      %p68 = scmp.eq.s32.totalorder %s30, 3
      %p69 = por %p67, %p68
      %p71 = scmp.ne.s32.totalorder %s56, %s70
      %p72 = scmp.eq.s32.totalorder %s30, 0
      %p73 = por %p71, %p72
      %s74 = ssub.s32 %s24, %s31
      %p75 = scmp.eq.s32.totalorder %s74, 0
      %s77 = sadd.s32 %s76, 1
      %s78 = scalar_select %p75, %s76, %s77
      %p81 = pneg %p75
      %p82 = scmp.eq.s32.totalorder %s24, 3
      %p83 = por %p81, %p82
      %p84 = scmp.ne.s32.totalorder %s76, %s79
      %p85 = scmp.eq.s32.totalorder %s24, 0
      %p86 = por %p84, %p85
      %p87 = scmp.ne.s32.totalorder %s76, %s79
      %p88 = scmp.eq.s32.totalorder %s29, 3
      %p89 = por %p87, %p88
      %p90 = scmp.ne.s32.totalorder %s79, %s80
      %p91 = scmp.eq.s32.totalorder %s29, 0
      %p92 = por %p90, %p91
      %p93 = scmp.ne.s32.totalorder %s79, %s80
      %p94 = scmp.eq.s32.totalorder %s30, 3
      %p95 = por %p93, %p94
      %p97 = scmp.ne.s32.totalorder %s80, %s96
      %p98 = scmp.eq.s32.totalorder %s30, 0
      %p99 = por %p97, %p98
      %s101 = sadd.s32 %s100, 1
      %p104 = scmp.eq.s32.totalorder %s24, 3
      %p105 = scmp.ne.s32.totalorder %s100, %s102
      %p106 = scmp.eq.s32.totalorder %s24, 0
      %p107 = por %p105, %p106
      %p108 = scmp.ne.s32.totalorder %s100, %s102
      %p109 = scmp.eq.s32.totalorder %s29, 3
      %p110 = por %p108, %p109
      %p111 = scmp.ne.s32.totalorder %s102, %s103
      %p112 = scmp.eq.s32.totalorder %s29, 0
      %p113 = por %p111, %p112
      %p114 = scmp.ne.s32.totalorder %s102, %s103
      %p115 = scmp.eq.s32.totalorder %s30, 3
      %p116 = por %p114, %p115
      %p118 = scmp.ne.s32.totalorder %s103, %s117
      %p119 = scmp.eq.s32.totalorder %s30, 0
      %p120 = por %p118, %p119
      %s122 = sadd.s32 %s121, 1
      %p125 = scmp.eq.s32.totalorder %s24, 3
      %p126 = scmp.ne.s32.totalorder %s121, %s123
      %p127 = scmp.eq.s32.totalorder %s24, 0
      %p128 = por %p126, %p127
      %p129 = scmp.ne.s32.totalorder %s121, %s123
      %p130 = scmp.eq.s32.totalorder %s29, 3
      %p131 = por %p129, %p130
      %p132 = scmp.ne.s32.totalorder %s123, %s124
      %p133 = scmp.eq.s32.totalorder %s29, 0
      %p134 = por %p132, %p133
      %p135 = scmp.ne.s32.totalorder %s123, %s124
      %p136 = scmp.eq.s32.totalorder %s30, 3
      %p137 = por %p135, %p136
      %p139 = scmp.ne.s32.totalorder %s124, %s138
      %p140 = scmp.eq.s32.totalorder %s30, 0
      %p141 = por %p139, %p140
      %s143 = sadd.s32 %s142, 1
      %p146 = scmp.eq.s32.totalorder %s24, 3
      %p147 = scmp.ne.s32.totalorder %s142, %s144
      %p148 = scmp.eq.s32.totalorder %s24, 0
      %p149 = por %p147, %p148
      %p150 = scmp.ne.s32.totalorder %s142, %s144
      %p151 = scmp.eq.s32.totalorder %s29, 3
      %p152 = por %p150, %p151
      %p153 = scmp.ne.s32.totalorder %s144, %s145
      %p154 = scmp.eq.s32.totalorder %s29, 0
      %p155 = por %p153, %p154
      %p156 = scmp.ne.s32.totalorder %s144, %s145
      %p157 = scmp.eq.s32.totalorder %s30, 3
      %p158 = por %p156, %p157
      %p160 = scmp.ne.s32.totalorder %s145, %s159
      %p161 = scmp.eq.s32.totalorder %s30, 0
      %p162 = por %p160, %p161
      %s164 = sadd.s32 %s163, 1
      %p167 = scmp.eq.s32.totalorder %s24, 3
      %p168 = scmp.ne.s32.totalorder %s163, %s165
      %p169 = scmp.eq.s32.totalorder %s24, 0
      %p170 = por %p168, %p169
      %p171 = scmp.ne.s32.totalorder %s163, %s165
      %p172 = scmp.eq.s32.totalorder %s29, 3
      %p173 = por %p171, %p172
      %p174 = scmp.ne.s32.totalorder %s165, %s166
      %p175 = scmp.eq.s32.totalorder %s29, 0
      %p176 = por %p174, %p175
      %p177 = scmp.ne.s32.totalorder %s165, %s166
      %p178 = scmp.eq.s32.totalorder %s30, 3
      %p179 = por %p177, %p178
      %p181 = scmp.ne.s32.totalorder %s166, %s180
      %p182 = scmp.eq.s32.totalorder %s30, 0
      %p183 = por %p181, %p182
      %s185 = sadd.s32 %s184, 1
      %p188 = scmp.eq.s32.totalorder %s24, 3
      %p189 = scmp.ne.s32.totalorder %s184, %s186
      %p190 = scmp.eq.s32.totalorder %s24, 0
      %p191 = por %p189, %p190
      %p192 = scmp.ne.s32.totalorder %s184, %s186
      %p193 = scmp.eq.s32.totalorder %s29, 3
      %p194 = por %p192, %p193
      %p195 = scmp.ne.s32.totalorder %s186, %s187
      %p196 = scmp.eq.s32.totalorder %s29, 0
      %p197 = por %p195, %p196
      %p198 = scmp.ne.s32.totalorder %s186, %s187
      %p199 = scmp.eq.s32.totalorder %s30, 3
      %p200 = por %p198, %p199
      %p202 = scmp.ne.s32.totalorder %s187, %s201
      %p203 = scmp.eq.s32.totalorder %s30, 0
      %p204 = por %p202, %p203
      %s206 = sadd.s32 %s205, 1
      %p209 = scmp.eq.s32.totalorder %s24, 3
      %p210 = scmp.ne.s32.totalorder %s205, %s207
      %p211 = scmp.eq.s32.totalorder %s24, 0
      %p212 = por %p210, %p211
      %p213 = scmp.ne.s32.totalorder %s205, %s207
      %p214 = scmp.eq.s32.totalorder %s29, 3
      %p215 = por %p213, %p214
      %p216 = scmp.ne.s32.totalorder %s207, %s208
      %p217 = scmp.eq.s32.totalorder %s29, 0
      %p218 = por %p216, %p217
      %p219 = scmp.ne.s32.totalorder %s207, %s208
      %p220 = scmp.eq.s32.totalorder %s30, 3
      %p221 = por %p219, %p220
      %p223 = scmp.ne.s32.totalorder %s208, %s222
      %p224 = scmp.eq.s32.totalorder %s30, 0
      %p225 = por %p223, %p224
      %s227 = sadd.s32 %s226, 1
      %p230 = scmp.eq.s32.totalorder %s24, 3
      %p231 = scmp.ne.s32.totalorder %s226, %s228
      %p232 = scmp.eq.s32.totalorder %s24, 0
      %p233 = por %p231, %p232
      %p234 = scmp.ne.s32.totalorder %s226, %s228
      %p235 = scmp.eq.s32.totalorder %s29, 3
      %p236 = por %p234, %p235
      %p237 = scmp.ne.s32.totalorder %s228, %s229
      %p238 = scmp.eq.s32.totalorder %s29, 0
      %p239 = por %p237, %p238
      %p240 = scmp.ne.s32.totalorder %s228, %s229
      %p241 = scmp.eq.s32.totalorder %s30, 3
      %p242 = por %p240, %p241
      %p244 = scmp.ne.s32.totalorder %s229, %s243
      %p245 = scmp.eq.s32.totalorder %s30, 0
      %p246 = por %p244, %p245
      %s248 = sadd.s32 %s247, 1
      %p251 = scmp.eq.s32.totalorder %s24, 3
      %p252 = scmp.ne.s32.totalorder %s247, %s249
      %p253 = scmp.eq.s32.totalorder %s24, 0
      %p254 = por %p252, %p253
      %p255 = scmp.ne.s32.totalorder %s247, %s249
      %p256 = scmp.eq.s32.totalorder %s29, 3
      %p257 = por %p255, %p256
      %p258 = scmp.ne.s32.totalorder %s249, %s250
      %p259 = scmp.eq.s32.totalorder %s29, 0
      %p260 = por %p258, %p259
      %p261 = scmp.ne.s32.totalorder %s249, %s250
      %p262 = scmp.eq.s32.totalorder %s30, 3
      %p263 = por %p261, %p262
      %p265 = scmp.ne.s32.totalorder %s250, %s264
      %p266 = scmp.eq.s32.totalorder %s30, 0
      %p267 = por %p265, %p266
      %s269 = sadd.s32 %s268, 1
      %p272 = scmp.eq.s32.totalorder %s24, 3
      %p273 = scmp.ne.s32.totalorder %s268, %s270
      %p274 = scmp.eq.s32.totalorder %s24, 0
      %p275 = por %p273, %p274
      %p276 = scmp.ne.s32.totalorder %s268, %s270
      %p277 = scmp.eq.s32.totalorder %s29, 3
      %p278 = por %p276, %p277
      %p279 = scmp.ne.s32.totalorder %s270, %s271
      %p280 = scmp.eq.s32.totalorder %s29, 0
      %p281 = por %p279, %p280
      %p282 = scmp.ne.s32.totalorder %s270, %s271
      %p283 = scmp.eq.s32.totalorder %s30, 3
      %p284 = por %p282, %p283
      %p286 = scmp.ne.s32.totalorder %s271, %s285
      %p287 = scmp.eq.s32.totalorder %s30, 0
      %p288 = por %p286, %p287
      %s290 = sadd.s32 %s289, 1
      %p293 = scmp.eq.s32.totalorder %s24, 3
      %p294 = scmp.ne.s32.totalorder %s289, %s291
      %p295 = scmp.eq.s32.totalorder %s24, 0
      %p296 = por %p294, %p295
      %p297 = scmp.ne.s32.totalorder %s289, %s291
      %p298 = scmp.eq.s32.totalorder %s29, 3
      %p299 = por %p297, %p298
      %p300 = scmp.ne.s32.totalorder %s291, %s292
      %p301 = scmp.eq.s32.totalorder %s29, 0
      %p302 = por %p300, %p301
      %p303 = scmp.ne.s32.totalorder %s291, %s292
      %p304 = scmp.eq.s32.totalorder %s30, 3
      %p305 = por %p303, %p304
      %p307 = scmp.ne.s32.totalorder %s292, %s306
      %p308 = scmp.eq.s32.totalorder %s30, 0
      %p309 = por %p307, %p308
      %s310 = ssub.s32 %s24, %s31
      %p311 = scmp.eq.s32.totalorder %s310, 0
      %s313 = sadd.s32 %s312, 1
      %s314 = scalar_select %p311, %s312, %s313
      %p317 = pneg %p311
      %p318 = scmp.eq.s32.totalorder %s24, 3
      %p319 = por %p317, %p318
      %p320 = scmp.ne.s32.totalorder %s312, %s315
      %p321 = scmp.eq.s32.totalorder %s24, 0
      %p322 = por %p320, %p321
      %p323 = scmp.ne.s32.totalorder %s312, %s315
      %p324 = scmp.eq.s32.totalorder %s29, 3
      %p325 = por %p323, %p324
      %p326 = scmp.ne.s32.totalorder %s315, %s316
      %p327 = scmp.eq.s32.totalorder %s29, 0
      %p328 = por %p326, %p327
      %p329 = scmp.ne.s32.totalorder %s315, %s316
      %p330 = scmp.eq.s32.totalorder %s30, 3
      %p331 = por %p329, %p330
      %p333 = scmp.ne.s32.totalorder %s316, %s332
      %p334 = scmp.eq.s32.totalorder %s30, 0
      %p335 = por %p333, %p334
      %p336 = scmp.le.s32.totalorder 1, %s24
      %p337 = scmp.lt.s32.totalorder %s24, 5
      %p338 = pnand %p336, %p337
      %p339 = pneg %p338
      // Predicated region
      $region9: #{tpu_custom_call.1} parent=5 // pred_check
        _
      $region10: #{tpu_custom_call.1} parent=5 // pred_check_branch
        %341 = sbr.rel (%p338) target = $region12
      $region11: #{tpu_custom_call.1} parent=5 // pred_region
        %s342 = ssub.s32 %s24, 1
        // Predicated region
        $region13: #{tpu_custom_call.1} parent=11 // pred_check
          %p343 = pneg %p45
        $region14: #{tpu_custom_call.1} parent=11 // pred_check_branch
          %345 = sbr.rel (%p343) target = $region16
        $region15: #{tpu_custom_call.1} parent=11 // pred_region
          _
        $region16: #{tpu_custom_call.1} parent=11 // pred_fallthru
          _
        // Predicated region
        $region17: #{tpu_custom_call.1} parent=11 // pred_check
          %p346 = pneg %p66
        $region18: #{tpu_custom_call.1} parent=11 // pred_check_branch
          %348 = sbr.rel (%p346) target = $region20
        $region19: #{tpu_custom_call.1} parent=11 // pred_region
          _
        $region20: #{tpu_custom_call.1} parent=11 // pred_fallthru
          _
        // Predicated region
        $region21: #{tpu_custom_call.1} parent=11 // pred_check
          %p349 = pneg %p113
        $region22: #{tpu_custom_call.1} parent=11 // pred_check_branch
          %351 = sbr.rel (%p349) target = $region24
        $region23: #{tpu_custom_call.1} parent=11 // pred_region
          _
        $region24: #{tpu_custom_call.1} parent=11 // pred_fallthru
          _
        // Predicated region
        $region25: #{tpu_custom_call.1} parent=11 // pred_check
          %p352 = pneg %p134
        $region26: #{tpu_custom_call.1} parent=11 // pred_check_branch
          %354 = sbr.rel (%p352) target = $region28
        $region27: #{tpu_custom_call.1} parent=11 // pred_region
          _
        $region28: #{tpu_custom_call.1} parent=11 // pred_fallthru
          _
        // Predicated region
        $region29: #{tpu_custom_call.1} parent=11 // pred_check
          %p355 = pneg %p155
        $region30: #{tpu_custom_call.1} parent=11 // pred_check_branch
          %357 = sbr.rel (%p355) target = $region32
        $region31: #{tpu_custom_call.1} parent=11 // pred_region
          %s359 = ssub.s32 4608, 4608
          %360 = vsyncadd [#allocation5], %s359
          %s361 = sshll.u32 [#allocation4], 4
          %s362 = int_to_ptr.vmem [resolvable:$true] %s361
          %367 = dma.hbm_to_vmem [thread:$0]  %s5, 4608, %s362, [#allocation5], 64, 64, 4
        $region32: #{tpu_custom_call.1} parent=11 // pred_fallthru
          _
        // Predicated region
        $region33: #{tpu_custom_call.1} parent=11 // pred_check
          %p368 = pneg %p176
        $region34: #{tpu_custom_call.1} parent=11 // pred_check_branch
          %370 = sbr.rel (%p368) target = $region36
        $region35: #{tpu_custom_call.1} parent=11 // pred_region
          _
        $region36: #{tpu_custom_call.1} parent=11 // pred_fallthru
          _
        // Predicated region
        $region37: #{tpu_custom_call.1} parent=11 // pred_check
          %p371 = pneg %p197
        $region38: #{tpu_custom_call.1} parent=11 // pred_check_branch
          %373 = sbr.rel (%p371) target = $region40
        $region39: #{tpu_custom_call.1} parent=11 // pred_region
          _
        $region40: #{tpu_custom_call.1} parent=11 // pred_fallthru
          _
        // Predicated region
        $region41: #{tpu_custom_call.1} parent=11 // pred_check
          %p374 = pneg %p218
        $region42: #{tpu_custom_call.1} parent=11 // pred_check_branch
          %376 = sbr.rel (%p374) target = $region44
        $region43: #{tpu_custom_call.1} parent=11 // pred_region
          _
        $region44: #{tpu_custom_call.1} parent=11 // pred_fallthru
          _
        // Predicated region
        $region45: #{tpu_custom_call.1} parent=11 // pred_check
          %p377 = pneg %p239
        $region46: #{tpu_custom_call.1} parent=11 // pred_check_branch
          %379 = sbr.rel (%p377) target = $region48
        $region47: #{tpu_custom_call.1} parent=11 // pred_region
          _
        $region48: #{tpu_custom_call.1} parent=11 // pred_fallthru
          _
        // Predicated region
        $region49: #{tpu_custom_call.1} parent=11 // pred_check
          %p380 = pneg %p260
        $region50: #{tpu_custom_call.1} parent=11 // pred_check_branch
          %382 = sbr.rel (%p380) target = $region52
        $region51: #{tpu_custom_call.1} parent=11 // pred_region
          _
        $region52: #{tpu_custom_call.1} parent=11 // pred_fallthru
          _
        // Predicated region
        $region53: #{tpu_custom_call.1} parent=11 // pred_check
          %p383 = pneg %p281
        $region54: #{tpu_custom_call.1} parent=11 // pred_check_branch
          %385 = sbr.rel (%p383) target = $region56
        $region55: #{tpu_custom_call.1} parent=11 // pred_region
          %s387 = ssub.s32 512, 512
          %388 = vsyncadd [#allocation8], %s387
          %s389 = sshll.u32 [#allocation7], 4
          %s390 = int_to_ptr.vmem [resolvable:$true] %s389
          %395 = dma.hbm_to_vmem [thread:$0]  %s11, 512, %s390, [#allocation8], 64, 64, 4
        $region56: #{tpu_custom_call.1} parent=11 // pred_fallthru
          _
        // Predicated region
        $region57: #{tpu_custom_call.1} parent=11 // pred_check
          %p396 = pneg %p302
        $region58: #{tpu_custom_call.1} parent=11 // pred_check_branch
          %398 = sbr.rel (%p396) target = $region60
        $region59: #{tpu_custom_call.1} parent=11 // pred_region
          _
        $region60: #{tpu_custom_call.1} parent=11 // pred_fallthru
          _
      $region12: #{tpu_custom_call.1} parent=5 // pred_fallthru
        _
      %p399 = scmp.lt.s32.totalorder %s24, 4
      // Predicated region
      $region61: #{tpu_custom_call.1} parent=5 // pred_check
        %p400 = pneg %p399
      $region62: #{tpu_custom_call.1} parent=5 // pred_check_branch
        %402 = sbr.rel (%p400) target = $region64
      $region63: #{tpu_custom_call.1} parent=5 // pred_region
        // Predicated region
        $region65: #{tpu_custom_call.1} parent=63 // pred_check
          %p403 = pneg %p86
        $region66: #{tpu_custom_call.1} parent=63 // pred_check_branch
          %405 = sbr.rel (%p403) target = $region68
        $region67: #{tpu_custom_call.1} parent=63 // pred_region
          %p406 = scmp.lt.s32.totalorder %s24, 3
          %s407 = scalar_select %p406, %s24, 3
          %s408 = smul.addr %s407, 32
          %s409 = smul.addr %s408, 4
          %s410 = scalar_lea.vmem %s2, %s409
        $region68: #{tpu_custom_call.1} parent=63 // pred_fallthru
          _
      $region64: #{tpu_custom_call.1} parent=5 // pred_fallthru
        _
      %p411 = scmp.le.s32.totalorder 1, %s24
      %p412 = scmp.lt.s32.totalorder %s24, 5
      %p413 = pnand %p411, %p412
      %p414 = pneg %p413
      // Predicated region
      $region69: #{tpu_custom_call.1} parent=5 // pred_check
        _
      $region70: #{tpu_custom_call.1} parent=5 // pred_check_branch
        %416 = sbr.rel (%p413) target = $region72
      $region71: #{tpu_custom_call.1} parent=5 // pred_region
        %s417 = ssub.s32 %s24, 1
        // Predicated region
        $region73: #{tpu_custom_call.1} parent=71 // pred_check
          %p418 = pneg %p155
        $region74: #{tpu_custom_call.1} parent=71 // pred_check_branch
          %420 = sbr.rel (%p418) target = $region76
        $region75: #{tpu_custom_call.1} parent=71 // pred_region
          %421 = dma.done [#allocation5], 4608
        $region76: #{tpu_custom_call.1} parent=71 // pred_fallthru
          _
        // Predicated region
        $region77: #{tpu_custom_call.1} parent=71 // pred_check
          %p422 = pneg %p281
        $region78: #{tpu_custom_call.1} parent=71 // pred_check_branch
          %424 = sbr.rel (%p422) target = $region80
        $region79: #{tpu_custom_call.1} parent=71 // pred_region
          %425 = dma.done [#allocation8], 512
        $region80: #{tpu_custom_call.1} parent=71 // pred_fallthru
          _
        %p426 = pneg %p45
        %p427 = pneg %p42
        %p428 = pneg %p66
        %p429 = pneg %p63
        %p430 = scmp.lt.s32.totalorder %s29, 3
        %s431 = scalar_select %p430, %s29, 3
        %s432 = smul.addr %s431, 32
        %s433 = smul.addr %s432, 4
        %s434 = scalar_lea.vmem %s2, %s433
        %p435 = pneg %p92
        %p436 = pneg %p89
        %p437 = pneg %p113
        %p438 = pneg %p110
        %p439 = pneg %p134
        %p440 = pneg %p131
        %p441 = pneg %p155
        %p442 = pneg %p152
        %p443 = pneg %p176
        %p444 = pneg %p173
        %p445 = pneg %p197
        %p446 = pneg %p194
        %p447 = pneg %p218
        %p448 = pneg %p215
        %p449 = pneg %p239
        %p450 = pneg %p236
        %p451 = pneg %p260
        %p452 = pneg %p257
        %p453 = pneg %p281
        %p454 = pneg %p278
        %p455 = pneg %p302
        %p456 = pneg %p299
        %p457 = pneg %p328
        %p458 = pneg %p325
        %s459 = sand.u32 %s315, 1
        %s460 = scalar_lea.sflag [#allocation6], %s459
        %s461 = sand.u32 %s315, 1
        %s462 = smul.addr %s461, 128
        %s463 = scalar_lea.vmem [#allocation9], %s462
        %p464 = scmp.lt.s32.totalorder %s29, 3
        %s465 = scalar_select %p464, %s29, 3
        %s466 = smul.addr %s465, 32
        %s467 = smul.addr %s466, 4
        %s468 = scalar_lea.vmem %s2, %s467
        %v470 = vld [vmem:[%s468] sm:$0xf]
        %v471 = vld [vmem:[%s468 + $0x4] sm:$0xf]
        %v472 = vld [vmem:[%s468 + $0x8] sm:$0xf]
        %v473 = vld [vmem:[%s468 + $0xc] sm:$0xf]
        %v474 = vld [vmem:[%s468 + $0x10] sm:$0xf]
        %v475 = vld [vmem:[%s468 + $0x14] sm:$0xf]
        %v476 = vld [vmem:[%s468 + $0x18] sm:$0xf]
        %v477 = vld [vmem:[%s468 + $0x1c] sm:$0xf]
        %v478 = vld [vmem:[%s468 + $0x20] sm:$0xf]
        %v479 = vld [vmem:[%s468 + $0x24] sm:$0xf]
        %v480 = vld [vmem:[%s468 + $0x28] sm:$0xf]
        %v481 = vld [vmem:[%s468 + $0x2c] sm:$0xf]
        %v482 = vld [vmem:[%s468 + $0x30] sm:$0xf]
        %v483 = vld [vmem:[%s468 + $0x34] sm:$0xf]
        %v484 = vld [vmem:[%s468 + $0x38] sm:$0xf]
        %v485 = vld [vmem:[%s468 + $0x3c] sm:$0xf]
        %v486 = vld [vmem:[%s468 + $0x40] sm:$0xf]
        %v487 = vld [vmem:[%s468 + $0x44] sm:$0xf]
        %v488 = vld [vmem:[%s468 + $0x48] sm:$0xf]
        %v489 = vld [vmem:[%s468 + $0x4c] sm:$0xf]
        %v490 = vld [vmem:[%s468 + $0x50] sm:$0xf]
        %v491 = vld [vmem:[%s468 + $0x54] sm:$0xf]
        %v492 = vld [vmem:[%s468 + $0x58] sm:$0xf]
        %v493 = vld [vmem:[%s468 + $0x5c] sm:$0xf]
        %v494 = vld [vmem:[%s468 + $0x60] sm:$0xf]
        %v495 = vld [vmem:[%s468 + $0x64] sm:$0xf]
        %v496 = vld [vmem:[%s468 + $0x68] sm:$0xf]
        %v497 = vld [vmem:[%s468 + $0x6c] sm:$0xf]
        %v498 = vld [vmem:[%s468 + $0x70] sm:$0xf]
        %v499 = vld [vmem:[%s468 + $0x74] sm:$0xf]
        %v500 = vld [vmem:[%s468 + $0x78] sm:$0xf]
        %v501 = vld [vmem:[%s468 + $0x7c] sm:$0xf]
        %v502 = vunpack.c.l.bf16 %v470
        %v503 = vunpack.c.l.bf16 %v471
        %v504 = vunpack.c.l.bf16 %v472
        %v505 = vunpack.c.l.bf16 %v473
        %v506 = vunpack.c.l.bf16 %v474
        %v507 = vunpack.c.l.bf16 %v475
        %v508 = vunpack.c.l.bf16 %v476
        %v509 = vunpack.c.l.bf16 %v477
        %v510 = vunpack.c.l.bf16 %v478
        %v511 = vunpack.c.l.bf16 %v479
        %v512 = vunpack.c.l.bf16 %v480
        %v513 = vunpack.c.l.bf16 %v481
        %v514 = vunpack.c.l.bf16 %v482
        %v515 = vunpack.c.l.bf16 %v483
        %v516 = vunpack.c.l.bf16 %v484
        %v517 = vunpack.c.l.bf16 %v485
        %v518 = vunpack.c.l.bf16 %v486
        %v519 = vunpack.c.l.bf16 %v487
        %v520 = vunpack.c.l.bf16 %v488
        %v521 = vunpack.c.l.bf16 %v489
        %v522 = vunpack.c.l.bf16 %v490
        %v523 = vunpack.c.l.bf16 %v491
        %v524 = vunpack.c.l.bf16 %v492
        %v525 = vunpack.c.l.bf16 %v493
        %v526 = vunpack.c.l.bf16 %v494
        %v527 = vunpack.c.l.bf16 %v495
        %v528 = vunpack.c.l.bf16 %v496
        %v529 = vunpack.c.l.bf16 %v497
        %v530 = vunpack.c.l.bf16 %v498
        %v531 = vunpack.c.l.bf16 %v499
        %v532 = vunpack.c.l.bf16 %v500
        %v533 = vunpack.c.l.bf16 %v501
        %v534 = vlaneseq
        %v535 = vshrl.u32 %v534, 7
        %v536 = vadd.s32 %v535, 8
        %v537 = vadd.s32 %v535, 16
        %v538 = vadd.s32 %v535, 24
        %v539 = vadd.s32 %v535, 32
        %v540 = vadd.s32 %v535, 40
        %v541 = vadd.s32 %v535, 48
        %v542 = vadd.s32 %v535, 56
        %v543 = vadd.s32 %v535, 64
        %v544 = vadd.s32 %v535, 72
        %v545 = vadd.s32 %v535, 80
        %v546 = vadd.s32 %v535, 88
        %v547 = vadd.s32 %v535, 96
        %v548 = vadd.s32 %v535, 104
        %v549 = vadd.s32 %v535, 112
        %v550 = vadd.s32 %v535, 120
        %v551 = vadd.s32 %v535, 128
        %v552 = vadd.s32 %v535, 136
        %v553 = vadd.s32 %v535, 144
        %v554 = vadd.s32 %v535, 152
        %v555 = vadd.s32 %v535, 160
        %v556 = vadd.s32 %v535, 168
        %v557 = vadd.s32 %v535, 176
        %v558 = vadd.s32 %v535, 184
        %v559 = vadd.s32 %v535, 192
        %v560 = vadd.s32 %v535, 200
        %v561 = vadd.s32 %v535, 208
        %v562 = vadd.s32 %v535, 216
        %v563 = vadd.s32 %v535, 224
        %v564 = vadd.s32 %v535, 232
        %v565 = vadd.s32 %v535, 240
        %v566 = vadd.s32 %v535, 248
        %vm567 = vcmp.lt.s32.totalorder %v535, 0
        %v568 = vsub.s32 0, %v535
        %v569 = vsel %vm567, %v568, %v535
        %v570 = vshrl.u32 %v569, 4
        %v571 = vand.u32 %v569, 15
        %v572 = vsub.s32 0, %v571
        %v573 = vsel %vm567, %v572, %v571
        %vm574 = vcmp.lt.s32.totalorder %v536, 0
        %v575 = vsub.s32 0, %v536
        %v576 = vsel %vm574, %v575, %v536
        %v577 = vshrl.u32 %v576, 4
        %v578 = vand.u32 %v576, 15
        %v579 = vsub.s32 0, %v578
        %v580 = vsel %vm574, %v579, %v578
        %vm581 = vcmp.lt.s32.totalorder %v537, 0
        %v582 = vsub.s32 0, %v537
        %v583 = vsel %vm581, %v582, %v537
        %v584 = vshrl.u32 %v583, 4
        %v585 = vand.u32 %v583, 15
        %v586 = vsub.s32 0, %v585
        %v587 = vsel %vm581, %v586, %v585
        %vm588 = vcmp.lt.s32.totalorder %v538, 0
        %v589 = vsub.s32 0, %v538
        %v590 = vsel %vm588, %v589, %v538
        %v591 = vshrl.u32 %v590, 4
        %v592 = vand.u32 %v590, 15
        %v593 = vsub.s32 0, %v592
        %v594 = vsel %vm588, %v593, %v592
        %vm595 = vcmp.lt.s32.totalorder %v539, 0
        %v596 = vsub.s32 0, %v539
        %v597 = vsel %vm595, %v596, %v539
        %v598 = vshrl.u32 %v597, 4
        %v599 = vand.u32 %v597, 15
        %v600 = vsub.s32 0, %v599
        %v601 = vsel %vm595, %v600, %v599
        %vm602 = vcmp.lt.s32.totalorder %v540, 0
        %v603 = vsub.s32 0, %v540
        %v604 = vsel %vm602, %v603, %v540
        %v605 = vshrl.u32 %v604, 4
        %v606 = vand.u32 %v604, 15
        %v607 = vsub.s32 0, %v606
        %v608 = vsel %vm602, %v607, %v606
        %vm609 = vcmp.lt.s32.totalorder %v541, 0
        %v610 = vsub.s32 0, %v541
        %v611 = vsel %vm609, %v610, %v541
        %v612 = vshrl.u32 %v611, 4
        %v613 = vand.u32 %v611, 15
        %v614 = vsub.s32 0, %v613
        %v615 = vsel %vm609, %v614, %v613
        %vm616 = vcmp.lt.s32.totalorder %v542, 0
        %v617 = vsub.s32 0, %v542
        %v618 = vsel %vm616, %v617, %v542
        %v619 = vshrl.u32 %v618, 4
        %v620 = vand.u32 %v618, 15
        %v621 = vsub.s32 0, %v620
        %v622 = vsel %vm616, %v621, %v620
        %vm623 = vcmp.lt.s32.totalorder %v543, 0
        %v624 = vsub.s32 0, %v543
        %v625 = vsel %vm623, %v624, %v543
        %v626 = vshrl.u32 %v625, 4
        %v627 = vand.u32 %v625, 15
        %v628 = vsub.s32 0, %v627
        %v629 = vsel %vm623, %v628, %v627
        %vm630 = vcmp.lt.s32.totalorder %v544, 0
        %v631 = vsub.s32 0, %v544
        %v632 = vsel %vm630, %v631, %v544
        %v633 = vshrl.u32 %v632, 4
        %v634 = vand.u32 %v632, 15
        %v635 = vsub.s32 0, %v634
        %v636 = vsel %vm630, %v635, %v634
        %vm637 = vcmp.lt.s32.totalorder %v545, 0
        %v638 = vsub.s32 0, %v545
        %v639 = vsel %vm637, %v638, %v545
        %v640 = vshrl.u32 %v639, 4
        %v641 = vand.u32 %v639, 15
        %v642 = vsub.s32 0, %v641
        %v643 = vsel %vm637, %v642, %v641
        %vm644 = vcmp.lt.s32.totalorder %v546, 0
        %v645 = vsub.s32 0, %v546
        %v646 = vsel %vm644, %v645, %v546
        %v647 = vshrl.u32 %v646, 4
        %v648 = vand.u32 %v646, 15
        %v649 = vsub.s32 0, %v648
        %v650 = vsel %vm644, %v649, %v648
        %vm651 = vcmp.lt.s32.totalorder %v547, 0
        %v652 = vsub.s32 0, %v547
        %v653 = vsel %vm651, %v652, %v547
        %v654 = vshrl.u32 %v653, 4
        %v655 = vand.u32 %v653, 15
        %v656 = vsub.s32 0, %v655
        %v657 = vsel %vm651, %v656, %v655
        %vm658 = vcmp.lt.s32.totalorder %v548, 0
        %v659 = vsub.s32 0, %v548
        %v660 = vsel %vm658, %v659, %v548
        %v661 = vshrl.u32 %v660, 4
        %v662 = vand.u32 %v660, 15
        %v663 = vsub.s32 0, %v662
        %v664 = vsel %vm658, %v663, %v662
        %vm665 = vcmp.lt.s32.totalorder %v549, 0
        %v666 = vsub.s32 0, %v549
        %v667 = vsel %vm665, %v666, %v549
        %v668 = vshrl.u32 %v667, 4
        %v669 = vand.u32 %v667, 15
        %v670 = vsub.s32 0, %v669
        %v671 = vsel %vm665, %v670, %v669
        %vm672 = vcmp.lt.s32.totalorder %v550, 0
        %v673 = vsub.s32 0, %v550
        %v674 = vsel %vm672, %v673, %v550
        %v675 = vshrl.u32 %v674, 4
        %v676 = vand.u32 %v674, 15
        %v677 = vsub.s32 0, %v676
        %v678 = vsel %vm672, %v677, %v676
        %vm679 = vcmp.lt.s32.totalorder %v551, 0
        %v680 = vsub.s32 0, %v551
        %v681 = vsel %vm679, %v680, %v551
        %v682 = vshrl.u32 %v681, 4
        %v683 = vand.u32 %v681, 15
        %v684 = vsub.s32 0, %v683
        %v685 = vsel %vm679, %v684, %v683
        %vm686 = vcmp.lt.s32.totalorder %v552, 0
        %v687 = vsub.s32 0, %v552
        %v688 = vsel %vm686, %v687, %v552
        %v689 = vshrl.u32 %v688, 4
        %v690 = vand.u32 %v688, 15
        %v691 = vsub.s32 0, %v690
        %v692 = vsel %vm686, %v691, %v690
        %vm693 = vcmp.lt.s32.totalorder %v553, 0
        %v694 = vsub.s32 0, %v553
        %v695 = vsel %vm693, %v694, %v553
        %v696 = vshrl.u32 %v695, 4
        %v697 = vand.u32 %v695, 15
        %v698 = vsub.s32 0, %v697
        %v699 = vsel %vm693, %v698, %v697
        %vm700 = vcmp.lt.s32.totalorder %v554, 0
        %v701 = vsub.s32 0, %v554
        %v702 = vsel %vm700, %v701, %v554
        %v703 = vshrl.u32 %v702, 4
        %v704 = vand.u32 %v702, 15
        %v705 = vsub.s32 0, %v704
        %v706 = vsel %vm700, %v705, %v704
        %vm707 = vcmp.lt.s32.totalorder %v555, 0
        %v708 = vsub.s32 0, %v555
        %v709 = vsel %vm707, %v708, %v555
        %v710 = vshrl.u32 %v709, 4
        %v711 = vand.u32 %v709, 15
        %v712 = vsub.s32 0, %v711
        %v713 = vsel %vm707, %v712, %v711
        %vm714 = vcmp.lt.s32.totalorder %v556, 0
        %v715 = vsub.s32 0, %v556
        %v716 = vsel %vm714, %v715, %v556
        %v717 = vshrl.u32 %v716, 4
        %v718 = vand.u32 %v716, 15
        %v719 = vsub.s32 0, %v718
        %v720 = vsel %vm714, %v719, %v718
        %vm721 = vcmp.lt.s32.totalorder %v557, 0
        %v722 = vsub.s32 0, %v557
        %v723 = vsel %vm721, %v722, %v557
        %v724 = vshrl.u32 %v723, 4
        %v725 = vand.u32 %v723, 15
        %v726 = vsub.s32 0, %v725
        %v727 = vsel %vm721, %v726, %v725
        %vm728 = vcmp.lt.s32.totalorder %v558, 0
        %v729 = vsub.s32 0, %v558
        %v730 = vsel %vm728, %v729, %v558
        %v731 = vshrl.u32 %v730, 4
        %v732 = vand.u32 %v730, 15
        %v733 = vsub.s32 0, %v732
        %v734 = vsel %vm728, %v733, %v732
        %vm735 = vcmp.lt.s32.totalorder %v559, 0
        %v736 = vsub.s32 0, %v559
        %v737 = vsel %vm735, %v736, %v559
        %v738 = vshrl.u32 %v737, 4
        %v739 = vand.u32 %v737, 15
        %v740 = vsub.s32 0, %v739
        %v741 = vsel %vm735, %v740, %v739
        %vm742 = vcmp.lt.s32.totalorder %v560, 0
        %v743 = vsub.s32 0, %v560
        %v744 = vsel %vm742, %v743, %v560
        %v745 = vshrl.u32 %v744, 4
        %v746 = vand.u32 %v744, 15
        %v747 = vsub.s32 0, %v746
        %v748 = vsel %vm742, %v747, %v746
        %vm749 = vcmp.lt.s32.totalorder %v561, 0
        %v750 = vsub.s32 0, %v561
        %v751 = vsel %vm749, %v750, %v561
        %v752 = vshrl.u32 %v751, 4
        %v753 = vand.u32 %v751, 15
        %v754 = vsub.s32 0, %v753
        %v755 = vsel %vm749, %v754, %v753
        %vm756 = vcmp.lt.s32.totalorder %v562, 0
        %v757 = vsub.s32 0, %v562
        %v758 = vsel %vm756, %v757, %v562
        %v759 = vshrl.u32 %v758, 4
        %v760 = vand.u32 %v758, 15
        %v761 = vsub.s32 0, %v760
        %v762 = vsel %vm756, %v761, %v760
        %vm763 = vcmp.lt.s32.totalorder %v563, 0
        %v764 = vsub.s32 0, %v563
        %v765 = vsel %vm763, %v764, %v563
        %v766 = vshrl.u32 %v765, 4
        %v767 = vand.u32 %v765, 15
        %v768 = vsub.s32 0, %v767
        %v769 = vsel %vm763, %v768, %v767
        %vm770 = vcmp.lt.s32.totalorder %v564, 0
        %v771 = vsub.s32 0, %v564
        %v772 = vsel %vm770, %v771, %v564
        %v773 = vshrl.u32 %v772, 4
        %v774 = vand.u32 %v772, 15
        %v775 = vsub.s32 0, %v774
        %v776 = vsel %vm770, %v775, %v774
        %vm777 = vcmp.lt.s32.totalorder %v565, 0
        %v778 = vsub.s32 0, %v565
        %v779 = vsel %vm777, %v778, %v565
        %v780 = vshrl.u32 %v779, 4
        %v781 = vand.u32 %v779, 15
        %v782 = vsub.s32 0, %v781
        %v783 = vsel %vm777, %v782, %v781
        %vm784 = vcmp.lt.s32.totalorder %v566, 0
        %v785 = vsub.s32 0, %v566
        %v786 = vsel %vm784, %v785, %v566
        %v787 = vshrl.u32 %v786, 4
        %v788 = vand.u32 %v786, 15
        %v789 = vsub.s32 0, %v788
        %v790 = vsel %vm784, %v789, %v788
        %vm791 = vcmp.ne.s32.totalorder %v573, 0
        %vm792 = vcmp.ne.s32.totalorder %v580, 0
        %vm793 = vcmp.ne.s32.totalorder %v587, 0
        %vm794 = vcmp.ne.s32.totalorder %v594, 0
        %vm795 = vcmp.ne.s32.totalorder %v601, 0
        %vm796 = vcmp.ne.s32.totalorder %v608, 0
        %vm797 = vcmp.ne.s32.totalorder %v615, 0
        %vm798 = vcmp.ne.s32.totalorder %v622, 0
        %vm799 = vcmp.ne.s32.totalorder %v629, 0
        %vm800 = vcmp.ne.s32.totalorder %v636, 0
        %vm801 = vcmp.ne.s32.totalorder %v643, 0
        %vm802 = vcmp.ne.s32.totalorder %v650, 0
        %vm803 = vcmp.ne.s32.totalorder %v657, 0
        %vm804 = vcmp.ne.s32.totalorder %v664, 0
        %vm805 = vcmp.ne.s32.totalorder %v671, 0
        %vm806 = vcmp.ne.s32.totalorder %v678, 0
        %vm807 = vcmp.ne.s32.totalorder %v685, 0
        %vm808 = vcmp.ne.s32.totalorder %v692, 0
        %vm809 = vcmp.ne.s32.totalorder %v699, 0
        %vm810 = vcmp.ne.s32.totalorder %v706, 0
        %vm811 = vcmp.ne.s32.totalorder %v713, 0
        %vm812 = vcmp.ne.s32.totalorder %v720, 0
        %vm813 = vcmp.ne.s32.totalorder %v727, 0
        %vm814 = vcmp.ne.s32.totalorder %v734, 0
        %vm815 = vcmp.ne.s32.totalorder %v741, 0
        %vm816 = vcmp.ne.s32.totalorder %v748, 0
        %vm817 = vcmp.ne.s32.totalorder %v755, 0
        %vm818 = vcmp.ne.s32.totalorder %v762, 0
        %vm819 = vcmp.ne.s32.totalorder %v769, 0
        %vm820 = vcmp.ne.s32.totalorder %v776, 0
        %vm821 = vcmp.ne.s32.totalorder %v783, 0
        %vm822 = vcmp.ne.s32.totalorder %v790, 0
        %vm823 = vcmp.lt.s32.totalorder %v573, 0
        %vm824 = vcmp.lt.s32.totalorder %v580, 0
        %vm825 = vcmp.lt.s32.totalorder %v587, 0
        %vm826 = vcmp.lt.s32.totalorder %v594, 0
        %vm827 = vcmp.lt.s32.totalorder %v601, 0
        %vm828 = vcmp.lt.s32.totalorder %v608, 0
        %vm829 = vcmp.lt.s32.totalorder %v615, 0
        %vm830 = vcmp.lt.s32.totalorder %v622, 0
        %vm831 = vcmp.lt.s32.totalorder %v629, 0
        %vm832 = vcmp.lt.s32.totalorder %v636, 0
        %vm833 = vcmp.lt.s32.totalorder %v643, 0
        %vm834 = vcmp.lt.s32.totalorder %v650, 0
        %vm835 = vcmp.lt.s32.totalorder %v657, 0
        %vm836 = vcmp.lt.s32.totalorder %v664, 0
        %vm837 = vcmp.lt.s32.totalorder %v671, 0
        %vm838 = vcmp.lt.s32.totalorder %v678, 0
        %vm839 = vcmp.lt.s32.totalorder %v685, 0
        %vm840 = vcmp.lt.s32.totalorder %v692, 0
        %vm841 = vcmp.lt.s32.totalorder %v699, 0
        %vm842 = vcmp.lt.s32.totalorder %v706, 0
        %vm843 = vcmp.lt.s32.totalorder %v713, 0
        %vm844 = vcmp.lt.s32.totalorder %v720, 0
        %vm845 = vcmp.lt.s32.totalorder %v727, 0
        %vm846 = vcmp.lt.s32.totalorder %v734, 0
        %vm847 = vcmp.lt.s32.totalorder %v741, 0
        %vm848 = vcmp.lt.s32.totalorder %v748, 0
        %vm849 = vcmp.lt.s32.totalorder %v755, 0
        %vm850 = vcmp.lt.s32.totalorder %v762, 0
        %vm851 = vcmp.lt.s32.totalorder %v769, 0
        %vm852 = vcmp.lt.s32.totalorder %v776, 0
        %vm853 = vcmp.lt.s32.totalorder %v783, 0
        %vm854 = vcmp.lt.s32.totalorder %v790, 0
        %vm855 = vmand %vm823, %vm791
        %vm856 = vmand %vm824, %vm792
        %vm857 = vmand %vm825, %vm793
        %vm858 = vmand %vm826, %vm794
        %vm859 = vmand %vm827, %vm795
        %vm860 = vmand %vm828, %vm796
        %vm861 = vmand %vm829, %vm797
        %vm862 = vmand %vm830, %vm798
        %vm863 = vmand %vm831, %vm799
        %vm864 = vmand %vm832, %vm800
        %vm865 = vmand %vm833, %vm801
        %vm866 = vmand %vm834, %vm802
        %vm867 = vmand %vm835, %vm803
        %vm868 = vmand %vm836, %vm804
        %vm869 = vmand %vm837, %vm805
        %vm870 = vmand %vm838, %vm806
        %vm871 = vmand %vm839, %vm807
        %vm872 = vmand %vm840, %vm808
        %vm873 = vmand %vm841, %vm809
        %vm874 = vmand %vm842, %vm810
        %vm875 = vmand %vm843, %vm811
        %vm876 = vmand %vm844, %vm812
        %vm877 = vmand %vm845, %vm813
        %vm878 = vmand %vm846, %vm814
        %vm879 = vmand %vm847, %vm815
        %vm880 = vmand %vm848, %vm816
        %vm881 = vmand %vm849, %vm817
        %vm882 = vmand %vm850, %vm818
        %vm883 = vmand %vm851, %vm819
        %vm884 = vmand %vm852, %vm820
        %vm885 = vmand %vm853, %vm821
        %vm886 = vmand %vm854, %vm822
        %v887 = vadd.s32 %v573, 16
        %v888 = vadd.s32 %v580, 16
        %v889 = vadd.s32 %v587, 16
        %v890 = vadd.s32 %v594, 16
        %v891 = vadd.s32 %v601, 16
        %v892 = vadd.s32 %v608, 16
        %v893 = vadd.s32 %v615, 16
        %v894 = vadd.s32 %v622, 16
        %v895 = vadd.s32 %v629, 16
        %v896 = vadd.s32 %v636, 16
        %v897 = vadd.s32 %v643, 16
        %v898 = vadd.s32 %v650, 16
        %v899 = vadd.s32 %v657, 16
        %v900 = vadd.s32 %v664, 16
        %v901 = vadd.s32 %v671, 16
        %v902 = vadd.s32 %v678, 16
        %v903 = vadd.s32 %v685, 16
        %v904 = vadd.s32 %v692, 16
        %v905 = vadd.s32 %v699, 16
        %v906 = vadd.s32 %v706, 16
        %v907 = vadd.s32 %v713, 16
        %v908 = vadd.s32 %v720, 16
        %v909 = vadd.s32 %v727, 16
        %v910 = vadd.s32 %v734, 16
        %v911 = vadd.s32 %v741, 16
        %v912 = vadd.s32 %v748, 16
        %v913 = vadd.s32 %v755, 16
        %v914 = vadd.s32 %v762, 16
        %v915 = vadd.s32 %v769, 16
        %v916 = vadd.s32 %v776, 16
        %v917 = vadd.s32 %v783, 16
        %v918 = vadd.s32 %v790, 16
        %v919 = vsel %vm855, %v887, %v573
        %v920 = vsel %vm856, %v888, %v580
        %v921 = vsel %vm857, %v889, %v587
        %v922 = vsel %vm858, %v890, %v594
        %v923 = vsel %vm859, %v891, %v601
        %v924 = vsel %vm860, %v892, %v608
        %v925 = vsel %vm861, %v893, %v615
        %v926 = vsel %vm862, %v894, %v622
        %v927 = vsel %vm863, %v895, %v629
        %v928 = vsel %vm864, %v896, %v636
        %v929 = vsel %vm865, %v897, %v643
        %v930 = vsel %vm866, %v898, %v650
        %v931 = vsel %vm867, %v899, %v657
        %v932 = vsel %vm868, %v900, %v664
        %v933 = vsel %vm869, %v901, %v671
        %v934 = vsel %vm870, %v902, %v678
        %v935 = vsel %vm871, %v903, %v685
        %v936 = vsel %vm872, %v904, %v692
        %v937 = vsel %vm873, %v905, %v699
        %v938 = vsel %vm874, %v906, %v706
        %v939 = vsel %vm875, %v907, %v713
        %v940 = vsel %vm876, %v908, %v720
        %v941 = vsel %vm877, %v909, %v727
        %v942 = vsel %vm878, %v910, %v734
        %v943 = vsel %vm879, %v911, %v741
        %v944 = vsel %vm880, %v912, %v748
        %v945 = vsel %vm881, %v913, %v755
        %v946 = vsel %vm882, %v914, %v762
        %v947 = vsel %vm883, %v915, %v769
        %v948 = vsel %vm884, %v916, %v776
        %v949 = vsel %vm885, %v917, %v783
        %v950 = vsel %vm886, %v918, %v790
        %vm951 = vcmp.eq.s32.totalorder %v919, 0
        %vm952 = vcmp.eq.s32.totalorder %v920, 0
        %vm953 = vcmp.eq.s32.totalorder %v921, 0
        %vm954 = vcmp.eq.s32.totalorder %v922, 0
        %vm955 = vcmp.eq.s32.totalorder %v923, 0
        %vm956 = vcmp.eq.s32.totalorder %v924, 0
        %vm957 = vcmp.eq.s32.totalorder %v925, 0
        %vm958 = vcmp.eq.s32.totalorder %v926, 0
        %vm959 = vcmp.eq.s32.totalorder %v927, 0
        %vm960 = vcmp.eq.s32.totalorder %v928, 0
        %vm961 = vcmp.eq.s32.totalorder %v929, 0
        %vm962 = vcmp.eq.s32.totalorder %v930, 0
        %vm963 = vcmp.eq.s32.totalorder %v931, 0
        %vm964 = vcmp.eq.s32.totalorder %v932, 0
        %vm965 = vcmp.eq.s32.totalorder %v933, 0
        %vm966 = vcmp.eq.s32.totalorder %v934, 0
        %vm967 = vcmp.eq.s32.totalorder %v935, 0
        %vm968 = vcmp.eq.s32.totalorder %v936, 0
        %vm969 = vcmp.eq.s32.totalorder %v937, 0
        %vm970 = vcmp.eq.s32.totalorder %v938, 0
        %vm971 = vcmp.eq.s32.totalorder %v939, 0
        %vm972 = vcmp.eq.s32.totalorder %v940, 0
        %vm973 = vcmp.eq.s32.totalorder %v941, 0
        %vm974 = vcmp.eq.s32.totalorder %v942, 0
        %vm975 = vcmp.eq.s32.totalorder %v943, 0
        %vm976 = vcmp.eq.s32.totalorder %v944, 0
        %vm977 = vcmp.eq.s32.totalorder %v945, 0
        %vm978 = vcmp.eq.s32.totalorder %v946, 0
        %vm979 = vcmp.eq.s32.totalorder %v947, 0
        %vm980 = vcmp.eq.s32.totalorder %v948, 0
        %vm981 = vcmp.eq.s32.totalorder %v949, 0
        %vm982 = vcmp.eq.s32.totalorder %v950, 0
        %vm983 = vcmp.eq.s32.totalorder %v919, 15
        %vm984 = vcmp.eq.s32.totalorder %v920, 15
        %vm985 = vcmp.eq.s32.totalorder %v921, 15
        %vm986 = vcmp.eq.s32.totalorder %v922, 15
        %vm987 = vcmp.eq.s32.totalorder %v923, 15
        %vm988 = vcmp.eq.s32.totalorder %v924, 15
        %vm989 = vcmp.eq.s32.totalorder %v925, 15
        %vm990 = vcmp.eq.s32.totalorder %v926, 15
        %vm991 = vcmp.eq.s32.totalorder %v927, 15
        %vm992 = vcmp.eq.s32.totalorder %v928, 15
        %vm993 = vcmp.eq.s32.totalorder %v929, 15
        %vm994 = vcmp.eq.s32.totalorder %v930, 15
        %vm995 = vcmp.eq.s32.totalorder %v931, 15
        %vm996 = vcmp.eq.s32.totalorder %v932, 15
        %vm997 = vcmp.eq.s32.totalorder %v933, 15
        %vm998 = vcmp.eq.s32.totalorder %v934, 15
        %vm999 = vcmp.eq.s32.totalorder %v935, 15
        %vm1000 = vcmp.eq.s32.totalorder %v936, 15
        %vm1001 = vcmp.eq.s32.totalorder %v937, 15
        %vm1002 = vcmp.eq.s32.totalorder %v938, 15
        %vm1003 = vcmp.eq.s32.totalorder %v939, 15
        %vm1004 = vcmp.eq.s32.totalorder %v940, 15
        %vm1005 = vcmp.eq.s32.totalorder %v941, 15
        %vm1006 = vcmp.eq.s32.totalorder %v942, 15
        %vm1007 = vcmp.eq.s32.totalorder %v943, 15
        %vm1008 = vcmp.eq.s32.totalorder %v944, 15
        %vm1009 = vcmp.eq.s32.totalorder %v945, 15
        %vm1010 = vcmp.eq.s32.totalorder %v946, 15
        %vm1011 = vcmp.eq.s32.totalorder %v947, 15
        %vm1012 = vcmp.eq.s32.totalorder %v948, 15
        %vm1013 = vcmp.eq.s32.totalorder %v949, 15
        %vm1014 = vcmp.eq.s32.totalorder %v950, 15
        %v1015 = vld [vmem:[%s3] sm:$0x1]
        %v1016 = vld [vmem:[%s4] sm:$0x1]
        %v1017 = vld [vmem:[%s0] sm:$0xff]
        %v1018 = vld [vmem:[%s0 + $0x8] sm:$0xff]
        %v1019 = vld [vmem:[%s0 + $0x10] sm:$0xff]
        %v1020 = vld [vmem:[%s0 + $0x18] sm:$0xff]
        %v1021 = vld [vmem:[%s0 + $0x20] sm:$0xff]
        %v1022 = vld [vmem:[%s0 + $0x28] sm:$0xff]
        %v1023 = vld [vmem:[%s0 + $0x30] sm:$0xff]
        %v1024 = vld [vmem:[%s0 + $0x38] sm:$0xff]
        %vm1025 = vcmask 523264
        %v1026 = vsel %vm1025, %v502, 0.0
        %v1027 = vsel %vm1025, %v503, 0.0
        %v1028 = vadd.f32 %v1026, %v1027
        %v1029 = vsel %vm1025, %v504, 0.0
        %v1030 = vadd.f32 %v1028, %v1029
        %v1031 = vsel %vm1025, %v505, 0.0
        %v1032 = vadd.f32 %v1030, %v1031
        %v1033 = vsel %vm1025, %v506, 0.0
        %v1034 = vadd.f32 %v1032, %v1033
        %v1035 = vsel %vm1025, %v507, 0.0
        %v1036 = vadd.f32 %v1034, %v1035
        %v1037 = vsel %vm1025, %v508, 0.0
        %v1038 = vadd.f32 %v1036, %v1037
        %v1039 = vsel %vm1025, %v509, 0.0
        %v1040 = vadd.f32 %v1038, %v1039
        %v1041 = vsel %vm1025, %v510, 0.0
        %v1042 = vadd.f32 %v1040, %v1041
        %v1043 = vsel %vm1025, %v511, 0.0
        %v1044 = vadd.f32 %v1042, %v1043
        %v1045 = vsel %vm1025, %v512, 0.0
        %v1046 = vadd.f32 %v1044, %v1045
        %v1047 = vsel %vm1025, %v513, 0.0
        %v1048 = vadd.f32 %v1046, %v1047
        %v1049 = vsel %vm1025, %v514, 0.0
        %v1050 = vadd.f32 %v1048, %v1049
        %v1051 = vsel %vm1025, %v515, 0.0
        %v1052 = vadd.f32 %v1050, %v1051
        %v1053 = vsel %vm1025, %v516, 0.0
        %v1054 = vadd.f32 %v1052, %v1053
        %v1055 = vsel %vm1025, %v517, 0.0
        %v1056 = vadd.f32 %v1054, %v1055
        %v1057 = vsel %vm1025, %v518, 0.0
        %v1058 = vadd.f32 %v1056, %v1057
        %v1059 = vsel %vm1025, %v519, 0.0
        %v1060 = vadd.f32 %v1058, %v1059
        %v1061 = vsel %vm1025, %v520, 0.0
        %v1062 = vadd.f32 %v1060, %v1061
        %v1063 = vsel %vm1025, %v521, 0.0
        %v1064 = vadd.f32 %v1062, %v1063
        %v1065 = vsel %vm1025, %v522, 0.0
        %v1066 = vadd.f32 %v1064, %v1065
        %v1067 = vsel %vm1025, %v523, 0.0
        %v1068 = vadd.f32 %v1066, %v1067
        %v1069 = vsel %vm1025, %v524, 0.0
        %v1070 = vadd.f32 %v1068, %v1069
        %v1071 = vsel %vm1025, %v525, 0.0
        %v1072 = vadd.f32 %v1070, %v1071
        %v1073 = vsel %vm1025, %v526, 0.0
        %v1074 = vadd.f32 %v1072, %v1073
        %v1075 = vsel %vm1025, %v527, 0.0
        %v1076 = vadd.f32 %v1074, %v1075
        %v1077 = vsel %vm1025, %v528, 0.0
        %v1078 = vadd.f32 %v1076, %v1077
        %v1079 = vsel %vm1025, %v529, 0.0
        %v1080 = vadd.f32 %v1078, %v1079
        %v1081 = vsel %vm1025, %v530, 0.0
        %v1082 = vadd.f32 %v1080, %v1081
        %v1083 = vsel %vm1025, %v531, 0.0
        %v1084 = vadd.f32 %v1082, %v1083
        %v1085 = vsel %vm1025, %v532, 0.0
        %v1086 = vadd.f32 %v1084, %v1085
        %v1087 = vsel %vm1025, %v533, 0.0
        %v1088 = vadd.f32 %v1086, %v1087
        %v1089 = vrot.slane %v1088, 4
        %v1090 = vadd.f32 %v1088, %v1089
        %v1091 = vrot.slane %v1090, 2
        %v1092 = vadd.f32 %v1090, %v1091
        %v1093 = vrot.slane %v1092, 1
        %v1094 = vadd.f32 %v1092, %v1093
        %v1095 = vmul.f32 %v502, %v502
        %v1096 = vmul.f32 %v503, %v503
        %v1097 = vmul.f32 %v504, %v504
        %v1098 = vmul.f32 %v505, %v505
        %v1099 = vmul.f32 %v506, %v506
        %v1100 = vmul.f32 %v507, %v507
        %v1101 = vmul.f32 %v508, %v508
        %v1102 = vmul.f32 %v509, %v509
        %v1103 = vmul.f32 %v510, %v510
        %v1104 = vmul.f32 %v511, %v511
        %v1105 = vmul.f32 %v512, %v512
        %v1106 = vmul.f32 %v513, %v513
        %v1107 = vmul.f32 %v514, %v514
        %v1108 = vmul.f32 %v515, %v515
        %v1109 = vmul.f32 %v516, %v516
        %v1110 = vmul.f32 %v517, %v517
        %v1111 = vmul.f32 %v518, %v518
        %v1112 = vmul.f32 %v519, %v519
        %v1113 = vmul.f32 %v520, %v520
        %v1114 = vmul.f32 %v521, %v521
        %v1115 = vmul.f32 %v522, %v522
        %v1116 = vmul.f32 %v523, %v523
        %v1117 = vmul.f32 %v524, %v524
        %v1118 = vmul.f32 %v525, %v525
        %v1119 = vmul.f32 %v526, %v526
        %v1120 = vmul.f32 %v527, %v527
        %v1121 = vmul.f32 %v528, %v528
        %v1122 = vmul.f32 %v529, %v529
        %v1123 = vmul.f32 %v530, %v530
        %v1124 = vmul.f32 %v531, %v531
        %v1125 = vmul.f32 %v532, %v532
        %v1126 = vmul.f32 %v533, %v533
        %v1127 = vsel %vm1025, %v1095, 0.0
        %v1128 = vsel %vm1025, %v1096, 0.0
        %v1129 = vadd.f32 %v1127, %v1128
        %v1130 = vsel %vm1025, %v1097, 0.0
        %v1131 = vadd.f32 %v1129, %v1130
        %v1132 = vsel %vm1025, %v1098, 0.0
        %v1133 = vadd.f32 %v1131, %v1132
        %v1134 = vsel %vm1025, %v1099, 0.0
        %v1135 = vadd.f32 %v1133, %v1134
        %v1136 = vsel %vm1025, %v1100, 0.0
        %v1137 = vadd.f32 %v1135, %v1136
        %v1138 = vsel %vm1025, %v1101, 0.0
        %v1139 = vadd.f32 %v1137, %v1138
        %v1140 = vsel %vm1025, %v1102, 0.0
        %v1141 = vadd.f32 %v1139, %v1140
        %v1142 = vsel %vm1025, %v1103, 0.0
        %v1143 = vadd.f32 %v1141, %v1142
        %v1144 = vsel %vm1025, %v1104, 0.0
        %v1145 = vadd.f32 %v1143, %v1144
        %v1146 = vsel %vm1025, %v1105, 0.0
        %v1147 = vadd.f32 %v1145, %v1146
        %v1148 = vsel %vm1025, %v1106, 0.0
        %v1149 = vadd.f32 %v1147, %v1148
        %v1150 = vsel %vm1025, %v1107, 0.0
        %v1151 = vadd.f32 %v1149, %v1150
        %v1152 = vsel %vm1025, %v1108, 0.0
        %v1153 = vadd.f32 %v1151, %v1152
        %v1154 = vsel %vm1025, %v1109, 0.0
        %v1155 = vadd.f32 %v1153, %v1154
        %v1156 = vsel %vm1025, %v1110, 0.0
        %v1157 = vadd.f32 %v1155, %v1156
        %v1158 = vsel %vm1025, %v1111, 0.0
        %v1159 = vadd.f32 %v1157, %v1158
        %v1160 = vsel %vm1025, %v1112, 0.0
        %v1161 = vadd.f32 %v1159, %v1160
        %v1162 = vsel %vm1025, %v1113, 0.0
        %v1163 = vadd.f32 %v1161, %v1162
        %v1164 = vsel %vm1025, %v1114, 0.0
        %v1165 = vadd.f32 %v1163, %v1164
        %v1166 = vsel %vm1025, %v1115, 0.0
        %v1167 = vadd.f32 %v1165, %v1166
        %v1168 = vsel %vm1025, %v1116, 0.0
        %v1169 = vadd.f32 %v1167, %v1168
        %v1170 = vsel %vm1025, %v1117, 0.0
        %v1171 = vadd.f32 %v1169, %v1170
        %v1172 = vsel %vm1025, %v1118, 0.0
        %v1173 = vadd.f32 %v1171, %v1172
        %v1174 = vsel %vm1025, %v1119, 0.0
        %v1175 = vadd.f32 %v1173, %v1174
        %v1176 = vsel %vm1025, %v1120, 0.0
        %v1177 = vadd.f32 %v1175, %v1176
        %v1178 = vsel %vm1025, %v1121, 0.0
        %v1179 = vadd.f32 %v1177, %v1178
        %v1180 = vsel %vm1025, %v1122, 0.0
        %v1181 = vadd.f32 %v1179, %v1180
        %v1182 = vsel %vm1025, %v1123, 0.0
        %v1183 = vadd.f32 %v1181, %v1182
        %v1184 = vsel %vm1025, %v1124, 0.0
        %v1185 = vadd.f32 %v1183, %v1184
        %v1186 = vsel %vm1025, %v1125, 0.0
        %v1187 = vadd.f32 %v1185, %v1186
        %v1188 = vsel %vm1025, %v1126, 0.0
        %v1189 = vadd.f32 %v1187, %v1188
        %v1190 = vrot.slane %v1189, 4
        %v1191 = vadd.f32 %v1189, %v1190
        %v1192 = vrot.slane %v1191, 2
        %v1193 = vadd.f32 %v1191, %v1192
        %v1194 = vrot.slane %v1193, 1
        %v1195 = vadd.f32 %v1193, %v1194
        %v1197 = vsel %vm1025, %v1094, 0
        %1199 = vmatprep.subr.mxu0 0.0
        %1200 = vmatpush1.msra.mxu0 0.0
        %1201 = vmatprep.subr.mxu0 0.0
        %1202 = vmatpush1.msra.mxu0 0.0
        %1203 = vmatprep.subr.mxu0 0.0
        %1204 = vmatpush1.msra.mxu0 0.0
        %1205 = vmatprep.subr.mxu0 0.0
        %1206 = vmatpush1.msra.mxu0 0.0
        %1207 = vmatprep.subr.mxu0 0.0
        %1208 = vmatpush1.msra.mxu0 0.0
        %1209 = vmatprep.subr.mxu0 0.0
        %1210 = vmatpush1.msra.mxu0 0.0
        %1211 = vmatprep.subr.mxu0 0.0
        %1212 = vmatpush1.msra.mxu0 0.0
        %1213 = vmatprep.subr.mxu0 0.0
        %1214 = vmatpush1.msra.mxu0 0.0
        %1215 = vmatprep.subr.mxu0 0.0
        %1216 = vmatpush1.msra.mxu0 %v1024
        %1217 = vmatprep.subr.mxu0 0.0
        %1218 = vmatpush1.msra.mxu0 %v1023
        %1219 = vmatprep.subr.mxu0 0.0
        %1220 = vmatpush1.msra.mxu0 %v1022
        %1221 = vmatprep.subr.mxu0 0.0
        %1222 = vmatpush1.msra.mxu0 %v1021
        %1223 = vmatprep.subr.mxu0 0.0
        %1224 = vmatpush1.msra.mxu0 %v1020
        %1225 = vmatprep.subr.mxu0 0.0
        %1226 = vmatpush1.msra.mxu0 %v1019
        %1227 = vmatprep.subr.mxu0 0.0
        %1228 = vmatpush1.msra.mxu0 %v1018
        %1229 = vmatprep.subr.mxu0 0.0
        %1230 = vmatpush1.msra.mxu0 %v1017
        %1231 = vmatprep.subr.mxu0 0.0
        %1232 = vmatpush2.msra.mxu0 0.0
        %1233 = vmatprep.subr.mxu0 0.0
        %1234 = vmatpush2.msra.mxu0 0.0
        %1235 = vmatprep.subr.mxu0 0.0
        %1236 = vmatpush2.msra.mxu0 0.0
        %1237 = vmatprep.subr.mxu0 0.0
        %1238 = vmatpush2.msra.mxu0 0.0
        %1239 = vmatprep.subr.mxu0 0.0
        %1240 = vmatpush2.msra.mxu0 0.0
        %1241 = vmatprep.subr.mxu0 0.0
        %1242 = vmatpush2.msra.mxu0 0.0
        %1243 = vmatprep.subr.mxu0 0.0
        %1244 = vmatpush2.msra.mxu0 0.0
        %1245 = vmatprep.subr.mxu0 0.0
        %1246 = vmatpush2.msra.mxu0 0.0
        %1247 = vmatprep.subr.mxu0 0.0
        %1248 = vmatpush2.msra.mxu0 0.0
        %1249 = vmatprep.subr.mxu0 0.0
        %1250 = vmatpush2.msra.mxu0 0.0
        %1251 = vmatprep.subr.mxu0 0.0
        %1252 = vmatpush2.msra.mxu0 0.0
        %1253 = vmatprep.subr.mxu0 0.0
        %1254 = vmatpush2.msra.mxu0 0.0
        %1255 = vmatprep.subr.mxu0 0.0
        %1256 = vmatpush2.msra.mxu0 0.0
        %1257 = vmatprep.subr.mxu0 0.0
        %1258 = vmatpush2.msra.mxu0 0.0
        %1259 = vmatprep.subr.mxu0 0.0
        %1260 = vmatpush2.msra.mxu0 0.0
        %1261 = vmatprep.subr.mxu0 0.0
        %1262 = vmatpush2.msra.mxu0 0.0
        %1263 = vmatprep.mubr.f32.mxu0 0.0
        %1264 = vmatmul.mubr.f32.gmra.mxu0 %v1197
        %v1265 = vpop.f32.mrf.mxu0
        %v1266 = vadd.f32 0.0, %v1265
        %v1267 = vpop.f32.mrf.mxu0
        %1268 = vdwg.mxu0
        %v1270 = vsel %vm1025, %v1195, 0
        %1272 = vmatprep.subr.mxu0 0.0
        %1273 = vmatpush1.msra.mxu0 0.0
        %1274 = vmatprep.subr.mxu0 0.0
        %1275 = vmatpush1.msra.mxu0 0.0
        %1276 = vmatprep.subr.mxu0 0.0
        %1277 = vmatpush1.msra.mxu0 0.0
        %1278 = vmatprep.subr.mxu0 0.0
        %1279 = vmatpush1.msra.mxu0 0.0
        %1280 = vmatprep.subr.mxu0 0.0
        %1281 = vmatpush1.msra.mxu0 0.0
        %1282 = vmatprep.subr.mxu0 0.0
        %1283 = vmatpush1.msra.mxu0 0.0
        %1284 = vmatprep.subr.mxu0 0.0
        %1285 = vmatpush1.msra.mxu0 0.0
        %1286 = vmatprep.subr.mxu0 0.0
        %1287 = vmatpush1.msra.mxu0 0.0
        %1288 = vmatprep.subr.mxu0 0.0
        %1289 = vmatpush1.msra.mxu0 %v1024
        %1290 = vmatprep.subr.mxu0 0.0
        %1291 = vmatpush1.msra.mxu0 %v1023
        %1292 = vmatprep.subr.mxu0 0.0
        %1293 = vmatpush1.msra.mxu0 %v1022
        %1294 = vmatprep.subr.mxu0 0.0
        %1295 = vmatpush1.msra.mxu0 %v1021
        %1296 = vmatprep.subr.mxu0 0.0
        %1297 = vmatpush1.msra.mxu0 %v1020
        %1298 = vmatprep.subr.mxu0 0.0
        %1299 = vmatpush1.msra.mxu0 %v1019
        %1300 = vmatprep.subr.mxu0 0.0
        %1301 = vmatpush1.msra.mxu0 %v1018
        %1302 = vmatprep.subr.mxu0 0.0
        %1303 = vmatpush1.msra.mxu0 %v1017
        %1304 = vmatprep.subr.mxu0 0.0
        %1305 = vmatpush2.msra.mxu0 0.0
        %1306 = vmatprep.subr.mxu0 0.0
        %1307 = vmatpush2.msra.mxu0 0.0
        %1308 = vmatprep.subr.mxu0 0.0
        %1309 = vmatpush2.msra.mxu0 0.0
        %1310 = vmatprep.subr.mxu0 0.0
        %1311 = vmatpush2.msra.mxu0 0.0
        %1312 = vmatprep.subr.mxu0 0.0
        %1313 = vmatpush2.msra.mxu0 0.0
        %1314 = vmatprep.subr.mxu0 0.0
        %1315 = vmatpush2.msra.mxu0 0.0
        %1316 = vmatprep.subr.mxu0 0.0
        %1317 = vmatpush2.msra.mxu0 0.0
        %1318 = vmatprep.subr.mxu0 0.0
        %1319 = vmatpush2.msra.mxu0 0.0
        %1320 = vmatprep.subr.mxu0 0.0
        %1321 = vmatpush2.msra.mxu0 0.0
        %1322 = vmatprep.subr.mxu0 0.0
        %1323 = vmatpush2.msra.mxu0 0.0
        %1324 = vmatprep.subr.mxu0 0.0
        %1325 = vmatpush2.msra.mxu0 0.0
        %1326 = vmatprep.subr.mxu0 0.0
        %1327 = vmatpush2.msra.mxu0 0.0
        %1328 = vmatprep.subr.mxu0 0.0
        %1329 = vmatpush2.msra.mxu0 0.0
        %1330 = vmatprep.subr.mxu0 0.0
        %1331 = vmatpush2.msra.mxu0 0.0
        %1332 = vmatprep.subr.mxu0 0.0
        %1333 = vmatpush2.msra.mxu0 0.0
        %1334 = vmatprep.subr.mxu0 0.0
        %1335 = vmatpush2.msra.mxu0 0.0
        %1336 = vmatprep.mubr.f32.mxu0 0.0
        %1337 = vmatmul.mubr.f32.gmra.mxu0 %v1270
        %v1338 = vpop.f32.mrf.mxu0
        %v1339 = vadd.f32 0.0, %v1338
        %v1340 = vpop.f32.mrf.mxu0
        %1341 = vdwg.mxu0
        %v1342 = vmul.f32 %v1266, %v1266
        %v1343 = vsub.f32 %v1339, %v1342
        %v1344 = vmax.f32 %v1343, 0.0
        %v1345 = vadd.f32 %v1344, 1e-05
        %v1346 = vrsqrt.pop %v1345
        %v1347 = vlaneseq
        %v1348 = vshrl.u32 %v1347, 7
        %v1349 = vsub.s32 0, %v1348
        %v1350 = vrot.slane %v1266, %v1349
        %v1351 = vsub.f32 %v502, %v1350
        %v1352 = vsub.f32 %v503, %v1350
        %v1353 = vsub.f32 %v504, %v1350
        %v1354 = vsub.f32 %v505, %v1350
        %v1355 = vsub.f32 %v506, %v1350
        %v1356 = vsub.f32 %v507, %v1350
        %v1357 = vsub.f32 %v508, %v1350
        %v1358 = vsub.f32 %v509, %v1350
        %v1359 = vsub.f32 %v510, %v1350
        %v1360 = vsub.f32 %v511, %v1350
        %v1361 = vsub.f32 %v512, %v1350
        %v1362 = vsub.f32 %v513, %v1350
        %v1363 = vsub.f32 %v514, %v1350
        %v1364 = vsub.f32 %v515, %v1350
        %v1365 = vsub.f32 %v516, %v1350
        %v1366 = vsub.f32 %v517, %v1350
        %v1367 = vsub.f32 %v518, %v1350
        %v1368 = vsub.f32 %v519, %v1350
        %v1369 = vsub.f32 %v520, %v1350
        %v1370 = vsub.f32 %v521, %v1350
        %v1371 = vsub.f32 %v522, %v1350
        %v1372 = vsub.f32 %v523, %v1350
        %v1373 = vsub.f32 %v524, %v1350
        %v1374 = vsub.f32 %v525, %v1350
        %v1375 = vsub.f32 %v526, %v1350
        %v1376 = vsub.f32 %v527, %v1350
        %v1377 = vsub.f32 %v528, %v1350
        %v1378 = vsub.f32 %v529, %v1350
        %v1379 = vsub.f32 %v530, %v1350
        %v1380 = vsub.f32 %v531, %v1350
        %v1381 = vsub.f32 %v532, %v1350
        %v1382 = vsub.f32 %v533, %v1350
        %v1383 = vmul.f32 %v1346, %v1015
        %v1384 = vlaneseq
        %v1385 = vshrl.u32 %v1384, 7
        %v1386 = vsub.s32 0, %v1385
        %v1387 = vrot.slane %v1383, %v1386
        %v1388 = vmul.f32 %v1351, %v1387
        %v1389 = vmul.f32 %v1352, %v1387
        %v1390 = vmul.f32 %v1353, %v1387
        %v1391 = vmul.f32 %v1354, %v1387
        %v1392 = vmul.f32 %v1355, %v1387
        %v1393 = vmul.f32 %v1356, %v1387
        %v1394 = vmul.f32 %v1357, %v1387
        %v1395 = vmul.f32 %v1358, %v1387
        %v1396 = vmul.f32 %v1359, %v1387
        %v1397 = vmul.f32 %v1360, %v1387
        %v1398 = vmul.f32 %v1361, %v1387
        %v1399 = vmul.f32 %v1362, %v1387
        %v1400 = vmul.f32 %v1363, %v1387
        %v1401 = vmul.f32 %v1364, %v1387
        %v1402 = vmul.f32 %v1365, %v1387
        %v1403 = vmul.f32 %v1366, %v1387
        %v1404 = vmul.f32 %v1367, %v1387
        %v1405 = vmul.f32 %v1368, %v1387
        %v1406 = vmul.f32 %v1369, %v1387
        %v1407 = vmul.f32 %v1370, %v1387
        %v1408 = vmul.f32 %v1371, %v1387
        %v1409 = vmul.f32 %v1372, %v1387
        %v1410 = vmul.f32 %v1373, %v1387
        %v1411 = vmul.f32 %v1374, %v1387
        %v1412 = vmul.f32 %v1375, %v1387
        %v1413 = vmul.f32 %v1376, %v1387
        %v1414 = vmul.f32 %v1377, %v1387
        %v1415 = vmul.f32 %v1378, %v1387
        %v1416 = vmul.f32 %v1379, %v1387
        %v1417 = vmul.f32 %v1380, %v1387
        %v1418 = vmul.f32 %v1381, %v1387
        %v1419 = vmul.f32 %v1382, %v1387
        %v1421 = vlaneseq
        %v1422 = vshrl.u32 %v1421, 7
        %v1423 = vsub.s32 0, %v1422
        %v1424 = vrot.slane %v1016, %v1423
        %v1426 = vadd.f32 %v1388, %v1424
        %v1427 = vadd.f32 %v1389, %v1424
        %v1428 = vadd.f32 %v1390, %v1424
        %v1429 = vadd.f32 %v1391, %v1424
        %v1430 = vadd.f32 %v1392, %v1424
        %v1431 = vadd.f32 %v1393, %v1424
        %v1432 = vadd.f32 %v1394, %v1424
        %v1433 = vadd.f32 %v1395, %v1424
        %v1434 = vadd.f32 %v1396, %v1424
        %v1435 = vadd.f32 %v1397, %v1424
        %v1436 = vadd.f32 %v1398, %v1424
        %v1437 = vadd.f32 %v1399, %v1424
        %v1438 = vadd.f32 %v1400, %v1424
        %v1439 = vadd.f32 %v1401, %v1424
        %v1440 = vadd.f32 %v1402, %v1424
        %v1441 = vadd.f32 %v1403, %v1424
        %v1442 = vadd.f32 %v1404, %v1424
        %v1443 = vadd.f32 %v1405, %v1424
        %v1444 = vadd.f32 %v1406, %v1424
        %v1445 = vadd.f32 %v1407, %v1424
        %v1446 = vadd.f32 %v1408, %v1424
        %v1447 = vadd.f32 %v1409, %v1424
        %v1448 = vadd.f32 %v1410, %v1424
        %v1449 = vadd.f32 %v1411, %v1424
        %v1450 = vadd.f32 %v1412, %v1424
        %v1451 = vadd.f32 %v1413, %v1424
        %v1452 = vadd.f32 %v1414, %v1424
        %v1453 = vadd.f32 %v1415, %v1424
        %v1454 = vadd.f32 %v1416, %v1424
        %v1455 = vadd.f32 %v1417, %v1424
        %v1456 = vadd.f32 %v1418, %v1424
        %v1457 = vadd.f32 %v1419, %v1424
        %v1458 = vmul.f32 %v1426, 0.5
        %v1459 = vmul.f32 %v1427, 0.5
        %v1460 = vmul.f32 %v1428, 0.5
        %v1461 = vmul.f32 %v1429, 0.5
        %v1462 = vmul.f32 %v1430, 0.5
        %v1463 = vmul.f32 %v1431, 0.5
        %v1464 = vmul.f32 %v1432, 0.5
        %v1465 = vmul.f32 %v1433, 0.5
        %v1466 = vmul.f32 %v1434, 0.5
        %v1467 = vmul.f32 %v1435, 0.5
        %v1468 = vmul.f32 %v1436, 0.5
        %v1469 = vmul.f32 %v1437, 0.5
        %v1470 = vmul.f32 %v1438, 0.5
        %v1471 = vmul.f32 %v1439, 0.5
        %v1472 = vmul.f32 %v1440, 0.5
        %v1473 = vmul.f32 %v1441, 0.5
        %v1474 = vmul.f32 %v1442, 0.5
        %v1475 = vmul.f32 %v1443, 0.5
        %v1476 = vmul.f32 %v1444, 0.5
        %v1477 = vmul.f32 %v1445, 0.5
        %v1478 = vmul.f32 %v1446, 0.5
        %v1479 = vmul.f32 %v1447, 0.5
        %v1480 = vmul.f32 %v1448, 0.5
        %v1481 = vmul.f32 %v1449, 0.5
        %v1482 = vmul.f32 %v1450, 0.5
        %v1483 = vmul.f32 %v1451, 0.5
        %v1484 = vmul.f32 %v1452, 0.5
        %v1485 = vmul.f32 %v1453, 0.5
        %v1486 = vmul.f32 %v1454, 0.5
        %v1487 = vmul.f32 %v1455, 0.5
        %v1488 = vmul.f32 %v1456, 0.5
        %v1489 = vmul.f32 %v1457, 0.5
        %v1490 = vtanh.pop %v1458
        %v1491 = vtanh.pop %v1459
        %v1492 = vtanh.pop %v1460
        %v1493 = vtanh.pop %v1461
        %v1494 = vtanh.pop %v1462
        %v1495 = vtanh.pop %v1463
        %v1496 = vtanh.pop %v1464
        %v1497 = vtanh.pop %v1465
        %v1498 = vtanh.pop %v1466
        %v1499 = vtanh.pop %v1467
        %v1500 = vtanh.pop %v1468
        %v1501 = vtanh.pop %v1469
        %v1502 = vtanh.pop %v1470
        %v1503 = vtanh.pop %v1471
        %v1504 = vtanh.pop %v1472
        %v1505 = vtanh.pop %v1473
        %v1506 = vtanh.pop %v1474
        %v1507 = vtanh.pop %v1475
        %v1508 = vtanh.pop %v1476
        %v1509 = vtanh.pop %v1477
        %v1510 = vtanh.pop %v1478
        %v1511 = vtanh.pop %v1479
        %v1512 = vtanh.pop %v1480
        %v1513 = vtanh.pop %v1481
        %v1514 = vtanh.pop %v1482
        %v1515 = vtanh.pop %v1483
        %v1516 = vtanh.pop %v1484
        %v1517 = vtanh.pop %v1485
        %v1518 = vtanh.pop %v1486
        %v1519 = vtanh.pop %v1487
        %v1520 = vtanh.pop %v1488
        %v1521 = vtanh.pop %v1489
        %v1522 = vmul.f32 %v1490, 0.5
        %v1523 = vmul.f32 %v1491, 0.5
        %v1524 = vmul.f32 %v1492, 0.5
        %v1525 = vmul.f32 %v1493, 0.5
        %v1526 = vmul.f32 %v1494, 0.5
        %v1527 = vmul.f32 %v1495, 0.5
        %v1528 = vmul.f32 %v1496, 0.5
        %v1529 = vmul.f32 %v1497, 0.5
        %v1530 = vmul.f32 %v1498, 0.5
        %v1531 = vmul.f32 %v1499, 0.5
        %v1532 = vmul.f32 %v1500, 0.5
        %v1533 = vmul.f32 %v1501, 0.5
        %v1534 = vmul.f32 %v1502, 0.5
        %v1535 = vmul.f32 %v1503, 0.5
        %v1536 = vmul.f32 %v1504, 0.5
        %v1537 = vmul.f32 %v1505, 0.5
        %v1538 = vmul.f32 %v1506, 0.5
        %v1539 = vmul.f32 %v1507, 0.5
        %v1540 = vmul.f32 %v1508, 0.5
        %v1541 = vmul.f32 %v1509, 0.5
        %v1542 = vmul.f32 %v1510, 0.5
        %v1543 = vmul.f32 %v1511, 0.5
        %v1544 = vmul.f32 %v1512, 0.5
        %v1545 = vmul.f32 %v1513, 0.5
        %v1546 = vmul.f32 %v1514, 0.5
        %v1547 = vmul.f32 %v1515, 0.5
        %v1548 = vmul.f32 %v1516, 0.5
        %v1549 = vmul.f32 %v1517, 0.5
        %v1550 = vmul.f32 %v1518, 0.5
        %v1551 = vmul.f32 %v1519, 0.5
        %v1552 = vmul.f32 %v1520, 0.5
        %v1553 = vmul.f32 %v1521, 0.5
        %v1554 = vadd.f32 %v1522, 0.5
        %v1555 = vadd.f32 %v1523, 0.5
        %v1556 = vadd.f32 %v1524, 0.5
        %v1557 = vadd.f32 %v1525, 0.5
        %v1558 = vadd.f32 %v1526, 0.5
        %v1559 = vadd.f32 %v1527, 0.5
        %v1560 = vadd.f32 %v1528, 0.5
        %v1561 = vadd.f32 %v1529, 0.5
        %v1562 = vadd.f32 %v1530, 0.5
        %v1563 = vadd.f32 %v1531, 0.5
        %v1564 = vadd.f32 %v1532, 0.5
        %v1565 = vadd.f32 %v1533, 0.5
        %v1566 = vadd.f32 %v1534, 0.5
        %v1567 = vadd.f32 %v1535, 0.5
        %v1568 = vadd.f32 %v1536, 0.5
        %v1569 = vadd.f32 %v1537, 0.5
        %v1570 = vadd.f32 %v1538, 0.5
        %v1571 = vadd.f32 %v1539, 0.5
        %v1572 = vadd.f32 %v1540, 0.5
        %v1573 = vadd.f32 %v1541, 0.5
        %v1574 = vadd.f32 %v1542, 0.5
        %v1575 = vadd.f32 %v1543, 0.5
        %v1576 = vadd.f32 %v1544, 0.5
        %v1577 = vadd.f32 %v1545, 0.5
        %v1578 = vadd.f32 %v1546, 0.5
        %v1579 = vadd.f32 %v1547, 0.5
        %v1580 = vadd.f32 %v1548, 0.5
        %v1581 = vadd.f32 %v1549, 0.5
        %v1582 = vadd.f32 %v1550, 0.5
        %v1583 = vadd.f32 %v1551, 0.5
        %v1584 = vadd.f32 %v1552, 0.5
        %v1585 = vadd.f32 %v1553, 0.5
        %v1586 = vmul.f32 %v1426, %v1554
        %v1587 = vmul.f32 %v1427, %v1555
        %v1588 = vmul.f32 %v1428, %v1556
        %v1589 = vmul.f32 %v1429, %v1557
        %v1590 = vmul.f32 %v1430, %v1558
        %v1591 = vmul.f32 %v1431, %v1559
        %v1592 = vmul.f32 %v1432, %v1560
        %v1593 = vmul.f32 %v1433, %v1561
        %v1594 = vmul.f32 %v1434, %v1562
        %v1595 = vmul.f32 %v1435, %v1563
        %v1596 = vmul.f32 %v1436, %v1564
        %v1597 = vmul.f32 %v1437, %v1565
        %v1598 = vmul.f32 %v1438, %v1566
        %v1599 = vmul.f32 %v1439, %v1567
        %v1600 = vmul.f32 %v1440, %v1568
        %v1601 = vmul.f32 %v1441, %v1569
        %v1602 = vmul.f32 %v1442, %v1570
        %v1603 = vmul.f32 %v1443, %v1571
        %v1604 = vmul.f32 %v1444, %v1572
        %v1605 = vmul.f32 %v1445, %v1573
        %v1606 = vmul.f32 %v1446, %v1574
        %v1607 = vmul.f32 %v1447, %v1575
        %v1608 = vmul.f32 %v1448, %v1576
        %v1609 = vmul.f32 %v1449, %v1577
        %v1610 = vmul.f32 %v1450, %v1578
        %v1611 = vmul.f32 %v1451, %v1579
        %v1612 = vmul.f32 %v1452, %v1580
        %v1613 = vmul.f32 %v1453, %v1581
        %v1614 = vmul.f32 %v1454, %v1582
        %v1615 = vmul.f32 %v1455, %v1583
        %v1616 = vmul.f32 %v1456, %v1584
        %v1617 = vmul.f32 %v1457, %v1585
        %v1618 = vld [vmem:[%s6] sm:$0x1]
        %v1619 = vrot.slane %v1586, 7
        %v1620 = vrot.slane %v1587, 7
        %v1621 = vrot.slane %v1588, 7
        %v1622 = vrot.slane %v1589, 7
        %v1623 = vrot.slane %v1590, 7
        %v1624 = vrot.slane %v1591, 7
        %v1625 = vrot.slane %v1592, 7
        %v1626 = vrot.slane %v1593, 7
        %v1627 = vrot.slane %v1594, 7
        %v1628 = vrot.slane %v1595, 7
        %v1629 = vrot.slane %v1596, 7
        %v1630 = vrot.slane %v1597, 7
        %v1631 = vrot.slane %v1598, 7
        %v1632 = vrot.slane %v1599, 7
        %v1633 = vrot.slane %v1600, 7
        %v1634 = vrot.slane %v1601, 7
        %v1635 = vrot.slane %v1602, 7
        %v1636 = vrot.slane %v1603, 7
        %v1637 = vrot.slane %v1604, 7
        %v1638 = vrot.slane %v1605, 7
        %v1639 = vrot.slane %v1606, 7
        %v1640 = vrot.slane %v1607, 7
        %v1641 = vrot.slane %v1608, 7
        %v1642 = vrot.slane %v1609, 7
        %v1643 = vrot.slane %v1610, 7
        %v1644 = vrot.slane %v1611, 7
        %v1645 = vrot.slane %v1612, 7
        %v1646 = vrot.slane %v1613, 7
        %v1647 = vrot.slane %v1614, 7
        %v1648 = vrot.slane %v1615, 7
        %v1649 = vrot.slane %v1616, 7
        %v1650 = vrot.slane %v1617, 7
        %vm1651 = vcmp.lt.s32.totalorder %v535, 1
        %v1652 = vsel %vm1651, %v1649, %v1650
        %v1653 = vsel %vm1651, %v1648, %v1649
        %v1654 = vsel %vm1651, %v1647, %v1648
        %v1655 = vsel %vm1651, %v1646, %v1647
        %v1656 = vsel %vm1651, %v1645, %v1646
        %v1657 = vsel %vm1651, %v1644, %v1645
        %v1658 = vsel %vm1651, %v1643, %v1644
        %v1659 = vsel %vm1651, %v1642, %v1643
        %v1660 = vsel %vm1651, %v1641, %v1642
        %v1661 = vsel %vm1651, %v1640, %v1641
        %v1662 = vsel %vm1651, %v1639, %v1640
        %v1663 = vsel %vm1651, %v1638, %v1639
        %v1664 = vsel %vm1651, %v1637, %v1638
        %v1665 = vsel %vm1651, %v1636, %v1637
        %v1666 = vsel %vm1651, %v1635, %v1636
        %v1667 = vsel %vm1651, %v1634, %v1635
        %v1668 = vsel %vm1651, %v1633, %v1634
        %v1669 = vsel %vm1651, %v1632, %v1633
        %v1670 = vsel %vm1651, %v1631, %v1632
        %v1671 = vsel %vm1651, %v1630, %v1631
        %v1672 = vsel %vm1651, %v1629, %v1630
        %v1673 = vsel %vm1651, %v1628, %v1629
        %v1674 = vsel %vm1651, %v1627, %v1628
        %v1675 = vsel %vm1651, %v1626, %v1627
        %v1676 = vsel %vm1651, %v1625, %v1626
        %v1677 = vsel %vm1651, %v1624, %v1625
        %v1678 = vsel %vm1651, %v1623, %v1624
        %v1679 = vsel %vm1651, %v1622, %v1623
        %v1680 = vsel %vm1651, %v1621, %v1622
        %v1681 = vsel %vm1651, %v1620, %v1621
        %v1682 = vsel %vm1651, %v1619, %v1620
        %v1683 = vsel %vm1651, %v1650, %v1619
        %v1684 = vsel %vm951, 1, 0
        %v1685 = vsel %vm952, 1, 0
        %v1686 = vsel %vm953, 1, 0
        %v1687 = vsel %vm954, 1, 0
        %v1688 = vsel %vm955, 1, 0
        %v1689 = vsel %vm956, 1, 0
        %v1690 = vsel %vm957, 1, 0
        %v1691 = vsel %vm958, 1, 0
        %v1692 = vsel %vm959, 1, 0
        %v1693 = vsel %vm960, 1, 0
        %v1694 = vsel %vm961, 1, 0
        %v1695 = vsel %vm962, 1, 0
        %v1696 = vsel %vm963, 1, 0
        %v1697 = vsel %vm964, 1, 0
        %v1698 = vsel %vm965, 1, 0
        %v1699 = vsel %vm966, 1, 0
        %v1700 = vsel %vm967, 1, 0
        %v1701 = vsel %vm968, 1, 0
        %v1702 = vsel %vm969, 1, 0
        %v1703 = vsel %vm970, 1, 0
        %v1704 = vsel %vm971, 1, 0
        %v1705 = vsel %vm972, 1, 0
        %v1706 = vsel %vm973, 1, 0
        %v1707 = vsel %vm974, 1, 0
        %v1708 = vsel %vm975, 1, 0
        %v1709 = vsel %vm976, 1, 0
        %v1710 = vsel %vm977, 1, 0
        %v1711 = vsel %vm978, 1, 0
        %v1712 = vsel %vm979, 1, 0
        %v1713 = vsel %vm980, 1, 0
        %v1714 = vsel %vm981, 1, 0
        %v1715 = vsel %vm982, 1, 0
        %vm1716 = vcmp.eq.s32.totalorder %v1684, 1
        %vm1717 = vcmp.eq.s32.totalorder %v1685, 1
        %vm1718 = vcmp.eq.s32.totalorder %v1686, 1
        %vm1719 = vcmp.eq.s32.totalorder %v1687, 1
        %vm1720 = vcmp.eq.s32.totalorder %v1688, 1
        %vm1721 = vcmp.eq.s32.totalorder %v1689, 1
        %vm1722 = vcmp.eq.s32.totalorder %v1690, 1
        %vm1723 = vcmp.eq.s32.totalorder %v1691, 1
        %vm1724 = vcmp.eq.s32.totalorder %v1692, 1
        %vm1725 = vcmp.eq.s32.totalorder %v1693, 1
        %vm1726 = vcmp.eq.s32.totalorder %v1694, 1
        %vm1727 = vcmp.eq.s32.totalorder %v1695, 1
        %vm1728 = vcmp.eq.s32.totalorder %v1696, 1
        %vm1729 = vcmp.eq.s32.totalorder %v1697, 1
        %vm1730 = vcmp.eq.s32.totalorder %v1698, 1
        %vm1731 = vcmp.eq.s32.totalorder %v1699, 1
        %vm1732 = vcmp.eq.s32.totalorder %v1700, 1
        %vm1733 = vcmp.eq.s32.totalorder %v1701, 1
        %vm1734 = vcmp.eq.s32.totalorder %v1702, 1
        %vm1735 = vcmp.eq.s32.totalorder %v1703, 1
        %vm1736 = vcmp.eq.s32.totalorder %v1704, 1
        %vm1737 = vcmp.eq.s32.totalorder %v1705, 1
        %vm1738 = vcmp.eq.s32.totalorder %v1706, 1
        %vm1739 = vcmp.eq.s32.totalorder %v1707, 1
        %vm1740 = vcmp.eq.s32.totalorder %v1708, 1
        %vm1741 = vcmp.eq.s32.totalorder %v1709, 1
        %vm1742 = vcmp.eq.s32.totalorder %v1710, 1
        %vm1743 = vcmp.eq.s32.totalorder %v1711, 1
        %vm1744 = vcmp.eq.s32.totalorder %v1712, 1
        %vm1745 = vcmp.eq.s32.totalorder %v1713, 1
        %vm1746 = vcmp.eq.s32.totalorder %v1714, 1
        %vm1747 = vcmp.eq.s32.totalorder %v1715, 1
        %v1748 = vsel %vm1716, 0.0, %v1683
        %v1749 = vsel %vm1717, 0.0, %v1682
        %v1750 = vsel %vm1718, 0.0, %v1681
        %v1751 = vsel %vm1719, 0.0, %v1680
        %v1752 = vsel %vm1720, 0.0, %v1679
        %v1753 = vsel %vm1721, 0.0, %v1678
        %v1754 = vsel %vm1722, 0.0, %v1677
        %v1755 = vsel %vm1723, 0.0, %v1676
        %v1756 = vsel %vm1724, 0.0, %v1675
        %v1757 = vsel %vm1725, 0.0, %v1674
        %v1758 = vsel %vm1726, 0.0, %v1673
        %v1759 = vsel %vm1727, 0.0, %v1672
        %v1760 = vsel %vm1728, 0.0, %v1671
        %v1761 = vsel %vm1729, 0.0, %v1670
        %v1762 = vsel %vm1730, 0.0, %v1669
        %v1763 = vsel %vm1731, 0.0, %v1668
        %v1764 = vsel %vm1732, 0.0, %v1667
        %v1765 = vsel %vm1733, 0.0, %v1666
        %v1766 = vsel %vm1734, 0.0, %v1665
        %v1767 = vsel %vm1735, 0.0, %v1664
        %v1768 = vsel %vm1736, 0.0, %v1663
        %v1769 = vsel %vm1737, 0.0, %v1662
        %v1770 = vsel %vm1738, 0.0, %v1661
        %v1771 = vsel %vm1739, 0.0, %v1660
        %v1772 = vsel %vm1740, 0.0, %v1659
        %v1773 = vsel %vm1741, 0.0, %v1658
        %v1774 = vsel %vm1742, 0.0, %v1657
        %v1775 = vsel %vm1743, 0.0, %v1656
        %v1776 = vsel %vm1744, 0.0, %v1655
        %v1777 = vsel %vm1745, 0.0, %v1654
        %v1778 = vsel %vm1746, 0.0, %v1653
        %v1779 = vsel %vm1747, 0.0, %v1652
        %v1780 = vrot.slane %v1586, 1
        %v1781 = vrot.slane %v1587, 1
        %v1782 = vrot.slane %v1588, 1
        %v1783 = vrot.slane %v1589, 1
        %v1784 = vrot.slane %v1590, 1
        %v1785 = vrot.slane %v1591, 1
        %v1786 = vrot.slane %v1592, 1
        %v1787 = vrot.slane %v1593, 1
        %v1788 = vrot.slane %v1594, 1
        %v1789 = vrot.slane %v1595, 1
        %v1790 = vrot.slane %v1596, 1
        %v1791 = vrot.slane %v1597, 1
        %v1792 = vrot.slane %v1598, 1
        %v1793 = vrot.slane %v1599, 1
        %v1794 = vrot.slane %v1600, 1
        %v1795 = vrot.slane %v1601, 1
        %v1796 = vrot.slane %v1602, 1
        %v1797 = vrot.slane %v1603, 1
        %v1798 = vrot.slane %v1604, 1
        %v1799 = vrot.slane %v1605, 1
        %v1800 = vrot.slane %v1606, 1
        %v1801 = vrot.slane %v1607, 1
        %v1802 = vrot.slane %v1608, 1
        %v1803 = vrot.slane %v1609, 1
        %v1804 = vrot.slane %v1610, 1
        %v1805 = vrot.slane %v1611, 1
        %v1806 = vrot.slane %v1612, 1
        %v1807 = vrot.slane %v1613, 1
        %v1808 = vrot.slane %v1614, 1
        %v1809 = vrot.slane %v1615, 1
        %v1810 = vrot.slane %v1616, 1
        %v1811 = vrot.slane %v1617, 1
        %vm1812 = vcmp.lt.s32.totalorder %v535, 7
        %v1813 = vsel %vm1812, %v1810, %v1811
        %v1814 = vsel %vm1812, %v1809, %v1810
        %v1815 = vsel %vm1812, %v1808, %v1809
        %v1816 = vsel %vm1812, %v1807, %v1808
        %v1817 = vsel %vm1812, %v1806, %v1807
        %v1818 = vsel %vm1812, %v1805, %v1806
        %v1819 = vsel %vm1812, %v1804, %v1805
        %v1820 = vsel %vm1812, %v1803, %v1804
        %v1821 = vsel %vm1812, %v1802, %v1803
        %v1822 = vsel %vm1812, %v1801, %v1802
        %v1823 = vsel %vm1812, %v1800, %v1801
        %v1824 = vsel %vm1812, %v1799, %v1800
        %v1825 = vsel %vm1812, %v1798, %v1799
        %v1826 = vsel %vm1812, %v1797, %v1798
        %v1827 = vsel %vm1812, %v1796, %v1797
        %v1828 = vsel %vm1812, %v1795, %v1796
        %v1829 = vsel %vm1812, %v1794, %v1795
        %v1830 = vsel %vm1812, %v1793, %v1794
        %v1831 = vsel %vm1812, %v1792, %v1793
        %v1832 = vsel %vm1812, %v1791, %v1792
        %v1833 = vsel %vm1812, %v1790, %v1791
        %v1834 = vsel %vm1812, %v1789, %v1790
        %v1835 = vsel %vm1812, %v1788, %v1789
        %v1836 = vsel %vm1812, %v1787, %v1788
        %v1837 = vsel %vm1812, %v1786, %v1787
        %v1838 = vsel %vm1812, %v1785, %v1786
        %v1839 = vsel %vm1812, %v1784, %v1785
        %v1840 = vsel %vm1812, %v1783, %v1784
        %v1841 = vsel %vm1812, %v1782, %v1783
        %v1842 = vsel %vm1812, %v1781, %v1782
        %v1843 = vsel %vm1812, %v1780, %v1781
        %v1844 = vsel %vm1812, %v1811, %v1780
        %v1845 = vsel %vm983, 1, 0
        %v1846 = vsel %vm984, 1, 0
        %v1847 = vsel %vm985, 1, 0
        %v1848 = vsel %vm986, 1, 0
        %v1849 = vsel %vm987, 1, 0
        %v1850 = vsel %vm988, 1, 0
        %v1851 = vsel %vm989, 1, 0
        %v1852 = vsel %vm990, 1, 0
        %v1853 = vsel %vm991, 1, 0
        %v1854 = vsel %vm992, 1, 0
        %v1855 = vsel %vm993, 1, 0
        %v1856 = vsel %vm994, 1, 0
        %v1857 = vsel %vm995, 1, 0
        %v1858 = vsel %vm996, 1, 0
        %v1859 = vsel %vm997, 1, 0
        %v1860 = vsel %vm998, 1, 0
        %v1861 = vsel %vm999, 1, 0
        %v1862 = vsel %vm1000, 1, 0
        %v1863 = vsel %vm1001, 1, 0
        %v1864 = vsel %vm1002, 1, 0
        %v1865 = vsel %vm1003, 1, 0
        %v1866 = vsel %vm1004, 1, 0
        %v1867 = vsel %vm1005, 1, 0
        %v1868 = vsel %vm1006, 1, 0
        %v1869 = vsel %vm1007, 1, 0
        %v1870 = vsel %vm1008, 1, 0
        %v1871 = vsel %vm1009, 1, 0
        %v1872 = vsel %vm1010, 1, 0
        %v1873 = vsel %vm1011, 1, 0
        %v1874 = vsel %vm1012, 1, 0
        %v1875 = vsel %vm1013, 1, 0
        %v1876 = vsel %vm1014, 1, 0
        %vm1877 = vcmp.eq.s32.totalorder %v1845, 1
        %vm1878 = vcmp.eq.s32.totalorder %v1846, 1
        %vm1879 = vcmp.eq.s32.totalorder %v1847, 1
        %vm1880 = vcmp.eq.s32.totalorder %v1848, 1
        %vm1881 = vcmp.eq.s32.totalorder %v1849, 1
        %vm1882 = vcmp.eq.s32.totalorder %v1850, 1
        %vm1883 = vcmp.eq.s32.totalorder %v1851, 1
        %vm1884 = vcmp.eq.s32.totalorder %v1852, 1
        %vm1885 = vcmp.eq.s32.totalorder %v1853, 1
        %vm1886 = vcmp.eq.s32.totalorder %v1854, 1
        %vm1887 = vcmp.eq.s32.totalorder %v1855, 1
        %vm1888 = vcmp.eq.s32.totalorder %v1856, 1
        %vm1889 = vcmp.eq.s32.totalorder %v1857, 1
        %vm1890 = vcmp.eq.s32.totalorder %v1858, 1
        %vm1891 = vcmp.eq.s32.totalorder %v1859, 1
        %vm1892 = vcmp.eq.s32.totalorder %v1860, 1
        %vm1893 = vcmp.eq.s32.totalorder %v1861, 1
        %vm1894 = vcmp.eq.s32.totalorder %v1862, 1
        %vm1895 = vcmp.eq.s32.totalorder %v1863, 1
        %vm1896 = vcmp.eq.s32.totalorder %v1864, 1
        %vm1897 = vcmp.eq.s32.totalorder %v1865, 1
        %vm1898 = vcmp.eq.s32.totalorder %v1866, 1
        %vm1899 = vcmp.eq.s32.totalorder %v1867, 1
        %vm1900 = vcmp.eq.s32.totalorder %v1868, 1
        %vm1901 = vcmp.eq.s32.totalorder %v1869, 1
        %vm1902 = vcmp.eq.s32.totalorder %v1870, 1
        %vm1903 = vcmp.eq.s32.totalorder %v1871, 1
        %vm1904 = vcmp.eq.s32.totalorder %v1872, 1
        %vm1905 = vcmp.eq.s32.totalorder %v1873, 1
        %vm1906 = vcmp.eq.s32.totalorder %v1874, 1
        %vm1907 = vcmp.eq.s32.totalorder %v1875, 1
        %vm1908 = vcmp.eq.s32.totalorder %v1876, 1
        %v1909 = vsel %vm1877, 0.0, %v1843
        %v1910 = vsel %vm1878, 0.0, %v1842
        %v1911 = vsel %vm1879, 0.0, %v1841
        %v1912 = vsel %vm1880, 0.0, %v1840
        %v1913 = vsel %vm1881, 0.0, %v1839
        %v1914 = vsel %vm1882, 0.0, %v1838
        %v1915 = vsel %vm1883, 0.0, %v1837
        %v1916 = vsel %vm1884, 0.0, %v1836
        %v1917 = vsel %vm1885, 0.0, %v1835
        %v1918 = vsel %vm1886, 0.0, %v1834
        %v1919 = vsel %vm1887, 0.0, %v1833
        %v1920 = vsel %vm1888, 0.0, %v1832
        %v1921 = vsel %vm1889, 0.0, %v1831
        %v1922 = vsel %vm1890, 0.0, %v1830
        %v1923 = vsel %vm1891, 0.0, %v1829
        %v1924 = vsel %vm1892, 0.0, %v1828
        %v1925 = vsel %vm1893, 0.0, %v1827
        %v1926 = vsel %vm1894, 0.0, %v1826
        %v1927 = vsel %vm1895, 0.0, %v1825
        %v1928 = vsel %vm1896, 0.0, %v1824
        %v1929 = vsel %vm1897, 0.0, %v1823
        %v1930 = vsel %vm1898, 0.0, %v1822
        %v1931 = vsel %vm1899, 0.0, %v1821
        %v1932 = vsel %vm1900, 0.0, %v1820
        %v1933 = vsel %vm1901, 0.0, %v1819
        %v1934 = vsel %vm1902, 0.0, %v1818
        %v1935 = vsel %vm1903, 0.0, %v1817
        %v1936 = vsel %vm1904, 0.0, %v1816
        %v1937 = vsel %vm1905, 0.0, %v1815
        %v1938 = vsel %vm1906, 0.0, %v1814
        %v1939 = vsel %vm1907, 0.0, %v1813
        %v1940 = vsel %vm1908, 0.0, %v1844
        %v1941 = vpack.c.bf16 %v1749, %v1748
        %v1942 = vpack.c.bf16 %v1751, %v1750
        %v1943 = vpack.c.bf16 %v1753, %v1752
        %v1944 = vpack.c.bf16 %v1755, %v1754
        %v1945 = vpack.c.bf16 %v1757, %v1756
        %v1946 = vpack.c.bf16 %v1759, %v1758
        %v1947 = vpack.c.bf16 %v1761, %v1760
        %v1948 = vpack.c.bf16 %v1763, %v1762
        %v1949 = vpack.c.bf16 %v1765, %v1764
        %v1950 = vpack.c.bf16 %v1767, %v1766
        %v1951 = vpack.c.bf16 %v1769, %v1768
        %v1952 = vpack.c.bf16 %v1771, %v1770
        %v1953 = vpack.c.bf16 %v1773, %v1772
        %v1954 = vpack.c.bf16 %v1775, %v1774
        %v1955 = vpack.c.bf16 %v1777, %v1776
        %v1956 = vpack.c.bf16 %v1779, %v1778
        %v1957 = vpack.c.bf16 %v1587, %v1586
        %v1958 = vpack.c.bf16 %v1589, %v1588
        %v1959 = vpack.c.bf16 %v1591, %v1590
        %v1960 = vpack.c.bf16 %v1593, %v1592
        %v1961 = vpack.c.bf16 %v1595, %v1594
        %v1962 = vpack.c.bf16 %v1597, %v1596
        %v1963 = vpack.c.bf16 %v1599, %v1598
        %v1964 = vpack.c.bf16 %v1601, %v1600
        %v1965 = vpack.c.bf16 %v1603, %v1602
        %v1966 = vpack.c.bf16 %v1605, %v1604
        %v1967 = vpack.c.bf16 %v1607, %v1606
        %v1968 = vpack.c.bf16 %v1609, %v1608
        %v1969 = vpack.c.bf16 %v1611, %v1610
        %v1970 = vpack.c.bf16 %v1613, %v1612
        %v1971 = vpack.c.bf16 %v1615, %v1614
        %v1972 = vpack.c.bf16 %v1617, %v1616
        %v1973 = vpack.c.bf16 %v1910, %v1909
        %v1974 = vpack.c.bf16 %v1912, %v1911
        %v1975 = vpack.c.bf16 %v1914, %v1913
        %v1976 = vpack.c.bf16 %v1916, %v1915
        %v1977 = vpack.c.bf16 %v1918, %v1917
        %v1978 = vpack.c.bf16 %v1920, %v1919
        %v1979 = vpack.c.bf16 %v1922, %v1921
        %v1980 = vpack.c.bf16 %v1924, %v1923
        %v1981 = vpack.c.bf16 %v1926, %v1925
        %v1982 = vpack.c.bf16 %v1928, %v1927
        %v1983 = vpack.c.bf16 %v1930, %v1929
        %v1984 = vpack.c.bf16 %v1932, %v1931
        %v1985 = vpack.c.bf16 %v1934, %v1933
        %v1986 = vpack.c.bf16 %v1936, %v1935
        %v1987 = vpack.c.bf16 %v1938, %v1937
        %v1988 = vpack.c.bf16 %v1940, %v1939
        %2005 = vrot.lane.b32.xlu0 %v1957, 64
        %v2006 = vpop.permute.xlu0 %2005
        %2007 = vrot.lane.b32.xlu0 %v1958, 64
        %v2008 = vpop.permute.xlu0 %2007
        %2009 = vrot.lane.b32.xlu0 %v1959, 64
        %v2010 = vpop.permute.xlu0 %2009
        %2011 = vrot.lane.b32.xlu0 %v1960, 64
        %v2012 = vpop.permute.xlu0 %2011
        %2013 = vrot.lane.b32.xlu0 %v1961, 64
        %v2014 = vpop.permute.xlu0 %2013
        %2015 = vrot.lane.b32.xlu0 %v1962, 64
        %v2016 = vpop.permute.xlu0 %2015
        %2017 = vrot.lane.b32.xlu0 %v1963, 64
        %v2018 = vpop.permute.xlu0 %2017
        %2019 = vrot.lane.b32.xlu0 %v1964, 64
        %v2020 = vpop.permute.xlu0 %2019
        %2021 = vrot.lane.b32.xlu0 %v1965, 64
        %v2022 = vpop.permute.xlu0 %2021
        %2023 = vrot.lane.b32.xlu0 %v1966, 64
        %v2024 = vpop.permute.xlu0 %2023
        %2025 = vrot.lane.b32.xlu0 %v1967, 64
        %v2026 = vpop.permute.xlu0 %2025
        %2027 = vrot.lane.b32.xlu0 %v1968, 64
        %v2028 = vpop.permute.xlu0 %2027
        %2029 = vrot.lane.b32.xlu0 %v1969, 64
        %v2030 = vpop.permute.xlu0 %2029
        %2031 = vrot.lane.b32.xlu0 %v1970, 64
        %v2032 = vpop.permute.xlu0 %2031
        %2033 = vrot.lane.b32.xlu0 %v1971, 64
        %v2034 = vpop.permute.xlu0 %2033
        %2035 = vrot.lane.b32.xlu0 %v1972, 64
        %v2036 = vpop.permute.xlu0 %2035
        %v2039 = vsel %vm1025, %v1941, %v2006
        %v2042 = vsel %vm1025, %v1942, %v2008
        %v2045 = vsel %vm1025, %v1943, %v2010
        %v2048 = vsel %vm1025, %v1944, %v2012
        %v2051 = vsel %vm1025, %v1945, %v2014
        %v2054 = vsel %vm1025, %v1946, %v2016
        %v2057 = vsel %vm1025, %v1947, %v2018
        %v2060 = vsel %vm1025, %v1948, %v2020
        %v2063 = vsel %vm1025, %v1949, %v2022
        %v2066 = vsel %vm1025, %v1950, %v2024
        %v2069 = vsel %vm1025, %v1951, %v2026
        %v2072 = vsel %vm1025, %v1952, %v2028
        %v2075 = vsel %vm1025, %v1953, %v2030
        %v2078 = vsel %vm1025, %v1954, %v2032
        %v2081 = vsel %vm1025, %v1955, %v2034
        %v2084 = vsel %vm1025, %v1956, %v2036
        %vm2085 = vcmask 1043456
        %vm2086 = vcmask 523268
        %vm2087 = vmor %vm2086, %vm2085
        %2088 = vst.msk [vmem:[#allocation2] sm:$0xff] %vm2087, 0
        %2089 = vst.msk [vmem:[#allocation2 + $0x8] sm:$0xff] %vm2087, 0
        %2090 = vst.msk [vmem:[#allocation2 + $0x110] sm:$0xff] %vm2087, 0
        %2091 = vst.msk [vmem:[#allocation2 + $0x118] sm:$0xff] %vm2087, 0
        %v2124 = vunpack.c.l.b16 %v2039
        %v2125 = vunpack.c.l.b16 %v1973
        %v2126 = vunpack.c.h.b16 %v2039
        %v2127 = vunpack.c.h.b16 %v1973
        %v2128 = vunpack.c.l.b16 %v2042
        %v2129 = vunpack.c.l.b16 %v1974
        %v2130 = vunpack.c.h.b16 %v2042
        %v2131 = vunpack.c.h.b16 %v1974
        %v2132 = vunpack.c.l.b16 %v2045
        %v2133 = vunpack.c.l.b16 %v1975
        %v2134 = vunpack.c.h.b16 %v2045
        %v2135 = vunpack.c.h.b16 %v1975
        %v2136 = vunpack.c.l.b16 %v2048
        %v2137 = vunpack.c.l.b16 %v1976
        %v2138 = vunpack.c.h.b16 %v2048
        %v2139 = vunpack.c.h.b16 %v1976
        %v2140 = vunpack.c.l.b16 %v2051
        %v2141 = vunpack.c.l.b16 %v1977
        %v2142 = vunpack.c.h.b16 %v2051
        %v2143 = vunpack.c.h.b16 %v1977
        %v2144 = vunpack.c.l.b16 %v2054
        %v2145 = vunpack.c.l.b16 %v1978
        %v2146 = vunpack.c.h.b16 %v2054
        %v2147 = vunpack.c.h.b16 %v1978
        %v2148 = vunpack.c.l.b16 %v2057
        %v2149 = vunpack.c.l.b16 %v1979
        %v2150 = vunpack.c.h.b16 %v2057
        %v2151 = vunpack.c.h.b16 %v1979
        %v2152 = vunpack.c.l.b16 %v2060
        %v2153 = vunpack.c.l.b16 %v1980
        %v2154 = vunpack.c.h.b16 %v2060
        %v2155 = vunpack.c.h.b16 %v1980
        %v2156 = vunpack.c.l.b16 %v2063
        %v2157 = vunpack.c.l.b16 %v1981
        %v2158 = vunpack.c.h.b16 %v2063
        %v2159 = vunpack.c.h.b16 %v1981
        %v2160 = vunpack.c.l.b16 %v2066
        %v2161 = vunpack.c.l.b16 %v1982
        %v2162 = vunpack.c.h.b16 %v2066
        %v2163 = vunpack.c.h.b16 %v1982
        %v2164 = vunpack.c.l.b16 %v2069
        %v2165 = vunpack.c.l.b16 %v1983
        %v2166 = vunpack.c.h.b16 %v2069
        %v2167 = vunpack.c.h.b16 %v1983
        %v2168 = vunpack.c.l.b16 %v2072
        %v2169 = vunpack.c.l.b16 %v1984
        %v2170 = vunpack.c.h.b16 %v2072
        %v2171 = vunpack.c.h.b16 %v1984
        %v2172 = vunpack.c.l.b16 %v2075
        %v2173 = vunpack.c.l.b16 %v1985
        %v2174 = vunpack.c.h.b16 %v2075
        %v2175 = vunpack.c.h.b16 %v1985
        %v2176 = vunpack.c.l.b16 %v2078
        %v2177 = vunpack.c.l.b16 %v1986
        %v2178 = vunpack.c.h.b16 %v2078
        %v2179 = vunpack.c.h.b16 %v1986
        %v2180 = vunpack.c.l.b16 %v2081
        %v2181 = vunpack.c.l.b16 %v1987
        %v2182 = vunpack.c.h.b16 %v2081
        %v2183 = vunpack.c.h.b16 %v1987
        %v2184 = vunpack.c.l.b16 %v2084
        %v2185 = vunpack.c.l.b16 %v1988
        %v2186 = vunpack.c.h.b16 %v2084
        %v2187 = vunpack.c.h.b16 %v1988
        %v2188 = vpack.c.b16 %v2125, %v2124
        %v2189 = vpack.c.b16 %v2127, %v2126
        %v2190 = vpack.c.b16 %v2129, %v2128
        %v2191 = vpack.c.b16 %v2131, %v2130
        %v2192 = vpack.c.b16 %v2133, %v2132
        %v2193 = vpack.c.b16 %v2135, %v2134
        %v2194 = vpack.c.b16 %v2137, %v2136
        %v2195 = vpack.c.b16 %v2139, %v2138
        %v2196 = vpack.c.b16 %v2141, %v2140
        %v2197 = vpack.c.b16 %v2143, %v2142
        %v2198 = vpack.c.b16 %v2145, %v2144
        %v2199 = vpack.c.b16 %v2147, %v2146
        %v2200 = vpack.c.b16 %v2149, %v2148
        %v2201 = vpack.c.b16 %v2151, %v2150
        %v2202 = vpack.c.b16 %v2153, %v2152
        %v2203 = vpack.c.b16 %v2155, %v2154
        %v2204 = vpack.c.b16 %v2157, %v2156
        %v2205 = vpack.c.b16 %v2159, %v2158
        %v2206 = vpack.c.b16 %v2161, %v2160
        %v2207 = vpack.c.b16 %v2163, %v2162
        %v2208 = vpack.c.b16 %v2165, %v2164
        %v2209 = vpack.c.b16 %v2167, %v2166
        %v2210 = vpack.c.b16 %v2169, %v2168
        %v2211 = vpack.c.b16 %v2171, %v2170
        %v2212 = vpack.c.b16 %v2173, %v2172
        %v2213 = vpack.c.b16 %v2175, %v2174
        %v2214 = vpack.c.b16 %v2177, %v2176
        %v2215 = vpack.c.b16 %v2179, %v2178
        %v2216 = vpack.c.b16 %v2181, %v2180
        %v2217 = vpack.c.b16 %v2183, %v2182
        %v2218 = vpack.c.b16 %v2185, %v2184
        %v2219 = vpack.c.b16 %v2187, %v2186
        %2252 = vst.msk [vmem:[#allocation2 + $0x10] sm:$0xff] %vm2087, %v2188
        %2253 = vst.msk [vmem:[#allocation2 + $0x18] sm:$0xff] %vm2087, %v2189
        %2254 = vst.msk [vmem:[#allocation2 + $0x20] sm:$0xff] %vm2087, %v2190
        %2255 = vst.msk [vmem:[#allocation2 + $0x28] sm:$0xff] %vm2087, %v2191
        %2256 = vst.msk [vmem:[#allocation2 + $0x30] sm:$0xff] %vm2087, %v2192
        %2257 = vst.msk [vmem:[#allocation2 + $0x38] sm:$0xff] %vm2087, %v2193
        %2258 = vst.msk [vmem:[#allocation2 + $0x40] sm:$0xff] %vm2087, %v2194
        %2259 = vst.msk [vmem:[#allocation2 + $0x48] sm:$0xff] %vm2087, %v2195
        %2260 = vst.msk [vmem:[#allocation2 + $0x50] sm:$0xff] %vm2087, %v2196
        %2261 = vst.msk [vmem:[#allocation2 + $0x58] sm:$0xff] %vm2087, %v2197
        %2262 = vst.msk [vmem:[#allocation2 + $0x60] sm:$0xff] %vm2087, %v2198
        %2263 = vst.msk [vmem:[#allocation2 + $0x68] sm:$0xff] %vm2087, %v2199
        %2264 = vst.msk [vmem:[#allocation2 + $0x70] sm:$0xff] %vm2087, %v2200
        %2265 = vst.msk [vmem:[#allocation2 + $0x78] sm:$0xff] %vm2087, %v2201
        %2266 = vst.msk [vmem:[#allocation2 + $0x80] sm:$0xff] %vm2087, %v2202
        %2267 = vst.msk [vmem:[#allocation2 + $0x88] sm:$0xff] %vm2087, %v2203
        %2268 = vst.msk [vmem:[#allocation2 + $0x90] sm:$0xff] %vm2087, %v2204
        %2269 = vst.msk [vmem:[#allocation2 + $0x98] sm:$0xff] %vm2087, %v2205
        %2270 = vst.msk [vmem:[#allocation2 + $0xa0] sm:$0xff] %vm2087, %v2206
        %2271 = vst.msk [vmem:[#allocation2 + $0xa8] sm:$0xff] %vm2087, %v2207
        %2272 = vst.msk [vmem:[#allocation2 + $0xb0] sm:$0xff] %vm2087, %v2208
        %2273 = vst.msk [vmem:[#allocation2 + $0xb8] sm:$0xff] %vm2087, %v2209
        %2274 = vst.msk [vmem:[#allocation2 + $0xc0] sm:$0xff] %vm2087, %v2210
        %2275 = vst.msk [vmem:[#allocation2 + $0xc8] sm:$0xff] %vm2087, %v2211
        %2276 = vst.msk [vmem:[#allocation2 + $0xd0] sm:$0xff] %vm2087, %v2212
        %2277 = vst.msk [vmem:[#allocation2 + $0xd8] sm:$0xff] %vm2087, %v2213
        %2278 = vst.msk [vmem:[#allocation2 + $0xe0] sm:$0xff] %vm2087, %v2214
        %2279 = vst.msk [vmem:[#allocation2 + $0xe8] sm:$0xff] %vm2087, %v2215
        %2280 = vst.msk [vmem:[#allocation2 + $0xf0] sm:$0xff] %vm2087, %v2216
        %2281 = vst.msk [vmem:[#allocation2 + $0xf8] sm:$0xff] %vm2087, %v2217
        %2282 = vst.msk [vmem:[#allocation2 + $0x100] sm:$0xff] %vm2087, %v2218
        %2283 = vst.msk [vmem:[#allocation2 + $0x108] sm:$0xff] %vm2087, %v2219
        %v2284 = vld [vmem:[#allocation2] sm:$0xff]
        %v2285 = vld [vmem:[#allocation2 + $0x8] sm:$0xff]
        %v2286 = vld [vmem:[#allocation2 + $0x10] sm:$0xff]
        %v2287 = vld [vmem:[#allocation2 + $0x18] sm:$0xff]
        %v2288 = vld [vmem:[#allocation2 + $0x20] sm:$0xff]
        %v2289 = vld [vmem:[#allocation2 + $0x28] sm:$0xff]
        %v2290 = vld [vmem:[#allocation2 + $0x30] sm:$0xff]
        %v2291 = vld [vmem:[#allocation2 + $0x38] sm:$0xff]
        %v2292 = vld [vmem:[#allocation2 + $0x40] sm:$0xff]
        %v2293 = vld [vmem:[#allocation2 + $0x48] sm:$0xff]
        %v2294 = vld [vmem:[#allocation2 + $0x50] sm:$0xff]
        %v2295 = vld [vmem:[#allocation2 + $0x58] sm:$0xff]
        %v2296 = vld [vmem:[#allocation2 + $0x60] sm:$0xff]
        %v2297 = vld [vmem:[#allocation2 + $0x68] sm:$0xff]
        %v2298 = vld [vmem:[#allocation2 + $0x70] sm:$0xff]
        %v2299 = vld [vmem:[#allocation2 + $0x78] sm:$0xff]
        %v2300 = vld [vmem:[#allocation2 + $0x80] sm:$0xff]
        %v2301 = vld [vmem:[#allocation2 + $0x88] sm:$0xff]
        %v2302 = vld [vmem:[#allocation2 + $0x90] sm:$0xff]
        %v2303 = vld [vmem:[#allocation2 + $0x98] sm:$0xff]
        %v2304 = vld [vmem:[#allocation2 + $0xa0] sm:$0xff]
        %v2305 = vld [vmem:[#allocation2 + $0xa8] sm:$0xff]
        %v2306 = vld [vmem:[#allocation2 + $0xb0] sm:$0xff]
        %v2307 = vld [vmem:[#allocation2 + $0xb8] sm:$0xff]
        %v2308 = vld [vmem:[#allocation2 + $0xc0] sm:$0xff]
        %v2309 = vld [vmem:[#allocation2 + $0xc8] sm:$0xff]
        %v2310 = vld [vmem:[#allocation2 + $0xd0] sm:$0xff]
        %v2311 = vld [vmem:[#allocation2 + $0xd8] sm:$0xff]
        %v2312 = vld [vmem:[#allocation2 + $0xe0] sm:$0xff]
        %v2313 = vld [vmem:[#allocation2 + $0xe8] sm:$0xff]
        %v2314 = vld [vmem:[#allocation2 + $0xf0] sm:$0xff]
        %v2315 = vld [vmem:[#allocation2 + $0xf8] sm:$0xff]
        %v2316 = vld [vmem:[#allocation4] sm:$0xf]
        %v2317 = vld [vmem:[#allocation4 + $0x4] sm:$0xf]
        %v2318 = vld [vmem:[#allocation4 + $0x8] sm:$0xf]
        %v2319 = vld [vmem:[#allocation4 + $0xc] sm:$0xf]
        %v2320 = vld [vmem:[#allocation4 + $0x10] sm:$0xf]
        %v2321 = vld [vmem:[#allocation4 + $0x14] sm:$0xf]
        %v2322 = vld [vmem:[#allocation4 + $0x18] sm:$0xf]
        %v2323 = vld [vmem:[#allocation4 + $0x1c] sm:$0xf]
        %v2324 = vld [vmem:[#allocation4 + $0x20] sm:$0xf]
        %v2325 = vld [vmem:[#allocation4 + $0x24] sm:$0xf]
        %v2326 = vld [vmem:[#allocation4 + $0x28] sm:$0xf]
        %v2327 = vld [vmem:[#allocation4 + $0x2c] sm:$0xf]
        %v2328 = vld [vmem:[#allocation4 + $0x30] sm:$0xf]
        %v2329 = vld [vmem:[#allocation4 + $0x34] sm:$0xf]
        %v2330 = vld [vmem:[#allocation4 + $0x38] sm:$0xf]
        %v2331 = vld [vmem:[#allocation4 + $0x3c] sm:$0xf]
        %v2332 = vld [vmem:[#allocation4 + $0x40] sm:$0xf]
        %v2333 = vld [vmem:[#allocation4 + $0x44] sm:$0xf]
        %v2334 = vld [vmem:[#allocation4 + $0x48] sm:$0xf]
        %v2335 = vld [vmem:[#allocation4 + $0x4c] sm:$0xf]
        %v2336 = vld [vmem:[#allocation4 + $0x50] sm:$0xf]
        %v2337 = vld [vmem:[#allocation4 + $0x54] sm:$0xf]
        %v2338 = vld [vmem:[#allocation4 + $0x58] sm:$0xf]
        %v2339 = vld [vmem:[#allocation4 + $0x5c] sm:$0xf]
        %v2340 = vld [vmem:[#allocation2 + $0x100] sm:$0xff]
        %v2341 = vld [vmem:[#allocation2 + $0x108] sm:$0xff]
        %s2342 = scalar_lea.vmem [#allocation4], 96
        %v2343 = vld [vmem:[%s2342] sm:$0xf]
        %v2344 = vld [vmem:[%s2342 + $0x4] sm:$0xf]
        %v2345 = vld [vmem:[%s2342 + $0x8] sm:$0xf]
        %v2346 = vld [vmem:[%s2342 + $0xc] sm:$0xf]
        %v2347 = vld [vmem:[%s2342 + $0x10] sm:$0xf]
        %v2348 = vld [vmem:[%s2342 + $0x14] sm:$0xf]
        %v2349 = vld [vmem:[%s2342 + $0x18] sm:$0xf]
        %v2350 = vld [vmem:[%s2342 + $0x1c] sm:$0xf]
        %v2351 = vld [vmem:[%s2342 + $0x20] sm:$0xf]
        %v2352 = vld [vmem:[%s2342 + $0x24] sm:$0xf]
        %v2353 = vld [vmem:[%s2342 + $0x28] sm:$0xf]
        %v2354 = vld [vmem:[%s2342 + $0x2c] sm:$0xf]
        %v2355 = vld [vmem:[%s2342 + $0x30] sm:$0xf]
        %v2356 = vld [vmem:[%s2342 + $0x34] sm:$0xf]
        %v2357 = vld [vmem:[%s2342 + $0x38] sm:$0xf]
        %v2358 = vld [vmem:[%s2342 + $0x3c] sm:$0xf]
        %v2359 = vld [vmem:[%s2342 + $0x40] sm:$0xf]
        %v2360 = vld [vmem:[%s2342 + $0x44] sm:$0xf]
        %v2361 = vld [vmem:[%s2342 + $0x48] sm:$0xf]
        %v2362 = vld [vmem:[%s2342 + $0x4c] sm:$0xf]
        %v2363 = vld [vmem:[%s2342 + $0x50] sm:$0xf]
        %v2364 = vld [vmem:[%s2342 + $0x54] sm:$0xf]
        %v2365 = vld [vmem:[%s2342 + $0x58] sm:$0xf]
        %v2366 = vld [vmem:[%s2342 + $0x5c] sm:$0xf]
        %v2399 = vunpack.c.l.b16 %v2286
        %v2400 = vunpack.c.h.b16 %v2286
        %v2401 = vunpack.c.l.b16 %v2287
        %v2402 = vunpack.c.h.b16 %v2287
        %v2403 = vunpack.c.l.b16 %v2288
        %v2404 = vunpack.c.h.b16 %v2288
        %v2405 = vunpack.c.l.b16 %v2289
        %v2406 = vunpack.c.h.b16 %v2289
        %v2407 = vunpack.c.l.b16 %v2290
        %v2408 = vunpack.c.h.b16 %v2290
        %v2409 = vunpack.c.l.b16 %v2291
        %v2410 = vunpack.c.h.b16 %v2291
        %v2411 = vunpack.c.l.b16 %v2292
        %v2412 = vunpack.c.h.b16 %v2292
        %v2413 = vunpack.c.l.b16 %v2293
        %v2414 = vunpack.c.h.b16 %v2293
        %v2415 = vunpack.c.l.b16 %v2294
        %v2416 = vunpack.c.h.b16 %v2294
        %v2417 = vunpack.c.l.b16 %v2295
        %v2418 = vunpack.c.h.b16 %v2295
        %v2419 = vunpack.c.l.b16 %v2296
        %v2420 = vunpack.c.h.b16 %v2296
        %v2421 = vunpack.c.l.b16 %v2297
        %v2422 = vunpack.c.h.b16 %v2297
        %v2423 = vunpack.c.l.b16 %v2298
        %v2424 = vunpack.c.h.b16 %v2298
        %v2425 = vunpack.c.l.b16 %v2299
        %v2426 = vunpack.c.h.b16 %v2299
        %v2427 = vunpack.c.l.b16 %v2300
        %v2428 = vunpack.c.h.b16 %v2300
        %v2429 = vunpack.c.l.b16 %v2301
        %v2430 = vunpack.c.h.b16 %v2301
        %v2431 = vunpack.c.l.b16 %v2302
        %v2432 = vunpack.c.h.b16 %v2302
        %v2433 = vunpack.c.l.b16 %v2303
        %v2434 = vunpack.c.h.b16 %v2303
        %v2435 = vunpack.c.l.b16 %v2304
        %v2436 = vunpack.c.h.b16 %v2304
        %v2437 = vunpack.c.l.b16 %v2305
        %v2438 = vunpack.c.h.b16 %v2305
        %v2439 = vunpack.c.l.b16 %v2306
        %v2440 = vunpack.c.h.b16 %v2306
        %v2441 = vunpack.c.l.b16 %v2307
        %v2442 = vunpack.c.h.b16 %v2307
        %v2443 = vunpack.c.l.b16 %v2308
        %v2444 = vunpack.c.h.b16 %v2308
        %v2445 = vunpack.c.l.b16 %v2309
        %v2446 = vunpack.c.h.b16 %v2309
        %v2447 = vunpack.c.l.b16 %v2310
        %v2448 = vunpack.c.h.b16 %v2310
        %v2449 = vunpack.c.l.b16 %v2311
        %v2450 = vunpack.c.h.b16 %v2311
        %v2451 = vunpack.c.l.b16 %v2312
        %v2452 = vunpack.c.h.b16 %v2312
        %v2453 = vunpack.c.l.b16 %v2313
        %v2454 = vunpack.c.h.b16 %v2313
        %v2455 = vunpack.c.l.b16 %v2314
        %v2456 = vunpack.c.h.b16 %v2314
        %v2457 = vunpack.c.l.b16 %v2315
        %v2458 = vunpack.c.h.b16 %v2315
        %v2459 = vunpack.c.l.b16 %v2340
        %v2460 = vunpack.c.h.b16 %v2340
        %v2461 = vunpack.c.l.b16 %v2341
        %v2462 = vunpack.c.h.b16 %v2341
        %v2463 = vpack.c.b16 %v2401, %v2399
        %v2464 = vpack.c.b16 %v2402, %v2400
        %v2465 = vpack.c.b16 %v2405, %v2403
        %v2466 = vpack.c.b16 %v2406, %v2404
        %v2467 = vpack.c.b16 %v2409, %v2407
        %v2468 = vpack.c.b16 %v2410, %v2408
        %v2469 = vpack.c.b16 %v2413, %v2411
        %v2470 = vpack.c.b16 %v2414, %v2412
        %v2471 = vpack.c.b16 %v2417, %v2415
        %v2472 = vpack.c.b16 %v2418, %v2416
        %v2473 = vpack.c.b16 %v2421, %v2419
        %v2474 = vpack.c.b16 %v2422, %v2420
        %v2475 = vpack.c.b16 %v2425, %v2423
        %v2476 = vpack.c.b16 %v2426, %v2424
        %v2477 = vpack.c.b16 %v2429, %v2427
        %v2478 = vpack.c.b16 %v2430, %v2428
        %v2479 = vpack.c.b16 %v2433, %v2431
        %v2480 = vpack.c.b16 %v2434, %v2432
        %v2481 = vpack.c.b16 %v2437, %v2435
        %v2482 = vpack.c.b16 %v2438, %v2436
        %v2483 = vpack.c.b16 %v2441, %v2439
        %v2484 = vpack.c.b16 %v2442, %v2440
        %v2485 = vpack.c.b16 %v2445, %v2443
        %v2486 = vpack.c.b16 %v2446, %v2444
        %v2487 = vpack.c.b16 %v2449, %v2447
        %v2488 = vpack.c.b16 %v2450, %v2448
        %v2489 = vpack.c.b16 %v2453, %v2451
        %v2490 = vpack.c.b16 %v2454, %v2452
        %v2491 = vpack.c.b16 %v2457, %v2455
        %v2492 = vpack.c.b16 %v2458, %v2456
        %v2493 = vpack.c.b16 %v2461, %v2459
        %v2494 = vpack.c.b16 %v2462, %v2460
        %v2535 = vunpack.c.l.b16 %v2343
        %v2536 = vunpack.c.l.b16 %v2344
        %v2537 = vunpack.c.l.b16 %v2345
        %v2538 = vunpack.c.l.b16 %v2346
        %v2539 = vunpack.c.l.b16 %v2347
        %v2540 = vunpack.c.l.b16 %v2348
        %v2541 = vunpack.c.l.b16 %v2349
        %v2542 = vunpack.c.l.b16 %v2350
        %v2543 = vunpack.c.l.b16 %v2351
        %v2544 = vunpack.c.l.b16 %v2352
        %v2545 = vunpack.c.l.b16 %v2353
        %v2546 = vunpack.c.l.b16 %v2354
        %v2547 = vunpack.c.l.b16 %v2355
        %v2548 = vunpack.c.l.b16 %v2356
        %v2549 = vunpack.c.l.b16 %v2357
        %v2550 = vunpack.c.l.b16 %v2358
        %v2551 = vunpack.c.l.b16 %v2359
        %v2552 = vunpack.c.l.b16 %v2360
        %v2553 = vunpack.c.l.b16 %v2361
        %v2554 = vunpack.c.l.b16 %v2362
        %v2555 = vunpack.c.l.b16 %v2363
        %v2556 = vunpack.c.l.b16 %v2364
        %v2557 = vunpack.c.l.b16 %v2365
        %v2558 = vunpack.c.l.b16 %v2366
        %v2559 = vpack.c.b16 %v2536, %v2535
        %v2560 = vpack.c.b16 %v2538, %v2537
        %v2561 = vpack.c.b16 %v2540, %v2539
        %v2562 = vpack.c.b16 %v2542, %v2541
        %v2563 = vpack.c.b16 %v2544, %v2543
        %v2564 = vpack.c.b16 %v2546, %v2545
        %v2565 = vpack.c.b16 %v2548, %v2547
        %v2566 = vpack.c.b16 %v2550, %v2549
        %v2567 = vpack.c.b16 %v2552, %v2551
        %v2568 = vpack.c.b16 %v2554, %v2553
        %v2569 = vpack.c.b16 %v2556, %v2555
        %v2570 = vpack.c.b16 %v2558, %v2557
        %v2584 = vsel %vm1025, %v2464, 0
        %v2587 = vsel %vm1025, %v2466, 0
        %v2590 = vsel %vm1025, %v2468, 0
        %v2593 = vsel %vm1025, %v2470, 0
        %v2596 = vsel %vm1025, %v2472, 0
        %v2599 = vsel %vm1025, %v2474, 0
        %v2602 = vsel %vm1025, %v2476, 0
        %v2605 = vsel %vm1025, %v2478, 0
        %v2608 = vsel %vm1025, %v2480, 0
        %v2611 = vsel %vm1025, %v2482, 0
        %v2614 = vsel %vm1025, %v2484, 0
        %v2617 = vsel %vm1025, %v2486, 0
        %v2620 = vsel %vm1025, %v2488, 0
        %v2623 = vsel %vm1025, %v2490, 0
        %v2626 = vsel %vm1025, %v2492, 0
        %v2629 = vsel %vm1025, %v2494, 0
        %2631 = vmatprep.subr.bf16.mxu0 0
        %2632 = vmatpush1.bf16.msra.mxu0 %v2566
        %2633 = vmatprep.subr.bf16.mxu0 0
        %2634 = vmatpush1.bf16.msra.mxu0 %v2565
        %2635 = vmatprep.subr.bf16.mxu0 0
        %2636 = vmatpush1.bf16.msra.mxu0 %v2564
        %2637 = vmatprep.subr.bf16.mxu0 0
        %2638 = vmatpush1.bf16.msra.mxu0 %v2563
        %2639 = vmatprep.subr.bf16.mxu0 0
        %2640 = vmatpush1.bf16.msra.mxu0 %v2562
        %2641 = vmatprep.subr.bf16.mxu0 0
        %2642 = vmatpush1.bf16.msra.mxu0 %v2561
        %2643 = vmatprep.subr.bf16.mxu0 0
        %2644 = vmatpush1.bf16.msra.mxu0 %v2560
        %2645 = vmatprep.subr.bf16.mxu0 0
        %2646 = vmatpush1.bf16.msra.mxu0 %v2559
        %2647 = vmatprep.subr.bf16.mxu0 0
        %2648 = vmatpush2.bf16.msra.mxu0 0
        %2649 = vmatprep.subr.bf16.mxu0 0
        %2650 = vmatpush2.bf16.msra.mxu0 0
        %2651 = vmatprep.subr.bf16.mxu0 0
        %2652 = vmatpush2.bf16.msra.mxu0 0
        %2653 = vmatprep.subr.bf16.mxu0 0
        %2654 = vmatpush2.bf16.msra.mxu0 0
        %2655 = vmatprep.subr.bf16.mxu0 0
        %2656 = vmatpush2.bf16.msra.mxu0 %v2570
        %2657 = vmatprep.subr.bf16.mxu0 0
        %2658 = vmatpush2.bf16.msra.mxu0 %v2569
        %2659 = vmatprep.subr.bf16.mxu0 0
        %2660 = vmatpush2.bf16.msra.mxu0 %v2568
        %2661 = vmatprep.subr.bf16.mxu0 0
        %2662 = vmatpush2.bf16.msra.mxu0 %v2567
        %2663 = vmatprep.mubr.bf16.mxu0 %v2584
        %2664 = vmatmul.mubr.bf16.gmra.mxu0 %v2463
        %v2665 = vpop.f32.mrf.mxu0
        %v2666 = vadd.f32 0.0, %v2665
        %v2667 = vpop.f32.mrf.mxu0
        %v2668 = vpop.f32.mrf.mxu0
        %v2669 = vadd.f32 0.0, %v2668
        %v2670 = vpop.f32.mrf.mxu0
        %2671 = vmatprep.mubr.bf16.mxu0 %v2587
        %2672 = vmatmul.mubr.bf16.gmra.mxu0 %v2465
        %v2673 = vpop.f32.mrf.mxu0
        %v2674 = vadd.f32 0.0, %v2673
        %v2675 = vpop.f32.mrf.mxu0
        %v2676 = vpop.f32.mrf.mxu0
        %v2677 = vadd.f32 0.0, %v2676
        %v2678 = vpop.f32.mrf.mxu0
        %2679 = vmatprep.mubr.bf16.mxu0 %v2590
        %2680 = vmatmul.mubr.bf16.gmra.mxu0 %v2467
        %v2681 = vpop.f32.mrf.mxu0
        %v2682 = vadd.f32 0.0, %v2681
        %v2683 = vpop.f32.mrf.mxu0
        %v2684 = vpop.f32.mrf.mxu0
        %v2685 = vadd.f32 0.0, %v2684
        %v2686 = vpop.f32.mrf.mxu0
        %2687 = vmatprep.mubr.bf16.mxu0 %v2593
        %2688 = vmatmul.mubr.bf16.gmra.mxu0 %v2469
        %v2689 = vpop.f32.mrf.mxu0
        %v2690 = vadd.f32 0.0, %v2689
        %v2691 = vpop.f32.mrf.mxu0
        %v2692 = vpop.f32.mrf.mxu0
        %v2693 = vadd.f32 0.0, %v2692
        %v2694 = vpop.f32.mrf.mxu0
        %2695 = vmatprep.mubr.bf16.mxu0 %v2596
        %2696 = vmatmul.mubr.bf16.gmra.mxu0 %v2471
        %v2697 = vpop.f32.mrf.mxu0
        %v2698 = vadd.f32 0.0, %v2697
        %v2699 = vpop.f32.mrf.mxu0
        %v2700 = vpop.f32.mrf.mxu0
        %v2701 = vadd.f32 0.0, %v2700
        %v2702 = vpop.f32.mrf.mxu0
        %2703 = vmatprep.mubr.bf16.mxu0 %v2599
        %2704 = vmatmul.mubr.bf16.gmra.mxu0 %v2473
        %v2705 = vpop.f32.mrf.mxu0
        %v2706 = vadd.f32 0.0, %v2705
        %v2707 = vpop.f32.mrf.mxu0
        %v2708 = vpop.f32.mrf.mxu0
        %v2709 = vadd.f32 0.0, %v2708
        %v2710 = vpop.f32.mrf.mxu0
        %2711 = vmatprep.mubr.bf16.mxu0 %v2602
        %2712 = vmatmul.mubr.bf16.gmra.mxu0 %v2475
        %v2713 = vpop.f32.mrf.mxu0
        %v2714 = vadd.f32 0.0, %v2713
        %v2715 = vpop.f32.mrf.mxu0
        %v2716 = vpop.f32.mrf.mxu0
        %v2717 = vadd.f32 0.0, %v2716
        %v2718 = vpop.f32.mrf.mxu0
        %2719 = vmatprep.mubr.bf16.mxu0 %v2605
        %2720 = vmatmul.mubr.bf16.gmra.mxu0 %v2477
        %v2721 = vpop.f32.mrf.mxu0
        %v2722 = vadd.f32 0.0, %v2721
        %v2723 = vpop.f32.mrf.mxu0
        %v2724 = vpop.f32.mrf.mxu0
        %v2725 = vadd.f32 0.0, %v2724
        %v2726 = vpop.f32.mrf.mxu0
        %2727 = vmatprep.mubr.bf16.mxu0 %v2608
        %2728 = vmatmul.mubr.bf16.gmra.mxu0 %v2479
        %v2729 = vpop.f32.mrf.mxu0
        %v2730 = vadd.f32 0.0, %v2729
        %v2731 = vpop.f32.mrf.mxu0
        %v2732 = vpop.f32.mrf.mxu0
        %v2733 = vadd.f32 0.0, %v2732
        %v2734 = vpop.f32.mrf.mxu0
        %2735 = vmatprep.mubr.bf16.mxu0 %v2611
        %2736 = vmatmul.mubr.bf16.gmra.mxu0 %v2481
        %v2737 = vpop.f32.mrf.mxu0
        %v2738 = vadd.f32 0.0, %v2737
        %v2739 = vpop.f32.mrf.mxu0
        %v2740 = vpop.f32.mrf.mxu0
        %v2741 = vadd.f32 0.0, %v2740
        %v2742 = vpop.f32.mrf.mxu0
        %2743 = vmatprep.mubr.bf16.mxu0 %v2614
        %2744 = vmatmul.mubr.bf16.gmra.mxu0 %v2483
        %v2745 = vpop.f32.mrf.mxu0
        %v2746 = vadd.f32 0.0, %v2745
        %v2747 = vpop.f32.mrf.mxu0
        %v2748 = vpop.f32.mrf.mxu0
        %v2749 = vadd.f32 0.0, %v2748
        %v2750 = vpop.f32.mrf.mxu0
        %2751 = vmatprep.mubr.bf16.mxu0 %v2617
        %2752 = vmatmul.mubr.bf16.gmra.mxu0 %v2485
        %v2753 = vpop.f32.mrf.mxu0
        %v2754 = vadd.f32 0.0, %v2753
        %v2755 = vpop.f32.mrf.mxu0
        %v2756 = vpop.f32.mrf.mxu0
        %v2757 = vadd.f32 0.0, %v2756
        %v2758 = vpop.f32.mrf.mxu0
        %2759 = vmatprep.mubr.bf16.mxu0 %v2620
        %2760 = vmatmul.mubr.bf16.gmra.mxu0 %v2487
        %v2761 = vpop.f32.mrf.mxu0
        %v2762 = vadd.f32 0.0, %v2761
        %v2763 = vpop.f32.mrf.mxu0
        %v2764 = vpop.f32.mrf.mxu0
        %v2765 = vadd.f32 0.0, %v2764
        %v2766 = vpop.f32.mrf.mxu0
        %2767 = vmatprep.mubr.bf16.mxu0 %v2623
        %2768 = vmatmul.mubr.bf16.gmra.mxu0 %v2489
        %v2769 = vpop.f32.mrf.mxu0
        %v2770 = vadd.f32 0.0, %v2769
        %v2771 = vpop.f32.mrf.mxu0
        %v2772 = vpop.f32.mrf.mxu0
        %v2773 = vadd.f32 0.0, %v2772
        %v2774 = vpop.f32.mrf.mxu0
        %2775 = vmatprep.mubr.bf16.mxu0 %v2626
        %2776 = vmatmul.mubr.bf16.gmra.mxu0 %v2491
        %v2777 = vpop.f32.mrf.mxu0
        %v2778 = vadd.f32 0.0, %v2777
        %v2779 = vpop.f32.mrf.mxu0
        %v2780 = vpop.f32.mrf.mxu0
        %v2781 = vadd.f32 0.0, %v2780
        %v2782 = vpop.f32.mrf.mxu0
        %2783 = vmatprep.mubr.bf16.mxu0 %v2629
        %2784 = vmatmul.mubr.bf16.gmra.mxu0 %v2493
        %v2785 = vpop.f32.mrf.mxu0
        %v2786 = vadd.f32 0.0, %v2785
        %v2787 = vpop.f32.mrf.mxu0
        %v2788 = vpop.f32.mrf.mxu0
        %v2789 = vadd.f32 0.0, %v2788
        %v2790 = vpop.f32.mrf.mxu0
        %2791 = vdwg.mxu0
        %v2794 = vunpack.c.l.b16 %v2284
        %v2795 = vunpack.c.h.b16 %v2284
        %v2796 = vunpack.c.l.b16 %v2285
        %v2797 = vunpack.c.h.b16 %v2285
        %v2798 = vpack.c.b16 %v2796, %v2794
        %v2799 = vpack.c.b16 %v2797, %v2795
        %v2825 = vunpack.c.l.b16 %v2316
        %v2826 = vunpack.c.l.b16 %v2317
        %v2827 = vunpack.c.l.b16 %v2318
        %v2828 = vunpack.c.l.b16 %v2319
        %v2829 = vunpack.c.l.b16 %v2320
        %v2830 = vunpack.c.l.b16 %v2321
        %v2831 = vunpack.c.l.b16 %v2322
        %v2832 = vunpack.c.l.b16 %v2323
        %v2833 = vunpack.c.l.b16 %v2324
        %v2834 = vunpack.c.l.b16 %v2325
        %v2835 = vunpack.c.l.b16 %v2326
        %v2836 = vunpack.c.l.b16 %v2327
        %v2837 = vunpack.c.l.b16 %v2328
        %v2838 = vunpack.c.l.b16 %v2329
        %v2839 = vunpack.c.l.b16 %v2330
        %v2840 = vunpack.c.l.b16 %v2331
        %v2841 = vunpack.c.l.b16 %v2332
        %v2842 = vunpack.c.l.b16 %v2333
        %v2843 = vunpack.c.l.b16 %v2334
        %v2844 = vunpack.c.l.b16 %v2335
        %v2845 = vunpack.c.l.b16 %v2336
        %v2846 = vunpack.c.l.b16 %v2337
        %v2847 = vunpack.c.l.b16 %v2338
        %v2848 = vunpack.c.l.b16 %v2339
        %v2849 = vpack.c.b16 %v2826, %v2825
        %v2850 = vpack.c.b16 %v2828, %v2827
        %v2851 = vpack.c.b16 %v2830, %v2829
        %v2852 = vpack.c.b16 %v2832, %v2831
        %v2853 = vpack.c.b16 %v2834, %v2833
        %v2854 = vpack.c.b16 %v2836, %v2835
        %v2855 = vpack.c.b16 %v2838, %v2837
        %v2856 = vpack.c.b16 %v2840, %v2839
        %v2857 = vpack.c.b16 %v2842, %v2841
        %v2858 = vpack.c.b16 %v2844, %v2843
        %v2859 = vpack.c.b16 %v2846, %v2845
        %v2860 = vpack.c.b16 %v2848, %v2847
        %v2874 = vsel %vm1025, %v2799, 0
        %2876 = vmatprep.subr.bf16.mxu0 0
        %2877 = vmatpush1.bf16.msra.mxu0 %v2856
        %2878 = vmatprep.subr.bf16.mxu0 0
        %2879 = vmatpush1.bf16.msra.mxu0 %v2855
        %2880 = vmatprep.subr.bf16.mxu0 0
        %2881 = vmatpush1.bf16.msra.mxu0 %v2854
        %2882 = vmatprep.subr.bf16.mxu0 0
        %2883 = vmatpush1.bf16.msra.mxu0 %v2853
        %2884 = vmatprep.subr.bf16.mxu0 0
        %2885 = vmatpush1.bf16.msra.mxu0 %v2852
        %2886 = vmatprep.subr.bf16.mxu0 0
        %2887 = vmatpush1.bf16.msra.mxu0 %v2851
        %2888 = vmatprep.subr.bf16.mxu0 0
        %2889 = vmatpush1.bf16.msra.mxu0 %v2850
        %2890 = vmatprep.subr.bf16.mxu0 0
        %2891 = vmatpush1.bf16.msra.mxu0 %v2849
        %2892 = vmatprep.subr.bf16.mxu0 0
        %2893 = vmatpush2.bf16.msra.mxu0 0
        %2894 = vmatprep.subr.bf16.mxu0 0
        %2895 = vmatpush2.bf16.msra.mxu0 0
        %2896 = vmatprep.subr.bf16.mxu0 0
        %2897 = vmatpush2.bf16.msra.mxu0 0
        %2898 = vmatprep.subr.bf16.mxu0 0
        %2899 = vmatpush2.bf16.msra.mxu0 0
        %2900 = vmatprep.subr.bf16.mxu0 0
        %2901 = vmatpush2.bf16.msra.mxu0 %v2860
        %2902 = vmatprep.subr.bf16.mxu0 0
        %2903 = vmatpush2.bf16.msra.mxu0 %v2859
        %2904 = vmatprep.subr.bf16.mxu0 0
        %2905 = vmatpush2.bf16.msra.mxu0 %v2858
        %2906 = vmatprep.subr.bf16.mxu0 0
        %2907 = vmatpush2.bf16.msra.mxu0 %v2857
        %2908 = vmatprep.mubr.bf16.mxu0 %v2874
        %2909 = vmatmul.mubr.bf16.gmra.mxu0 %v2798
        %v2910 = vpop.f32.mrf.mxu0
        %v2911 = vadd.f32 %v2666, %v2910
        %v2912 = vpop.f32.mrf.mxu0
        %v2913 = vpop.f32.mrf.mxu0
        %v2914 = vadd.f32 %v2669, %v2913
        %v2915 = vpop.f32.mrf.mxu0
        %2916 = vmatprep.mubr.bf16.mxu0 %v2584
        %2917 = vmatmul.mubr.bf16.gmra.mxu0 %v2463
        %v2918 = vpop.f32.mrf.mxu0
        %v2919 = vadd.f32 %v2674, %v2918
        %v2920 = vpop.f32.mrf.mxu0
        %v2921 = vpop.f32.mrf.mxu0
        %v2922 = vadd.f32 %v2677, %v2921
        %v2923 = vpop.f32.mrf.mxu0
        %2924 = vmatprep.mubr.bf16.mxu0 %v2587
        %2925 = vmatmul.mubr.bf16.gmra.mxu0 %v2465
        %v2926 = vpop.f32.mrf.mxu0
        %v2927 = vadd.f32 %v2682, %v2926
        %v2928 = vpop.f32.mrf.mxu0
        %v2929 = vpop.f32.mrf.mxu0
        %v2930 = vadd.f32 %v2685, %v2929
        %v2931 = vpop.f32.mrf.mxu0
        %2932 = vmatprep.mubr.bf16.mxu0 %v2590
        %2933 = vmatmul.mubr.bf16.gmra.mxu0 %v2467
        %v2934 = vpop.f32.mrf.mxu0
        %v2935 = vadd.f32 %v2690, %v2934
        %v2936 = vpop.f32.mrf.mxu0
        %v2937 = vpop.f32.mrf.mxu0
        %v2938 = vadd.f32 %v2693, %v2937
        %v2939 = vpop.f32.mrf.mxu0
        %2940 = vmatprep.mubr.bf16.mxu0 %v2593
        %2941 = vmatmul.mubr.bf16.gmra.mxu0 %v2469
        %v2942 = vpop.f32.mrf.mxu0
        %v2943 = vadd.f32 %v2698, %v2942
        %v2944 = vpop.f32.mrf.mxu0
        %v2945 = vpop.f32.mrf.mxu0
        %v2946 = vadd.f32 %v2701, %v2945
        %v2947 = vpop.f32.mrf.mxu0
        %2948 = vmatprep.mubr.bf16.mxu0 %v2596
        %2949 = vmatmul.mubr.bf16.gmra.mxu0 %v2471
        %v2950 = vpop.f32.mrf.mxu0
        %v2951 = vadd.f32 %v2706, %v2950
        %v2952 = vpop.f32.mrf.mxu0
        %v2953 = vpop.f32.mrf.mxu0
        %v2954 = vadd.f32 %v2709, %v2953
        %v2955 = vpop.f32.mrf.mxu0
        %2956 = vmatprep.mubr.bf16.mxu0 %v2599
        %2957 = vmatmul.mubr.bf16.gmra.mxu0 %v2473
        %v2958 = vpop.f32.mrf.mxu0
        %v2959 = vadd.f32 %v2714, %v2958
        %v2960 = vpop.f32.mrf.mxu0
        %v2961 = vpop.f32.mrf.mxu0
        %v2962 = vadd.f32 %v2717, %v2961
        %v2963 = vpop.f32.mrf.mxu0
        %2964 = vmatprep.mubr.bf16.mxu0 %v2602
        %2965 = vmatmul.mubr.bf16.gmra.mxu0 %v2475
        %v2966 = vpop.f32.mrf.mxu0
        %v2967 = vadd.f32 %v2722, %v2966
        %v2968 = vpop.f32.mrf.mxu0
        %v2969 = vpop.f32.mrf.mxu0
        %v2970 = vadd.f32 %v2725, %v2969
        %v2971 = vpop.f32.mrf.mxu0
        %2972 = vmatprep.mubr.bf16.mxu0 %v2605
        %2973 = vmatmul.mubr.bf16.gmra.mxu0 %v2477
        %v2974 = vpop.f32.mrf.mxu0
        %v2975 = vadd.f32 %v2730, %v2974
        %v2976 = vpop.f32.mrf.mxu0
        %v2977 = vpop.f32.mrf.mxu0
        %v2978 = vadd.f32 %v2733, %v2977
        %v2979 = vpop.f32.mrf.mxu0
        %2980 = vmatprep.mubr.bf16.mxu0 %v2608
        %2981 = vmatmul.mubr.bf16.gmra.mxu0 %v2479
        %v2982 = vpop.f32.mrf.mxu0
        %v2983 = vadd.f32 %v2738, %v2982
        %v2984 = vpop.f32.mrf.mxu0
        %v2985 = vpop.f32.mrf.mxu0
        %v2986 = vadd.f32 %v2741, %v2985
        %v2987 = vpop.f32.mrf.mxu0
        %2988 = vmatprep.mubr.bf16.mxu0 %v2611
        %2989 = vmatmul.mubr.bf16.gmra.mxu0 %v2481
        %v2990 = vpop.f32.mrf.mxu0
        %v2991 = vadd.f32 %v2746, %v2990
        %v2992 = vpop.f32.mrf.mxu0
        %v2993 = vpop.f32.mrf.mxu0
        %v2994 = vadd.f32 %v2749, %v2993
        %v2995 = vpop.f32.mrf.mxu0
        %2996 = vmatprep.mubr.bf16.mxu0 %v2614
        %2997 = vmatmul.mubr.bf16.gmra.mxu0 %v2483
        %v2998 = vpop.f32.mrf.mxu0
        %v2999 = vadd.f32 %v2754, %v2998
        %v3000 = vpop.f32.mrf.mxu0
        %v3001 = vpop.f32.mrf.mxu0
        %v3002 = vadd.f32 %v2757, %v3001
        %v3003 = vpop.f32.mrf.mxu0
        %3004 = vmatprep.mubr.bf16.mxu0 %v2617
        %3005 = vmatmul.mubr.bf16.gmra.mxu0 %v2485
        %v3006 = vpop.f32.mrf.mxu0
        %v3007 = vadd.f32 %v2762, %v3006
        %v3008 = vpop.f32.mrf.mxu0
        %v3009 = vpop.f32.mrf.mxu0
        %v3010 = vadd.f32 %v2765, %v3009
        %v3011 = vpop.f32.mrf.mxu0
        %3012 = vmatprep.mubr.bf16.mxu0 %v2620
        %3013 = vmatmul.mubr.bf16.gmra.mxu0 %v2487
        %v3014 = vpop.f32.mrf.mxu0
        %v3015 = vadd.f32 %v2770, %v3014
        %v3016 = vpop.f32.mrf.mxu0
        %v3017 = vpop.f32.mrf.mxu0
        %v3018 = vadd.f32 %v2773, %v3017
        %v3019 = vpop.f32.mrf.mxu0
        %3020 = vmatprep.mubr.bf16.mxu0 %v2623
        %3021 = vmatmul.mubr.bf16.gmra.mxu0 %v2489
        %v3022 = vpop.f32.mrf.mxu0
        %v3023 = vadd.f32 %v2778, %v3022
        %v3024 = vpop.f32.mrf.mxu0
        %v3025 = vpop.f32.mrf.mxu0
        %v3026 = vadd.f32 %v2781, %v3025
        %v3027 = vpop.f32.mrf.mxu0
        %3028 = vmatprep.mubr.bf16.mxu0 %v2626
        %3029 = vmatmul.mubr.bf16.gmra.mxu0 %v2491
        %v3030 = vpop.f32.mrf.mxu0
        %v3031 = vadd.f32 %v2786, %v3030
        %v3032 = vpop.f32.mrf.mxu0
        %v3033 = vpop.f32.mrf.mxu0
        %v3034 = vadd.f32 %v2789, %v3033
        %v3035 = vpop.f32.mrf.mxu0
        %3036 = vdwg.mxu0
        %v3037 = vld [vmem:[#allocation2 + $0x20] sm:$0xff]
        %v3038 = vld [vmem:[#allocation2 + $0x28] sm:$0xff]
        %v3039 = vld [vmem:[#allocation2 + $0x30] sm:$0xff]
        %v3040 = vld [vmem:[#allocation2 + $0x38] sm:$0xff]
        %v3041 = vld [vmem:[#allocation2 + $0x40] sm:$0xff]
        %v3042 = vld [vmem:[#allocation2 + $0x48] sm:$0xff]
        %v3043 = vld [vmem:[#allocation2 + $0x50] sm:$0xff]
        %v3044 = vld [vmem:[#allocation2 + $0x58] sm:$0xff]
        %v3045 = vld [vmem:[#allocation2 + $0x60] sm:$0xff]
        %v3046 = vld [vmem:[#allocation2 + $0x68] sm:$0xff]
        %v3047 = vld [vmem:[#allocation2 + $0x70] sm:$0xff]
        %v3048 = vld [vmem:[#allocation2 + $0x78] sm:$0xff]
        %v3049 = vld [vmem:[#allocation2 + $0x80] sm:$0xff]
        %v3050 = vld [vmem:[#allocation2 + $0x88] sm:$0xff]
        %v3051 = vld [vmem:[#allocation2 + $0x90] sm:$0xff]
        %v3052 = vld [vmem:[#allocation2 + $0x98] sm:$0xff]
        %v3053 = vld [vmem:[#allocation2 + $0xa0] sm:$0xff]
        %v3054 = vld [vmem:[#allocation2 + $0xa8] sm:$0xff]
        %v3055 = vld [vmem:[#allocation2 + $0xb0] sm:$0xff]
        %v3056 = vld [vmem:[#allocation2 + $0xb8] sm:$0xff]
        %v3057 = vld [vmem:[#allocation2 + $0xc0] sm:$0xff]
        %v3058 = vld [vmem:[#allocation2 + $0xc8] sm:$0xff]
        %v3059 = vld [vmem:[#allocation2 + $0xd0] sm:$0xff]
        %v3060 = vld [vmem:[#allocation2 + $0xd8] sm:$0xff]
        %v3061 = vld [vmem:[#allocation2 + $0xe0] sm:$0xff]
        %v3062 = vld [vmem:[#allocation2 + $0xe8] sm:$0xff]
        %v3063 = vld [vmem:[#allocation2 + $0xf0] sm:$0xff]
        %v3064 = vld [vmem:[#allocation2 + $0xf8] sm:$0xff]
        %v3065 = vld [vmem:[#allocation2 + $0x100] sm:$0xff]
        %v3066 = vld [vmem:[#allocation2 + $0x108] sm:$0xff]
        %v3067 = vld [vmem:[#allocation2 + $0x110] sm:$0xff]
        %v3068 = vld [vmem:[#allocation2 + $0x118] sm:$0xff]
        %s3069 = scalar_lea.vmem [#allocation4], 192
        %v3070 = vld [vmem:[%s3069] sm:$0xf]
        %v3071 = vld [vmem:[%s3069 + $0x4] sm:$0xf]
        %v3072 = vld [vmem:[%s3069 + $0x8] sm:$0xf]
        %v3073 = vld [vmem:[%s3069 + $0xc] sm:$0xf]
        %v3074 = vld [vmem:[%s3069 + $0x10] sm:$0xf]
        %v3075 = vld [vmem:[%s3069 + $0x14] sm:$0xf]
        %v3076 = vld [vmem:[%s3069 + $0x18] sm:$0xf]
        %v3077 = vld [vmem:[%s3069 + $0x1c] sm:$0xf]
        %v3078 = vld [vmem:[%s3069 + $0x20] sm:$0xf]
        %v3079 = vld [vmem:[%s3069 + $0x24] sm:$0xf]
        %v3080 = vld [vmem:[%s3069 + $0x28] sm:$0xf]
        %v3081 = vld [vmem:[%s3069 + $0x2c] sm:$0xf]
        %v3082 = vld [vmem:[%s3069 + $0x30] sm:$0xf]
        %v3083 = vld [vmem:[%s3069 + $0x34] sm:$0xf]
        %v3084 = vld [vmem:[%s3069 + $0x38] sm:$0xf]
        %v3085 = vld [vmem:[%s3069 + $0x3c] sm:$0xf]
        %v3086 = vld [vmem:[%s3069 + $0x40] sm:$0xf]
        %v3087 = vld [vmem:[%s3069 + $0x44] sm:$0xf]
        %v3088 = vld [vmem:[%s3069 + $0x48] sm:$0xf]
        %v3089 = vld [vmem:[%s3069 + $0x4c] sm:$0xf]
        %v3090 = vld [vmem:[%s3069 + $0x50] sm:$0xf]
        %v3091 = vld [vmem:[%s3069 + $0x54] sm:$0xf]
        %v3092 = vld [vmem:[%s3069 + $0x58] sm:$0xf]
        %v3093 = vld [vmem:[%s3069 + $0x5c] sm:$0xf]
        %v3126 = vunpack.c.l.b16 %v3037
        %v3127 = vunpack.c.h.b16 %v3037
        %v3128 = vunpack.c.l.b16 %v3038
        %v3129 = vunpack.c.h.b16 %v3038
        %v3130 = vunpack.c.l.b16 %v3039
        %v3131 = vunpack.c.h.b16 %v3039
        %v3132 = vunpack.c.l.b16 %v3040
        %v3133 = vunpack.c.h.b16 %v3040
        %v3134 = vunpack.c.l.b16 %v3041
        %v3135 = vunpack.c.h.b16 %v3041
        %v3136 = vunpack.c.l.b16 %v3042
        %v3137 = vunpack.c.h.b16 %v3042
        %v3138 = vunpack.c.l.b16 %v3043
        %v3139 = vunpack.c.h.b16 %v3043
        %v3140 = vunpack.c.l.b16 %v3044
        %v3141 = vunpack.c.h.b16 %v3044
        %v3142 = vunpack.c.l.b16 %v3045
        %v3143 = vunpack.c.h.b16 %v3045
        %v3144 = vunpack.c.l.b16 %v3046
        %v3145 = vunpack.c.h.b16 %v3046
        %v3146 = vunpack.c.l.b16 %v3047
        %v3147 = vunpack.c.h.b16 %v3047
        %v3148 = vunpack.c.l.b16 %v3048
        %v3149 = vunpack.c.h.b16 %v3048
        %v3150 = vunpack.c.l.b16 %v3049
        %v3151 = vunpack.c.h.b16 %v3049
        %v3152 = vunpack.c.l.b16 %v3050
        %v3153 = vunpack.c.h.b16 %v3050
        %v3154 = vunpack.c.l.b16 %v3051
        %v3155 = vunpack.c.h.b16 %v3051
        %v3156 = vunpack.c.l.b16 %v3052
        %v3157 = vunpack.c.h.b16 %v3052
        %v3158 = vunpack.c.l.b16 %v3053
        %v3159 = vunpack.c.h.b16 %v3053
        %v3160 = vunpack.c.l.b16 %v3054
        %v3161 = vunpack.c.h.b16 %v3054
        %v3162 = vunpack.c.l.b16 %v3055
        %v3163 = vunpack.c.h.b16 %v3055
        %v3164 = vunpack.c.l.b16 %v3056
        %v3165 = vunpack.c.h.b16 %v3056
        %v3166 = vunpack.c.l.b16 %v3057
        %v3167 = vunpack.c.h.b16 %v3057
        %v3168 = vunpack.c.l.b16 %v3058
        %v3169 = vunpack.c.h.b16 %v3058
        %v3170 = vunpack.c.l.b16 %v3059
        %v3171 = vunpack.c.h.b16 %v3059
        %v3172 = vunpack.c.l.b16 %v3060
        %v3173 = vunpack.c.h.b16 %v3060
        %v3174 = vunpack.c.l.b16 %v3061
        %v3175 = vunpack.c.h.b16 %v3061
        %v3176 = vunpack.c.l.b16 %v3062
        %v3177 = vunpack.c.h.b16 %v3062
        %v3178 = vunpack.c.l.b16 %v3063
        %v3179 = vunpack.c.h.b16 %v3063
        %v3180 = vunpack.c.l.b16 %v3064
        %v3181 = vunpack.c.h.b16 %v3064
        %v3182 = vunpack.c.l.b16 %v3065
        %v3183 = vunpack.c.h.b16 %v3065
        %v3184 = vunpack.c.l.b16 %v3066
        %v3185 = vunpack.c.h.b16 %v3066
        %v3186 = vunpack.c.l.b16 %v3067
        %v3187 = vunpack.c.h.b16 %v3067
        %v3188 = vunpack.c.l.b16 %v3068
        %v3189 = vunpack.c.h.b16 %v3068
        %v3190 = vpack.c.b16 %v3128, %v3126
        %v3191 = vpack.c.b16 %v3129, %v3127
        %v3192 = vpack.c.b16 %v3132, %v3130
        %v3193 = vpack.c.b16 %v3133, %v3131
        %v3194 = vpack.c.b16 %v3136, %v3134
        %v3195 = vpack.c.b16 %v3137, %v3135
        %v3196 = vpack.c.b16 %v3140, %v3138
        %v3197 = vpack.c.b16 %v3141, %v3139
        %v3198 = vpack.c.b16 %v3144, %v3142
        %v3199 = vpack.c.b16 %v3145, %v3143
        %v3200 = vpack.c.b16 %v3148, %v3146
        %v3201 = vpack.c.b16 %v3149, %v3147
        %v3202 = vpack.c.b16 %v3152, %v3150
        %v3203 = vpack.c.b16 %v3153, %v3151
        %v3204 = vpack.c.b16 %v3156, %v3154
        %v3205 = vpack.c.b16 %v3157, %v3155
        %v3206 = vpack.c.b16 %v3160, %v3158
        %v3207 = vpack.c.b16 %v3161, %v3159
        %v3208 = vpack.c.b16 %v3164, %v3162
        %v3209 = vpack.c.b16 %v3165, %v3163
        %v3210 = vpack.c.b16 %v3168, %v3166
        %v3211 = vpack.c.b16 %v3169, %v3167
        %v3212 = vpack.c.b16 %v3172, %v3170
        %v3213 = vpack.c.b16 %v3173, %v3171
        %v3214 = vpack.c.b16 %v3176, %v3174
        %v3215 = vpack.c.b16 %v3177, %v3175
        %v3216 = vpack.c.b16 %v3180, %v3178
        %v3217 = vpack.c.b16 %v3181, %v3179
        %v3218 = vpack.c.b16 %v3184, %v3182
        %v3219 = vpack.c.b16 %v3185, %v3183
        %v3220 = vpack.c.b16 %v3188, %v3186
        %v3221 = vpack.c.b16 %v3189, %v3187
        %v3262 = vunpack.c.l.b16 %v3070
        %v3263 = vunpack.c.l.b16 %v3071
        %v3264 = vunpack.c.l.b16 %v3072
        %v3265 = vunpack.c.l.b16 %v3073
        %v3266 = vunpack.c.l.b16 %v3074
        %v3267 = vunpack.c.l.b16 %v3075
        %v3268 = vunpack.c.l.b16 %v3076
        %v3269 = vunpack.c.l.b16 %v3077
        %v3270 = vunpack.c.l.b16 %v3078
        %v3271 = vunpack.c.l.b16 %v3079
        %v3272 = vunpack.c.l.b16 %v3080
        %v3273 = vunpack.c.l.b16 %v3081
        %v3274 = vunpack.c.l.b16 %v3082
        %v3275 = vunpack.c.l.b16 %v3083
        %v3276 = vunpack.c.l.b16 %v3084
        %v3277 = vunpack.c.l.b16 %v3085
        %v3278 = vunpack.c.l.b16 %v3086
        %v3279 = vunpack.c.l.b16 %v3087
        %v3280 = vunpack.c.l.b16 %v3088
        %v3281 = vunpack.c.l.b16 %v3089
        %v3282 = vunpack.c.l.b16 %v3090
        %v3283 = vunpack.c.l.b16 %v3091
        %v3284 = vunpack.c.l.b16 %v3092
        %v3285 = vunpack.c.l.b16 %v3093
        %v3286 = vpack.c.b16 %v3263, %v3262
        %v3287 = vpack.c.b16 %v3265, %v3264
        %v3288 = vpack.c.b16 %v3267, %v3266
        %v3289 = vpack.c.b16 %v3269, %v3268
        %v3290 = vpack.c.b16 %v3271, %v3270
        %v3291 = vpack.c.b16 %v3273, %v3272
        %v3292 = vpack.c.b16 %v3275, %v3274
        %v3293 = vpack.c.b16 %v3277, %v3276
        %v3294 = vpack.c.b16 %v3279, %v3278
        %v3295 = vpack.c.b16 %v3281, %v3280
        %v3296 = vpack.c.b16 %v3283, %v3282
        %v3297 = vpack.c.b16 %v3285, %v3284
        %v3311 = vsel %vm1025, %v3191, 0
        %v3314 = vsel %vm1025, %v3193, 0
        %v3317 = vsel %vm1025, %v3195, 0
        %v3320 = vsel %vm1025, %v3197, 0
        %v3323 = vsel %vm1025, %v3199, 0
        %v3326 = vsel %vm1025, %v3201, 0
        %v3329 = vsel %vm1025, %v3203, 0
        %v3332 = vsel %vm1025, %v3205, 0
        %v3335 = vsel %vm1025, %v3207, 0
        %v3338 = vsel %vm1025, %v3209, 0
        %v3341 = vsel %vm1025, %v3211, 0
        %v3344 = vsel %vm1025, %v3213, 0
        %v3347 = vsel %vm1025, %v3215, 0
        %v3350 = vsel %vm1025, %v3217, 0
        %v3353 = vsel %vm1025, %v3219, 0
        %v3356 = vsel %vm1025, %v3221, 0
        %3358 = vmatprep.subr.bf16.mxu0 0
        %3359 = vmatpush1.bf16.msra.mxu0 %v3293
        %3360 = vmatprep.subr.bf16.mxu0 0
        %3361 = vmatpush1.bf16.msra.mxu0 %v3292
        %3362 = vmatprep.subr.bf16.mxu0 0
        %3363 = vmatpush1.bf16.msra.mxu0 %v3291
        %3364 = vmatprep.subr.bf16.mxu0 0
        %3365 = vmatpush1.bf16.msra.mxu0 %v3290
        %3366 = vmatprep.subr.bf16.mxu0 0
        %3367 = vmatpush1.bf16.msra.mxu0 %v3289
        %3368 = vmatprep.subr.bf16.mxu0 0
        %3369 = vmatpush1.bf16.msra.mxu0 %v3288
        %3370 = vmatprep.subr.bf16.mxu0 0
        %3371 = vmatpush1.bf16.msra.mxu0 %v3287
        %3372 = vmatprep.subr.bf16.mxu0 0
        %3373 = vmatpush1.bf16.msra.mxu0 %v3286
        %3374 = vmatprep.subr.bf16.mxu0 0
        %3375 = vmatpush2.bf16.msra.mxu0 0
        %3376 = vmatprep.subr.bf16.mxu0 0
        %3377 = vmatpush2.bf16.msra.mxu0 0
        %3378 = vmatprep.subr.bf16.mxu0 0
        %3379 = vmatpush2.bf16.msra.mxu0 0
        %3380 = vmatprep.subr.bf16.mxu0 0
        %3381 = vmatpush2.bf16.msra.mxu0 0
        %3382 = vmatprep.subr.bf16.mxu0 0
        %3383 = vmatpush2.bf16.msra.mxu0 %v3297
        %3384 = vmatprep.subr.bf16.mxu0 0
        %3385 = vmatpush2.bf16.msra.mxu0 %v3296
        %3386 = vmatprep.subr.bf16.mxu0 0
        %3387 = vmatpush2.bf16.msra.mxu0 %v3295
        %3388 = vmatprep.subr.bf16.mxu0 0
        %3389 = vmatpush2.bf16.msra.mxu0 %v3294
        %3390 = vmatprep.mubr.bf16.mxu0 %v3311
        %3391 = vmatmul.mubr.bf16.gmra.mxu0 %v3190
        %v3392 = vpop.f32.mrf.mxu0
        %v3393 = vadd.f32 0.0, %v3392
        %v3394 = vpop.f32.mrf.mxu0
        %v3395 = vpop.f32.mrf.mxu0
        %v3396 = vadd.f32 0.0, %v3395
        %v3397 = vpop.f32.mrf.mxu0
        %3398 = vmatprep.mubr.bf16.mxu0 %v3314
        %3399 = vmatmul.mubr.bf16.gmra.mxu0 %v3192
        %v3400 = vpop.f32.mrf.mxu0
        %v3401 = vadd.f32 0.0, %v3400
        %v3402 = vpop.f32.mrf.mxu0
        %v3403 = vpop.f32.mrf.mxu0
        %v3404 = vadd.f32 0.0, %v3403
        %v3405 = vpop.f32.mrf.mxu0
        %3406 = vmatprep.mubr.bf16.mxu0 %v3317
        %3407 = vmatmul.mubr.bf16.gmra.mxu0 %v3194
        %v3408 = vpop.f32.mrf.mxu0
        %v3409 = vadd.f32 0.0, %v3408
        %v3410 = vpop.f32.mrf.mxu0
        %v3411 = vpop.f32.mrf.mxu0
        %v3412 = vadd.f32 0.0, %v3411
        %v3413 = vpop.f32.mrf.mxu0
        %3414 = vmatprep.mubr.bf16.mxu0 %v3320
        %3415 = vmatmul.mubr.bf16.gmra.mxu0 %v3196
        %v3416 = vpop.f32.mrf.mxu0
        %v3417 = vadd.f32 0.0, %v3416
        %v3418 = vpop.f32.mrf.mxu0
        %v3419 = vpop.f32.mrf.mxu0
        %v3420 = vadd.f32 0.0, %v3419
        %v3421 = vpop.f32.mrf.mxu0
        %3422 = vmatprep.mubr.bf16.mxu0 %v3323
        %3423 = vmatmul.mubr.bf16.gmra.mxu0 %v3198
        %v3424 = vpop.f32.mrf.mxu0
        %v3425 = vadd.f32 0.0, %v3424
        %v3426 = vpop.f32.mrf.mxu0
        %v3427 = vpop.f32.mrf.mxu0
        %v3428 = vadd.f32 0.0, %v3427
        %v3429 = vpop.f32.mrf.mxu0
        %3430 = vmatprep.mubr.bf16.mxu0 %v3326
        %3431 = vmatmul.mubr.bf16.gmra.mxu0 %v3200
        %v3432 = vpop.f32.mrf.mxu0
        %v3433 = vadd.f32 0.0, %v3432
        %v3434 = vpop.f32.mrf.mxu0
        %v3435 = vpop.f32.mrf.mxu0
        %v3436 = vadd.f32 0.0, %v3435
        %v3437 = vpop.f32.mrf.mxu0
        %3438 = vmatprep.mubr.bf16.mxu0 %v3329
        %3439 = vmatmul.mubr.bf16.gmra.mxu0 %v3202
        %v3440 = vpop.f32.mrf.mxu0
        %v3441 = vadd.f32 0.0, %v3440
        %v3442 = vpop.f32.mrf.mxu0
        %v3443 = vpop.f32.mrf.mxu0
        %v3444 = vadd.f32 0.0, %v3443
        %v3445 = vpop.f32.mrf.mxu0
        %3446 = vmatprep.mubr.bf16.mxu0 %v3332
        %3447 = vmatmul.mubr.bf16.gmra.mxu0 %v3204
        %v3448 = vpop.f32.mrf.mxu0
        %v3449 = vadd.f32 0.0, %v3448
        %v3450 = vpop.f32.mrf.mxu0
        %v3451 = vpop.f32.mrf.mxu0
        %v3452 = vadd.f32 0.0, %v3451
        %v3453 = vpop.f32.mrf.mxu0
        %3454 = vmatprep.mubr.bf16.mxu0 %v3335
        %3455 = vmatmul.mubr.bf16.gmra.mxu0 %v3206
        %v3456 = vpop.f32.mrf.mxu0
        %v3457 = vadd.f32 0.0, %v3456
        %v3458 = vpop.f32.mrf.mxu0
        %v3459 = vpop.f32.mrf.mxu0
        %v3460 = vadd.f32 0.0, %v3459
        %v3461 = vpop.f32.mrf.mxu0
        %3462 = vmatprep.mubr.bf16.mxu0 %v3338
        %3463 = vmatmul.mubr.bf16.gmra.mxu0 %v3208
        %v3464 = vpop.f32.mrf.mxu0
        %v3465 = vadd.f32 0.0, %v3464
        %v3466 = vpop.f32.mrf.mxu0
        %v3467 = vpop.f32.mrf.mxu0
        %v3468 = vadd.f32 0.0, %v3467
        %v3469 = vpop.f32.mrf.mxu0
        %3470 = vmatprep.mubr.bf16.mxu0 %v3341
        %3471 = vmatmul.mubr.bf16.gmra.mxu0 %v3210
        %v3472 = vpop.f32.mrf.mxu0
        %v3473 = vadd.f32 0.0, %v3472
        %v3474 = vpop.f32.mrf.mxu0
        %v3475 = vpop.f32.mrf.mxu0
        %v3476 = vadd.f32 0.0, %v3475
        %v3477 = vpop.f32.mrf.mxu0
        %3478 = vmatprep.mubr.bf16.mxu0 %v3344
        %3479 = vmatmul.mubr.bf16.gmra.mxu0 %v3212
        %v3480 = vpop.f32.mrf.mxu0
        %v3481 = vadd.f32 0.0, %v3480
        %v3482 = vpop.f32.mrf.mxu0
        %v3483 = vpop.f32.mrf.mxu0
        %v3484 = vadd.f32 0.0, %v3483
        %v3485 = vpop.f32.mrf.mxu0
        %3486 = vmatprep.mubr.bf16.mxu0 %v3347
        %3487 = vmatmul.mubr.bf16.gmra.mxu0 %v3214
        %v3488 = vpop.f32.mrf.mxu0
        %v3489 = vadd.f32 0.0, %v3488
        %v3490 = vpop.f32.mrf.mxu0
        %v3491 = vpop.f32.mrf.mxu0
        %v3492 = vadd.f32 0.0, %v3491
        %v3493 = vpop.f32.mrf.mxu0
        %3494 = vmatprep.mubr.bf16.mxu0 %v3350
        %3495 = vmatmul.mubr.bf16.gmra.mxu0 %v3216
        %v3496 = vpop.f32.mrf.mxu0
        %v3497 = vadd.f32 0.0, %v3496
        %v3498 = vpop.f32.mrf.mxu0
        %v3499 = vpop.f32.mrf.mxu0
        %v3500 = vadd.f32 0.0, %v3499
        %v3501 = vpop.f32.mrf.mxu0
        %3502 = vmatprep.mubr.bf16.mxu0 %v3353
        %3503 = vmatmul.mubr.bf16.gmra.mxu0 %v3218
        %v3504 = vpop.f32.mrf.mxu0
        %v3505 = vadd.f32 0.0, %v3504
        %v3506 = vpop.f32.mrf.mxu0
        %v3507 = vpop.f32.mrf.mxu0
        %v3508 = vadd.f32 0.0, %v3507
        %v3509 = vpop.f32.mrf.mxu0
        %3510 = vmatprep.mubr.bf16.mxu0 %v3356
        %3511 = vmatmul.mubr.bf16.gmra.mxu0 %v3220
        %v3512 = vpop.f32.mrf.mxu0
        %v3513 = vadd.f32 0.0, %v3512
        %v3514 = vpop.f32.mrf.mxu0
        %v3515 = vpop.f32.mrf.mxu0
        %v3516 = vadd.f32 0.0, %v3515
        %v3517 = vpop.f32.mrf.mxu0
        %3518 = vdwg.mxu0
        %v3519 = vadd.f32 %v2911, %v3393
        %v3520 = vadd.f32 %v2914, %v3396
        %v3521 = vadd.f32 %v2919, %v3401
        %v3522 = vadd.f32 %v2922, %v3404
        %v3523 = vadd.f32 %v2927, %v3409
        %v3524 = vadd.f32 %v2930, %v3412
        %v3525 = vadd.f32 %v2935, %v3417
        %v3526 = vadd.f32 %v2938, %v3420
        %v3527 = vadd.f32 %v2943, %v3425
        %v3528 = vadd.f32 %v2946, %v3428
        %v3529 = vadd.f32 %v2951, %v3433
        %v3530 = vadd.f32 %v2954, %v3436
        %v3531 = vadd.f32 %v2959, %v3441
        %v3532 = vadd.f32 %v2962, %v3444
        %v3533 = vadd.f32 %v2967, %v3449
        %v3534 = vadd.f32 %v2970, %v3452
        %v3535 = vadd.f32 %v2975, %v3457
        %v3536 = vadd.f32 %v2978, %v3460
        %v3537 = vadd.f32 %v2983, %v3465
        %v3538 = vadd.f32 %v2986, %v3468
        %v3539 = vadd.f32 %v2991, %v3473
        %v3540 = vadd.f32 %v2994, %v3476
        %v3541 = vadd.f32 %v2999, %v3481
        %v3542 = vadd.f32 %v3002, %v3484
        %v3543 = vadd.f32 %v3007, %v3489
        %v3544 = vadd.f32 %v3010, %v3492
        %v3545 = vadd.f32 %v3015, %v3497
        %v3546 = vadd.f32 %v3018, %v3500
        %v3547 = vadd.f32 %v3023, %v3505
        %v3548 = vadd.f32 %v3026, %v3508
        %v3549 = vadd.f32 %v3031, %v3513
        %v3550 = vadd.f32 %v3034, %v3516
        %v3552 = vlaneseq
        %v3553 = vshrl.u32 %v3552, 7
        %v3554 = vsub.s32 0, %v3553
        %v3555 = vrot.slane %v1618, %v3554
        %v3557 = vadd.f32 %v3519, %v3555
        %v3558 = vadd.f32 %v3520, %v3555
        %v3559 = vadd.f32 %v3521, %v3555
        %v3560 = vadd.f32 %v3522, %v3555
        %v3561 = vadd.f32 %v3523, %v3555
        %v3562 = vadd.f32 %v3524, %v3555
        %v3563 = vadd.f32 %v3525, %v3555
        %v3564 = vadd.f32 %v3526, %v3555
        %v3565 = vadd.f32 %v3527, %v3555
        %v3566 = vadd.f32 %v3528, %v3555
        %v3567 = vadd.f32 %v3529, %v3555
        %v3568 = vadd.f32 %v3530, %v3555
        %v3569 = vadd.f32 %v3531, %v3555
        %v3570 = vadd.f32 %v3532, %v3555
        %v3571 = vadd.f32 %v3533, %v3555
        %v3572 = vadd.f32 %v3534, %v3555
        %v3573 = vadd.f32 %v3535, %v3555
        %v3574 = vadd.f32 %v3536, %v3555
        %v3575 = vadd.f32 %v3537, %v3555
        %v3576 = vadd.f32 %v3538, %v3555
        %v3577 = vadd.f32 %v3539, %v3555
        %v3578 = vadd.f32 %v3540, %v3555
        %v3579 = vadd.f32 %v3541, %v3555
        %v3580 = vadd.f32 %v3542, %v3555
        %v3581 = vadd.f32 %v3543, %v3555
        %v3582 = vadd.f32 %v3544, %v3555
        %v3583 = vadd.f32 %v3545, %v3555
        %v3584 = vadd.f32 %v3546, %v3555
        %v3585 = vadd.f32 %v3547, %v3555
        %v3586 = vadd.f32 %v3548, %v3555
        %v3587 = vadd.f32 %v3549, %v3555
        %v3588 = vadd.f32 %v3550, %v3555
        %v3589 = vld [vmem:[%s7] sm:$0x1]
        %v3590 = vld [vmem:[%s8] sm:$0x1]
        %v3591 = vld [vmem:[%s1] sm:$0xff]
        %v3592 = vld [vmem:[%s1 + $0x8] sm:$0xff]
        %v3593 = vld [vmem:[%s1 + $0x10] sm:$0xff]
        %v3594 = vld [vmem:[%s1 + $0x18] sm:$0xff]
        %v3595 = vld [vmem:[%s1 + $0x20] sm:$0xff]
        %v3596 = vld [vmem:[%s1 + $0x28] sm:$0xff]
        %v3597 = vld [vmem:[%s1 + $0x30] sm:$0xff]
        %v3598 = vld [vmem:[%s1 + $0x38] sm:$0xff]
        %v3599 = vld [vmem:[%s1 + $0x40] sm:$0xff]
        %v3600 = vld [vmem:[%s1 + $0x48] sm:$0xff]
        %v3601 = vld [vmem:[%s1 + $0x50] sm:$0xff]
        %v3602 = vld [vmem:[%s1 + $0x58] sm:$0xff]
        %v3603 = vld [vmem:[%s1 + $0x60] sm:$0xff]
        %v3604 = vld [vmem:[%s1 + $0x68] sm:$0xff]
        %v3605 = vld [vmem:[%s1 + $0x70] sm:$0xff]
        %v3606 = vld [vmem:[%s1 + $0x78] sm:$0xff]
        %v3607 = vadd.f32 %v3557, %v3558
        %v3608 = vadd.f32 %v3607, %v3559
        %v3609 = vadd.f32 %v3608, %v3560
        %v3610 = vadd.f32 %v3609, %v3561
        %v3611 = vadd.f32 %v3610, %v3562
        %v3612 = vadd.f32 %v3611, %v3563
        %v3613 = vadd.f32 %v3612, %v3564
        %v3614 = vadd.f32 %v3613, %v3565
        %v3615 = vadd.f32 %v3614, %v3566
        %v3616 = vadd.f32 %v3615, %v3567
        %v3617 = vadd.f32 %v3616, %v3568
        %v3618 = vadd.f32 %v3617, %v3569
        %v3619 = vadd.f32 %v3618, %v3570
        %v3620 = vadd.f32 %v3619, %v3571
        %v3621 = vadd.f32 %v3620, %v3572
        %v3622 = vadd.f32 %v3621, %v3573
        %v3623 = vadd.f32 %v3622, %v3574
        %v3624 = vadd.f32 %v3623, %v3575
        %v3625 = vadd.f32 %v3624, %v3576
        %v3626 = vadd.f32 %v3625, %v3577
        %v3627 = vadd.f32 %v3626, %v3578
        %v3628 = vadd.f32 %v3627, %v3579
        %v3629 = vadd.f32 %v3628, %v3580
        %v3630 = vadd.f32 %v3629, %v3581
        %v3631 = vadd.f32 %v3630, %v3582
        %v3632 = vadd.f32 %v3631, %v3583
        %v3633 = vadd.f32 %v3632, %v3584
        %v3634 = vadd.f32 %v3633, %v3585
        %v3635 = vadd.f32 %v3634, %v3586
        %v3636 = vadd.f32 %v3635, %v3587
        %v3637 = vadd.f32 %v3636, %v3588
        %v3638 = vrot.slane %v3637, 4
        %v3639 = vadd.f32 %v3637, %v3638
        %v3640 = vrot.slane %v3639, 2
        %v3641 = vadd.f32 %v3639, %v3640
        %v3642 = vrot.slane %v3641, 1
        %v3643 = vadd.f32 %v3641, %v3642
        %v3644 = vmul.f32 %v3557, %v3557
        %v3645 = vmul.f32 %v3558, %v3558
        %v3646 = vmul.f32 %v3559, %v3559
        %v3647 = vmul.f32 %v3560, %v3560
        %v3648 = vmul.f32 %v3561, %v3561
        %v3649 = vmul.f32 %v3562, %v3562
        %v3650 = vmul.f32 %v3563, %v3563
        %v3651 = vmul.f32 %v3564, %v3564
        %v3652 = vmul.f32 %v3565, %v3565
        %v3653 = vmul.f32 %v3566, %v3566
        %v3654 = vmul.f32 %v3567, %v3567
        %v3655 = vmul.f32 %v3568, %v3568
        %v3656 = vmul.f32 %v3569, %v3569
        %v3657 = vmul.f32 %v3570, %v3570
        %v3658 = vmul.f32 %v3571, %v3571
        %v3659 = vmul.f32 %v3572, %v3572
        %v3660 = vmul.f32 %v3573, %v3573
        %v3661 = vmul.f32 %v3574, %v3574
        %v3662 = vmul.f32 %v3575, %v3575
        %v3663 = vmul.f32 %v3576, %v3576
        %v3664 = vmul.f32 %v3577, %v3577
        %v3665 = vmul.f32 %v3578, %v3578
        %v3666 = vmul.f32 %v3579, %v3579
        %v3667 = vmul.f32 %v3580, %v3580
        %v3668 = vmul.f32 %v3581, %v3581
        %v3669 = vmul.f32 %v3582, %v3582
        %v3670 = vmul.f32 %v3583, %v3583
        %v3671 = vmul.f32 %v3584, %v3584
        %v3672 = vmul.f32 %v3585, %v3585
        %v3673 = vmul.f32 %v3586, %v3586
        %v3674 = vmul.f32 %v3587, %v3587
        %v3675 = vmul.f32 %v3588, %v3588
        %v3676 = vadd.f32 %v3644, %v3645
        %v3677 = vadd.f32 %v3676, %v3646
        %v3678 = vadd.f32 %v3677, %v3647
        %v3679 = vadd.f32 %v3678, %v3648
        %v3680 = vadd.f32 %v3679, %v3649
        %v3681 = vadd.f32 %v3680, %v3650
        %v3682 = vadd.f32 %v3681, %v3651
        %v3683 = vadd.f32 %v3682, %v3652
        %v3684 = vadd.f32 %v3683, %v3653
        %v3685 = vadd.f32 %v3684, %v3654
        %v3686 = vadd.f32 %v3685, %v3655
        %v3687 = vadd.f32 %v3686, %v3656
        %v3688 = vadd.f32 %v3687, %v3657
        %v3689 = vadd.f32 %v3688, %v3658
        %v3690 = vadd.f32 %v3689, %v3659
        %v3691 = vadd.f32 %v3690, %v3660
        %v3692 = vadd.f32 %v3691, %v3661
        %v3693 = vadd.f32 %v3692, %v3662
        %v3694 = vadd.f32 %v3693, %v3663
        %v3695 = vadd.f32 %v3694, %v3664
        %v3696 = vadd.f32 %v3695, %v3665
        %v3697 = vadd.f32 %v3696, %v3666
        %v3698 = vadd.f32 %v3697, %v3667
        %v3699 = vadd.f32 %v3698, %v3668
        %v3700 = vadd.f32 %v3699, %v3669
        %v3701 = vadd.f32 %v3700, %v3670
        %v3702 = vadd.f32 %v3701, %v3671
        %v3703 = vadd.f32 %v3702, %v3672
        %v3704 = vadd.f32 %v3703, %v3673
        %v3705 = vadd.f32 %v3704, %v3674
        %v3706 = vadd.f32 %v3705, %v3675
        %v3707 = vrot.slane %v3706, 4
        %v3708 = vadd.f32 %v3706, %v3707
        %v3709 = vrot.slane %v3708, 2
        %v3710 = vadd.f32 %v3708, %v3709
        %v3711 = vrot.slane %v3710, 1
        %v3712 = vadd.f32 %v3710, %v3711
        %3713 = vmatprep.subr.mxu0 0.0
        %3714 = vmatpush1.msra.mxu0 %v3606
        %3715 = vmatprep.subr.mxu0 0.0
        %3716 = vmatpush1.msra.mxu0 %v3605
        %3717 = vmatprep.subr.mxu0 0.0
        %3718 = vmatpush1.msra.mxu0 %v3604
        %3719 = vmatprep.subr.mxu0 0.0
        %3720 = vmatpush1.msra.mxu0 %v3603
        %3721 = vmatprep.subr.mxu0 0.0
        %3722 = vmatpush1.msra.mxu0 %v3602
        %3723 = vmatprep.subr.mxu0 0.0
        %3724 = vmatpush1.msra.mxu0 %v3601
        %3725 = vmatprep.subr.mxu0 0.0
        %3726 = vmatpush1.msra.mxu0 %v3600
        %3727 = vmatprep.subr.mxu0 0.0
        %3728 = vmatpush1.msra.mxu0 %v3599
        %3729 = vmatprep.subr.mxu0 0.0
        %3730 = vmatpush1.msra.mxu0 %v3598
        %3731 = vmatprep.subr.mxu0 0.0
        %3732 = vmatpush1.msra.mxu0 %v3597
        %3733 = vmatprep.subr.mxu0 0.0
        %3734 = vmatpush1.msra.mxu0 %v3596
        %3735 = vmatprep.subr.mxu0 0.0
        %3736 = vmatpush1.msra.mxu0 %v3595
        %3737 = vmatprep.subr.mxu0 0.0
        %3738 = vmatpush1.msra.mxu0 %v3594
        %3739 = vmatprep.subr.mxu0 0.0
        %3740 = vmatpush1.msra.mxu0 %v3593
        %3741 = vmatprep.subr.mxu0 0.0
        %3742 = vmatpush1.msra.mxu0 %v3592
        %3743 = vmatprep.subr.mxu0 0.0
        %3744 = vmatpush1.msra.mxu0 %v3591
        %3745 = vmatprep.subr.mxu0 0.0
        %3746 = vmatpush2.msra.mxu0 0.0
        %3747 = vmatprep.subr.mxu0 0.0
        %3748 = vmatpush2.msra.mxu0 0.0
        %3749 = vmatprep.subr.mxu0 0.0
        %3750 = vmatpush2.msra.mxu0 0.0
        %3751 = vmatprep.subr.mxu0 0.0
        %3752 = vmatpush2.msra.mxu0 0.0
        %3753 = vmatprep.subr.mxu0 0.0
        %3754 = vmatpush2.msra.mxu0 0.0
        %3755 = vmatprep.subr.mxu0 0.0
        %3756 = vmatpush2.msra.mxu0 0.0
        %3757 = vmatprep.subr.mxu0 0.0
        %3758 = vmatpush2.msra.mxu0 0.0
        %3759 = vmatprep.subr.mxu0 0.0
        %3760 = vmatpush2.msra.mxu0 0.0
        %3761 = vmatprep.subr.mxu0 0.0
        %3762 = vmatpush2.msra.mxu0 0.0
        %3763 = vmatprep.subr.mxu0 0.0
        %3764 = vmatpush2.msra.mxu0 0.0
        %3765 = vmatprep.subr.mxu0 0.0
        %3766 = vmatpush2.msra.mxu0 0.0
        %3767 = vmatprep.subr.mxu0 0.0
        %3768 = vmatpush2.msra.mxu0 0.0
        %3769 = vmatprep.subr.mxu0 0.0
        %3770 = vmatpush2.msra.mxu0 0.0
        %3771 = vmatprep.subr.mxu0 0.0
        %3772 = vmatpush2.msra.mxu0 0.0
        %3773 = vmatprep.subr.mxu0 0.0
        %3774 = vmatpush2.msra.mxu0 0.0
        %3775 = vmatprep.subr.mxu0 0.0
        %3776 = vmatpush2.msra.mxu0 0.0
        %3777 = vmatprep.mubr.f32.mxu0 0.0
        %3778 = vmatmul.mubr.f32.gmra.mxu0 %v3643
        %v3779 = vpop.f32.mrf.mxu0
        %v3780 = vadd.f32 0.0, %v3779
        %v3781 = vpop.f32.mrf.mxu0
        %3782 = vdwg.mxu0
        %3783 = vmatprep.subr.mxu0 0.0
        %3784 = vmatpush1.msra.mxu0 %v3606
        %3785 = vmatprep.subr.mxu0 0.0
        %3786 = vmatpush1.msra.mxu0 %v3605
        %3787 = vmatprep.subr.mxu0 0.0
        %3788 = vmatpush1.msra.mxu0 %v3604
        %3789 = vmatprep.subr.mxu0 0.0
        %3790 = vmatpush1.msra.mxu0 %v3603
        %3791 = vmatprep.subr.mxu0 0.0
        %3792 = vmatpush1.msra.mxu0 %v3602
        %3793 = vmatprep.subr.mxu0 0.0
        %3794 = vmatpush1.msra.mxu0 %v3601
        %3795 = vmatprep.subr.mxu0 0.0
        %3796 = vmatpush1.msra.mxu0 %v3600
        %3797 = vmatprep.subr.mxu0 0.0
        %3798 = vmatpush1.msra.mxu0 %v3599
        %3799 = vmatprep.subr.mxu0 0.0
        %3800 = vmatpush1.msra.mxu0 %v3598
        %3801 = vmatprep.subr.mxu0 0.0
        %3802 = vmatpush1.msra.mxu0 %v3597
        %3803 = vmatprep.subr.mxu0 0.0
        %3804 = vmatpush1.msra.mxu0 %v3596
        %3805 = vmatprep.subr.mxu0 0.0
        %3806 = vmatpush1.msra.mxu0 %v3595
        %3807 = vmatprep.subr.mxu0 0.0
        %3808 = vmatpush1.msra.mxu0 %v3594
        %3809 = vmatprep.subr.mxu0 0.0
        %3810 = vmatpush1.msra.mxu0 %v3593
        %3811 = vmatprep.subr.mxu0 0.0
        %3812 = vmatpush1.msra.mxu0 %v3592
        %3813 = vmatprep.subr.mxu0 0.0
        %3814 = vmatpush1.msra.mxu0 %v3591
        %3815 = vmatprep.subr.mxu0 0.0
        %3816 = vmatpush2.msra.mxu0 0.0
        %3817 = vmatprep.subr.mxu0 0.0
        %3818 = vmatpush2.msra.mxu0 0.0
        %3819 = vmatprep.subr.mxu0 0.0
        %3820 = vmatpush2.msra.mxu0 0.0
        %3821 = vmatprep.subr.mxu0 0.0
        %3822 = vmatpush2.msra.mxu0 0.0
        %3823 = vmatprep.subr.mxu0 0.0
        %3824 = vmatpush2.msra.mxu0 0.0
        %3825 = vmatprep.subr.mxu0 0.0
        %3826 = vmatpush2.msra.mxu0 0.0
        %3827 = vmatprep.subr.mxu0 0.0
        %3828 = vmatpush2.msra.mxu0 0.0
        %3829 = vmatprep.subr.mxu0 0.0
        %3830 = vmatpush2.msra.mxu0 0.0
        %3831 = vmatprep.subr.mxu0 0.0
        %3832 = vmatpush2.msra.mxu0 0.0
        %3833 = vmatprep.subr.mxu0 0.0
        %3834 = vmatpush2.msra.mxu0 0.0
        %3835 = vmatprep.subr.mxu0 0.0
        %3836 = vmatpush2.msra.mxu0 0.0
        %3837 = vmatprep.subr.mxu0 0.0
        %3838 = vmatpush2.msra.mxu0 0.0
        %3839 = vmatprep.subr.mxu0 0.0
        %3840 = vmatpush2.msra.mxu0 0.0
        %3841 = vmatprep.subr.mxu0 0.0
        %3842 = vmatpush2.msra.mxu0 0.0
        %3843 = vmatprep.subr.mxu0 0.0
        %3844 = vmatpush2.msra.mxu0 0.0
        %3845 = vmatprep.subr.mxu0 0.0
        %3846 = vmatpush2.msra.mxu0 0.0
        %3847 = vmatprep.mubr.f32.mxu0 0.0
        %3848 = vmatmul.mubr.f32.gmra.mxu0 %v3712
        %v3849 = vpop.f32.mrf.mxu0
        %v3850 = vadd.f32 0.0, %v3849
        %v3851 = vpop.f32.mrf.mxu0
        %3852 = vdwg.mxu0
        %v3853 = vmul.f32 %v3780, %v3780
        %v3854 = vsub.f32 %v3850, %v3853
        %v3855 = vmax.f32 %v3854, 0.0
        %v3856 = vadd.f32 %v3855, 1e-05
        %v3857 = vrsqrt.pop %v3856
        %v3858 = vlaneseq
        %v3859 = vshrl.u32 %v3858, 7
        %v3860 = vsub.s32 0, %v3859
        %v3861 = vrot.slane %v3780, %v3860
        %v3862 = vsub.f32 %v3557, %v3861
        %v3863 = vsub.f32 %v3558, %v3861
        %v3864 = vsub.f32 %v3559, %v3861
        %v3865 = vsub.f32 %v3560, %v3861
        %v3866 = vsub.f32 %v3561, %v3861
        %v3867 = vsub.f32 %v3562, %v3861
        %v3868 = vsub.f32 %v3563, %v3861
        %v3869 = vsub.f32 %v3564, %v3861
        %v3870 = vsub.f32 %v3565, %v3861
        %v3871 = vsub.f32 %v3566, %v3861
        %v3872 = vsub.f32 %v3567, %v3861
        %v3873 = vsub.f32 %v3568, %v3861
        %v3874 = vsub.f32 %v3569, %v3861
        %v3875 = vsub.f32 %v3570, %v3861
        %v3876 = vsub.f32 %v3571, %v3861
        %v3877 = vsub.f32 %v3572, %v3861
        %v3878 = vsub.f32 %v3573, %v3861
        %v3879 = vsub.f32 %v3574, %v3861
        %v3880 = vsub.f32 %v3575, %v3861
        %v3881 = vsub.f32 %v3576, %v3861
        %v3882 = vsub.f32 %v3577, %v3861
        %v3883 = vsub.f32 %v3578, %v3861
        %v3884 = vsub.f32 %v3579, %v3861
        %v3885 = vsub.f32 %v3580, %v3861
        %v3886 = vsub.f32 %v3581, %v3861
        %v3887 = vsub.f32 %v3582, %v3861
        %v3888 = vsub.f32 %v3583, %v3861
        %v3889 = vsub.f32 %v3584, %v3861
        %v3890 = vsub.f32 %v3585, %v3861
        %v3891 = vsub.f32 %v3586, %v3861
        %v3892 = vsub.f32 %v3587, %v3861
        %v3893 = vsub.f32 %v3588, %v3861
        %v3894 = vmul.f32 %v3857, %v3589
        %v3895 = vlaneseq
        %v3896 = vshrl.u32 %v3895, 7
        %v3897 = vsub.s32 0, %v3896
        %v3898 = vrot.slane %v3894, %v3897
        %v3899 = vmul.f32 %v3862, %v3898
        %v3900 = vmul.f32 %v3863, %v3898
        %v3901 = vmul.f32 %v3864, %v3898
        %v3902 = vmul.f32 %v3865, %v3898
        %v3903 = vmul.f32 %v3866, %v3898
        %v3904 = vmul.f32 %v3867, %v3898
        %v3905 = vmul.f32 %v3868, %v3898
        %v3906 = vmul.f32 %v3869, %v3898
        %v3907 = vmul.f32 %v3870, %v3898
        %v3908 = vmul.f32 %v3871, %v3898
        %v3909 = vmul.f32 %v3872, %v3898
        %v3910 = vmul.f32 %v3873, %v3898
        %v3911 = vmul.f32 %v3874, %v3898
        %v3912 = vmul.f32 %v3875, %v3898
        %v3913 = vmul.f32 %v3876, %v3898
        %v3914 = vmul.f32 %v3877, %v3898
        %v3915 = vmul.f32 %v3878, %v3898
        %v3916 = vmul.f32 %v3879, %v3898
        %v3917 = vmul.f32 %v3880, %v3898
        %v3918 = vmul.f32 %v3881, %v3898
        %v3919 = vmul.f32 %v3882, %v3898
        %v3920 = vmul.f32 %v3883, %v3898
        %v3921 = vmul.f32 %v3884, %v3898
        %v3922 = vmul.f32 %v3885, %v3898
        %v3923 = vmul.f32 %v3886, %v3898
        %v3924 = vmul.f32 %v3887, %v3898
        %v3925 = vmul.f32 %v3888, %v3898
        %v3926 = vmul.f32 %v3889, %v3898
        %v3927 = vmul.f32 %v3890, %v3898
        %v3928 = vmul.f32 %v3891, %v3898
        %v3929 = vmul.f32 %v3892, %v3898
        %v3930 = vmul.f32 %v3893, %v3898
        %v3932 = vlaneseq
        %v3933 = vshrl.u32 %v3932, 7
        %v3934 = vsub.s32 0, %v3933
        %v3935 = vrot.slane %v3590, %v3934
        %v3937 = vadd.f32 %v3899, %v3935
        %v3938 = vadd.f32 %v3900, %v3935
        %v3939 = vadd.f32 %v3901, %v3935
        %v3940 = vadd.f32 %v3902, %v3935
        %v3941 = vadd.f32 %v3903, %v3935
        %v3942 = vadd.f32 %v3904, %v3935
        %v3943 = vadd.f32 %v3905, %v3935
        %v3944 = vadd.f32 %v3906, %v3935
        %v3945 = vadd.f32 %v3907, %v3935
        %v3946 = vadd.f32 %v3908, %v3935
        %v3947 = vadd.f32 %v3909, %v3935
        %v3948 = vadd.f32 %v3910, %v3935
        %v3949 = vadd.f32 %v3911, %v3935
        %v3950 = vadd.f32 %v3912, %v3935
        %v3951 = vadd.f32 %v3913, %v3935
        %v3952 = vadd.f32 %v3914, %v3935
        %v3953 = vadd.f32 %v3915, %v3935
        %v3954 = vadd.f32 %v3916, %v3935
        %v3955 = vadd.f32 %v3917, %v3935
        %v3956 = vadd.f32 %v3918, %v3935
        %v3957 = vadd.f32 %v3919, %v3935
        %v3958 = vadd.f32 %v3920, %v3935
        %v3959 = vadd.f32 %v3921, %v3935
        %v3960 = vadd.f32 %v3922, %v3935
        %v3961 = vadd.f32 %v3923, %v3935
        %v3962 = vadd.f32 %v3924, %v3935
        %v3963 = vadd.f32 %v3925, %v3935
        %v3964 = vadd.f32 %v3926, %v3935
        %v3965 = vadd.f32 %v3927, %v3935
        %v3966 = vadd.f32 %v3928, %v3935
        %v3967 = vadd.f32 %v3929, %v3935
        %v3968 = vadd.f32 %v3930, %v3935
        %v3969 = vmul.f32 %v3937, 0.5
        %v3970 = vmul.f32 %v3938, 0.5
        %v3971 = vmul.f32 %v3939, 0.5
        %v3972 = vmul.f32 %v3940, 0.5
        %v3973 = vmul.f32 %v3941, 0.5
        %v3974 = vmul.f32 %v3942, 0.5
        %v3975 = vmul.f32 %v3943, 0.5
        %v3976 = vmul.f32 %v3944, 0.5
        %v3977 = vmul.f32 %v3945, 0.5
        %v3978 = vmul.f32 %v3946, 0.5
        %v3979 = vmul.f32 %v3947, 0.5
        %v3980 = vmul.f32 %v3948, 0.5
        %v3981 = vmul.f32 %v3949, 0.5
        %v3982 = vmul.f32 %v3950, 0.5
        %v3983 = vmul.f32 %v3951, 0.5
        %v3984 = vmul.f32 %v3952, 0.5
        %v3985 = vmul.f32 %v3953, 0.5
        %v3986 = vmul.f32 %v3954, 0.5
        %v3987 = vmul.f32 %v3955, 0.5
        %v3988 = vmul.f32 %v3956, 0.5
        %v3989 = vmul.f32 %v3957, 0.5
        %v3990 = vmul.f32 %v3958, 0.5
        %v3991 = vmul.f32 %v3959, 0.5
        %v3992 = vmul.f32 %v3960, 0.5
        %v3993 = vmul.f32 %v3961, 0.5
        %v3994 = vmul.f32 %v3962, 0.5
        %v3995 = vmul.f32 %v3963, 0.5
        %v3996 = vmul.f32 %v3964, 0.5
        %v3997 = vmul.f32 %v3965, 0.5
        %v3998 = vmul.f32 %v3966, 0.5
        %v3999 = vmul.f32 %v3967, 0.5
        %v4000 = vmul.f32 %v3968, 0.5
        %v4001 = vtanh.pop %v3969
        %v4002 = vtanh.pop %v3970
        %v4003 = vtanh.pop %v3971
        %v4004 = vtanh.pop %v3972
        %v4005 = vtanh.pop %v3973
        %v4006 = vtanh.pop %v3974
        %v4007 = vtanh.pop %v3975
        %v4008 = vtanh.pop %v3976
        %v4009 = vtanh.pop %v3977
        %v4010 = vtanh.pop %v3978
        %v4011 = vtanh.pop %v3979
        %v4012 = vtanh.pop %v3980
        %v4013 = vtanh.pop %v3981
        %v4014 = vtanh.pop %v3982
        %v4015 = vtanh.pop %v3983
        %v4016 = vtanh.pop %v3984
        %v4017 = vtanh.pop %v3985
        %v4018 = vtanh.pop %v3986
        %v4019 = vtanh.pop %v3987
        %v4020 = vtanh.pop %v3988
        %v4021 = vtanh.pop %v3989
        %v4022 = vtanh.pop %v3990
        %v4023 = vtanh.pop %v3991
        %v4024 = vtanh.pop %v3992
        %v4025 = vtanh.pop %v3993
        %v4026 = vtanh.pop %v3994
        %v4027 = vtanh.pop %v3995
        %v4028 = vtanh.pop %v3996
        %v4029 = vtanh.pop %v3997
        %v4030 = vtanh.pop %v3998
        %v4031 = vtanh.pop %v3999
        %v4032 = vtanh.pop %v4000
        %v4033 = vmul.f32 %v4001, 0.5
        %v4034 = vmul.f32 %v4002, 0.5
        %v4035 = vmul.f32 %v4003, 0.5
        %v4036 = vmul.f32 %v4004, 0.5
        %v4037 = vmul.f32 %v4005, 0.5
        %v4038 = vmul.f32 %v4006, 0.5
        %v4039 = vmul.f32 %v4007, 0.5
        %v4040 = vmul.f32 %v4008, 0.5
        %v4041 = vmul.f32 %v4009, 0.5
        %v4042 = vmul.f32 %v4010, 0.5
        %v4043 = vmul.f32 %v4011, 0.5
        %v4044 = vmul.f32 %v4012, 0.5
        %v4045 = vmul.f32 %v4013, 0.5
        %v4046 = vmul.f32 %v4014, 0.5
        %v4047 = vmul.f32 %v4015, 0.5
        %v4048 = vmul.f32 %v4016, 0.5
        %v4049 = vmul.f32 %v4017, 0.5
        %v4050 = vmul.f32 %v4018, 0.5
        %v4051 = vmul.f32 %v4019, 0.5
        %v4052 = vmul.f32 %v4020, 0.5
        %v4053 = vmul.f32 %v4021, 0.5
        %v4054 = vmul.f32 %v4022, 0.5
        %v4055 = vmul.f32 %v4023, 0.5
        %v4056 = vmul.f32 %v4024, 0.5
        %v4057 = vmul.f32 %v4025, 0.5
        %v4058 = vmul.f32 %v4026, 0.5
        %v4059 = vmul.f32 %v4027, 0.5
        %v4060 = vmul.f32 %v4028, 0.5
        %v4061 = vmul.f32 %v4029, 0.5
        %v4062 = vmul.f32 %v4030, 0.5
        %v4063 = vmul.f32 %v4031, 0.5
        %v4064 = vmul.f32 %v4032, 0.5
        %v4065 = vadd.f32 %v4033, 0.5
        %v4066 = vadd.f32 %v4034, 0.5
        %v4067 = vadd.f32 %v4035, 0.5
        %v4068 = vadd.f32 %v4036, 0.5
        %v4069 = vadd.f32 %v4037, 0.5
        %v4070 = vadd.f32 %v4038, 0.5
        %v4071 = vadd.f32 %v4039, 0.5
        %v4072 = vadd.f32 %v4040, 0.5
        %v4073 = vadd.f32 %v4041, 0.5
        %v4074 = vadd.f32 %v4042, 0.5
        %v4075 = vadd.f32 %v4043, 0.5
        %v4076 = vadd.f32 %v4044, 0.5
        %v4077 = vadd.f32 %v4045, 0.5
        %v4078 = vadd.f32 %v4046, 0.5
        %v4079 = vadd.f32 %v4047, 0.5
        %v4080 = vadd.f32 %v4048, 0.5
        %v4081 = vadd.f32 %v4049, 0.5
        %v4082 = vadd.f32 %v4050, 0.5
        %v4083 = vadd.f32 %v4051, 0.5
        %v4084 = vadd.f32 %v4052, 0.5
        %v4085 = vadd.f32 %v4053, 0.5
        %v4086 = vadd.f32 %v4054, 0.5
        %v4087 = vadd.f32 %v4055, 0.5
        %v4088 = vadd.f32 %v4056, 0.5
        %v4089 = vadd.f32 %v4057, 0.5
        %v4090 = vadd.f32 %v4058, 0.5
        %v4091 = vadd.f32 %v4059, 0.5
        %v4092 = vadd.f32 %v4060, 0.5
        %v4093 = vadd.f32 %v4061, 0.5
        %v4094 = vadd.f32 %v4062, 0.5
        %v4095 = vadd.f32 %v4063, 0.5
        %v4096 = vadd.f32 %v4064, 0.5
        %v4097 = vmul.f32 %v3937, %v4065
        %v4098 = vmul.f32 %v3938, %v4066
        %v4099 = vmul.f32 %v3939, %v4067
        %v4100 = vmul.f32 %v3940, %v4068
        %v4101 = vmul.f32 %v3941, %v4069
        %v4102 = vmul.f32 %v3942, %v4070
        %v4103 = vmul.f32 %v3943, %v4071
        %v4104 = vmul.f32 %v3944, %v4072
        %v4105 = vmul.f32 %v3945, %v4073
        %v4106 = vmul.f32 %v3946, %v4074
        %v4107 = vmul.f32 %v3947, %v4075
        %v4108 = vmul.f32 %v3948, %v4076
        %v4109 = vmul.f32 %v3949, %v4077
        %v4110 = vmul.f32 %v3950, %v4078
        %v4111 = vmul.f32 %v3951, %v4079
        %v4112 = vmul.f32 %v3952, %v4080
        %v4113 = vmul.f32 %v3953, %v4081
        %v4114 = vmul.f32 %v3954, %v4082
        %v4115 = vmul.f32 %v3955, %v4083
        %v4116 = vmul.f32 %v3956, %v4084
        %v4117 = vmul.f32 %v3957, %v4085
        %v4118 = vmul.f32 %v3958, %v4086
        %v4119 = vmul.f32 %v3959, %v4087
        %v4120 = vmul.f32 %v3960, %v4088
        %v4121 = vmul.f32 %v3961, %v4089
        %v4122 = vmul.f32 %v3962, %v4090
        %v4123 = vmul.f32 %v3963, %v4091
        %v4124 = vmul.f32 %v3964, %v4092
        %v4125 = vmul.f32 %v3965, %v4093
        %v4126 = vmul.f32 %v3966, %v4094
        %v4127 = vmul.f32 %v3967, %v4095
        %v4128 = vmul.f32 %v3968, %v4096
        %v4129 = vld [vmem:[%s10] sm:$0x1]
        %v4130 = vrot.slane %v4097, 7
        %v4131 = vrot.slane %v4098, 7
        %v4132 = vrot.slane %v4099, 7
        %v4133 = vrot.slane %v4100, 7
        %v4134 = vrot.slane %v4101, 7
        %v4135 = vrot.slane %v4102, 7
        %v4136 = vrot.slane %v4103, 7
        %v4137 = vrot.slane %v4104, 7
        %v4138 = vrot.slane %v4105, 7
        %v4139 = vrot.slane %v4106, 7
        %v4140 = vrot.slane %v4107, 7
        %v4141 = vrot.slane %v4108, 7
        %v4142 = vrot.slane %v4109, 7
        %v4143 = vrot.slane %v4110, 7
        %v4144 = vrot.slane %v4111, 7
        %v4145 = vrot.slane %v4112, 7
        %v4146 = vrot.slane %v4113, 7
        %v4147 = vrot.slane %v4114, 7
        %v4148 = vrot.slane %v4115, 7
        %v4149 = vrot.slane %v4116, 7
        %v4150 = vrot.slane %v4117, 7
        %v4151 = vrot.slane %v4118, 7
        %v4152 = vrot.slane %v4119, 7
        %v4153 = vrot.slane %v4120, 7
        %v4154 = vrot.slane %v4121, 7
        %v4155 = vrot.slane %v4122, 7
        %v4156 = vrot.slane %v4123, 7
        %v4157 = vrot.slane %v4124, 7
        %v4158 = vrot.slane %v4125, 7
        %v4159 = vrot.slane %v4126, 7
        %v4160 = vrot.slane %v4127, 7
        %v4161 = vrot.slane %v4128, 7
        %v4162 = vsel %vm1651, %v4160, %v4161
        %v4163 = vsel %vm1651, %v4159, %v4160
        %v4164 = vsel %vm1651, %v4158, %v4159
        %v4165 = vsel %vm1651, %v4157, %v4158
        %v4166 = vsel %vm1651, %v4156, %v4157
        %v4167 = vsel %vm1651, %v4155, %v4156
        %v4168 = vsel %vm1651, %v4154, %v4155
        %v4169 = vsel %vm1651, %v4153, %v4154
        %v4170 = vsel %vm1651, %v4152, %v4153
        %v4171 = vsel %vm1651, %v4151, %v4152
        %v4172 = vsel %vm1651, %v4150, %v4151
        %v4173 = vsel %vm1651, %v4149, %v4150
        %v4174 = vsel %vm1651, %v4148, %v4149
        %v4175 = vsel %vm1651, %v4147, %v4148
        %v4176 = vsel %vm1651, %v4146, %v4147
        %v4177 = vsel %vm1651, %v4145, %v4146
        %v4178 = vsel %vm1651, %v4144, %v4145
        %v4179 = vsel %vm1651, %v4143, %v4144
        %v4180 = vsel %vm1651, %v4142, %v4143
        %v4181 = vsel %vm1651, %v4141, %v4142
        %v4182 = vsel %vm1651, %v4140, %v4141
        %v4183 = vsel %vm1651, %v4139, %v4140
        %v4184 = vsel %vm1651, %v4138, %v4139
        %v4185 = vsel %vm1651, %v4137, %v4138
        %v4186 = vsel %vm1651, %v4136, %v4137
        %v4187 = vsel %vm1651, %v4135, %v4136
        %v4188 = vsel %vm1651, %v4134, %v4135
        %v4189 = vsel %vm1651, %v4133, %v4134
        %v4190 = vsel %vm1651, %v4132, %v4133
        %v4191 = vsel %vm1651, %v4131, %v4132
        %v4192 = vsel %vm1651, %v4130, %v4131
        %v4193 = vsel %vm1651, %v4161, %v4130
        %v4194 = vsel %vm1716, 0.0, %v4193
        %v4195 = vsel %vm1717, 0.0, %v4192
        %v4196 = vsel %vm1718, 0.0, %v4191
        %v4197 = vsel %vm1719, 0.0, %v4190
        %v4198 = vsel %vm1720, 0.0, %v4189
        %v4199 = vsel %vm1721, 0.0, %v4188
        %v4200 = vsel %vm1722, 0.0, %v4187
        %v4201 = vsel %vm1723, 0.0, %v4186
        %v4202 = vsel %vm1724, 0.0, %v4185
        %v4203 = vsel %vm1725, 0.0, %v4184
        %v4204 = vsel %vm1726, 0.0, %v4183
        %v4205 = vsel %vm1727, 0.0, %v4182
        %v4206 = vsel %vm1728, 0.0, %v4181
        %v4207 = vsel %vm1729, 0.0, %v4180
        %v4208 = vsel %vm1730, 0.0, %v4179
        %v4209 = vsel %vm1731, 0.0, %v4178
        %v4210 = vsel %vm1732, 0.0, %v4177
        %v4211 = vsel %vm1733, 0.0, %v4176
        %v4212 = vsel %vm1734, 0.0, %v4175
        %v4213 = vsel %vm1735, 0.0, %v4174
        %v4214 = vsel %vm1736, 0.0, %v4173
        %v4215 = vsel %vm1737, 0.0, %v4172
        %v4216 = vsel %vm1738, 0.0, %v4171
        %v4217 = vsel %vm1739, 0.0, %v4170
        %v4218 = vsel %vm1740, 0.0, %v4169
        %v4219 = vsel %vm1741, 0.0, %v4168
        %v4220 = vsel %vm1742, 0.0, %v4167
        %v4221 = vsel %vm1743, 0.0, %v4166
        %v4222 = vsel %vm1744, 0.0, %v4165
        %v4223 = vsel %vm1745, 0.0, %v4164
        %v4224 = vsel %vm1746, 0.0, %v4163
        %v4225 = vsel %vm1747, 0.0, %v4162
        %v4226 = vrot.slane %v4097, 1
        %v4227 = vrot.slane %v4098, 1
        %v4228 = vrot.slane %v4099, 1
        %v4229 = vrot.slane %v4100, 1
        %v4230 = vrot.slane %v4101, 1
        %v4231 = vrot.slane %v4102, 1
        %v4232 = vrot.slane %v4103, 1
        %v4233 = vrot.slane %v4104, 1
        %v4234 = vrot.slane %v4105, 1
        %v4235 = vrot.slane %v4106, 1
        %v4236 = vrot.slane %v4107, 1
        %v4237 = vrot.slane %v4108, 1
        %v4238 = vrot.slane %v4109, 1
        %v4239 = vrot.slane %v4110, 1
        %v4240 = vrot.slane %v4111, 1
        %v4241 = vrot.slane %v4112, 1
        %v4242 = vrot.slane %v4113, 1
        %v4243 = vrot.slane %v4114, 1
        %v4244 = vrot.slane %v4115, 1
        %v4245 = vrot.slane %v4116, 1
        %v4246 = vrot.slane %v4117, 1
        %v4247 = vrot.slane %v4118, 1
        %v4248 = vrot.slane %v4119, 1
        %v4249 = vrot.slane %v4120, 1
        %v4250 = vrot.slane %v4121, 1
        %v4251 = vrot.slane %v4122, 1
        %v4252 = vrot.slane %v4123, 1
        %v4253 = vrot.slane %v4124, 1
        %v4254 = vrot.slane %v4125, 1
        %v4255 = vrot.slane %v4126, 1
        %v4256 = vrot.slane %v4127, 1
        %v4257 = vrot.slane %v4128, 1
        %v4258 = vsel %vm1812, %v4256, %v4257
        %v4259 = vsel %vm1812, %v4255, %v4256
        %v4260 = vsel %vm1812, %v4254, %v4255
        %v4261 = vsel %vm1812, %v4253, %v4254
        %v4262 = vsel %vm1812, %v4252, %v4253
        %v4263 = vsel %vm1812, %v4251, %v4252
        %v4264 = vsel %vm1812, %v4250, %v4251
        %v4265 = vsel %vm1812, %v4249, %v4250
        %v4266 = vsel %vm1812, %v4248, %v4249
        %v4267 = vsel %vm1812, %v4247, %v4248
        %v4268 = vsel %vm1812, %v4246, %v4247
        %v4269 = vsel %vm1812, %v4245, %v4246
        %v4270 = vsel %vm1812, %v4244, %v4245
        %v4271 = vsel %vm1812, %v4243, %v4244
        %v4272 = vsel %vm1812, %v4242, %v4243
        %v4273 = vsel %vm1812, %v4241, %v4242
        %v4274 = vsel %vm1812, %v4240, %v4241
        %v4275 = vsel %vm1812, %v4239, %v4240
        %v4276 = vsel %vm1812, %v4238, %v4239
        %v4277 = vsel %vm1812, %v4237, %v4238
        %v4278 = vsel %vm1812, %v4236, %v4237
        %v4279 = vsel %vm1812, %v4235, %v4236
        %v4280 = vsel %vm1812, %v4234, %v4235
        %v4281 = vsel %vm1812, %v4233, %v4234
        %v4282 = vsel %vm1812, %v4232, %v4233
        %v4283 = vsel %vm1812, %v4231, %v4232
        %v4284 = vsel %vm1812, %v4230, %v4231
        %v4285 = vsel %vm1812, %v4229, %v4230
        %v4286 = vsel %vm1812, %v4228, %v4229
        %v4287 = vsel %vm1812, %v4227, %v4228
        %v4288 = vsel %vm1812, %v4226, %v4227
        %v4289 = vsel %vm1812, %v4257, %v4226
        %v4290 = vsel %vm1877, 0.0, %v4288
        %v4291 = vsel %vm1878, 0.0, %v4287
        %v4292 = vsel %vm1879, 0.0, %v4286
        %v4293 = vsel %vm1880, 0.0, %v4285
        %v4294 = vsel %vm1881, 0.0, %v4284
        %v4295 = vsel %vm1882, 0.0, %v4283
        %v4296 = vsel %vm1883, 0.0, %v4282
        %v4297 = vsel %vm1884, 0.0, %v4281
        %v4298 = vsel %vm1885, 0.0, %v4280
        %v4299 = vsel %vm1886, 0.0, %v4279
        %v4300 = vsel %vm1887, 0.0, %v4278
        %v4301 = vsel %vm1888, 0.0, %v4277
        %v4302 = vsel %vm1889, 0.0, %v4276
        %v4303 = vsel %vm1890, 0.0, %v4275
        %v4304 = vsel %vm1891, 0.0, %v4274
        %v4305 = vsel %vm1892, 0.0, %v4273
        %v4306 = vsel %vm1893, 0.0, %v4272
        %v4307 = vsel %vm1894, 0.0, %v4271
        %v4308 = vsel %vm1895, 0.0, %v4270
        %v4309 = vsel %vm1896, 0.0, %v4269
        %v4310 = vsel %vm1897, 0.0, %v4268
        %v4311 = vsel %vm1898, 0.0, %v4267
        %v4312 = vsel %vm1899, 0.0, %v4266
        %v4313 = vsel %vm1900, 0.0, %v4265
        %v4314 = vsel %vm1901, 0.0, %v4264
        %v4315 = vsel %vm1902, 0.0, %v4263
        %v4316 = vsel %vm1903, 0.0, %v4262
        %v4317 = vsel %vm1904, 0.0, %v4261
        %v4318 = vsel %vm1905, 0.0, %v4260
        %v4319 = vsel %vm1906, 0.0, %v4259
        %v4320 = vsel %vm1907, 0.0, %v4258
        %v4321 = vsel %vm1908, 0.0, %v4289
        %v4322 = vpack.c.bf16 %v4195, %v4194
        %v4323 = vpack.c.bf16 %v4197, %v4196
        %v4324 = vpack.c.bf16 %v4199, %v4198
        %v4325 = vpack.c.bf16 %v4201, %v4200
        %v4326 = vpack.c.bf16 %v4203, %v4202
        %v4327 = vpack.c.bf16 %v4205, %v4204
        %v4328 = vpack.c.bf16 %v4207, %v4206
        %v4329 = vpack.c.bf16 %v4209, %v4208
        %v4330 = vpack.c.bf16 %v4211, %v4210
        %v4331 = vpack.c.bf16 %v4213, %v4212
        %v4332 = vpack.c.bf16 %v4215, %v4214
        %v4333 = vpack.c.bf16 %v4217, %v4216
        %v4334 = vpack.c.bf16 %v4219, %v4218
        %v4335 = vpack.c.bf16 %v4221, %v4220
        %v4336 = vpack.c.bf16 %v4223, %v4222
        %v4337 = vpack.c.bf16 %v4225, %v4224
        %v4338 = vpack.c.bf16 %v4098, %v4097
        %v4339 = vpack.c.bf16 %v4100, %v4099
        %v4340 = vpack.c.bf16 %v4102, %v4101
        %v4341 = vpack.c.bf16 %v4104, %v4103
        %v4342 = vpack.c.bf16 %v4106, %v4105
        %v4343 = vpack.c.bf16 %v4108, %v4107
        %v4344 = vpack.c.bf16 %v4110, %v4109
        %v4345 = vpack.c.bf16 %v4112, %v4111
        %v4346 = vpack.c.bf16 %v4114, %v4113
        %v4347 = vpack.c.bf16 %v4116, %v4115
        %v4348 = vpack.c.bf16 %v4118, %v4117
        %v4349 = vpack.c.bf16 %v4120, %v4119
        %v4350 = vpack.c.bf16 %v4122, %v4121
        %v4351 = vpack.c.bf16 %v4124, %v4123
        %v4352 = vpack.c.bf16 %v4126, %v4125
        %v4353 = vpack.c.bf16 %v4128, %v4127
        %v4354 = vpack.c.bf16 %v4291, %v4290
        %v4355 = vpack.c.bf16 %v4293, %v4292
        %v4356 = vpack.c.bf16 %v4295, %v4294
        %v4357 = vpack.c.bf16 %v4297, %v4296
        %v4358 = vpack.c.bf16 %v4299, %v4298
        %v4359 = vpack.c.bf16 %v4301, %v4300
        %v4360 = vpack.c.bf16 %v4303, %v4302
        %v4361 = vpack.c.bf16 %v4305, %v4304
        %v4362 = vpack.c.bf16 %v4307, %v4306
        %v4363 = vpack.c.bf16 %v4309, %v4308
        %v4364 = vpack.c.bf16 %v4311, %v4310
        %v4365 = vpack.c.bf16 %v4313, %v4312
        %v4366 = vpack.c.bf16 %v4315, %v4314
        %v4367 = vpack.c.bf16 %v4317, %v4316
        %v4368 = vpack.c.bf16 %v4319, %v4318
        %v4369 = vpack.c.bf16 %v4321, %v4320
        %4370 = vst [vmem:[#allocation3] sm:$0xff] 0
        %4371 = vst [vmem:[#allocation3 + $0x8] sm:$0xf] 0
        %4372 = vst [vmem:[#allocation3 + $0xc] sm:$0xff] 0
        %4373 = vst [vmem:[#allocation3 + $0x14] sm:$0xf] 0
        %4374 = vst [vmem:[#allocation3 + $0x198] sm:$0xff] 0
        %4375 = vst [vmem:[#allocation3 + $0x1a0] sm:$0xf] 0
        %4376 = vst [vmem:[#allocation3 + $0x1a4] sm:$0xff] 0
        %4377 = vst [vmem:[#allocation3 + $0x1ac] sm:$0xf] 0
        %v4426 = vunpack.c.l.b16 %v4322
        %v4427 = vunpack.c.l.b16 %v4338
        %v4428 = vunpack.c.l.b16 %v4354
        %v4429 = vunpack.c.h.b16 %v4322
        %v4430 = vunpack.c.h.b16 %v4338
        %v4431 = vunpack.c.h.b16 %v4354
        %v4432 = vunpack.c.l.b16 %v4323
        %v4433 = vunpack.c.l.b16 %v4339
        %v4434 = vunpack.c.l.b16 %v4355
        %v4435 = vunpack.c.h.b16 %v4323
        %v4436 = vunpack.c.h.b16 %v4339
        %v4437 = vunpack.c.h.b16 %v4355
        %v4438 = vunpack.c.l.b16 %v4324
        %v4439 = vunpack.c.l.b16 %v4340
        %v4440 = vunpack.c.l.b16 %v4356
        %v4441 = vunpack.c.h.b16 %v4324
        %v4442 = vunpack.c.h.b16 %v4340
        %v4443 = vunpack.c.h.b16 %v4356
        %v4444 = vunpack.c.l.b16 %v4325
        %v4445 = vunpack.c.l.b16 %v4341
        %v4446 = vunpack.c.l.b16 %v4357
        %v4447 = vunpack.c.h.b16 %v4325
        %v4448 = vunpack.c.h.b16 %v4341
        %v4449 = vunpack.c.h.b16 %v4357
        %v4450 = vunpack.c.l.b16 %v4326
        %v4451 = vunpack.c.l.b16 %v4342
        %v4452 = vunpack.c.l.b16 %v4358
        %v4453 = vunpack.c.h.b16 %v4326
        %v4454 = vunpack.c.h.b16 %v4342
        %v4455 = vunpack.c.h.b16 %v4358
        %v4456 = vunpack.c.l.b16 %v4327
        %v4457 = vunpack.c.l.b16 %v4343
        %v4458 = vunpack.c.l.b16 %v4359
        %v4459 = vunpack.c.h.b16 %v4327
        %v4460 = vunpack.c.h.b16 %v4343
        %v4461 = vunpack.c.h.b16 %v4359
        %v4462 = vunpack.c.l.b16 %v4328
        %v4463 = vunpack.c.l.b16 %v4344
        %v4464 = vunpack.c.l.b16 %v4360
        %v4465 = vunpack.c.h.b16 %v4328
        %v4466 = vunpack.c.h.b16 %v4344
        %v4467 = vunpack.c.h.b16 %v4360
        %v4468 = vunpack.c.l.b16 %v4329
        %v4469 = vunpack.c.l.b16 %v4345
        %v4470 = vunpack.c.l.b16 %v4361
        %v4471 = vunpack.c.h.b16 %v4329
        %v4472 = vunpack.c.h.b16 %v4345
        %v4473 = vunpack.c.h.b16 %v4361
        %v4474 = vunpack.c.l.b16 %v4330
        %v4475 = vunpack.c.l.b16 %v4346
        %v4476 = vunpack.c.l.b16 %v4362
        %v4477 = vunpack.c.h.b16 %v4330
        %v4478 = vunpack.c.h.b16 %v4346
        %v4479 = vunpack.c.h.b16 %v4362
        %v4480 = vunpack.c.l.b16 %v4331
        %v4481 = vunpack.c.l.b16 %v4347
        %v4482 = vunpack.c.l.b16 %v4363
        %v4483 = vunpack.c.h.b16 %v4331
        %v4484 = vunpack.c.h.b16 %v4347
        %v4485 = vunpack.c.h.b16 %v4363
        %v4486 = vunpack.c.l.b16 %v4332
        %v4487 = vunpack.c.l.b16 %v4348
        %v4488 = vunpack.c.l.b16 %v4364
        %v4489 = vunpack.c.h.b16 %v4332
        %v4490 = vunpack.c.h.b16 %v4348
        %v4491 = vunpack.c.h.b16 %v4364
        %v4492 = vunpack.c.l.b16 %v4333
        %v4493 = vunpack.c.l.b16 %v4349
        %v4494 = vunpack.c.l.b16 %v4365
        %v4495 = vunpack.c.h.b16 %v4333
        %v4496 = vunpack.c.h.b16 %v4349
        %v4497 = vunpack.c.h.b16 %v4365
        %v4498 = vunpack.c.l.b16 %v4334
        %v4499 = vunpack.c.l.b16 %v4350
        %v4500 = vunpack.c.l.b16 %v4366
        %v4501 = vunpack.c.h.b16 %v4334
        %v4502 = vunpack.c.h.b16 %v4350
        %v4503 = vunpack.c.h.b16 %v4366
        %v4504 = vunpack.c.l.b16 %v4335
        %v4505 = vunpack.c.l.b16 %v4351
        %v4506 = vunpack.c.l.b16 %v4367
        %v4507 = vunpack.c.h.b16 %v4335
        %v4508 = vunpack.c.h.b16 %v4351
        %v4509 = vunpack.c.h.b16 %v4367
        %v4510 = vunpack.c.l.b16 %v4336
        %v4511 = vunpack.c.l.b16 %v4352
        %v4512 = vunpack.c.l.b16 %v4368
        %v4513 = vunpack.c.h.b16 %v4336
        %v4514 = vunpack.c.h.b16 %v4352
        %v4515 = vunpack.c.h.b16 %v4368
        %v4516 = vunpack.c.l.b16 %v4337
        %v4517 = vunpack.c.l.b16 %v4353
        %v4518 = vunpack.c.l.b16 %v4369
        %v4519 = vunpack.c.h.b16 %v4337
        %v4520 = vunpack.c.h.b16 %v4353
        %v4521 = vunpack.c.h.b16 %v4369
        %v4522 = vpack.c.b16 %v4427, %v4426
        %v4523 = vpack.c.b16 %v4428, %v4428
        %v4524 = vpack.c.b16 %v4430, %v4429
        %v4525 = vpack.c.b16 %v4431, %v4431
        %v4526 = vpack.c.b16 %v4433, %v4432
        %v4527 = vpack.c.b16 %v4434, %v4434
        %v4528 = vpack.c.b16 %v4436, %v4435
        %v4529 = vpack.c.b16 %v4437, %v4437
        %v4530 = vpack.c.b16 %v4439, %v4438
        %v4531 = vpack.c.b16 %v4440, %v4440
        %v4532 = vpack.c.b16 %v4442, %v4441
        %v4533 = vpack.c.b16 %v4443, %v4443
        %v4534 = vpack.c.b16 %v4445, %v4444
        %v4535 = vpack.c.b16 %v4446, %v4446
        %v4536 = vpack.c.b16 %v4448, %v4447
        %v4537 = vpack.c.b16 %v4449, %v4449
        %v4538 = vpack.c.b16 %v4451, %v4450
        %v4539 = vpack.c.b16 %v4452, %v4452
        %v4540 = vpack.c.b16 %v4454, %v4453
        %v4541 = vpack.c.b16 %v4455, %v4455
        %v4542 = vpack.c.b16 %v4457, %v4456
        %v4543 = vpack.c.b16 %v4458, %v4458
        %v4544 = vpack.c.b16 %v4460, %v4459
        %v4545 = vpack.c.b16 %v4461, %v4461
        %v4546 = vpack.c.b16 %v4463, %v4462
        %v4547 = vpack.c.b16 %v4464, %v4464
        %v4548 = vpack.c.b16 %v4466, %v4465
        %v4549 = vpack.c.b16 %v4467, %v4467
        %v4550 = vpack.c.b16 %v4469, %v4468
        %v4551 = vpack.c.b16 %v4470, %v4470
        %v4552 = vpack.c.b16 %v4472, %v4471
        %v4553 = vpack.c.b16 %v4473, %v4473
        %v4554 = vpack.c.b16 %v4475, %v4474
        %v4555 = vpack.c.b16 %v4476, %v4476
        %v4556 = vpack.c.b16 %v4478, %v4477
        %v4557 = vpack.c.b16 %v4479, %v4479
        %v4558 = vpack.c.b16 %v4481, %v4480
        %v4559 = vpack.c.b16 %v4482, %v4482
        %v4560 = vpack.c.b16 %v4484, %v4483
        %v4561 = vpack.c.b16 %v4485, %v4485
        %v4562 = vpack.c.b16 %v4487, %v4486
        %v4563 = vpack.c.b16 %v4488, %v4488
        %v4564 = vpack.c.b16 %v4490, %v4489
        %v4565 = vpack.c.b16 %v4491, %v4491
        %v4566 = vpack.c.b16 %v4493, %v4492
        %v4567 = vpack.c.b16 %v4494, %v4494
        %v4568 = vpack.c.b16 %v4496, %v4495
        %v4569 = vpack.c.b16 %v4497, %v4497
        %v4570 = vpack.c.b16 %v4499, %v4498
        %v4571 = vpack.c.b16 %v4500, %v4500
        %v4572 = vpack.c.b16 %v4502, %v4501
        %v4573 = vpack.c.b16 %v4503, %v4503
        %v4574 = vpack.c.b16 %v4505, %v4504
        %v4575 = vpack.c.b16 %v4506, %v4506
        %v4576 = vpack.c.b16 %v4508, %v4507
        %v4577 = vpack.c.b16 %v4509, %v4509
        %v4578 = vpack.c.b16 %v4511, %v4510
        %v4579 = vpack.c.b16 %v4512, %v4512
        %v4580 = vpack.c.b16 %v4514, %v4513
        %v4581 = vpack.c.b16 %v4515, %v4515
        %v4582 = vpack.c.b16 %v4517, %v4516
        %v4583 = vpack.c.b16 %v4518, %v4518
        %v4584 = vpack.c.b16 %v4520, %v4519
        %v4585 = vpack.c.b16 %v4521, %v4521
        %4650 = vst [vmem:[#allocation3 + $0x18] sm:$0xff] %v4522
        %4651 = vst [vmem:[#allocation3 + $0x20] sm:$0xf] %v4523
        %4652 = vst [vmem:[#allocation3 + $0x24] sm:$0xff] %v4524
        %4653 = vst [vmem:[#allocation3 + $0x2c] sm:$0xf] %v4525
        %4654 = vst [vmem:[#allocation3 + $0x30] sm:$0xff] %v4526
        %4655 = vst [vmem:[#allocation3 + $0x38] sm:$0xf] %v4527
        %4656 = vst [vmem:[#allocation3 + $0x3c] sm:$0xff] %v4528
        %4657 = vst [vmem:[#allocation3 + $0x44] sm:$0xf] %v4529
        %4658 = vst [vmem:[#allocation3 + $0x48] sm:$0xff] %v4530
        %4659 = vst [vmem:[#allocation3 + $0x50] sm:$0xf] %v4531
        %4660 = vst [vmem:[#allocation3 + $0x54] sm:$0xff] %v4532
        %4661 = vst [vmem:[#allocation3 + $0x5c] sm:$0xf] %v4533
        %4662 = vst [vmem:[#allocation3 + $0x60] sm:$0xff] %v4534
        %4663 = vst [vmem:[#allocation3 + $0x68] sm:$0xf] %v4535
        %4664 = vst [vmem:[#allocation3 + $0x6c] sm:$0xff] %v4536
        %4665 = vst [vmem:[#allocation3 + $0x74] sm:$0xf] %v4537
        %4666 = vst [vmem:[#allocation3 + $0x78] sm:$0xff] %v4538
        %4667 = vst [vmem:[#allocation3 + $0x80] sm:$0xf] %v4539
        %4668 = vst [vmem:[#allocation3 + $0x84] sm:$0xff] %v4540
        %4669 = vst [vmem:[#allocation3 + $0x8c] sm:$0xf] %v4541
        %4670 = vst [vmem:[#allocation3 + $0x90] sm:$0xff] %v4542
        %4671 = vst [vmem:[#allocation3 + $0x98] sm:$0xf] %v4543
        %4672 = vst [vmem:[#allocation3 + $0x9c] sm:$0xff] %v4544
        %4673 = vst [vmem:[#allocation3 + $0xa4] sm:$0xf] %v4545
        %4674 = vst [vmem:[#allocation3 + $0xa8] sm:$0xff] %v4546
        %4675 = vst [vmem:[#allocation3 + $0xb0] sm:$0xf] %v4547
        %4676 = vst [vmem:[#allocation3 + $0xb4] sm:$0xff] %v4548
        %4677 = vst [vmem:[#allocation3 + $0xbc] sm:$0xf] %v4549
        %4678 = vst [vmem:[#allocation3 + $0xc0] sm:$0xff] %v4550
        %4679 = vst [vmem:[#allocation3 + $0xc8] sm:$0xf] %v4551
        %4680 = vst [vmem:[#allocation3 + $0xcc] sm:$0xff] %v4552
        %4681 = vst [vmem:[#allocation3 + $0xd4] sm:$0xf] %v4553
        %4682 = vst [vmem:[#allocation3 + $0xd8] sm:$0xff] %v4554
        %4683 = vst [vmem:[#allocation3 + $0xe0] sm:$0xf] %v4555
        %4684 = vst [vmem:[#allocation3 + $0xe4] sm:$0xff] %v4556
        %4685 = vst [vmem:[#allocation3 + $0xec] sm:$0xf] %v4557
        %4686 = vst [vmem:[#allocation3 + $0xf0] sm:$0xff] %v4558
        %4687 = vst [vmem:[#allocation3 + $0xf8] sm:$0xf] %v4559
        %4688 = vst [vmem:[#allocation3 + $0xfc] sm:$0xff] %v4560
        %4689 = vst [vmem:[#allocation3 + $0x104] sm:$0xf] %v4561
        %4690 = vst [vmem:[#allocation3 + $0x108] sm:$0xff] %v4562
        %4691 = vst [vmem:[#allocation3 + $0x110] sm:$0xf] %v4563
        %4692 = vst [vmem:[#allocation3 + $0x114] sm:$0xff] %v4564
        %4693 = vst [vmem:[#allocation3 + $0x11c] sm:$0xf] %v4565
        %4694 = vst [vmem:[#allocation3 + $0x120] sm:$0xff] %v4566
        %4695 = vst [vmem:[#allocation3 + $0x128] sm:$0xf] %v4567
        %4696 = vst [vmem:[#allocation3 + $0x12c] sm:$0xff] %v4568
        %4697 = vst [vmem:[#allocation3 + $0x134] sm:$0xf] %v4569
        %4698 = vst [vmem:[#allocation3 + $0x138] sm:$0xff] %v4570
        %4699 = vst [vmem:[#allocation3 + $0x140] sm:$0xf] %v4571
        %4700 = vst [vmem:[#allocation3 + $0x144] sm:$0xff] %v4572
        %4701 = vst [vmem:[#allocation3 + $0x14c] sm:$0xf] %v4573
        %4702 = vst [vmem:[#allocation3 + $0x150] sm:$0xff] %v4574
        %4703 = vst [vmem:[#allocation3 + $0x158] sm:$0xf] %v4575
        %4704 = vst [vmem:[#allocation3 + $0x15c] sm:$0xff] %v4576
        %4705 = vst [vmem:[#allocation3 + $0x164] sm:$0xf] %v4577
        %4706 = vst [vmem:[#allocation3 + $0x168] sm:$0xff] %v4578
        %4707 = vst [vmem:[#allocation3 + $0x170] sm:$0xf] %v4579
        %4708 = vst [vmem:[#allocation3 + $0x174] sm:$0xff] %v4580
        %4709 = vst [vmem:[#allocation3 + $0x17c] sm:$0xf] %v4581
        %4710 = vst [vmem:[#allocation3 + $0x180] sm:$0xff] %v4582
        %4711 = vst [vmem:[#allocation3 + $0x188] sm:$0xf] %v4583
        %4712 = vst [vmem:[#allocation3 + $0x18c] sm:$0xff] %v4584
        %4713 = vst [vmem:[#allocation3 + $0x194] sm:$0xf] %v4585
        %v4714 = vld [vmem:[#allocation3] sm:$0xff]
        %v4715 = vld [vmem:[#allocation3 + $0x8] sm:$0xf]
        %v4716 = vld [vmem:[#allocation3 + $0xc] sm:$0xff]
        %v4717 = vld [vmem:[#allocation3 + $0x14] sm:$0xf]
        %v4718 = vld [vmem:[#allocation3 + $0x18] sm:$0xff]
        %v4719 = vld [vmem:[#allocation3 + $0x20] sm:$0xf]
        %v4720 = vld [vmem:[#allocation3 + $0x24] sm:$0xff]
        %v4721 = vld [vmem:[#allocation3 + $0x2c] sm:$0xf]
        %v4722 = vld [vmem:[#allocation3 + $0x30] sm:$0xff]
        %v4723 = vld [vmem:[#allocation3 + $0x38] sm:$0xf]
        %v4724 = vld [vmem:[#allocation3 + $0x3c] sm:$0xff]
        %v4725 = vld [vmem:[#allocation3 + $0x44] sm:$0xf]
        %v4726 = vld [vmem:[#allocation3 + $0x48] sm:$0xff]
        %v4727 = vld [vmem:[#allocation3 + $0x50] sm:$0xf]
        %v4728 = vld [vmem:[#allocation3 + $0x54] sm:$0xff]
        %v4729 = vld [vmem:[#allocation3 + $0x5c] sm:$0xf]
        %v4730 = vld [vmem:[#allocation3 + $0x60] sm:$0xff]
        %v4731 = vld [vmem:[#allocation3 + $0x68] sm:$0xf]
        %v4732 = vld [vmem:[#allocation3 + $0x6c] sm:$0xff]
        %v4733 = vld [vmem:[#allocation3 + $0x74] sm:$0xf]
        %v4734 = vld [vmem:[#allocation3 + $0x78] sm:$0xff]
        %v4735 = vld [vmem:[#allocation3 + $0x80] sm:$0xf]
        %v4736 = vld [vmem:[#allocation3 + $0x84] sm:$0xff]
        %v4737 = vld [vmem:[#allocation3 + $0x8c] sm:$0xf]
        %v4738 = vld [vmem:[#allocation3 + $0x90] sm:$0xff]
        %v4739 = vld [vmem:[#allocation3 + $0x98] sm:$0xf]
        %v4740 = vld [vmem:[#allocation3 + $0x9c] sm:$0xff]
        %v4741 = vld [vmem:[#allocation3 + $0xa4] sm:$0xf]
        %v4742 = vld [vmem:[#allocation3 + $0xa8] sm:$0xff]
        %v4743 = vld [vmem:[#allocation3 + $0xb0] sm:$0xf]
        %v4744 = vld [vmem:[#allocation3 + $0xb4] sm:$0xff]
        %v4745 = vld [vmem:[#allocation3 + $0xbc] sm:$0xf]
        %v4746 = vld [vmem:[#allocation3 + $0xc0] sm:$0xff]
        %v4747 = vld [vmem:[#allocation3 + $0xc8] sm:$0xf]
        %v4748 = vld [vmem:[#allocation3 + $0xcc] sm:$0xff]
        %v4749 = vld [vmem:[#allocation3 + $0xd4] sm:$0xf]
        %v4750 = vld [vmem:[#allocation3 + $0xd8] sm:$0xff]
        %v4751 = vld [vmem:[#allocation3 + $0xe0] sm:$0xf]
        %v4752 = vld [vmem:[#allocation3 + $0xe4] sm:$0xff]
        %v4753 = vld [vmem:[#allocation3 + $0xec] sm:$0xf]
        %v4754 = vld [vmem:[#allocation3 + $0xf0] sm:$0xff]
        %v4755 = vld [vmem:[#allocation3 + $0xf8] sm:$0xf]
        %v4756 = vld [vmem:[#allocation3 + $0xfc] sm:$0xff]
        %v4757 = vld [vmem:[#allocation3 + $0x104] sm:$0xf]
        %v4758 = vld [vmem:[#allocation3 + $0x108] sm:$0xff]
        %v4759 = vld [vmem:[#allocation3 + $0x110] sm:$0xf]
        %v4760 = vld [vmem:[#allocation3 + $0x114] sm:$0xff]
        %v4761 = vld [vmem:[#allocation3 + $0x11c] sm:$0xf]
        %v4762 = vld [vmem:[#allocation3 + $0x120] sm:$0xff]
        %v4763 = vld [vmem:[#allocation3 + $0x128] sm:$0xf]
        %v4764 = vld [vmem:[#allocation3 + $0x12c] sm:$0xff]
        %v4765 = vld [vmem:[#allocation3 + $0x134] sm:$0xf]
        %v4766 = vld [vmem:[#allocation3 + $0x138] sm:$0xff]
        %v4767 = vld [vmem:[#allocation3 + $0x140] sm:$0xf]
        %v4768 = vld [vmem:[#allocation3 + $0x144] sm:$0xff]
        %v4769 = vld [vmem:[#allocation3 + $0x14c] sm:$0xf]
        %v4770 = vld [vmem:[#allocation3 + $0x150] sm:$0xff]
        %v4771 = vld [vmem:[#allocation3 + $0x158] sm:$0xf]
        %v4772 = vld [vmem:[#allocation3 + $0x15c] sm:$0xff]
        %v4773 = vld [vmem:[#allocation3 + $0x164] sm:$0xf]
        %v4774 = vld [vmem:[#allocation3 + $0x168] sm:$0xff]
        %v4775 = vld [vmem:[#allocation3 + $0x170] sm:$0xf]
        %v4776 = vld [vmem:[#allocation3 + $0x174] sm:$0xff]
        %v4777 = vld [vmem:[#allocation3 + $0x17c] sm:$0xf]
        %v4778 = vld [vmem:[%s9] sm:$0xf]
        %v4779 = vld [vmem:[%s9 + $0x4] sm:$0xf]
        %v4780 = vld [vmem:[%s9 + $0x8] sm:$0xf]
        %v4781 = vld [vmem:[%s9 + $0xc] sm:$0xf]
        %v4782 = vld [vmem:[%s9 + $0x10] sm:$0xf]
        %v4783 = vld [vmem:[%s9 + $0x14] sm:$0xf]
        %v4784 = vld [vmem:[%s9 + $0x18] sm:$0xf]
        %v4785 = vld [vmem:[%s9 + $0x1c] sm:$0xf]
        %v4786 = vld [vmem:[%s9 + $0x20] sm:$0xf]
        %v4787 = vld [vmem:[%s9 + $0x24] sm:$0xf]
        %v4788 = vld [vmem:[%s9 + $0x28] sm:$0xf]
        %v4789 = vld [vmem:[%s9 + $0x2c] sm:$0xf]
        %v4790 = vld [vmem:[%s9 + $0x30] sm:$0xf]
        %v4791 = vld [vmem:[%s9 + $0x34] sm:$0xf]
        %v4792 = vld [vmem:[%s9 + $0x38] sm:$0xf]
        %v4793 = vld [vmem:[%s9 + $0x3c] sm:$0xf]
        %v4794 = vld [vmem:[%s9 + $0x40] sm:$0xf]
        %v4795 = vld [vmem:[%s9 + $0x44] sm:$0xf]
        %v4796 = vld [vmem:[%s9 + $0x48] sm:$0xf]
        %v4797 = vld [vmem:[%s9 + $0x4c] sm:$0xf]
        %v4798 = vld [vmem:[%s9 + $0x50] sm:$0xf]
        %v4799 = vld [vmem:[%s9 + $0x54] sm:$0xf]
        %v4800 = vld [vmem:[%s9 + $0x58] sm:$0xf]
        %v4801 = vld [vmem:[%s9 + $0x5c] sm:$0xf]
        %v4802 = vld [vmem:[%s9 + $0x60] sm:$0xf]
        %v4803 = vld [vmem:[%s9 + $0x64] sm:$0xf]
        %v4804 = vld [vmem:[%s9 + $0x68] sm:$0xf]
        %v4805 = vld [vmem:[%s9 + $0x6c] sm:$0xf]
        %v4806 = vld [vmem:[%s9 + $0x70] sm:$0xf]
        %v4807 = vld [vmem:[%s9 + $0x74] sm:$0xf]
        %v4808 = vld [vmem:[%s9 + $0x78] sm:$0xf]
        %v4809 = vld [vmem:[%s9 + $0x7c] sm:$0xf]
        %v4810 = vld [vmem:[%s9 + $0x80] sm:$0xf]
        %v4811 = vld [vmem:[%s9 + $0x84] sm:$0xf]
        %v4812 = vld [vmem:[%s9 + $0x88] sm:$0xf]
        %v4813 = vld [vmem:[%s9 + $0x8c] sm:$0xf]
        %v4814 = vld [vmem:[%s9 + $0x90] sm:$0xf]
        %v4815 = vld [vmem:[%s9 + $0x94] sm:$0xf]
        %v4816 = vld [vmem:[%s9 + $0x98] sm:$0xf]
        %v4817 = vld [vmem:[%s9 + $0x9c] sm:$0xf]
        %v4818 = vld [vmem:[%s9 + $0xa0] sm:$0xf]
        %v4819 = vld [vmem:[%s9 + $0xa4] sm:$0xf]
        %v4820 = vld [vmem:[%s9 + $0xa8] sm:$0xf]
        %v4821 = vld [vmem:[%s9 + $0xac] sm:$0xf]
        %v4822 = vld [vmem:[%s9 + $0xb0] sm:$0xf]
        %v4823 = vld [vmem:[%s9 + $0xb4] sm:$0xf]
        %v4824 = vld [vmem:[%s9 + $0xb8] sm:$0xf]
        %v4825 = vld [vmem:[%s9 + $0xbc] sm:$0xf]
        %v4826 = vld [vmem:[#allocation3 + $0x180] sm:$0xff]
        %v4827 = vld [vmem:[#allocation3 + $0x188] sm:$0xf]
        %v4828 = vld [vmem:[#allocation3 + $0x18c] sm:$0xff]
        %v4829 = vld [vmem:[#allocation3 + $0x194] sm:$0xf]
        %s4830 = scalar_lea.vmem %s9, 192
        %v4831 = vld [vmem:[%s4830] sm:$0xf]
        %v4832 = vld [vmem:[%s4830 + $0x4] sm:$0xf]
        %v4833 = vld [vmem:[%s4830 + $0x8] sm:$0xf]
        %v4834 = vld [vmem:[%s4830 + $0xc] sm:$0xf]
        %v4835 = vld [vmem:[%s4830 + $0x10] sm:$0xf]
        %v4836 = vld [vmem:[%s4830 + $0x14] sm:$0xf]
        %v4837 = vld [vmem:[%s4830 + $0x18] sm:$0xf]
        %v4838 = vld [vmem:[%s4830 + $0x1c] sm:$0xf]
        %v4839 = vld [vmem:[%s4830 + $0x20] sm:$0xf]
        %v4840 = vld [vmem:[%s4830 + $0x24] sm:$0xf]
        %v4841 = vld [vmem:[%s4830 + $0x28] sm:$0xf]
        %v4842 = vld [vmem:[%s4830 + $0x2c] sm:$0xf]
        %v4843 = vld [vmem:[%s4830 + $0x30] sm:$0xf]
        %v4844 = vld [vmem:[%s4830 + $0x34] sm:$0xf]
        %v4845 = vld [vmem:[%s4830 + $0x38] sm:$0xf]
        %v4846 = vld [vmem:[%s4830 + $0x3c] sm:$0xf]
        %v4847 = vld [vmem:[%s4830 + $0x40] sm:$0xf]
        %v4848 = vld [vmem:[%s4830 + $0x44] sm:$0xf]
        %v4849 = vld [vmem:[%s4830 + $0x48] sm:$0xf]
        %v4850 = vld [vmem:[%s4830 + $0x4c] sm:$0xf]
        %v4851 = vld [vmem:[%s4830 + $0x50] sm:$0xf]
        %v4852 = vld [vmem:[%s4830 + $0x54] sm:$0xf]
        %v4853 = vld [vmem:[%s4830 + $0x58] sm:$0xf]
        %v4854 = vld [vmem:[%s4830 + $0x5c] sm:$0xf]
        %v4855 = vld [vmem:[%s4830 + $0x60] sm:$0xf]
        %v4856 = vld [vmem:[%s4830 + $0x64] sm:$0xf]
        %v4857 = vld [vmem:[%s4830 + $0x68] sm:$0xf]
        %v4858 = vld [vmem:[%s4830 + $0x6c] sm:$0xf]
        %v4859 = vld [vmem:[%s4830 + $0x70] sm:$0xf]
        %v4860 = vld [vmem:[%s4830 + $0x74] sm:$0xf]
        %v4861 = vld [vmem:[%s4830 + $0x78] sm:$0xf]
        %v4862 = vld [vmem:[%s4830 + $0x7c] sm:$0xf]
        %v4863 = vld [vmem:[%s4830 + $0x80] sm:$0xf]
        %v4864 = vld [vmem:[%s4830 + $0x84] sm:$0xf]
        %v4865 = vld [vmem:[%s4830 + $0x88] sm:$0xf]
        %v4866 = vld [vmem:[%s4830 + $0x8c] sm:$0xf]
        %v4867 = vld [vmem:[%s4830 + $0x90] sm:$0xf]
        %v4868 = vld [vmem:[%s4830 + $0x94] sm:$0xf]
        %v4869 = vld [vmem:[%s4830 + $0x98] sm:$0xf]
        %v4870 = vld [vmem:[%s4830 + $0x9c] sm:$0xf]
        %v4871 = vld [vmem:[%s4830 + $0xa0] sm:$0xf]
        %v4872 = vld [vmem:[%s4830 + $0xa4] sm:$0xf]
        %v4873 = vld [vmem:[%s4830 + $0xa8] sm:$0xf]
        %v4874 = vld [vmem:[%s4830 + $0xac] sm:$0xf]
        %v4875 = vld [vmem:[%s4830 + $0xb0] sm:$0xf]
        %v4876 = vld [vmem:[%s4830 + $0xb4] sm:$0xf]
        %v4877 = vld [vmem:[%s4830 + $0xb8] sm:$0xf]
        %v4878 = vld [vmem:[%s4830 + $0xbc] sm:$0xf]
        %v4943 = vunpack.c.l.b16 %v4718
        %v4944 = vunpack.c.h.b16 %v4718
        %v4945 = vunpack.c.l.b16 %v4719
        %v4946 = vunpack.c.l.b16 %v4720
        %v4947 = vunpack.c.h.b16 %v4720
        %v4948 = vunpack.c.l.b16 %v4721
        %v4949 = vunpack.c.l.b16 %v4722
        %v4950 = vunpack.c.h.b16 %v4722
        %v4951 = vunpack.c.l.b16 %v4723
        %v4952 = vunpack.c.l.b16 %v4724
        %v4953 = vunpack.c.h.b16 %v4724
        %v4954 = vunpack.c.l.b16 %v4725
        %v4955 = vunpack.c.l.b16 %v4726
        %v4956 = vunpack.c.h.b16 %v4726
        %v4957 = vunpack.c.l.b16 %v4727
        %v4958 = vunpack.c.l.b16 %v4728
        %v4959 = vunpack.c.h.b16 %v4728
        %v4960 = vunpack.c.l.b16 %v4729
        %v4961 = vunpack.c.l.b16 %v4730
        %v4962 = vunpack.c.h.b16 %v4730
        %v4963 = vunpack.c.l.b16 %v4731
        %v4964 = vunpack.c.l.b16 %v4732
        %v4965 = vunpack.c.h.b16 %v4732
        %v4966 = vunpack.c.l.b16 %v4733
        %v4967 = vunpack.c.l.b16 %v4734
        %v4968 = vunpack.c.h.b16 %v4734
        %v4969 = vunpack.c.l.b16 %v4735
        %v4970 = vunpack.c.l.b16 %v4736
        %v4971 = vunpack.c.h.b16 %v4736
        %v4972 = vunpack.c.l.b16 %v4737
        %v4973 = vunpack.c.l.b16 %v4738
        %v4974 = vunpack.c.h.b16 %v4738
        %v4975 = vunpack.c.l.b16 %v4739
        %v4976 = vunpack.c.l.b16 %v4740
        %v4977 = vunpack.c.h.b16 %v4740
        %v4978 = vunpack.c.l.b16 %v4741
        %v4979 = vunpack.c.l.b16 %v4742
        %v4980 = vunpack.c.h.b16 %v4742
        %v4981 = vunpack.c.l.b16 %v4743
        %v4982 = vunpack.c.l.b16 %v4744
        %v4983 = vunpack.c.h.b16 %v4744
        %v4984 = vunpack.c.l.b16 %v4745
        %v4985 = vunpack.c.l.b16 %v4746
        %v4986 = vunpack.c.h.b16 %v4746
        %v4987 = vunpack.c.l.b16 %v4747
        %v4988 = vunpack.c.l.b16 %v4748
        %v4989 = vunpack.c.h.b16 %v4748
        %v4990 = vunpack.c.l.b16 %v4749
        %v4991 = vunpack.c.l.b16 %v4750
        %v4992 = vunpack.c.h.b16 %v4750
        %v4993 = vunpack.c.l.b16 %v4751
        %v4994 = vunpack.c.l.b16 %v4752
        %v4995 = vunpack.c.h.b16 %v4752
        %v4996 = vunpack.c.l.b16 %v4753
        %v4997 = vunpack.c.l.b16 %v4754
        %v4998 = vunpack.c.h.b16 %v4754
        %v4999 = vunpack.c.l.b16 %v4755
        %v5000 = vunpack.c.l.b16 %v4756
        %v5001 = vunpack.c.h.b16 %v4756
        %v5002 = vunpack.c.l.b16 %v4757
        %v5003 = vunpack.c.l.b16 %v4758
        %v5004 = vunpack.c.h.b16 %v4758
        %v5005 = vunpack.c.l.b16 %v4759
        %v5006 = vunpack.c.l.b16 %v4760
        %v5007 = vunpack.c.h.b16 %v4760
        %v5008 = vunpack.c.l.b16 %v4761
        %v5009 = vunpack.c.l.b16 %v4762
        %v5010 = vunpack.c.h.b16 %v4762
        %v5011 = vunpack.c.l.b16 %v4763
        %v5012 = vunpack.c.l.b16 %v4764
        %v5013 = vunpack.c.h.b16 %v4764
        %v5014 = vunpack.c.l.b16 %v4765
        %v5015 = vunpack.c.l.b16 %v4766
        %v5016 = vunpack.c.h.b16 %v4766
        %v5017 = vunpack.c.l.b16 %v4767
        %v5018 = vunpack.c.l.b16 %v4768
        %v5019 = vunpack.c.h.b16 %v4768
        %v5020 = vunpack.c.l.b16 %v4769
        %v5021 = vunpack.c.l.b16 %v4770
        %v5022 = vunpack.c.h.b16 %v4770
        %v5023 = vunpack.c.l.b16 %v4771
        %v5024 = vunpack.c.l.b16 %v4772
        %v5025 = vunpack.c.h.b16 %v4772
        %v5026 = vunpack.c.l.b16 %v4773
        %v5027 = vunpack.c.l.b16 %v4774
        %v5028 = vunpack.c.h.b16 %v4774
        %v5029 = vunpack.c.l.b16 %v4775
        %v5030 = vunpack.c.l.b16 %v4776
        %v5031 = vunpack.c.h.b16 %v4776
        %v5032 = vunpack.c.l.b16 %v4777
        %v5033 = vunpack.c.l.b16 %v4826
        %v5034 = vunpack.c.h.b16 %v4826
        %v5035 = vunpack.c.l.b16 %v4827
        %v5036 = vunpack.c.l.b16 %v4828
        %v5037 = vunpack.c.h.b16 %v4828
        %v5038 = vunpack.c.l.b16 %v4829
        %v5039 = vpack.c.b16 %v4946, %v4943
        %v5040 = vpack.c.b16 %v4947, %v4944
        %v5041 = vpack.c.b16 %v4948, %v4945
        %v5042 = vpack.c.b16 %v4952, %v4949
        %v5043 = vpack.c.b16 %v4953, %v4950
        %v5044 = vpack.c.b16 %v4954, %v4951
        %v5045 = vpack.c.b16 %v4958, %v4955
        %v5046 = vpack.c.b16 %v4959, %v4956
        %v5047 = vpack.c.b16 %v4960, %v4957
        %v5048 = vpack.c.b16 %v4964, %v4961
        %v5049 = vpack.c.b16 %v4965, %v4962
        %v5050 = vpack.c.b16 %v4966, %v4963
        %v5051 = vpack.c.b16 %v4970, %v4967
        %v5052 = vpack.c.b16 %v4971, %v4968
        %v5053 = vpack.c.b16 %v4972, %v4969
        %v5054 = vpack.c.b16 %v4976, %v4973
        %v5055 = vpack.c.b16 %v4977, %v4974
        %v5056 = vpack.c.b16 %v4978, %v4975
        %v5057 = vpack.c.b16 %v4982, %v4979
        %v5058 = vpack.c.b16 %v4983, %v4980
        %v5059 = vpack.c.b16 %v4984, %v4981
        %v5060 = vpack.c.b16 %v4988, %v4985
        %v5061 = vpack.c.b16 %v4989, %v4986
        %v5062 = vpack.c.b16 %v4990, %v4987
        %v5063 = vpack.c.b16 %v4994, %v4991
        %v5064 = vpack.c.b16 %v4995, %v4992
        %v5065 = vpack.c.b16 %v4996, %v4993
        %v5066 = vpack.c.b16 %v5000, %v4997
        %v5067 = vpack.c.b16 %v5001, %v4998
        %v5068 = vpack.c.b16 %v5002, %v4999
        %v5069 = vpack.c.b16 %v5006, %v5003
        %v5070 = vpack.c.b16 %v5007, %v5004
        %v5071 = vpack.c.b16 %v5008, %v5005
        %v5072 = vpack.c.b16 %v5012, %v5009
        %v5073 = vpack.c.b16 %v5013, %v5010
        %v5074 = vpack.c.b16 %v5014, %v5011
        %v5075 = vpack.c.b16 %v5018, %v5015
        %v5076 = vpack.c.b16 %v5019, %v5016
        %v5077 = vpack.c.b16 %v5020, %v5017
        %v5078 = vpack.c.b16 %v5024, %v5021
        %v5079 = vpack.c.b16 %v5025, %v5022
        %v5080 = vpack.c.b16 %v5026, %v5023
        %v5081 = vpack.c.b16 %v5030, %v5027
        %v5082 = vpack.c.b16 %v5031, %v5028
        %v5083 = vpack.c.b16 %v5032, %v5029
        %v5084 = vpack.c.b16 %v5036, %v5033
        %v5085 = vpack.c.b16 %v5037, %v5034
        %v5086 = vpack.c.b16 %v5038, %v5035
        %v5183 = vunpack.c.l.b16 %v4831
        %v5184 = vunpack.c.l.b16 %v4832
        %v5185 = vunpack.c.l.b16 %v4833
        %v5186 = vunpack.c.l.b16 %v4834
        %v5187 = vunpack.c.l.b16 %v4835
        %v5188 = vunpack.c.l.b16 %v4836
        %v5189 = vunpack.c.l.b16 %v4837
        %v5190 = vunpack.c.l.b16 %v4838
        %v5191 = vunpack.c.l.b16 %v4839
        %v5192 = vunpack.c.l.b16 %v4840
        %v5193 = vunpack.c.l.b16 %v4841
        %v5194 = vunpack.c.l.b16 %v4842
        %v5195 = vunpack.c.l.b16 %v4843
        %v5196 = vunpack.c.l.b16 %v4844
        %v5197 = vunpack.c.l.b16 %v4845
        %v5198 = vunpack.c.l.b16 %v4846
        %v5199 = vunpack.c.l.b16 %v4847
        %v5200 = vunpack.c.l.b16 %v4848
        %v5201 = vunpack.c.l.b16 %v4849
        %v5202 = vunpack.c.l.b16 %v4850
        %v5203 = vunpack.c.l.b16 %v4851
        %v5204 = vunpack.c.l.b16 %v4852
        %v5205 = vunpack.c.l.b16 %v4853
        %v5206 = vunpack.c.l.b16 %v4854
        %v5207 = vunpack.c.l.b16 %v4855
        %v5208 = vunpack.c.l.b16 %v4856
        %v5209 = vunpack.c.l.b16 %v4857
        %v5210 = vunpack.c.l.b16 %v4858
        %v5211 = vunpack.c.l.b16 %v4859
        %v5212 = vunpack.c.l.b16 %v4860
        %v5213 = vunpack.c.l.b16 %v4861
        %v5214 = vunpack.c.l.b16 %v4862
        %v5215 = vunpack.c.l.b16 %v4863
        %v5216 = vunpack.c.l.b16 %v4864
        %v5217 = vunpack.c.l.b16 %v4865
        %v5218 = vunpack.c.l.b16 %v4866
        %v5219 = vunpack.c.l.b16 %v4867
        %v5220 = vunpack.c.l.b16 %v4868
        %v5221 = vunpack.c.l.b16 %v4869
        %v5222 = vunpack.c.l.b16 %v4870
        %v5223 = vunpack.c.l.b16 %v4871
        %v5224 = vunpack.c.l.b16 %v4872
        %v5225 = vunpack.c.l.b16 %v4873
        %v5226 = vunpack.c.l.b16 %v4874
        %v5227 = vunpack.c.l.b16 %v4875
        %v5228 = vunpack.c.l.b16 %v4876
        %v5229 = vunpack.c.l.b16 %v4877
        %v5230 = vunpack.c.l.b16 %v4878
        %v5231 = vpack.c.b16 %v5184, %v5183
        %v5232 = vpack.c.b16 %v5186, %v5185
        %v5233 = vpack.c.b16 %v5188, %v5187
        %v5234 = vpack.c.b16 %v5190, %v5189
        %v5235 = vpack.c.b16 %v5192, %v5191
        %v5236 = vpack.c.b16 %v5194, %v5193
        %v5237 = vpack.c.b16 %v5196, %v5195
        %v5238 = vpack.c.b16 %v5198, %v5197
        %v5239 = vpack.c.b16 %v5200, %v5199
        %v5240 = vpack.c.b16 %v5202, %v5201
        %v5241 = vpack.c.b16 %v5204, %v5203
        %v5242 = vpack.c.b16 %v5206, %v5205
        %v5243 = vpack.c.b16 %v5208, %v5207
        %v5244 = vpack.c.b16 %v5210, %v5209
        %v5245 = vpack.c.b16 %v5212, %v5211
        %v5246 = vpack.c.b16 %v5214, %v5213
        %v5247 = vpack.c.b16 %v5216, %v5215
        %v5248 = vpack.c.b16 %v5218, %v5217
        %v5249 = vpack.c.b16 %v5220, %v5219
        %v5250 = vpack.c.b16 %v5222, %v5221
        %v5251 = vpack.c.b16 %v5224, %v5223
        %v5252 = vpack.c.b16 %v5226, %v5225
        %v5253 = vpack.c.b16 %v5228, %v5227
        %v5254 = vpack.c.b16 %v5230, %v5229
        %5279 = vmatprep.subr.bf16.mxu0 0
        %5280 = vmatpush1.bf16.msra.mxu0 %v5238
        %5281 = vmatprep.subr.bf16.mxu0 0
        %5282 = vmatpush1.bf16.msra.mxu0 %v5237
        %5283 = vmatprep.subr.bf16.mxu0 0
        %5284 = vmatpush1.bf16.msra.mxu0 %v5236
        %5285 = vmatprep.subr.bf16.mxu0 0
        %5286 = vmatpush1.bf16.msra.mxu0 %v5235
        %5287 = vmatprep.subr.bf16.mxu0 0
        %5288 = vmatpush1.bf16.msra.mxu0 %v5234
        %5289 = vmatprep.subr.bf16.mxu0 0
        %5290 = vmatpush1.bf16.msra.mxu0 %v5233
        %5291 = vmatprep.subr.bf16.mxu0 0
        %5292 = vmatpush1.bf16.msra.mxu0 %v5232
        %5293 = vmatprep.subr.bf16.mxu0 0
        %5294 = vmatpush1.bf16.msra.mxu0 %v5231
        %5295 = vmatprep.subr.bf16.mxu0 0
        %5296 = vmatpush2.bf16.msra.mxu0 %v5246
        %5297 = vmatprep.subr.bf16.mxu0 0
        %5298 = vmatpush2.bf16.msra.mxu0 %v5245
        %5299 = vmatprep.subr.bf16.mxu0 0
        %5300 = vmatpush2.bf16.msra.mxu0 %v5244
        %5301 = vmatprep.subr.bf16.mxu0 0
        %5302 = vmatpush2.bf16.msra.mxu0 %v5243
        %5303 = vmatprep.subr.bf16.mxu0 0
        %5304 = vmatpush2.bf16.msra.mxu0 %v5242
        %5305 = vmatprep.subr.bf16.mxu0 0
        %5306 = vmatpush2.bf16.msra.mxu0 %v5241
        %5307 = vmatprep.subr.bf16.mxu0 0
        %5308 = vmatpush2.bf16.msra.mxu0 %v5240
        %5309 = vmatprep.subr.bf16.mxu0 0
        %5310 = vmatpush2.bf16.msra.mxu0 %v5239
        %5311 = vmatprep.mubr.bf16.mxu0 %v5040
        %5312 = vmatmul.mubr.bf16.gmra.mxu0 %v5039
        %v5313 = vpop.f32.mrf.mxu0
        %v5314 = vadd.f32 0.0, %v5313
        %v5315 = vpop.f32.mrf.mxu0
        %v5316 = vpop.f32.mrf.mxu0
        %v5317 = vadd.f32 0.0, %v5316
        %v5318 = vpop.f32.mrf.mxu0
        %5319 = vmatprep.mubr.bf16.mxu0 %v5043
        %5320 = vmatmul.mubr.bf16.gmra.mxu0 %v5042
        %v5321 = vpop.f32.mrf.mxu0
        %v5322 = vadd.f32 0.0, %v5321
        %v5323 = vpop.f32.mrf.mxu0
        %v5324 = vpop.f32.mrf.mxu0
        %v5325 = vadd.f32 0.0, %v5324
        %v5326 = vpop.f32.mrf.mxu0
        %5327 = vmatprep.mubr.bf16.mxu0 %v5046
        %5328 = vmatmul.mubr.bf16.gmra.mxu0 %v5045
        %v5329 = vpop.f32.mrf.mxu0
        %v5330 = vadd.f32 0.0, %v5329
        %v5331 = vpop.f32.mrf.mxu0
        %v5332 = vpop.f32.mrf.mxu0
        %v5333 = vadd.f32 0.0, %v5332
        %v5334 = vpop.f32.mrf.mxu0
        %5335 = vmatprep.mubr.bf16.mxu0 %v5049
        %5336 = vmatmul.mubr.bf16.gmra.mxu0 %v5048
        %v5337 = vpop.f32.mrf.mxu0
        %v5338 = vadd.f32 0.0, %v5337
        %v5339 = vpop.f32.mrf.mxu0
        %v5340 = vpop.f32.mrf.mxu0
        %v5341 = vadd.f32 0.0, %v5340
        %v5342 = vpop.f32.mrf.mxu0
        %5343 = vmatprep.mubr.bf16.mxu0 %v5052
        %5344 = vmatmul.mubr.bf16.gmra.mxu0 %v5051
        %v5345 = vpop.f32.mrf.mxu0
        %v5346 = vadd.f32 0.0, %v5345
        %v5347 = vpop.f32.mrf.mxu0
        %v5348 = vpop.f32.mrf.mxu0
        %v5349 = vadd.f32 0.0, %v5348
        %v5350 = vpop.f32.mrf.mxu0
        %5351 = vmatprep.mubr.bf16.mxu0 %v5055
        %5352 = vmatmul.mubr.bf16.gmra.mxu0 %v5054
        %v5353 = vpop.f32.mrf.mxu0
        %v5354 = vadd.f32 0.0, %v5353
        %v5355 = vpop.f32.mrf.mxu0
        %v5356 = vpop.f32.mrf.mxu0
        %v5357 = vadd.f32 0.0, %v5356
        %v5358 = vpop.f32.mrf.mxu0
        %5359 = vmatprep.mubr.bf16.mxu0 %v5058
        %5360 = vmatmul.mubr.bf16.gmra.mxu0 %v5057
        %v5361 = vpop.f32.mrf.mxu0
        %v5362 = vadd.f32 0.0, %v5361
        %v5363 = vpop.f32.mrf.mxu0
        %v5364 = vpop.f32.mrf.mxu0
        %v5365 = vadd.f32 0.0, %v5364
        %v5366 = vpop.f32.mrf.mxu0
        %5367 = vmatprep.mubr.bf16.mxu0 %v5061
        %5368 = vmatmul.mubr.bf16.gmra.mxu0 %v5060
        %v5369 = vpop.f32.mrf.mxu0
        %v5370 = vadd.f32 0.0, %v5369
        %v5371 = vpop.f32.mrf.mxu0
        %v5372 = vpop.f32.mrf.mxu0
        %v5373 = vadd.f32 0.0, %v5372
        %v5374 = vpop.f32.mrf.mxu0
        %5375 = vmatprep.mubr.bf16.mxu0 %v5064
        %5376 = vmatmul.mubr.bf16.gmra.mxu0 %v5063
        %v5377 = vpop.f32.mrf.mxu0
        %v5378 = vadd.f32 0.0, %v5377
        %v5379 = vpop.f32.mrf.mxu0
        %v5380 = vpop.f32.mrf.mxu0
        %v5381 = vadd.f32 0.0, %v5380
        %v5382 = vpop.f32.mrf.mxu0
        %5383 = vmatprep.mubr.bf16.mxu0 %v5067
        %5384 = vmatmul.mubr.bf16.gmra.mxu0 %v5066
        %v5385 = vpop.f32.mrf.mxu0
        %v5386 = vadd.f32 0.0, %v5385
        %v5387 = vpop.f32.mrf.mxu0
        %v5388 = vpop.f32.mrf.mxu0
        %v5389 = vadd.f32 0.0, %v5388
        %v5390 = vpop.f32.mrf.mxu0
        %5391 = vmatprep.mubr.bf16.mxu0 %v5070
        %5392 = vmatmul.mubr.bf16.gmra.mxu0 %v5069
        %v5393 = vpop.f32.mrf.mxu0
        %v5394 = vadd.f32 0.0, %v5393
        %v5395 = vpop.f32.mrf.mxu0
        %v5396 = vpop.f32.mrf.mxu0
        %v5397 = vadd.f32 0.0, %v5396
        %v5398 = vpop.f32.mrf.mxu0
        %5399 = vmatprep.mubr.bf16.mxu0 %v5073
        %5400 = vmatmul.mubr.bf16.gmra.mxu0 %v5072
        %v5401 = vpop.f32.mrf.mxu0
        %v5402 = vadd.f32 0.0, %v5401
        %v5403 = vpop.f32.mrf.mxu0
        %v5404 = vpop.f32.mrf.mxu0
        %v5405 = vadd.f32 0.0, %v5404
        %v5406 = vpop.f32.mrf.mxu0
        %5407 = vmatprep.mubr.bf16.mxu0 %v5076
        %5408 = vmatmul.mubr.bf16.gmra.mxu0 %v5075
        %v5409 = vpop.f32.mrf.mxu0
        %v5410 = vadd.f32 0.0, %v5409
        %v5411 = vpop.f32.mrf.mxu0
        %v5412 = vpop.f32.mrf.mxu0
        %v5413 = vadd.f32 0.0, %v5412
        %v5414 = vpop.f32.mrf.mxu0
        %5415 = vmatprep.mubr.bf16.mxu0 %v5079
        %5416 = vmatmul.mubr.bf16.gmra.mxu0 %v5078
        %v5417 = vpop.f32.mrf.mxu0
        %v5418 = vadd.f32 0.0, %v5417
        %v5419 = vpop.f32.mrf.mxu0
        %v5420 = vpop.f32.mrf.mxu0
        %v5421 = vadd.f32 0.0, %v5420
        %v5422 = vpop.f32.mrf.mxu0
        %5423 = vmatprep.mubr.bf16.mxu0 %v5082
        %5424 = vmatmul.mubr.bf16.gmra.mxu0 %v5081
        %v5425 = vpop.f32.mrf.mxu0
        %v5426 = vadd.f32 0.0, %v5425
        %v5427 = vpop.f32.mrf.mxu0
        %v5428 = vpop.f32.mrf.mxu0
        %v5429 = vadd.f32 0.0, %v5428
        %v5430 = vpop.f32.mrf.mxu0
        %5431 = vmatprep.mubr.bf16.mxu0 %v5085
        %5432 = vmatmul.mubr.bf16.gmra.mxu0 %v5084
        %v5433 = vpop.f32.mrf.mxu0
        %v5434 = vadd.f32 0.0, %v5433
        %v5435 = vpop.f32.mrf.mxu0
        %v5436 = vpop.f32.mrf.mxu0
        %v5437 = vadd.f32 0.0, %v5436
        %v5438 = vpop.f32.mrf.mxu0
        %5439 = vdwg.mxu0
        %5440 = vmatprep.subr.bf16.mxu0 0
        %5441 = vmatpush1.bf16.msra.mxu0 %v5254
        %5442 = vmatprep.subr.bf16.mxu0 0
        %5443 = vmatpush1.bf16.msra.mxu0 %v5253
        %5444 = vmatprep.subr.bf16.mxu0 0
        %5445 = vmatpush1.bf16.msra.mxu0 %v5252
        %5446 = vmatprep.subr.bf16.mxu0 0
        %5447 = vmatpush1.bf16.msra.mxu0 %v5251
        %5448 = vmatprep.subr.bf16.mxu0 0
        %5449 = vmatpush1.bf16.msra.mxu0 %v5250
        %5450 = vmatprep.subr.bf16.mxu0 0
        %5451 = vmatpush1.bf16.msra.mxu0 %v5249
        %5452 = vmatprep.subr.bf16.mxu0 0
        %5453 = vmatpush1.bf16.msra.mxu0 %v5248
        %5454 = vmatprep.subr.bf16.mxu0 0
        %5455 = vmatpush1.bf16.msra.mxu0 %v5247
        %5456 = vmatprep.subr.bf16.mxu0 0
        %5457 = vmatpush2.bf16.msra.mxu0 0
        %5458 = vmatprep.subr.bf16.mxu0 0
        %5459 = vmatpush2.bf16.msra.mxu0 0
        %5460 = vmatprep.subr.bf16.mxu0 0
        %5461 = vmatpush2.bf16.msra.mxu0 0
        %5462 = vmatprep.subr.bf16.mxu0 0
        %5463 = vmatpush2.bf16.msra.mxu0 0
        %5464 = vmatprep.subr.bf16.mxu0 0
        %5465 = vmatpush2.bf16.msra.mxu0 0
        %5466 = vmatprep.subr.bf16.mxu0 0
        %5467 = vmatpush2.bf16.msra.mxu0 0
        %5468 = vmatprep.subr.bf16.mxu0 0
        %5469 = vmatpush2.bf16.msra.mxu0 0
        %5470 = vmatprep.subr.bf16.mxu0 0
        %5471 = vmatpush2.bf16.msra.mxu0 0
        %5472 = vmatprep.mubr.bf16.mxu0 0
        %5473 = vmatmul.mubr.bf16.gmra.mxu0 %v5041
        %v5474 = vpop.f32.mrf.mxu0
        %v5475 = vadd.f32 %v5314, %v5474
        %v5476 = vpop.f32.mrf.mxu0
        %v5477 = vpop.f32.mrf.mxu0
        %v5478 = vadd.f32 %v5317, %v5477
        %v5479 = vpop.f32.mrf.mxu0
        %5480 = vmatprep.mubr.bf16.mxu0 0
        %5481 = vmatmul.mubr.bf16.gmra.mxu0 %v5044
        %v5482 = vpop.f32.mrf.mxu0
        %v5483 = vadd.f32 %v5322, %v5482
        %v5484 = vpop.f32.mrf.mxu0
        %v5485 = vpop.f32.mrf.mxu0
        %v5486 = vadd.f32 %v5325, %v5485
        %v5487 = vpop.f32.mrf.mxu0
        %5488 = vmatprep.mubr.bf16.mxu0 0
        %5489 = vmatmul.mubr.bf16.gmra.mxu0 %v5047
        %v5490 = vpop.f32.mrf.mxu0
        %v5491 = vadd.f32 %v5330, %v5490
        %v5492 = vpop.f32.mrf.mxu0
        %v5493 = vpop.f32.mrf.mxu0
        %v5494 = vadd.f32 %v5333, %v5493
        %v5495 = vpop.f32.mrf.mxu0
        %5496 = vmatprep.mubr.bf16.mxu0 0
        %5497 = vmatmul.mubr.bf16.gmra.mxu0 %v5050
        %v5498 = vpop.f32.mrf.mxu0
        %v5499 = vadd.f32 %v5338, %v5498
        %v5500 = vpop.f32.mrf.mxu0
        %v5501 = vpop.f32.mrf.mxu0
        %v5502 = vadd.f32 %v5341, %v5501
        %v5503 = vpop.f32.mrf.mxu0
        %5504 = vmatprep.mubr.bf16.mxu0 0
        %5505 = vmatmul.mubr.bf16.gmra.mxu0 %v5053
        %v5506 = vpop.f32.mrf.mxu0
        %v5507 = vadd.f32 %v5346, %v5506
        %v5508 = vpop.f32.mrf.mxu0
        %v5509 = vpop.f32.mrf.mxu0
        %v5510 = vadd.f32 %v5349, %v5509
        %v5511 = vpop.f32.mrf.mxu0
        %5512 = vmatprep.mubr.bf16.mxu0 0
        %5513 = vmatmul.mubr.bf16.gmra.mxu0 %v5056
        %v5514 = vpop.f32.mrf.mxu0
        %v5515 = vadd.f32 %v5354, %v5514
        %v5516 = vpop.f32.mrf.mxu0
        %v5517 = vpop.f32.mrf.mxu0
        %v5518 = vadd.f32 %v5357, %v5517
        %v5519 = vpop.f32.mrf.mxu0
        %5520 = vmatprep.mubr.bf16.mxu0 0
        %5521 = vmatmul.mubr.bf16.gmra.mxu0 %v5059
        %v5522 = vpop.f32.mrf.mxu0
        %v5523 = vadd.f32 %v5362, %v5522
        %v5524 = vpop.f32.mrf.mxu0
        %v5525 = vpop.f32.mrf.mxu0
        %v5526 = vadd.f32 %v5365, %v5525
        %v5527 = vpop.f32.mrf.mxu0
        %5528 = vmatprep.mubr.bf16.mxu0 0
        %5529 = vmatmul.mubr.bf16.gmra.mxu0 %v5062
        %v5530 = vpop.f32.mrf.mxu0
        %v5531 = vadd.f32 %v5370, %v5530
        %v5532 = vpop.f32.mrf.mxu0
        %v5533 = vpop.f32.mrf.mxu0
        %v5534 = vadd.f32 %v5373, %v5533
        %v5535 = vpop.f32.mrf.mxu0
        %5536 = vmatprep.mubr.bf16.mxu0 0
        %5537 = vmatmul.mubr.bf16.gmra.mxu0 %v5065
        %v5538 = vpop.f32.mrf.mxu0
        %v5539 = vadd.f32 %v5378, %v5538
        %v5540 = vpop.f32.mrf.mxu0
        %v5541 = vpop.f32.mrf.mxu0
        %v5542 = vadd.f32 %v5381, %v5541
        %v5543 = vpop.f32.mrf.mxu0
        %5544 = vmatprep.mubr.bf16.mxu0 0
        %5545 = vmatmul.mubr.bf16.gmra.mxu0 %v5068
        %v5546 = vpop.f32.mrf.mxu0
        %v5547 = vadd.f32 %v5386, %v5546
        %v5548 = vpop.f32.mrf.mxu0
        %v5549 = vpop.f32.mrf.mxu0
        %v5550 = vadd.f32 %v5389, %v5549
        %v5551 = vpop.f32.mrf.mxu0
        %5552 = vmatprep.mubr.bf16.mxu0 0
        %5553 = vmatmul.mubr.bf16.gmra.mxu0 %v5071
        %v5554 = vpop.f32.mrf.mxu0
        %v5555 = vadd.f32 %v5394, %v5554
        %v5556 = vpop.f32.mrf.mxu0
        %v5557 = vpop.f32.mrf.mxu0
        %v5558 = vadd.f32 %v5397, %v5557
        %v5559 = vpop.f32.mrf.mxu0
        %5560 = vmatprep.mubr.bf16.mxu0 0
        %5561 = vmatmul.mubr.bf16.gmra.mxu0 %v5074
        %v5562 = vpop.f32.mrf.mxu0
        %v5563 = vadd.f32 %v5402, %v5562
        %v5564 = vpop.f32.mrf.mxu0
        %v5565 = vpop.f32.mrf.mxu0
        %v5566 = vadd.f32 %v5405, %v5565
        %v5567 = vpop.f32.mrf.mxu0
        %5568 = vmatprep.mubr.bf16.mxu0 0
        %5569 = vmatmul.mubr.bf16.gmra.mxu0 %v5077
        %v5570 = vpop.f32.mrf.mxu0
        %v5571 = vadd.f32 %v5410, %v5570
        %v5572 = vpop.f32.mrf.mxu0
        %v5573 = vpop.f32.mrf.mxu0
        %v5574 = vadd.f32 %v5413, %v5573
        %v5575 = vpop.f32.mrf.mxu0
        %5576 = vmatprep.mubr.bf16.mxu0 0
        %5577 = vmatmul.mubr.bf16.gmra.mxu0 %v5080
        %v5578 = vpop.f32.mrf.mxu0
        %v5579 = vadd.f32 %v5418, %v5578
        %v5580 = vpop.f32.mrf.mxu0
        %v5581 = vpop.f32.mrf.mxu0
        %v5582 = vadd.f32 %v5421, %v5581
        %v5583 = vpop.f32.mrf.mxu0
        %5584 = vmatprep.mubr.bf16.mxu0 0
        %5585 = vmatmul.mubr.bf16.gmra.mxu0 %v5083
        %v5586 = vpop.f32.mrf.mxu0
        %v5587 = vadd.f32 %v5426, %v5586
        %v5588 = vpop.f32.mrf.mxu0
        %v5589 = vpop.f32.mrf.mxu0
        %v5590 = vadd.f32 %v5429, %v5589
        %v5591 = vpop.f32.mrf.mxu0
        %5592 = vmatprep.mubr.bf16.mxu0 0
        %5593 = vmatmul.mubr.bf16.gmra.mxu0 %v5086
        %v5594 = vpop.f32.mrf.mxu0
        %v5595 = vadd.f32 %v5434, %v5594
        %v5596 = vpop.f32.mrf.mxu0
        %v5597 = vpop.f32.mrf.mxu0
        %v5598 = vadd.f32 %v5437, %v5597
        %v5599 = vpop.f32.mrf.mxu0
        %5600 = vdwg.mxu0
        %v5605 = vunpack.c.l.b16 %v4714
        %v5606 = vunpack.c.h.b16 %v4714
        %v5607 = vunpack.c.l.b16 %v4715
        %v5608 = vunpack.c.l.b16 %v4716
        %v5609 = vunpack.c.h.b16 %v4716
        %v5610 = vunpack.c.l.b16 %v4717
        %v5611 = vpack.c.b16 %v5608, %v5605
        %v5612 = vpack.c.b16 %v5609, %v5606
        %v5613 = vpack.c.b16 %v5610, %v5607
        %v5665 = vunpack.c.l.b16 %v4778
        %v5666 = vunpack.c.l.b16 %v4779
        %v5667 = vunpack.c.l.b16 %v4780
        %v5668 = vunpack.c.l.b16 %v4781
        %v5669 = vunpack.c.l.b16 %v4782
        %v5670 = vunpack.c.l.b16 %v4783
        %v5671 = vunpack.c.l.b16 %v4784
        %v5672 = vunpack.c.l.b16 %v4785
        %v5673 = vunpack.c.l.b16 %v4786
        %v5674 = vunpack.c.l.b16 %v4787
        %v5675 = vunpack.c.l.b16 %v4788
        %v5676 = vunpack.c.l.b16 %v4789
        %v5677 = vunpack.c.l.b16 %v4790
        %v5678 = vunpack.c.l.b16 %v4791
        %v5679 = vunpack.c.l.b16 %v4792
        %v5680 = vunpack.c.l.b16 %v4793
        %v5681 = vunpack.c.l.b16 %v4794
        %v5682 = vunpack.c.l.b16 %v4795
        %v5683 = vunpack.c.l.b16 %v4796
        %v5684 = vunpack.c.l.b16 %v4797
        %v5685 = vunpack.c.l.b16 %v4798
        %v5686 = vunpack.c.l.b16 %v4799
        %v5687 = vunpack.c.l.b16 %v4800
        %v5688 = vunpack.c.l.b16 %v4801
        %v5689 = vunpack.c.l.b16 %v4802
        %v5690 = vunpack.c.l.b16 %v4803
        %v5691 = vunpack.c.l.b16 %v4804
        %v5692 = vunpack.c.l.b16 %v4805
        %v5693 = vunpack.c.l.b16 %v4806
        %v5694 = vunpack.c.l.b16 %v4807
        %v5695 = vunpack.c.l.b16 %v4808
        %v5696 = vunpack.c.l.b16 %v4809
        %v5697 = vunpack.c.l.b16 %v4810
        %v5698 = vunpack.c.l.b16 %v4811
        %v5699 = vunpack.c.l.b16 %v4812
        %v5700 = vunpack.c.l.b16 %v4813
        %v5701 = vunpack.c.l.b16 %v4814
        %v5702 = vunpack.c.l.b16 %v4815
        %v5703 = vunpack.c.l.b16 %v4816
        %v5704 = vunpack.c.l.b16 %v4817
        %v5705 = vunpack.c.l.b16 %v4818
        %v5706 = vunpack.c.l.b16 %v4819
        %v5707 = vunpack.c.l.b16 %v4820
        %v5708 = vunpack.c.l.b16 %v4821
        %v5709 = vunpack.c.l.b16 %v4822
        %v5710 = vunpack.c.l.b16 %v4823
        %v5711 = vunpack.c.l.b16 %v4824
        %v5712 = vunpack.c.l.b16 %v4825
        %v5713 = vpack.c.b16 %v5666, %v5665
        %v5714 = vpack.c.b16 %v5668, %v5667
        %v5715 = vpack.c.b16 %v5670, %v5669
        %v5716 = vpack.c.b16 %v5672, %v5671
        %v5717 = vpack.c.b16 %v5674, %v5673
        %v5718 = vpack.c.b16 %v5676, %v5675
        %v5719 = vpack.c.b16 %v5678, %v5677
        %v5720 = vpack.c.b16 %v5680, %v5679
        %v5721 = vpack.c.b16 %v5682, %v5681
        %v5722 = vpack.c.b16 %v5684, %v5683
        %v5723 = vpack.c.b16 %v5686, %v5685
        %v5724 = vpack.c.b16 %v5688, %v5687
        %v5725 = vpack.c.b16 %v5690, %v5689
        %v5726 = vpack.c.b16 %v5692, %v5691
        %v5727 = vpack.c.b16 %v5694, %v5693
        %v5728 = vpack.c.b16 %v5696, %v5695
        %v5729 = vpack.c.b16 %v5698, %v5697
        %v5730 = vpack.c.b16 %v5700, %v5699
        %v5731 = vpack.c.b16 %v5702, %v5701
        %v5732 = vpack.c.b16 %v5704, %v5703
        %v5733 = vpack.c.b16 %v5706, %v5705
        %v5734 = vpack.c.b16 %v5708, %v5707
        %v5735 = vpack.c.b16 %v5710, %v5709
        %v5736 = vpack.c.b16 %v5712, %v5711
        %5761 = vmatprep.subr.bf16.mxu0 0
        %5762 = vmatpush1.bf16.msra.mxu0 %v5720
        %5763 = vmatprep.subr.bf16.mxu0 0
        %5764 = vmatpush1.bf16.msra.mxu0 %v5719
        %5765 = vmatprep.subr.bf16.mxu0 0
        %5766 = vmatpush1.bf16.msra.mxu0 %v5718
        %5767 = vmatprep.subr.bf16.mxu0 0
        %5768 = vmatpush1.bf16.msra.mxu0 %v5717
        %5769 = vmatprep.subr.bf16.mxu0 0
        %5770 = vmatpush1.bf16.msra.mxu0 %v5716
        %5771 = vmatprep.subr.bf16.mxu0 0
        %5772 = vmatpush1.bf16.msra.mxu0 %v5715
        %5773 = vmatprep.subr.bf16.mxu0 0
        %5774 = vmatpush1.bf16.msra.mxu0 %v5714
        %5775 = vmatprep.subr.bf16.mxu0 0
        %5776 = vmatpush1.bf16.msra.mxu0 %v5713
        %5777 = vmatprep.subr.bf16.mxu0 0
        %5778 = vmatpush2.bf16.msra.mxu0 %v5728
        %5779 = vmatprep.subr.bf16.mxu0 0
        %5780 = vmatpush2.bf16.msra.mxu0 %v5727
        %5781 = vmatprep.subr.bf16.mxu0 0
        %5782 = vmatpush2.bf16.msra.mxu0 %v5726
        %5783 = vmatprep.subr.bf16.mxu0 0
        %5784 = vmatpush2.bf16.msra.mxu0 %v5725
        %5785 = vmatprep.subr.bf16.mxu0 0
        %5786 = vmatpush2.bf16.msra.mxu0 %v5724
        %5787 = vmatprep.subr.bf16.mxu0 0
        %5788 = vmatpush2.bf16.msra.mxu0 %v5723
        %5789 = vmatprep.subr.bf16.mxu0 0
        %5790 = vmatpush2.bf16.msra.mxu0 %v5722
        %5791 = vmatprep.subr.bf16.mxu0 0
        %5792 = vmatpush2.bf16.msra.mxu0 %v5721
        %5793 = vmatprep.mubr.bf16.mxu0 %v5612
        %5794 = vmatmul.mubr.bf16.gmra.mxu0 %v5611
        %v5795 = vpop.f32.mrf.mxu0
        %v5796 = vadd.f32 %v5475, %v5795
        %v5797 = vpop.f32.mrf.mxu0
        %v5798 = vpop.f32.mrf.mxu0
        %v5799 = vadd.f32 %v5478, %v5798
        %v5800 = vpop.f32.mrf.mxu0
        %5801 = vmatprep.mubr.bf16.mxu0 %v5040
        %5802 = vmatmul.mubr.bf16.gmra.mxu0 %v5039
        %v5803 = vpop.f32.mrf.mxu0
        %v5804 = vadd.f32 %v5483, %v5803
        %v5805 = vpop.f32.mrf.mxu0
        %v5806 = vpop.f32.mrf.mxu0
        %v5807 = vadd.f32 %v5486, %v5806
        %v5808 = vpop.f32.mrf.mxu0
        %5809 = vmatprep.mubr.bf16.mxu0 %v5043
        %5810 = vmatmul.mubr.bf16.gmra.mxu0 %v5042
        %v5811 = vpop.f32.mrf.mxu0
        %v5812 = vadd.f32 %v5491, %v5811
        %v5813 = vpop.f32.mrf.mxu0
        %v5814 = vpop.f32.mrf.mxu0
        %v5815 = vadd.f32 %v5494, %v5814
        %v5816 = vpop.f32.mrf.mxu0
        %5817 = vmatprep.mubr.bf16.mxu0 %v5046
        %5818 = vmatmul.mubr.bf16.gmra.mxu0 %v5045
        %v5819 = vpop.f32.mrf.mxu0
        %v5820 = vadd.f32 %v5499, %v5819
        %v5821 = vpop.f32.mrf.mxu0
        %v5822 = vpop.f32.mrf.mxu0
        %v5823 = vadd.f32 %v5502, %v5822
        %v5824 = vpop.f32.mrf.mxu0
        %5825 = vmatprep.mubr.bf16.mxu0 %v5049
        %5826 = vmatmul.mubr.bf16.gmra.mxu0 %v5048
        %v5827 = vpop.f32.mrf.mxu0
        %v5828 = vadd.f32 %v5507, %v5827
        %v5829 = vpop.f32.mrf.mxu0
        %v5830 = vpop.f32.mrf.mxu0
        %v5831 = vadd.f32 %v5510, %v5830
        %v5832 = vpop.f32.mrf.mxu0
        %5833 = vmatprep.mubr.bf16.mxu0 %v5052
        %5834 = vmatmul.mubr.bf16.gmra.mxu0 %v5051
        %v5835 = vpop.f32.mrf.mxu0
        %v5836 = vadd.f32 %v5515, %v5835
        %v5837 = vpop.f32.mrf.mxu0
        %v5838 = vpop.f32.mrf.mxu0
        %v5839 = vadd.f32 %v5518, %v5838
        %v5840 = vpop.f32.mrf.mxu0
        %5841 = vmatprep.mubr.bf16.mxu0 %v5055
        %5842 = vmatmul.mubr.bf16.gmra.mxu0 %v5054
        %v5843 = vpop.f32.mrf.mxu0
        %v5844 = vadd.f32 %v5523, %v5843
        %v5845 = vpop.f32.mrf.mxu0
        %v5846 = vpop.f32.mrf.mxu0
        %v5847 = vadd.f32 %v5526, %v5846
        %v5848 = vpop.f32.mrf.mxu0
        %5849 = vmatprep.mubr.bf16.mxu0 %v5058
        %5850 = vmatmul.mubr.bf16.gmra.mxu0 %v5057
        %v5851 = vpop.f32.mrf.mxu0
        %v5852 = vadd.f32 %v5531, %v5851
        %v5853 = vpop.f32.mrf.mxu0
        %v5854 = vpop.f32.mrf.mxu0
        %v5855 = vadd.f32 %v5534, %v5854
        %v5856 = vpop.f32.mrf.mxu0
        %5857 = vmatprep.mubr.bf16.mxu0 %v5061
        %5858 = vmatmul.mubr.bf16.gmra.mxu0 %v5060
        %v5859 = vpop.f32.mrf.mxu0
        %v5860 = vadd.f32 %v5539, %v5859
        %v5861 = vpop.f32.mrf.mxu0
        %v5862 = vpop.f32.mrf.mxu0
        %v5863 = vadd.f32 %v5542, %v5862
        %v5864 = vpop.f32.mrf.mxu0
        %5865 = vmatprep.mubr.bf16.mxu0 %v5064
        %5866 = vmatmul.mubr.bf16.gmra.mxu0 %v5063
        %v5867 = vpop.f32.mrf.mxu0
        %v5868 = vadd.f32 %v5547, %v5867
        %v5869 = vpop.f32.mrf.mxu0
        %v5870 = vpop.f32.mrf.mxu0
        %v5871 = vadd.f32 %v5550, %v5870
        %v5872 = vpop.f32.mrf.mxu0
        %5873 = vmatprep.mubr.bf16.mxu0 %v5067
        %5874 = vmatmul.mubr.bf16.gmra.mxu0 %v5066
        %v5875 = vpop.f32.mrf.mxu0
        %v5876 = vadd.f32 %v5555, %v5875
        %v5877 = vpop.f32.mrf.mxu0
        %v5878 = vpop.f32.mrf.mxu0
        %v5879 = vadd.f32 %v5558, %v5878
        %v5880 = vpop.f32.mrf.mxu0
        %5881 = vmatprep.mubr.bf16.mxu0 %v5070
        %5882 = vmatmul.mubr.bf16.gmra.mxu0 %v5069
        %v5883 = vpop.f32.mrf.mxu0
        %v5884 = vadd.f32 %v5563, %v5883
        %v5885 = vpop.f32.mrf.mxu0
        %v5886 = vpop.f32.mrf.mxu0
        %v5887 = vadd.f32 %v5566, %v5886
        %v5888 = vpop.f32.mrf.mxu0
        %5889 = vmatprep.mubr.bf16.mxu0 %v5073
        %5890 = vmatmul.mubr.bf16.gmra.mxu0 %v5072
        %v5891 = vpop.f32.mrf.mxu0
        %v5892 = vadd.f32 %v5571, %v5891
        %v5893 = vpop.f32.mrf.mxu0
        %v5894 = vpop.f32.mrf.mxu0
        %v5895 = vadd.f32 %v5574, %v5894
        %v5896 = vpop.f32.mrf.mxu0
        %5897 = vmatprep.mubr.bf16.mxu0 %v5076
        %5898 = vmatmul.mubr.bf16.gmra.mxu0 %v5075
        %v5899 = vpop.f32.mrf.mxu0
        %v5900 = vadd.f32 %v5579, %v5899
        %v5901 = vpop.f32.mrf.mxu0
        %v5902 = vpop.f32.mrf.mxu0
        %v5903 = vadd.f32 %v5582, %v5902
        %v5904 = vpop.f32.mrf.mxu0
        %5905 = vmatprep.mubr.bf16.mxu0 %v5079
        %5906 = vmatmul.mubr.bf16.gmra.mxu0 %v5078
        %v5907 = vpop.f32.mrf.mxu0
        %v5908 = vadd.f32 %v5587, %v5907
        %v5909 = vpop.f32.mrf.mxu0
        %v5910 = vpop.f32.mrf.mxu0
        %v5911 = vadd.f32 %v5590, %v5910
        %v5912 = vpop.f32.mrf.mxu0
        %5913 = vmatprep.mubr.bf16.mxu0 %v5082
        %5914 = vmatmul.mubr.bf16.gmra.mxu0 %v5081
        %v5915 = vpop.f32.mrf.mxu0
        %v5916 = vadd.f32 %v5595, %v5915
        %v5917 = vpop.f32.mrf.mxu0
        %v5918 = vpop.f32.mrf.mxu0
        %v5919 = vadd.f32 %v5598, %v5918
        %v5920 = vpop.f32.mrf.mxu0
        %5921 = vdwg.mxu0
        %5922 = vmatprep.subr.bf16.mxu0 0
        %5923 = vmatpush1.bf16.msra.mxu0 %v5736
        %5924 = vmatprep.subr.bf16.mxu0 0
        %5925 = vmatpush1.bf16.msra.mxu0 %v5735
        %5926 = vmatprep.subr.bf16.mxu0 0
        %5927 = vmatpush1.bf16.msra.mxu0 %v5734
        %5928 = vmatprep.subr.bf16.mxu0 0
        %5929 = vmatpush1.bf16.msra.mxu0 %v5733
        %5930 = vmatprep.subr.bf16.mxu0 0
        %5931 = vmatpush1.bf16.msra.mxu0 %v5732
        %5932 = vmatprep.subr.bf16.mxu0 0
        %5933 = vmatpush1.bf16.msra.mxu0 %v5731
        %5934 = vmatprep.subr.bf16.mxu0 0
        %5935 = vmatpush1.bf16.msra.mxu0 %v5730
        %5936 = vmatprep.subr.bf16.mxu0 0
        %5937 = vmatpush1.bf16.msra.mxu0 %v5729
        %5938 = vmatprep.subr.bf16.mxu0 0
        %5939 = vmatpush2.bf16.msra.mxu0 0
        %5940 = vmatprep.subr.bf16.mxu0 0
        %5941 = vmatpush2.bf16.msra.mxu0 0
        %5942 = vmatprep.subr.bf16.mxu0 0
        %5943 = vmatpush2.bf16.msra.mxu0 0
        %5944 = vmatprep.subr.bf16.mxu0 0
        %5945 = vmatpush2.bf16.msra.mxu0 0
        %5946 = vmatprep.subr.bf16.mxu0 0
        %5947 = vmatpush2.bf16.msra.mxu0 0
        %5948 = vmatprep.subr.bf16.mxu0 0
        %5949 = vmatpush2.bf16.msra.mxu0 0
        %5950 = vmatprep.subr.bf16.mxu0 0
        %5951 = vmatpush2.bf16.msra.mxu0 0
        %5952 = vmatprep.subr.bf16.mxu0 0
        %5953 = vmatpush2.bf16.msra.mxu0 0
        %5954 = vmatprep.mubr.bf16.mxu0 0
        %5955 = vmatmul.mubr.bf16.gmra.mxu0 %v5613
        %v5956 = vpop.f32.mrf.mxu0
        %v5957 = vadd.f32 %v5796, %v5956
        %v5958 = vpop.f32.mrf.mxu0
        %v5959 = vpop.f32.mrf.mxu0
        %v5960 = vadd.f32 %v5799, %v5959
        %v5961 = vpop.f32.mrf.mxu0
        %5962 = vmatprep.mubr.bf16.mxu0 0
        %5963 = vmatmul.mubr.bf16.gmra.mxu0 %v5041
        %v5964 = vpop.f32.mrf.mxu0
        %v5965 = vadd.f32 %v5804, %v5964
        %v5966 = vpop.f32.mrf.mxu0
        %v5967 = vpop.f32.mrf.mxu0
        %v5968 = vadd.f32 %v5807, %v5967
        %v5969 = vpop.f32.mrf.mxu0
        %5970 = vmatprep.mubr.bf16.mxu0 0
        %5971 = vmatmul.mubr.bf16.gmra.mxu0 %v5044
        %v5972 = vpop.f32.mrf.mxu0
        %v5973 = vadd.f32 %v5812, %v5972
        %v5974 = vpop.f32.mrf.mxu0
        %v5975 = vpop.f32.mrf.mxu0
        %v5976 = vadd.f32 %v5815, %v5975
        %v5977 = vpop.f32.mrf.mxu0
        %5978 = vmatprep.mubr.bf16.mxu0 0
        %5979 = vmatmul.mubr.bf16.gmra.mxu0 %v5047
        %v5980 = vpop.f32.mrf.mxu0
        %v5981 = vadd.f32 %v5820, %v5980
        %v5982 = vpop.f32.mrf.mxu0
        %v5983 = vpop.f32.mrf.mxu0
        %v5984 = vadd.f32 %v5823, %v5983
        %v5985 = vpop.f32.mrf.mxu0
        %5986 = vmatprep.mubr.bf16.mxu0 0
        %5987 = vmatmul.mubr.bf16.gmra.mxu0 %v5050
        %v5988 = vpop.f32.mrf.mxu0
        %v5989 = vadd.f32 %v5828, %v5988
        %v5990 = vpop.f32.mrf.mxu0
        %v5991 = vpop.f32.mrf.mxu0
        %v5992 = vadd.f32 %v5831, %v5991
        %v5993 = vpop.f32.mrf.mxu0
        %5994 = vmatprep.mubr.bf16.mxu0 0
        %5995 = vmatmul.mubr.bf16.gmra.mxu0 %v5053
        %v5996 = vpop.f32.mrf.mxu0
        %v5997 = vadd.f32 %v5836, %v5996
        %v5998 = vpop.f32.mrf.mxu0
        %v5999 = vpop.f32.mrf.mxu0
        %v6000 = vadd.f32 %v5839, %v5999
        %v6001 = vpop.f32.mrf.mxu0
        %6002 = vmatprep.mubr.bf16.mxu0 0
        %6003 = vmatmul.mubr.bf16.gmra.mxu0 %v5056
        %v6004 = vpop.f32.mrf.mxu0
        %v6005 = vadd.f32 %v5844, %v6004
        %v6006 = vpop.f32.mrf.mxu0
        %v6007 = vpop.f32.mrf.mxu0
        %v6008 = vadd.f32 %v5847, %v6007
        %v6009 = vpop.f32.mrf.mxu0
        %6010 = vmatprep.mubr.bf16.mxu0 0
        %6011 = vmatmul.mubr.bf16.gmra.mxu0 %v5059
        %v6012 = vpop.f32.mrf.mxu0
        %v6013 = vadd.f32 %v5852, %v6012
        %v6014 = vpop.f32.mrf.mxu0
        %v6015 = vpop.f32.mrf.mxu0
        %v6016 = vadd.f32 %v5855, %v6015
        %v6017 = vpop.f32.mrf.mxu0
        %6018 = vmatprep.mubr.bf16.mxu0 0
        %6019 = vmatmul.mubr.bf16.gmra.mxu0 %v5062
        %v6020 = vpop.f32.mrf.mxu0
        %v6021 = vadd.f32 %v5860, %v6020
        %v6022 = vpop.f32.mrf.mxu0
        %v6023 = vpop.f32.mrf.mxu0
        %v6024 = vadd.f32 %v5863, %v6023
        %v6025 = vpop.f32.mrf.mxu0
        %6026 = vmatprep.mubr.bf16.mxu0 0
        %6027 = vmatmul.mubr.bf16.gmra.mxu0 %v5065
        %v6028 = vpop.f32.mrf.mxu0
        %v6029 = vadd.f32 %v5868, %v6028
        %v6030 = vpop.f32.mrf.mxu0
        %v6031 = vpop.f32.mrf.mxu0
        %v6032 = vadd.f32 %v5871, %v6031
        %v6033 = vpop.f32.mrf.mxu0
        %6034 = vmatprep.mubr.bf16.mxu0 0
        %6035 = vmatmul.mubr.bf16.gmra.mxu0 %v5068
        %v6036 = vpop.f32.mrf.mxu0
        %v6037 = vadd.f32 %v5876, %v6036
        %v6038 = vpop.f32.mrf.mxu0
        %v6039 = vpop.f32.mrf.mxu0
        %v6040 = vadd.f32 %v5879, %v6039
        %v6041 = vpop.f32.mrf.mxu0
        %6042 = vmatprep.mubr.bf16.mxu0 0
        %6043 = vmatmul.mubr.bf16.gmra.mxu0 %v5071
        %v6044 = vpop.f32.mrf.mxu0
        %v6045 = vadd.f32 %v5884, %v6044
        %v6046 = vpop.f32.mrf.mxu0
        %v6047 = vpop.f32.mrf.mxu0
        %v6048 = vadd.f32 %v5887, %v6047
        %v6049 = vpop.f32.mrf.mxu0
        %6050 = vmatprep.mubr.bf16.mxu0 0
        %6051 = vmatmul.mubr.bf16.gmra.mxu0 %v5074
        %v6052 = vpop.f32.mrf.mxu0
        %v6053 = vadd.f32 %v5892, %v6052
        %v6054 = vpop.f32.mrf.mxu0
        %v6055 = vpop.f32.mrf.mxu0
        %v6056 = vadd.f32 %v5895, %v6055
        %v6057 = vpop.f32.mrf.mxu0
        %6058 = vmatprep.mubr.bf16.mxu0 0
        %6059 = vmatmul.mubr.bf16.gmra.mxu0 %v5077
        %v6060 = vpop.f32.mrf.mxu0
        %v6061 = vadd.f32 %v5900, %v6060
        %v6062 = vpop.f32.mrf.mxu0
        %v6063 = vpop.f32.mrf.mxu0
        %v6064 = vadd.f32 %v5903, %v6063
        %v6065 = vpop.f32.mrf.mxu0
        %6066 = vmatprep.mubr.bf16.mxu0 0
        %6067 = vmatmul.mubr.bf16.gmra.mxu0 %v5080
        %v6068 = vpop.f32.mrf.mxu0
        %v6069 = vadd.f32 %v5908, %v6068
        %v6070 = vpop.f32.mrf.mxu0
        %v6071 = vpop.f32.mrf.mxu0
        %v6072 = vadd.f32 %v5911, %v6071
        %v6073 = vpop.f32.mrf.mxu0
        %6074 = vmatprep.mubr.bf16.mxu0 0
        %6075 = vmatmul.mubr.bf16.gmra.mxu0 %v5083
        %v6076 = vpop.f32.mrf.mxu0
        %v6077 = vadd.f32 %v5916, %v6076
        %v6078 = vpop.f32.mrf.mxu0
        %v6079 = vpop.f32.mrf.mxu0
        %v6080 = vadd.f32 %v5919, %v6079
        %v6081 = vpop.f32.mrf.mxu0
        %6082 = vdwg.mxu0
        %v6083 = vld [vmem:[#allocation3 + $0x30] sm:$0xff]
        %v6084 = vld [vmem:[#allocation3 + $0x38] sm:$0xf]
        %v6085 = vld [vmem:[#allocation3 + $0x3c] sm:$0xff]
        %v6086 = vld [vmem:[#allocation3 + $0x44] sm:$0xf]
        %v6087 = vld [vmem:[#allocation3 + $0x48] sm:$0xff]
        %v6088 = vld [vmem:[#allocation3 + $0x50] sm:$0xf]
        %v6089 = vld [vmem:[#allocation3 + $0x54] sm:$0xff]
        %v6090 = vld [vmem:[#allocation3 + $0x5c] sm:$0xf]
        %v6091 = vld [vmem:[#allocation3 + $0x60] sm:$0xff]
        %v6092 = vld [vmem:[#allocation3 + $0x68] sm:$0xf]
        %v6093 = vld [vmem:[#allocation3 + $0x6c] sm:$0xff]
        %v6094 = vld [vmem:[#allocation3 + $0x74] sm:$0xf]
        %v6095 = vld [vmem:[#allocation3 + $0x78] sm:$0xff]
        %v6096 = vld [vmem:[#allocation3 + $0x80] sm:$0xf]
        %v6097 = vld [vmem:[#allocation3 + $0x84] sm:$0xff]
        %v6098 = vld [vmem:[#allocation3 + $0x8c] sm:$0xf]
        %v6099 = vld [vmem:[#allocation3 + $0x90] sm:$0xff]
        %v6100 = vld [vmem:[#allocation3 + $0x98] sm:$0xf]
        %v6101 = vld [vmem:[#allocation3 + $0x9c] sm:$0xff]
        %v6102 = vld [vmem:[#allocation3 + $0xa4] sm:$0xf]
        %v6103 = vld [vmem:[#allocation3 + $0xa8] sm:$0xff]
        %v6104 = vld [vmem:[#allocation3 + $0xb0] sm:$0xf]
        %v6105 = vld [vmem:[#allocation3 + $0xb4] sm:$0xff]
        %v6106 = vld [vmem:[#allocation3 + $0xbc] sm:$0xf]
        %v6107 = vld [vmem:[#allocation3 + $0xc0] sm:$0xff]
        %v6108 = vld [vmem:[#allocation3 + $0xc8] sm:$0xf]
        %v6109 = vld [vmem:[#allocation3 + $0xcc] sm:$0xff]
        %v6110 = vld [vmem:[#allocation3 + $0xd4] sm:$0xf]
        %v6111 = vld [vmem:[#allocation3 + $0xd8] sm:$0xff]
        %v6112 = vld [vmem:[#allocation3 + $0xe0] sm:$0xf]
        %v6113 = vld [vmem:[#allocation3 + $0xe4] sm:$0xff]
        %v6114 = vld [vmem:[#allocation3 + $0xec] sm:$0xf]
        %v6115 = vld [vmem:[#allocation3 + $0xf0] sm:$0xff]
        %v6116 = vld [vmem:[#allocation3 + $0xf8] sm:$0xf]
        %v6117 = vld [vmem:[#allocation3 + $0xfc] sm:$0xff]
        %v6118 = vld [vmem:[#allocation3 + $0x104] sm:$0xf]
        %v6119 = vld [vmem:[#allocation3 + $0x108] sm:$0xff]
        %v6120 = vld [vmem:[#allocation3 + $0x110] sm:$0xf]
        %v6121 = vld [vmem:[#allocation3 + $0x114] sm:$0xff]
        %v6122 = vld [vmem:[#allocation3 + $0x11c] sm:$0xf]
        %v6123 = vld [vmem:[#allocation3 + $0x120] sm:$0xff]
        %v6124 = vld [vmem:[#allocation3 + $0x128] sm:$0xf]
        %v6125 = vld [vmem:[#allocation3 + $0x12c] sm:$0xff]
        %v6126 = vld [vmem:[#allocation3 + $0x134] sm:$0xf]
        %v6127 = vld [vmem:[#allocation3 + $0x138] sm:$0xff]
        %v6128 = vld [vmem:[#allocation3 + $0x140] sm:$0xf]
        %v6129 = vld [vmem:[#allocation3 + $0x144] sm:$0xff]
        %v6130 = vld [vmem:[#allocation3 + $0x14c] sm:$0xf]
        %v6131 = vld [vmem:[#allocation3 + $0x150] sm:$0xff]
        %v6132 = vld [vmem:[#allocation3 + $0x158] sm:$0xf]
        %v6133 = vld [vmem:[#allocation3 + $0x15c] sm:$0xff]
        %v6134 = vld [vmem:[#allocation3 + $0x164] sm:$0xf]
        %v6135 = vld [vmem:[#allocation3 + $0x168] sm:$0xff]
        %v6136 = vld [vmem:[#allocation3 + $0x170] sm:$0xf]
        %v6137 = vld [vmem:[#allocation3 + $0x174] sm:$0xff]
        %v6138 = vld [vmem:[#allocation3 + $0x17c] sm:$0xf]
        %v6139 = vld [vmem:[#allocation3 + $0x180] sm:$0xff]
        %v6140 = vld [vmem:[#allocation3 + $0x188] sm:$0xf]
        %v6141 = vld [vmem:[#allocation3 + $0x18c] sm:$0xff]
        %v6142 = vld [vmem:[#allocation3 + $0x194] sm:$0xf]
        %v6143 = vld [vmem:[#allocation3 + $0x198] sm:$0xff]
        %v6144 = vld [vmem:[#allocation3 + $0x1a0] sm:$0xf]
        %v6145 = vld [vmem:[#allocation3 + $0x1a4] sm:$0xff]
        %v6146 = vld [vmem:[#allocation3 + $0x1ac] sm:$0xf]
        %s6147 = scalar_lea.vmem %s9, 384
        %v6148 = vld [vmem:[%s6147] sm:$0xf]
        %v6149 = vld [vmem:[%s6147 + $0x4] sm:$0xf]
        %v6150 = vld [vmem:[%s6147 + $0x8] sm:$0xf]
        %v6151 = vld [vmem:[%s6147 + $0xc] sm:$0xf]
        %v6152 = vld [vmem:[%s6147 + $0x10] sm:$0xf]
        %v6153 = vld [vmem:[%s6147 + $0x14] sm:$0xf]
        %v6154 = vld [vmem:[%s6147 + $0x18] sm:$0xf]
        %v6155 = vld [vmem:[%s6147 + $0x1c] sm:$0xf]
        %v6156 = vld [vmem:[%s6147 + $0x20] sm:$0xf]
        %v6157 = vld [vmem:[%s6147 + $0x24] sm:$0xf]
        %v6158 = vld [vmem:[%s6147 + $0x28] sm:$0xf]
        %v6159 = vld [vmem:[%s6147 + $0x2c] sm:$0xf]
        %v6160 = vld [vmem:[%s6147 + $0x30] sm:$0xf]
        %v6161 = vld [vmem:[%s6147 + $0x34] sm:$0xf]
        %v6162 = vld [vmem:[%s6147 + $0x38] sm:$0xf]
        %v6163 = vld [vmem:[%s6147 + $0x3c] sm:$0xf]
        %v6164 = vld [vmem:[%s6147 + $0x40] sm:$0xf]
        %v6165 = vld [vmem:[%s6147 + $0x44] sm:$0xf]
        %v6166 = vld [vmem:[%s6147 + $0x48] sm:$0xf]
        %v6167 = vld [vmem:[%s6147 + $0x4c] sm:$0xf]
        %v6168 = vld [vmem:[%s6147 + $0x50] sm:$0xf]
        %v6169 = vld [vmem:[%s6147 + $0x54] sm:$0xf]
        %v6170 = vld [vmem:[%s6147 + $0x58] sm:$0xf]
        %v6171 = vld [vmem:[%s6147 + $0x5c] sm:$0xf]
        %v6172 = vld [vmem:[%s6147 + $0x60] sm:$0xf]
        %v6173 = vld [vmem:[%s6147 + $0x64] sm:$0xf]
        %v6174 = vld [vmem:[%s6147 + $0x68] sm:$0xf]
        %v6175 = vld [vmem:[%s6147 + $0x6c] sm:$0xf]
        %v6176 = vld [vmem:[%s6147 + $0x70] sm:$0xf]
        %v6177 = vld [vmem:[%s6147 + $0x74] sm:$0xf]
        %v6178 = vld [vmem:[%s6147 + $0x78] sm:$0xf]
        %v6179 = vld [vmem:[%s6147 + $0x7c] sm:$0xf]
        %v6180 = vld [vmem:[%s6147 + $0x80] sm:$0xf]
        %v6181 = vld [vmem:[%s6147 + $0x84] sm:$0xf]
        %v6182 = vld [vmem:[%s6147 + $0x88] sm:$0xf]
        %v6183 = vld [vmem:[%s6147 + $0x8c] sm:$0xf]
        %v6184 = vld [vmem:[%s6147 + $0x90] sm:$0xf]
        %v6185 = vld [vmem:[%s6147 + $0x94] sm:$0xf]
        %v6186 = vld [vmem:[%s6147 + $0x98] sm:$0xf]
        %v6187 = vld [vmem:[%s6147 + $0x9c] sm:$0xf]
        %v6188 = vld [vmem:[%s6147 + $0xa0] sm:$0xf]
        %v6189 = vld [vmem:[%s6147 + $0xa4] sm:$0xf]
        %v6190 = vld [vmem:[%s6147 + $0xa8] sm:$0xf]
        %v6191 = vld [vmem:[%s6147 + $0xac] sm:$0xf]
        %v6192 = vld [vmem:[%s6147 + $0xb0] sm:$0xf]
        %v6193 = vld [vmem:[%s6147 + $0xb4] sm:$0xf]
        %v6194 = vld [vmem:[%s6147 + $0xb8] sm:$0xf]
        %v6195 = vld [vmem:[%s6147 + $0xbc] sm:$0xf]
        %v6260 = vunpack.c.l.b16 %v6083
        %v6261 = vunpack.c.h.b16 %v6083
        %v6262 = vunpack.c.l.b16 %v6084
        %v6263 = vunpack.c.l.b16 %v6085
        %v6264 = vunpack.c.h.b16 %v6085
        %v6265 = vunpack.c.l.b16 %v6086
        %v6266 = vunpack.c.l.b16 %v6087
        %v6267 = vunpack.c.h.b16 %v6087
        %v6268 = vunpack.c.l.b16 %v6088
        %v6269 = vunpack.c.l.b16 %v6089
        %v6270 = vunpack.c.h.b16 %v6089
        %v6271 = vunpack.c.l.b16 %v6090
        %v6272 = vunpack.c.l.b16 %v6091
        %v6273 = vunpack.c.h.b16 %v6091
        %v6274 = vunpack.c.l.b16 %v6092
        %v6275 = vunpack.c.l.b16 %v6093
        %v6276 = vunpack.c.h.b16 %v6093
        %v6277 = vunpack.c.l.b16 %v6094
        %v6278 = vunpack.c.l.b16 %v6095
        %v6279 = vunpack.c.h.b16 %v6095
        %v6280 = vunpack.c.l.b16 %v6096
        %v6281 = vunpack.c.l.b16 %v6097
        %v6282 = vunpack.c.h.b16 %v6097
        %v6283 = vunpack.c.l.b16 %v6098
        %v6284 = vunpack.c.l.b16 %v6099
        %v6285 = vunpack.c.h.b16 %v6099
        %v6286 = vunpack.c.l.b16 %v6100
        %v6287 = vunpack.c.l.b16 %v6101
        %v6288 = vunpack.c.h.b16 %v6101
        %v6289 = vunpack.c.l.b16 %v6102
        %v6290 = vunpack.c.l.b16 %v6103
        %v6291 = vunpack.c.h.b16 %v6103
        %v6292 = vunpack.c.l.b16 %v6104
        %v6293 = vunpack.c.l.b16 %v6105
        %v6294 = vunpack.c.h.b16 %v6105
        %v6295 = vunpack.c.l.b16 %v6106
        %v6296 = vunpack.c.l.b16 %v6107
        %v6297 = vunpack.c.h.b16 %v6107
        %v6298 = vunpack.c.l.b16 %v6108
        %v6299 = vunpack.c.l.b16 %v6109
        %v6300 = vunpack.c.h.b16 %v6109
        %v6301 = vunpack.c.l.b16 %v6110
        %v6302 = vunpack.c.l.b16 %v6111
        %v6303 = vunpack.c.h.b16 %v6111
        %v6304 = vunpack.c.l.b16 %v6112
        %v6305 = vunpack.c.l.b16 %v6113
        %v6306 = vunpack.c.h.b16 %v6113
        %v6307 = vunpack.c.l.b16 %v6114
        %v6308 = vunpack.c.l.b16 %v6115
        %v6309 = vunpack.c.h.b16 %v6115
        %v6310 = vunpack.c.l.b16 %v6116
        %v6311 = vunpack.c.l.b16 %v6117
        %v6312 = vunpack.c.h.b16 %v6117
        %v6313 = vunpack.c.l.b16 %v6118
        %v6314 = vunpack.c.l.b16 %v6119
        %v6315 = vunpack.c.h.b16 %v6119
        %v6316 = vunpack.c.l.b16 %v6120
        %v6317 = vunpack.c.l.b16 %v6121
        %v6318 = vunpack.c.h.b16 %v6121
        %v6319 = vunpack.c.l.b16 %v6122
        %v6320 = vunpack.c.l.b16 %v6123
        %v6321 = vunpack.c.h.b16 %v6123
        %v6322 = vunpack.c.l.b16 %v6124
        %v6323 = vunpack.c.l.b16 %v6125
        %v6324 = vunpack.c.h.b16 %v6125
        %v6325 = vunpack.c.l.b16 %v6126
        %v6326 = vunpack.c.l.b16 %v6127
        %v6327 = vunpack.c.h.b16 %v6127
        %v6328 = vunpack.c.l.b16 %v6128
        %v6329 = vunpack.c.l.b16 %v6129
        %v6330 = vunpack.c.h.b16 %v6129
        %v6331 = vunpack.c.l.b16 %v6130
        %v6332 = vunpack.c.l.b16 %v6131
        %v6333 = vunpack.c.h.b16 %v6131
        %v6334 = vunpack.c.l.b16 %v6132
        %v6335 = vunpack.c.l.b16 %v6133
        %v6336 = vunpack.c.h.b16 %v6133
        %v6337 = vunpack.c.l.b16 %v6134
        %v6338 = vunpack.c.l.b16 %v6135
        %v6339 = vunpack.c.h.b16 %v6135
        %v6340 = vunpack.c.l.b16 %v6136
        %v6341 = vunpack.c.l.b16 %v6137
        %v6342 = vunpack.c.h.b16 %v6137
        %v6343 = vunpack.c.l.b16 %v6138
        %v6344 = vunpack.c.l.b16 %v6139
        %v6345 = vunpack.c.h.b16 %v6139
        %v6346 = vunpack.c.l.b16 %v6140
        %v6347 = vunpack.c.l.b16 %v6141
        %v6348 = vunpack.c.h.b16 %v6141
        %v6349 = vunpack.c.l.b16 %v6142
        %v6350 = vunpack.c.l.b16 %v6143
        %v6351 = vunpack.c.h.b16 %v6143
        %v6352 = vunpack.c.l.b16 %v6144
        %v6353 = vunpack.c.l.b16 %v6145
        %v6354 = vunpack.c.h.b16 %v6145
        %v6355 = vunpack.c.l.b16 %v6146
        %v6356 = vpack.c.b16 %v6263, %v6260
        %v6357 = vpack.c.b16 %v6264, %v6261
        %v6358 = vpack.c.b16 %v6265, %v6262
        %v6359 = vpack.c.b16 %v6269, %v6266
        %v6360 = vpack.c.b16 %v6270, %v6267
        %v6361 = vpack.c.b16 %v6271, %v6268
        %v6362 = vpack.c.b16 %v6275, %v6272
        %v6363 = vpack.c.b16 %v6276, %v6273
        %v6364 = vpack.c.b16 %v6277, %v6274
        %v6365 = vpack.c.b16 %v6281, %v6278
        %v6366 = vpack.c.b16 %v6282, %v6279
        %v6367 = vpack.c.b16 %v6283, %v6280
        %v6368 = vpack.c.b16 %v6287, %v6284
        %v6369 = vpack.c.b16 %v6288, %v6285
        %v6370 = vpack.c.b16 %v6289, %v6286
        %v6371 = vpack.c.b16 %v6293, %v6290
        %v6372 = vpack.c.b16 %v6294, %v6291
        %v6373 = vpack.c.b16 %v6295, %v6292
        %v6374 = vpack.c.b16 %v6299, %v6296
        %v6375 = vpack.c.b16 %v6300, %v6297
        %v6376 = vpack.c.b16 %v6301, %v6298
        %v6377 = vpack.c.b16 %v6305, %v6302
        %v6378 = vpack.c.b16 %v6306, %v6303
        %v6379 = vpack.c.b16 %v6307, %v6304
        %v6380 = vpack.c.b16 %v6311, %v6308
        %v6381 = vpack.c.b16 %v6312, %v6309
        %v6382 = vpack.c.b16 %v6313, %v6310
        %v6383 = vpack.c.b16 %v6317, %v6314
        %v6384 = vpack.c.b16 %v6318, %v6315
        %v6385 = vpack.c.b16 %v6319, %v6316
        %v6386 = vpack.c.b16 %v6323, %v6320
        %v6387 = vpack.c.b16 %v6324, %v6321
        %v6388 = vpack.c.b16 %v6325, %v6322
        %v6389 = vpack.c.b16 %v6329, %v6326
        %v6390 = vpack.c.b16 %v6330, %v6327
        %v6391 = vpack.c.b16 %v6331, %v6328
        %v6392 = vpack.c.b16 %v6335, %v6332
        %v6393 = vpack.c.b16 %v6336, %v6333
        %v6394 = vpack.c.b16 %v6337, %v6334
        %v6395 = vpack.c.b16 %v6341, %v6338
        %v6396 = vpack.c.b16 %v6342, %v6339
        %v6397 = vpack.c.b16 %v6343, %v6340
        %v6398 = vpack.c.b16 %v6347, %v6344
        %v6399 = vpack.c.b16 %v6348, %v6345
        %v6400 = vpack.c.b16 %v6349, %v6346
        %v6401 = vpack.c.b16 %v6353, %v6350
        %v6402 = vpack.c.b16 %v6354, %v6351
        %v6403 = vpack.c.b16 %v6355, %v6352
        %v6500 = vunpack.c.l.b16 %v6148
        %v6501 = vunpack.c.l.b16 %v6149
        %v6502 = vunpack.c.l.b16 %v6150
        %v6503 = vunpack.c.l.b16 %v6151
        %v6504 = vunpack.c.l.b16 %v6152
        %v6505 = vunpack.c.l.b16 %v6153
        %v6506 = vunpack.c.l.b16 %v6154
        %v6507 = vunpack.c.l.b16 %v6155
        %v6508 = vunpack.c.l.b16 %v6156
        %v6509 = vunpack.c.l.b16 %v6157
        %v6510 = vunpack.c.l.b16 %v6158
        %v6511 = vunpack.c.l.b16 %v6159
        %v6512 = vunpack.c.l.b16 %v6160
        %v6513 = vunpack.c.l.b16 %v6161
        %v6514 = vunpack.c.l.b16 %v6162
        %v6515 = vunpack.c.l.b16 %v6163
        %v6516 = vunpack.c.l.b16 %v6164
        %v6517 = vunpack.c.l.b16 %v6165
        %v6518 = vunpack.c.l.b16 %v6166
        %v6519 = vunpack.c.l.b16 %v6167
        %v6520 = vunpack.c.l.b16 %v6168
        %v6521 = vunpack.c.l.b16 %v6169
        %v6522 = vunpack.c.l.b16 %v6170
        %v6523 = vunpack.c.l.b16 %v6171
        %v6524 = vunpack.c.l.b16 %v6172
        %v6525 = vunpack.c.l.b16 %v6173
        %v6526 = vunpack.c.l.b16 %v6174
        %v6527 = vunpack.c.l.b16 %v6175
        %v6528 = vunpack.c.l.b16 %v6176
        %v6529 = vunpack.c.l.b16 %v6177
        %v6530 = vunpack.c.l.b16 %v6178
        %v6531 = vunpack.c.l.b16 %v6179
        %v6532 = vunpack.c.l.b16 %v6180
        %v6533 = vunpack.c.l.b16 %v6181
        %v6534 = vunpack.c.l.b16 %v6182
        %v6535 = vunpack.c.l.b16 %v6183
        %v6536 = vunpack.c.l.b16 %v6184
        %v6537 = vunpack.c.l.b16 %v6185
        %v6538 = vunpack.c.l.b16 %v6186
        %v6539 = vunpack.c.l.b16 %v6187
        %v6540 = vunpack.c.l.b16 %v6188
        %v6541 = vunpack.c.l.b16 %v6189
        %v6542 = vunpack.c.l.b16 %v6190
        %v6543 = vunpack.c.l.b16 %v6191
        %v6544 = vunpack.c.l.b16 %v6192
        %v6545 = vunpack.c.l.b16 %v6193
        %v6546 = vunpack.c.l.b16 %v6194
        %v6547 = vunpack.c.l.b16 %v6195
        %v6548 = vpack.c.b16 %v6501, %v6500
        %v6549 = vpack.c.b16 %v6503, %v6502
        %v6550 = vpack.c.b16 %v6505, %v6504
        %v6551 = vpack.c.b16 %v6507, %v6506
        %v6552 = vpack.c.b16 %v6509, %v6508
        %v6553 = vpack.c.b16 %v6511, %v6510
        %v6554 = vpack.c.b16 %v6513, %v6512
        %v6555 = vpack.c.b16 %v6515, %v6514
        %v6556 = vpack.c.b16 %v6517, %v6516
        %v6557 = vpack.c.b16 %v6519, %v6518
        %v6558 = vpack.c.b16 %v6521, %v6520
        %v6559 = vpack.c.b16 %v6523, %v6522
        %v6560 = vpack.c.b16 %v6525, %v6524
        %v6561 = vpack.c.b16 %v6527, %v6526
        %v6562 = vpack.c.b16 %v6529, %v6528
        %v6563 = vpack.c.b16 %v6531, %v6530
        %v6564 = vpack.c.b16 %v6533, %v6532
        %v6565 = vpack.c.b16 %v6535, %v6534
        %v6566 = vpack.c.b16 %v6537, %v6536
        %v6567 = vpack.c.b16 %v6539, %v6538
        %v6568 = vpack.c.b16 %v6541, %v6540
        %v6569 = vpack.c.b16 %v6543, %v6542
        %v6570 = vpack.c.b16 %v6545, %v6544
        %v6571 = vpack.c.b16 %v6547, %v6546
        %6596 = vmatprep.subr.bf16.mxu0 0
        %6597 = vmatpush1.bf16.msra.mxu0 %v6555
        %6598 = vmatprep.subr.bf16.mxu0 0
        %6599 = vmatpush1.bf16.msra.mxu0 %v6554
        %6600 = vmatprep.subr.bf16.mxu0 0
        %6601 = vmatpush1.bf16.msra.mxu0 %v6553
        %6602 = vmatprep.subr.bf16.mxu0 0
        %6603 = vmatpush1.bf16.msra.mxu0 %v6552
        %6604 = vmatprep.subr.bf16.mxu0 0
        %6605 = vmatpush1.bf16.msra.mxu0 %v6551
        %6606 = vmatprep.subr.bf16.mxu0 0
        %6607 = vmatpush1.bf16.msra.mxu0 %v6550
        %6608 = vmatprep.subr.bf16.mxu0 0
        %6609 = vmatpush1.bf16.msra.mxu0 %v6549
        %6610 = vmatprep.subr.bf16.mxu0 0
        %6611 = vmatpush1.bf16.msra.mxu0 %v6548
        %6612 = vmatprep.subr.bf16.mxu0 0
        %6613 = vmatpush2.bf16.msra.mxu0 %v6563
        %6614 = vmatprep.subr.bf16.mxu0 0
        %6615 = vmatpush2.bf16.msra.mxu0 %v6562
        %6616 = vmatprep.subr.bf16.mxu0 0
        %6617 = vmatpush2.bf16.msra.mxu0 %v6561
        %6618 = vmatprep.subr.bf16.mxu0 0
        %6619 = vmatpush2.bf16.msra.mxu0 %v6560
        %6620 = vmatprep.subr.bf16.mxu0 0
        %6621 = vmatpush2.bf16.msra.mxu0 %v6559
        %6622 = vmatprep.subr.bf16.mxu0 0
        %6623 = vmatpush2.bf16.msra.mxu0 %v6558
        %6624 = vmatprep.subr.bf16.mxu0 0
        %6625 = vmatpush2.bf16.msra.mxu0 %v6557
        %6626 = vmatprep.subr.bf16.mxu0 0
        %6627 = vmatpush2.bf16.msra.mxu0 %v6556
        %6628 = vmatprep.mubr.bf16.mxu0 %v6357
        %6629 = vmatmul.mubr.bf16.gmra.mxu0 %v6356
        %v6630 = vpop.f32.mrf.mxu0
        %v6631 = vadd.f32 0.0, %v6630
        %v6632 = vpop.f32.mrf.mxu0
        %v6633 = vpop.f32.mrf.mxu0
        %v6634 = vadd.f32 0.0, %v6633
        %v6635 = vpop.f32.mrf.mxu0
        %6636 = vmatprep.mubr.bf16.mxu0 %v6360
        %6637 = vmatmul.mubr.bf16.gmra.mxu0 %v6359
        %v6638 = vpop.f32.mrf.mxu0
        %v6639 = vadd.f32 0.0, %v6638
        %v6640 = vpop.f32.mrf.mxu0
        %v6641 = vpop.f32.mrf.mxu0
        %v6642 = vadd.f32 0.0, %v6641
        %v6643 = vpop.f32.mrf.mxu0
        %6644 = vmatprep.mubr.bf16.mxu0 %v6363
        %6645 = vmatmul.mubr.bf16.gmra.mxu0 %v6362
        %v6646 = vpop.f32.mrf.mxu0
        %v6647 = vadd.f32 0.0, %v6646
        %v6648 = vpop.f32.mrf.mxu0
        %v6649 = vpop.f32.mrf.mxu0
        %v6650 = vadd.f32 0.0, %v6649
        %v6651 = vpop.f32.mrf.mxu0
        %6652 = vmatprep.mubr.bf16.mxu0 %v6366
        %6653 = vmatmul.mubr.bf16.gmra.mxu0 %v6365
        %v6654 = vpop.f32.mrf.mxu0
        %v6655 = vadd.f32 0.0, %v6654
        %v6656 = vpop.f32.mrf.mxu0
        %v6657 = vpop.f32.mrf.mxu0
        %v6658 = vadd.f32 0.0, %v6657
        %v6659 = vpop.f32.mrf.mxu0
        %6660 = vmatprep.mubr.bf16.mxu0 %v6369
        %6661 = vmatmul.mubr.bf16.gmra.mxu0 %v6368
        %v6662 = vpop.f32.mrf.mxu0
        %v6663 = vadd.f32 0.0, %v6662
        %v6664 = vpop.f32.mrf.mxu0
        %v6665 = vpop.f32.mrf.mxu0
        %v6666 = vadd.f32 0.0, %v6665
        %v6667 = vpop.f32.mrf.mxu0
        %6668 = vmatprep.mubr.bf16.mxu0 %v6372
        %6669 = vmatmul.mubr.bf16.gmra.mxu0 %v6371
        %v6670 = vpop.f32.mrf.mxu0
        %v6671 = vadd.f32 0.0, %v6670
        %v6672 = vpop.f32.mrf.mxu0
        %v6673 = vpop.f32.mrf.mxu0
        %v6674 = vadd.f32 0.0, %v6673
        %v6675 = vpop.f32.mrf.mxu0
        %6676 = vmatprep.mubr.bf16.mxu0 %v6375
        %6677 = vmatmul.mubr.bf16.gmra.mxu0 %v6374
        %v6678 = vpop.f32.mrf.mxu0
        %v6679 = vadd.f32 0.0, %v6678
        %v6680 = vpop.f32.mrf.mxu0
        %v6681 = vpop.f32.mrf.mxu0
        %v6682 = vadd.f32 0.0, %v6681
        %v6683 = vpop.f32.mrf.mxu0
        %6684 = vmatprep.mubr.bf16.mxu0 %v6378
        %6685 = vmatmul.mubr.bf16.gmra.mxu0 %v6377
        %v6686 = vpop.f32.mrf.mxu0
        %v6687 = vadd.f32 0.0, %v6686
        %v6688 = vpop.f32.mrf.mxu0
        %v6689 = vpop.f32.mrf.mxu0
        %v6690 = vadd.f32 0.0, %v6689
        %v6691 = vpop.f32.mrf.mxu0
        %6692 = vmatprep.mubr.bf16.mxu0 %v6381
        %6693 = vmatmul.mubr.bf16.gmra.mxu0 %v6380
        %v6694 = vpop.f32.mrf.mxu0
        %v6695 = vadd.f32 0.0, %v6694
        %v6696 = vpop.f32.mrf.mxu0
        %v6697 = vpop.f32.mrf.mxu0
        %v6698 = vadd.f32 0.0, %v6697
        %v6699 = vpop.f32.mrf.mxu0
        %6700 = vmatprep.mubr.bf16.mxu0 %v6384
        %6701 = vmatmul.mubr.bf16.gmra.mxu0 %v6383
        %v6702 = vpop.f32.mrf.mxu0
        %v6703 = vadd.f32 0.0, %v6702
        %v6704 = vpop.f32.mrf.mxu0
        %v6705 = vpop.f32.mrf.mxu0
        %v6706 = vadd.f32 0.0, %v6705
        %v6707 = vpop.f32.mrf.mxu0
        %6708 = vmatprep.mubr.bf16.mxu0 %v6387
        %6709 = vmatmul.mubr.bf16.gmra.mxu0 %v6386
        %v6710 = vpop.f32.mrf.mxu0
        %v6711 = vadd.f32 0.0, %v6710
        %v6712 = vpop.f32.mrf.mxu0
        %v6713 = vpop.f32.mrf.mxu0
        %v6714 = vadd.f32 0.0, %v6713
        %v6715 = vpop.f32.mrf.mxu0
        %6716 = vmatprep.mubr.bf16.mxu0 %v6390
        %6717 = vmatmul.mubr.bf16.gmra.mxu0 %v6389
        %v6718 = vpop.f32.mrf.mxu0
        %v6719 = vadd.f32 0.0, %v6718
        %v6720 = vpop.f32.mrf.mxu0
        %v6721 = vpop.f32.mrf.mxu0
        %v6722 = vadd.f32 0.0, %v6721
        %v6723 = vpop.f32.mrf.mxu0
        %6724 = vmatprep.mubr.bf16.mxu0 %v6393
        %6725 = vmatmul.mubr.bf16.gmra.mxu0 %v6392
        %v6726 = vpop.f32.mrf.mxu0
        %v6727 = vadd.f32 0.0, %v6726
        %v6728 = vpop.f32.mrf.mxu0
        %v6729 = vpop.f32.mrf.mxu0
        %v6730 = vadd.f32 0.0, %v6729
        %v6731 = vpop.f32.mrf.mxu0
        %6732 = vmatprep.mubr.bf16.mxu0 %v6396
        %6733 = vmatmul.mubr.bf16.gmra.mxu0 %v6395
        %v6734 = vpop.f32.mrf.mxu0
        %v6735 = vadd.f32 0.0, %v6734
        %v6736 = vpop.f32.mrf.mxu0
        %v6737 = vpop.f32.mrf.mxu0
        %v6738 = vadd.f32 0.0, %v6737
        %v6739 = vpop.f32.mrf.mxu0
        %6740 = vmatprep.mubr.bf16.mxu0 %v6399
        %6741 = vmatmul.mubr.bf16.gmra.mxu0 %v6398
        %v6742 = vpop.f32.mrf.mxu0
        %v6743 = vadd.f32 0.0, %v6742
        %v6744 = vpop.f32.mrf.mxu0
        %v6745 = vpop.f32.mrf.mxu0
        %v6746 = vadd.f32 0.0, %v6745
        %v6747 = vpop.f32.mrf.mxu0
        %6748 = vmatprep.mubr.bf16.mxu0 %v6402
        %6749 = vmatmul.mubr.bf16.gmra.mxu0 %v6401
        %v6750 = vpop.f32.mrf.mxu0
        %v6751 = vadd.f32 0.0, %v6750
        %v6752 = vpop.f32.mrf.mxu0
        %v6753 = vpop.f32.mrf.mxu0
        %v6754 = vadd.f32 0.0, %v6753
        %v6755 = vpop.f32.mrf.mxu0
        %6756 = vdwg.mxu0
        %6757 = vmatprep.subr.bf16.mxu0 0
        %6758 = vmatpush1.bf16.msra.mxu0 %v6571
        %6759 = vmatprep.subr.bf16.mxu0 0
        %6760 = vmatpush1.bf16.msra.mxu0 %v6570
        %6761 = vmatprep.subr.bf16.mxu0 0
        %6762 = vmatpush1.bf16.msra.mxu0 %v6569
        %6763 = vmatprep.subr.bf16.mxu0 0
        %6764 = vmatpush1.bf16.msra.mxu0 %v6568
        %6765 = vmatprep.subr.bf16.mxu0 0
        %6766 = vmatpush1.bf16.msra.mxu0 %v6567
        %6767 = vmatprep.subr.bf16.mxu0 0
        %6768 = vmatpush1.bf16.msra.mxu0 %v6566
        %6769 = vmatprep.subr.bf16.mxu0 0
        %6770 = vmatpush1.bf16.msra.mxu0 %v6565
        %6771 = vmatprep.subr.bf16.mxu0 0
        %6772 = vmatpush1.bf16.msra.mxu0 %v6564
        %6773 = vmatprep.subr.bf16.mxu0 0
        %6774 = vmatpush2.bf16.msra.mxu0 0
        %6775 = vmatprep.subr.bf16.mxu0 0
        %6776 = vmatpush2.bf16.msra.mxu0 0
        %6777 = vmatprep.subr.bf16.mxu0 0
        %6778 = vmatpush2.bf16.msra.mxu0 0
        %6779 = vmatprep.subr.bf16.mxu0 0
        %6780 = vmatpush2.bf16.msra.mxu0 0
        %6781 = vmatprep.subr.bf16.mxu0 0
        %6782 = vmatpush2.bf16.msra.mxu0 0
        %6783 = vmatprep.subr.bf16.mxu0 0
        %6784 = vmatpush2.bf16.msra.mxu0 0
        %6785 = vmatprep.subr.bf16.mxu0 0
        %6786 = vmatpush2.bf16.msra.mxu0 0
        %6787 = vmatprep.subr.bf16.mxu0 0
        %6788 = vmatpush2.bf16.msra.mxu0 0
        %6789 = vmatprep.mubr.bf16.mxu0 0
        %6790 = vmatmul.mubr.bf16.gmra.mxu0 %v6358
        %v6791 = vpop.f32.mrf.mxu0
        %v6792 = vadd.f32 %v6631, %v6791
        %v6793 = vpop.f32.mrf.mxu0
        %v6794 = vpop.f32.mrf.mxu0
        %v6795 = vadd.f32 %v6634, %v6794
        %v6796 = vpop.f32.mrf.mxu0
        %6797 = vmatprep.mubr.bf16.mxu0 0
        %6798 = vmatmul.mubr.bf16.gmra.mxu0 %v6361
        %v6799 = vpop.f32.mrf.mxu0
        %v6800 = vadd.f32 %v6639, %v6799
        %v6801 = vpop.f32.mrf.mxu0
        %v6802 = vpop.f32.mrf.mxu0
        %v6803 = vadd.f32 %v6642, %v6802
        %v6804 = vpop.f32.mrf.mxu0
        %6805 = vmatprep.mubr.bf16.mxu0 0
        %6806 = vmatmul.mubr.bf16.gmra.mxu0 %v6364
        %v6807 = vpop.f32.mrf.mxu0
        %v6808 = vadd.f32 %v6647, %v6807
        %v6809 = vpop.f32.mrf.mxu0
        %v6810 = vpop.f32.mrf.mxu0
        %v6811 = vadd.f32 %v6650, %v6810
        %v6812 = vpop.f32.mrf.mxu0
        %6813 = vmatprep.mubr.bf16.mxu0 0
        %6814 = vmatmul.mubr.bf16.gmra.mxu0 %v6367
        %v6815 = vpop.f32.mrf.mxu0
        %v6816 = vadd.f32 %v6655, %v6815
        %v6817 = vpop.f32.mrf.mxu0
        %v6818 = vpop.f32.mrf.mxu0
        %v6819 = vadd.f32 %v6658, %v6818
        %v6820 = vpop.f32.mrf.mxu0
        %6821 = vmatprep.mubr.bf16.mxu0 0
        %6822 = vmatmul.mubr.bf16.gmra.mxu0 %v6370
        %v6823 = vpop.f32.mrf.mxu0
        %v6824 = vadd.f32 %v6663, %v6823
        %v6825 = vpop.f32.mrf.mxu0
        %v6826 = vpop.f32.mrf.mxu0
        %v6827 = vadd.f32 %v6666, %v6826
        %v6828 = vpop.f32.mrf.mxu0
        %6829 = vmatprep.mubr.bf16.mxu0 0
        %6830 = vmatmul.mubr.bf16.gmra.mxu0 %v6373
        %v6831 = vpop.f32.mrf.mxu0
        %v6832 = vadd.f32 %v6671, %v6831
        %v6833 = vpop.f32.mrf.mxu0
        %v6834 = vpop.f32.mrf.mxu0
        %v6835 = vadd.f32 %v6674, %v6834
        %v6836 = vpop.f32.mrf.mxu0
        %6837 = vmatprep.mubr.bf16.mxu0 0
        %6838 = vmatmul.mubr.bf16.gmra.mxu0 %v6376
        %v6839 = vpop.f32.mrf.mxu0
        %v6840 = vadd.f32 %v6679, %v6839
        %v6841 = vpop.f32.mrf.mxu0
        %v6842 = vpop.f32.mrf.mxu0
        %v6843 = vadd.f32 %v6682, %v6842
        %v6844 = vpop.f32.mrf.mxu0
        %6845 = vmatprep.mubr.bf16.mxu0 0
        %6846 = vmatmul.mubr.bf16.gmra.mxu0 %v6379
        %v6847 = vpop.f32.mrf.mxu0
        %v6848 = vadd.f32 %v6687, %v6847
        %v6849 = vpop.f32.mrf.mxu0
        %v6850 = vpop.f32.mrf.mxu0
        %v6851 = vadd.f32 %v6690, %v6850
        %v6852 = vpop.f32.mrf.mxu0
        %6853 = vmatprep.mubr.bf16.mxu0 0
        %6854 = vmatmul.mubr.bf16.gmra.mxu0 %v6382
        %v6855 = vpop.f32.mrf.mxu0
        %v6856 = vadd.f32 %v6695, %v6855
        %v6857 = vpop.f32.mrf.mxu0
        %v6858 = vpop.f32.mrf.mxu0
        %v6859 = vadd.f32 %v6698, %v6858
        %v6860 = vpop.f32.mrf.mxu0
        %6861 = vmatprep.mubr.bf16.mxu0 0
        %6862 = vmatmul.mubr.bf16.gmra.mxu0 %v6385
        %v6863 = vpop.f32.mrf.mxu0
        %v6864 = vadd.f32 %v6703, %v6863
        %v6865 = vpop.f32.mrf.mxu0
        %v6866 = vpop.f32.mrf.mxu0
        %v6867 = vadd.f32 %v6706, %v6866
        %v6868 = vpop.f32.mrf.mxu0
        %6869 = vmatprep.mubr.bf16.mxu0 0
        %6870 = vmatmul.mubr.bf16.gmra.mxu0 %v6388
        %v6871 = vpop.f32.mrf.mxu0
        %v6872 = vadd.f32 %v6711, %v6871
        %v6873 = vpop.f32.mrf.mxu0
        %v6874 = vpop.f32.mrf.mxu0
        %v6875 = vadd.f32 %v6714, %v6874
        %v6876 = vpop.f32.mrf.mxu0
        %6877 = vmatprep.mubr.bf16.mxu0 0
        %6878 = vmatmul.mubr.bf16.gmra.mxu0 %v6391
        %v6879 = vpop.f32.mrf.mxu0
        %v6880 = vadd.f32 %v6719, %v6879
        %v6881 = vpop.f32.mrf.mxu0
        %v6882 = vpop.f32.mrf.mxu0
        %v6883 = vadd.f32 %v6722, %v6882
        %v6884 = vpop.f32.mrf.mxu0
        %6885 = vmatprep.mubr.bf16.mxu0 0
        %6886 = vmatmul.mubr.bf16.gmra.mxu0 %v6394
        %v6887 = vpop.f32.mrf.mxu0
        %v6888 = vadd.f32 %v6727, %v6887
        %v6889 = vpop.f32.mrf.mxu0
        %v6890 = vpop.f32.mrf.mxu0
        %v6891 = vadd.f32 %v6730, %v6890
        %v6892 = vpop.f32.mrf.mxu0
        %6893 = vmatprep.mubr.bf16.mxu0 0
        %6894 = vmatmul.mubr.bf16.gmra.mxu0 %v6397
        %v6895 = vpop.f32.mrf.mxu0
        %v6896 = vadd.f32 %v6735, %v6895
        %v6897 = vpop.f32.mrf.mxu0
        %v6898 = vpop.f32.mrf.mxu0
        %v6899 = vadd.f32 %v6738, %v6898
        %v6900 = vpop.f32.mrf.mxu0
        %6901 = vmatprep.mubr.bf16.mxu0 0
        %6902 = vmatmul.mubr.bf16.gmra.mxu0 %v6400
        %v6903 = vpop.f32.mrf.mxu0
        %v6904 = vadd.f32 %v6743, %v6903
        %v6905 = vpop.f32.mrf.mxu0
        %v6906 = vpop.f32.mrf.mxu0
        %v6907 = vadd.f32 %v6746, %v6906
        %v6908 = vpop.f32.mrf.mxu0
        %6909 = vmatprep.mubr.bf16.mxu0 0
        %6910 = vmatmul.mubr.bf16.gmra.mxu0 %v6403
        %v6911 = vpop.f32.mrf.mxu0
        %v6912 = vadd.f32 %v6751, %v6911
        %v6913 = vpop.f32.mrf.mxu0
        %v6914 = vpop.f32.mrf.mxu0
        %v6915 = vadd.f32 %v6754, %v6914
        %v6916 = vpop.f32.mrf.mxu0
        %6917 = vdwg.mxu0
        %v6918 = vadd.f32 %v5957, %v6792
        %v6919 = vadd.f32 %v5960, %v6795
        %v6920 = vadd.f32 %v5965, %v6800
        %v6921 = vadd.f32 %v5968, %v6803
        %v6922 = vadd.f32 %v5973, %v6808
        %v6923 = vadd.f32 %v5976, %v6811
        %v6924 = vadd.f32 %v5981, %v6816
        %v6925 = vadd.f32 %v5984, %v6819
        %v6926 = vadd.f32 %v5989, %v6824
        %v6927 = vadd.f32 %v5992, %v6827
        %v6928 = vadd.f32 %v5997, %v6832
        %v6929 = vadd.f32 %v6000, %v6835
        %v6930 = vadd.f32 %v6005, %v6840
        %v6931 = vadd.f32 %v6008, %v6843
        %v6932 = vadd.f32 %v6013, %v6848
        %v6933 = vadd.f32 %v6016, %v6851
        %v6934 = vadd.f32 %v6021, %v6856
        %v6935 = vadd.f32 %v6024, %v6859
        %v6936 = vadd.f32 %v6029, %v6864
        %v6937 = vadd.f32 %v6032, %v6867
        %v6938 = vadd.f32 %v6037, %v6872
        %v6939 = vadd.f32 %v6040, %v6875
        %v6940 = vadd.f32 %v6045, %v6880
        %v6941 = vadd.f32 %v6048, %v6883
        %v6942 = vadd.f32 %v6053, %v6888
        %v6943 = vadd.f32 %v6056, %v6891
        %v6944 = vadd.f32 %v6061, %v6896
        %v6945 = vadd.f32 %v6064, %v6899
        %v6946 = vadd.f32 %v6069, %v6904
        %v6947 = vadd.f32 %v6072, %v6907
        %v6948 = vadd.f32 %v6077, %v6912
        %v6949 = vadd.f32 %v6080, %v6915
        %v6951 = vlaneseq
        %v6952 = vshrl.u32 %v6951, 7
        %v6953 = vsub.s32 0, %v6952
        %v6954 = vrot.slane %v4129, %v6953
        %v6956 = vadd.f32 %v6918, %v6954
        %v6957 = vadd.f32 %v6919, %v6954
        %v6958 = vadd.f32 %v6920, %v6954
        %v6959 = vadd.f32 %v6921, %v6954
        %v6960 = vadd.f32 %v6922, %v6954
        %v6961 = vadd.f32 %v6923, %v6954
        %v6962 = vadd.f32 %v6924, %v6954
        %v6963 = vadd.f32 %v6925, %v6954
        %v6964 = vadd.f32 %v6926, %v6954
        %v6965 = vadd.f32 %v6927, %v6954
        %v6966 = vadd.f32 %v6928, %v6954
        %v6967 = vadd.f32 %v6929, %v6954
        %v6968 = vadd.f32 %v6930, %v6954
        %v6969 = vadd.f32 %v6931, %v6954
        %v6970 = vadd.f32 %v6932, %v6954
        %v6971 = vadd.f32 %v6933, %v6954
        %v6972 = vadd.f32 %v6934, %v6954
        %v6973 = vadd.f32 %v6935, %v6954
        %v6974 = vadd.f32 %v6936, %v6954
        %v6975 = vadd.f32 %v6937, %v6954
        %v6976 = vadd.f32 %v6938, %v6954
        %v6977 = vadd.f32 %v6939, %v6954
        %v6978 = vadd.f32 %v6940, %v6954
        %v6979 = vadd.f32 %v6941, %v6954
        %v6980 = vadd.f32 %v6942, %v6954
        %v6981 = vadd.f32 %v6943, %v6954
        %v6982 = vadd.f32 %v6944, %v6954
        %v6983 = vadd.f32 %v6945, %v6954
        %v6984 = vadd.f32 %v6946, %v6954
        %v6985 = vadd.f32 %v6947, %v6954
        %v6986 = vadd.f32 %v6948, %v6954
        %v6987 = vadd.f32 %v6949, %v6954
        %v6988 = vld [vmem:[#allocation7] sm:$0xf]
        %v6989 = vld [vmem:[#allocation7 + $0x4] sm:$0xf]
        %v6990 = vld [vmem:[#allocation7 + $0x8] sm:$0xf]
        %v6991 = vld [vmem:[#allocation7 + $0xc] sm:$0xf]
        %v6992 = vld [vmem:[#allocation7 + $0x10] sm:$0xf]
        %v6993 = vld [vmem:[#allocation7 + $0x14] sm:$0xf]
        %v6994 = vld [vmem:[#allocation7 + $0x18] sm:$0xf]
        %v6995 = vld [vmem:[#allocation7 + $0x1c] sm:$0xf]
        %v6996 = vld [vmem:[%s12] sm:$0x1]
        %v6998 = vlaneseq
        %v6999 = vshrl.u32 %v6998, 7
        %v7000 = vsub.s32 0, %v6999
        %v7001 = vrot.slane %v6996, %v7000
        %v7035 = vunpack.c.l.b16 %v470
        %v7036 = vunpack.c.l.b16 %v471
        %v7037 = vunpack.c.l.b16 %v472
        %v7038 = vunpack.c.l.b16 %v473
        %v7039 = vunpack.c.l.b16 %v474
        %v7040 = vunpack.c.l.b16 %v475
        %v7041 = vunpack.c.l.b16 %v476
        %v7042 = vunpack.c.l.b16 %v477
        %v7043 = vunpack.c.l.b16 %v478
        %v7044 = vunpack.c.l.b16 %v479
        %v7045 = vunpack.c.l.b16 %v480
        %v7046 = vunpack.c.l.b16 %v481
        %v7047 = vunpack.c.l.b16 %v482
        %v7048 = vunpack.c.l.b16 %v483
        %v7049 = vunpack.c.l.b16 %v484
        %v7050 = vunpack.c.l.b16 %v485
        %v7051 = vunpack.c.l.b16 %v486
        %v7052 = vunpack.c.l.b16 %v487
        %v7053 = vunpack.c.l.b16 %v488
        %v7054 = vunpack.c.l.b16 %v489
        %v7055 = vunpack.c.l.b16 %v490
        %v7056 = vunpack.c.l.b16 %v491
        %v7057 = vunpack.c.l.b16 %v492
        %v7058 = vunpack.c.l.b16 %v493
        %v7059 = vunpack.c.l.b16 %v494
        %v7060 = vunpack.c.l.b16 %v495
        %v7061 = vunpack.c.l.b16 %v496
        %v7062 = vunpack.c.l.b16 %v497
        %v7063 = vunpack.c.l.b16 %v498
        %v7064 = vunpack.c.l.b16 %v499
        %v7065 = vunpack.c.l.b16 %v500
        %v7066 = vunpack.c.l.b16 %v501
        %v7067 = vpack.c.b16 %v7036, %v7035
        %v7068 = vpack.c.b16 %v7038, %v7037
        %v7069 = vpack.c.b16 %v7040, %v7039
        %v7070 = vpack.c.b16 %v7042, %v7041
        %v7071 = vpack.c.b16 %v7044, %v7043
        %v7072 = vpack.c.b16 %v7046, %v7045
        %v7073 = vpack.c.b16 %v7048, %v7047
        %v7074 = vpack.c.b16 %v7050, %v7049
        %v7075 = vpack.c.b16 %v7052, %v7051
        %v7076 = vpack.c.b16 %v7054, %v7053
        %v7077 = vpack.c.b16 %v7056, %v7055
        %v7078 = vpack.c.b16 %v7058, %v7057
        %v7079 = vpack.c.b16 %v7060, %v7059
        %v7080 = vpack.c.b16 %v7062, %v7061
        %v7081 = vpack.c.b16 %v7064, %v7063
        %v7082 = vpack.c.b16 %v7066, %v7065
        %v7091 = vunpack.c.l.b16 %v6988
        %v7092 = vunpack.c.l.b16 %v6989
        %v7093 = vunpack.c.l.b16 %v6990
        %v7094 = vunpack.c.l.b16 %v6991
        %v7095 = vunpack.c.l.b16 %v6992
        %v7096 = vunpack.c.l.b16 %v6993
        %v7097 = vunpack.c.l.b16 %v6994
        %v7098 = vunpack.c.l.b16 %v6995
        %v7099 = vpack.c.b16 %v7092, %v7091
        %v7100 = vpack.c.b16 %v7094, %v7093
        %v7101 = vpack.c.b16 %v7096, %v7095
        %v7102 = vpack.c.b16 %v7098, %v7097
        %v7108 = vsel %vm1025, %v7067, 0
        %v7111 = vsel %vm1025, %v7068, 0
        %v7114 = vsel %vm1025, %v7069, 0
        %v7117 = vsel %vm1025, %v7070, 0
        %v7120 = vsel %vm1025, %v7071, 0
        %v7123 = vsel %vm1025, %v7072, 0
        %v7126 = vsel %vm1025, %v7073, 0
        %v7129 = vsel %vm1025, %v7074, 0
        %v7132 = vsel %vm1025, %v7075, 0
        %v7135 = vsel %vm1025, %v7076, 0
        %v7138 = vsel %vm1025, %v7077, 0
        %v7141 = vsel %vm1025, %v7078, 0
        %v7144 = vsel %vm1025, %v7079, 0
        %v7147 = vsel %vm1025, %v7080, 0
        %v7150 = vsel %vm1025, %v7081, 0
        %v7153 = vsel %vm1025, %v7082, 0
        %7155 = vmatprep.subr.bf16.mxu0 0
        %7156 = vmatpush1.bf16.msra.mxu0 0
        %7157 = vmatprep.subr.bf16.mxu0 0
        %7158 = vmatpush1.bf16.msra.mxu0 0
        %7159 = vmatprep.subr.bf16.mxu0 0
        %7160 = vmatpush1.bf16.msra.mxu0 0
        %7161 = vmatprep.subr.bf16.mxu0 0
        %7162 = vmatpush1.bf16.msra.mxu0 0
        %7163 = vmatprep.subr.bf16.mxu0 0
        %7164 = vmatpush1.bf16.msra.mxu0 %v7102
        %7165 = vmatprep.subr.bf16.mxu0 0
        %7166 = vmatpush1.bf16.msra.mxu0 %v7101
        %7167 = vmatprep.subr.bf16.mxu0 0
        %7168 = vmatpush1.bf16.msra.mxu0 %v7100
        %7169 = vmatprep.subr.bf16.mxu0 0
        %7170 = vmatpush1.bf16.msra.mxu0 %v7099
        %7171 = vmatprep.subr.bf16.mxu0 0
        %7172 = vmatpush2.bf16.msra.mxu0 0
        %7173 = vmatprep.subr.bf16.mxu0 0
        %7174 = vmatpush2.bf16.msra.mxu0 0
        %7175 = vmatprep.subr.bf16.mxu0 0
        %7176 = vmatpush2.bf16.msra.mxu0 0
        %7177 = vmatprep.subr.bf16.mxu0 0
        %7178 = vmatpush2.bf16.msra.mxu0 0
        %7179 = vmatprep.subr.bf16.mxu0 0
        %7180 = vmatpush2.bf16.msra.mxu0 0
        %7181 = vmatprep.subr.bf16.mxu0 0
        %7182 = vmatpush2.bf16.msra.mxu0 0
        %7183 = vmatprep.subr.bf16.mxu0 0
        %7184 = vmatpush2.bf16.msra.mxu0 0
        %7185 = vmatprep.subr.bf16.mxu0 0
        %7186 = vmatpush2.bf16.msra.mxu0 0
        %7187 = vmatprep.mubr.bf16.mxu0 0
        %7188 = vmatmul.mubr.bf16.gmra.mxu0 %v7108
        %v7189 = vpop.f32.mrf.mxu0
        %v7190 = vadd.f32 %v7001, %v7189
        %v7191 = vpop.f32.mrf.mxu0
        %v7192 = vpop.f32.mrf.mxu0
        %v7193 = vadd.f32 %v7001, %v7192
        %v7194 = vpop.f32.mrf.mxu0
        %7195 = vmatprep.mubr.bf16.mxu0 0
        %7196 = vmatmul.mubr.bf16.gmra.mxu0 %v7111
        %v7197 = vpop.f32.mrf.mxu0
        %v7198 = vadd.f32 %v7001, %v7197
        %v7199 = vpop.f32.mrf.mxu0
        %v7200 = vpop.f32.mrf.mxu0
        %v7201 = vadd.f32 %v7001, %v7200
        %v7202 = vpop.f32.mrf.mxu0
        %7203 = vmatprep.mubr.bf16.mxu0 0
        %7204 = vmatmul.mubr.bf16.gmra.mxu0 %v7114
        %v7205 = vpop.f32.mrf.mxu0
        %v7206 = vadd.f32 %v7001, %v7205
        %v7207 = vpop.f32.mrf.mxu0
        %v7208 = vpop.f32.mrf.mxu0
        %v7209 = vadd.f32 %v7001, %v7208
        %v7210 = vpop.f32.mrf.mxu0
        %7211 = vmatprep.mubr.bf16.mxu0 0
        %7212 = vmatmul.mubr.bf16.gmra.mxu0 %v7117
        %v7213 = vpop.f32.mrf.mxu0
        %v7214 = vadd.f32 %v7001, %v7213
        %v7215 = vpop.f32.mrf.mxu0
        %v7216 = vpop.f32.mrf.mxu0
        %v7217 = vadd.f32 %v7001, %v7216
        %v7218 = vpop.f32.mrf.mxu0
        %7219 = vmatprep.mubr.bf16.mxu0 0
        %7220 = vmatmul.mubr.bf16.gmra.mxu0 %v7120
        %v7221 = vpop.f32.mrf.mxu0
        %v7222 = vadd.f32 %v7001, %v7221
        %v7223 = vpop.f32.mrf.mxu0
        %v7224 = vpop.f32.mrf.mxu0
        %v7225 = vadd.f32 %v7001, %v7224
        %v7226 = vpop.f32.mrf.mxu0
        %7227 = vmatprep.mubr.bf16.mxu0 0
        %7228 = vmatmul.mubr.bf16.gmra.mxu0 %v7123
        %v7229 = vpop.f32.mrf.mxu0
        %v7230 = vadd.f32 %v7001, %v7229
        %v7231 = vpop.f32.mrf.mxu0
        %v7232 = vpop.f32.mrf.mxu0
        %v7233 = vadd.f32 %v7001, %v7232
        %v7234 = vpop.f32.mrf.mxu0
        %7235 = vmatprep.mubr.bf16.mxu0 0
        %7236 = vmatmul.mubr.bf16.gmra.mxu0 %v7126
        %v7237 = vpop.f32.mrf.mxu0
        %v7238 = vadd.f32 %v7001, %v7237
        %v7239 = vpop.f32.mrf.mxu0
        %v7240 = vpop.f32.mrf.mxu0
        %v7241 = vadd.f32 %v7001, %v7240
        %v7242 = vpop.f32.mrf.mxu0
        %7243 = vmatprep.mubr.bf16.mxu0 0
        %7244 = vmatmul.mubr.bf16.gmra.mxu0 %v7129
        %v7245 = vpop.f32.mrf.mxu0
        %v7246 = vadd.f32 %v7001, %v7245
        %v7247 = vpop.f32.mrf.mxu0
        %v7248 = vpop.f32.mrf.mxu0
        %v7249 = vadd.f32 %v7001, %v7248
        %v7250 = vpop.f32.mrf.mxu0
        %7251 = vmatprep.mubr.bf16.mxu0 0
        %7252 = vmatmul.mubr.bf16.gmra.mxu0 %v7132
        %v7253 = vpop.f32.mrf.mxu0
        %v7254 = vadd.f32 %v7001, %v7253
        %v7255 = vpop.f32.mrf.mxu0
        %v7256 = vpop.f32.mrf.mxu0
        %v7257 = vadd.f32 %v7001, %v7256
        %v7258 = vpop.f32.mrf.mxu0
        %7259 = vmatprep.mubr.bf16.mxu0 0
        %7260 = vmatmul.mubr.bf16.gmra.mxu0 %v7135
        %v7261 = vpop.f32.mrf.mxu0
        %v7262 = vadd.f32 %v7001, %v7261
        %v7263 = vpop.f32.mrf.mxu0
        %v7264 = vpop.f32.mrf.mxu0
        %v7265 = vadd.f32 %v7001, %v7264
        %v7266 = vpop.f32.mrf.mxu0
        %7267 = vmatprep.mubr.bf16.mxu0 0
        %7268 = vmatmul.mubr.bf16.gmra.mxu0 %v7138
        %v7269 = vpop.f32.mrf.mxu0
        %v7270 = vadd.f32 %v7001, %v7269
        %v7271 = vpop.f32.mrf.mxu0
        %v7272 = vpop.f32.mrf.mxu0
        %v7273 = vadd.f32 %v7001, %v7272
        %v7274 = vpop.f32.mrf.mxu0
        %7275 = vmatprep.mubr.bf16.mxu0 0
        %7276 = vmatmul.mubr.bf16.gmra.mxu0 %v7141
        %v7277 = vpop.f32.mrf.mxu0
        %v7278 = vadd.f32 %v7001, %v7277
        %v7279 = vpop.f32.mrf.mxu0
        %v7280 = vpop.f32.mrf.mxu0
        %v7281 = vadd.f32 %v7001, %v7280
        %v7282 = vpop.f32.mrf.mxu0
        %7283 = vmatprep.mubr.bf16.mxu0 0
        %7284 = vmatmul.mubr.bf16.gmra.mxu0 %v7144
        %v7285 = vpop.f32.mrf.mxu0
        %v7286 = vadd.f32 %v7001, %v7285
        %v7287 = vpop.f32.mrf.mxu0
        %v7288 = vpop.f32.mrf.mxu0
        %v7289 = vadd.f32 %v7001, %v7288
        %v7290 = vpop.f32.mrf.mxu0
        %7291 = vmatprep.mubr.bf16.mxu0 0
        %7292 = vmatmul.mubr.bf16.gmra.mxu0 %v7147
        %v7293 = vpop.f32.mrf.mxu0
        %v7294 = vadd.f32 %v7001, %v7293
        %v7295 = vpop.f32.mrf.mxu0
        %v7296 = vpop.f32.mrf.mxu0
        %v7297 = vadd.f32 %v7001, %v7296
        %v7298 = vpop.f32.mrf.mxu0
        %7299 = vmatprep.mubr.bf16.mxu0 0
        %7300 = vmatmul.mubr.bf16.gmra.mxu0 %v7150
        %v7301 = vpop.f32.mrf.mxu0
        %v7302 = vadd.f32 %v7001, %v7301
        %v7303 = vpop.f32.mrf.mxu0
        %v7304 = vpop.f32.mrf.mxu0
        %v7305 = vadd.f32 %v7001, %v7304
        %v7306 = vpop.f32.mrf.mxu0
        %7307 = vmatprep.mubr.bf16.mxu0 0
        %7308 = vmatmul.mubr.bf16.gmra.mxu0 %v7153
        %v7309 = vpop.f32.mrf.mxu0
        %v7310 = vadd.f32 %v7001, %v7309
        %v7311 = vpop.f32.mrf.mxu0
        %v7312 = vpop.f32.mrf.mxu0
        %v7313 = vadd.f32 %v7001, %v7312
        %v7314 = vpop.f32.mrf.mxu0
        %7315 = vdwg.mxu0
        %v7316 = vadd.f32 %v6956, %v7190
        %v7317 = vadd.f32 %v6957, %v7193
        %v7318 = vadd.f32 %v6958, %v7198
        %v7319 = vadd.f32 %v6959, %v7201
        %v7320 = vadd.f32 %v6960, %v7206
        %v7321 = vadd.f32 %v6961, %v7209
        %v7322 = vadd.f32 %v6962, %v7214
        %v7323 = vadd.f32 %v6963, %v7217
        %v7324 = vadd.f32 %v6964, %v7222
        %v7325 = vadd.f32 %v6965, %v7225
        %v7326 = vadd.f32 %v6966, %v7230
        %v7327 = vadd.f32 %v6967, %v7233
        %v7328 = vadd.f32 %v6968, %v7238
        %v7329 = vadd.f32 %v6969, %v7241
        %v7330 = vadd.f32 %v6970, %v7246
        %v7331 = vadd.f32 %v6971, %v7249
        %v7332 = vadd.f32 %v6972, %v7254
        %v7333 = vadd.f32 %v6973, %v7257
        %v7334 = vadd.f32 %v6974, %v7262
        %v7335 = vadd.f32 %v6975, %v7265
        %v7336 = vadd.f32 %v6976, %v7270
        %v7337 = vadd.f32 %v6977, %v7273
        %v7338 = vadd.f32 %v6978, %v7278
        %v7339 = vadd.f32 %v6979, %v7281
        %v7340 = vadd.f32 %v6980, %v7286
        %v7341 = vadd.f32 %v6981, %v7289
        %v7342 = vadd.f32 %v6982, %v7294
        %v7343 = vadd.f32 %v6983, %v7297
        %v7344 = vadd.f32 %v6984, %v7302
        %v7345 = vadd.f32 %v6985, %v7305
        %v7346 = vadd.f32 %v6986, %v7310
        %v7347 = vadd.f32 %v6987, %v7313
        %v7348 = vpack.c.bf16 %v7317, %v7316
        %v7349 = vpack.c.bf16 %v7319, %v7318
        %v7350 = vpack.c.bf16 %v7321, %v7320
        %v7351 = vpack.c.bf16 %v7323, %v7322
        %v7352 = vpack.c.bf16 %v7325, %v7324
        %v7353 = vpack.c.bf16 %v7327, %v7326
        %v7354 = vpack.c.bf16 %v7329, %v7328
        %v7355 = vpack.c.bf16 %v7331, %v7330
        %v7356 = vpack.c.bf16 %v7333, %v7332
        %v7357 = vpack.c.bf16 %v7335, %v7334
        %v7358 = vpack.c.bf16 %v7337, %v7336
        %v7359 = vpack.c.bf16 %v7339, %v7338
        %v7360 = vpack.c.bf16 %v7341, %v7340
        %v7361 = vpack.c.bf16 %v7343, %v7342
        %v7362 = vpack.c.bf16 %v7345, %v7344
        %v7363 = vpack.c.bf16 %v7347, %v7346
        %v7380 = vunpack.c.l.b16 %v7348
        %v7381 = vunpack.c.h.b16 %v7348
        %v7382 = vunpack.c.l.b16 %v7349
        %v7383 = vunpack.c.h.b16 %v7349
        %v7384 = vunpack.c.l.b16 %v7350
        %v7385 = vunpack.c.h.b16 %v7350
        %v7386 = vunpack.c.l.b16 %v7351
        %v7387 = vunpack.c.h.b16 %v7351
        %v7388 = vunpack.c.l.b16 %v7352
        %v7389 = vunpack.c.h.b16 %v7352
        %v7390 = vunpack.c.l.b16 %v7353
        %v7391 = vunpack.c.h.b16 %v7353
        %v7392 = vunpack.c.l.b16 %v7354
        %v7393 = vunpack.c.h.b16 %v7354
        %v7394 = vunpack.c.l.b16 %v7355
        %v7395 = vunpack.c.h.b16 %v7355
        %v7396 = vunpack.c.l.b16 %v7356
        %v7397 = vunpack.c.h.b16 %v7356
        %v7398 = vunpack.c.l.b16 %v7357
        %v7399 = vunpack.c.h.b16 %v7357
        %v7400 = vunpack.c.l.b16 %v7358
        %v7401 = vunpack.c.h.b16 %v7358
        %v7402 = vunpack.c.l.b16 %v7359
        %v7403 = vunpack.c.h.b16 %v7359
        %v7404 = vunpack.c.l.b16 %v7360
        %v7405 = vunpack.c.h.b16 %v7360
        %v7406 = vunpack.c.l.b16 %v7361
        %v7407 = vunpack.c.h.b16 %v7361
        %v7408 = vunpack.c.l.b16 %v7362
        %v7409 = vunpack.c.h.b16 %v7362
        %v7410 = vunpack.c.l.b16 %v7363
        %v7411 = vunpack.c.h.b16 %v7363
        %v7412 = vpack.c.b16 %v7380, %v7380
        %v7413 = vpack.c.b16 %v7381, %v7381
        %v7414 = vpack.c.b16 %v7382, %v7382
        %v7415 = vpack.c.b16 %v7383, %v7383
        %v7416 = vpack.c.b16 %v7384, %v7384
        %v7417 = vpack.c.b16 %v7385, %v7385
        %v7418 = vpack.c.b16 %v7386, %v7386
        %v7419 = vpack.c.b16 %v7387, %v7387
        %v7420 = vpack.c.b16 %v7388, %v7388
        %v7421 = vpack.c.b16 %v7389, %v7389
        %v7422 = vpack.c.b16 %v7390, %v7390
        %v7423 = vpack.c.b16 %v7391, %v7391
        %v7424 = vpack.c.b16 %v7392, %v7392
        %v7425 = vpack.c.b16 %v7393, %v7393
        %v7426 = vpack.c.b16 %v7394, %v7394
        %v7427 = vpack.c.b16 %v7395, %v7395
        %v7428 = vpack.c.b16 %v7396, %v7396
        %v7429 = vpack.c.b16 %v7397, %v7397
        %v7430 = vpack.c.b16 %v7398, %v7398
        %v7431 = vpack.c.b16 %v7399, %v7399
        %v7432 = vpack.c.b16 %v7400, %v7400
        %v7433 = vpack.c.b16 %v7401, %v7401
        %v7434 = vpack.c.b16 %v7402, %v7402
        %v7435 = vpack.c.b16 %v7403, %v7403
        %v7436 = vpack.c.b16 %v7404, %v7404
        %v7437 = vpack.c.b16 %v7405, %v7405
        %v7438 = vpack.c.b16 %v7406, %v7406
        %v7439 = vpack.c.b16 %v7407, %v7407
        %v7440 = vpack.c.b16 %v7408, %v7408
        %v7441 = vpack.c.b16 %v7409, %v7409
        %v7442 = vpack.c.b16 %v7410, %v7410
        %v7443 = vpack.c.b16 %v7411, %v7411
        %7476 = vst [vmem:[%s463] sm:$0xf] %v7412
        %7477 = vst [vmem:[%s463 + $0x4] sm:$0xf] %v7413
        %7478 = vst [vmem:[%s463 + $0x8] sm:$0xf] %v7414
        %7479 = vst [vmem:[%s463 + $0xc] sm:$0xf] %v7415
        %7480 = vst [vmem:[%s463 + $0x10] sm:$0xf] %v7416
        %7481 = vst [vmem:[%s463 + $0x14] sm:$0xf] %v7417
        %7482 = vst [vmem:[%s463 + $0x18] sm:$0xf] %v7418
        %7483 = vst [vmem:[%s463 + $0x1c] sm:$0xf] %v7419
        %7484 = vst [vmem:[%s463 + $0x20] sm:$0xf] %v7420
        %7485 = vst [vmem:[%s463 + $0x24] sm:$0xf] %v7421
        %7486 = vst [vmem:[%s463 + $0x28] sm:$0xf] %v7422
        %7487 = vst [vmem:[%s463 + $0x2c] sm:$0xf] %v7423
        %7488 = vst [vmem:[%s463 + $0x30] sm:$0xf] %v7424
        %7489 = vst [vmem:[%s463 + $0x34] sm:$0xf] %v7425
        %7490 = vst [vmem:[%s463 + $0x38] sm:$0xf] %v7426
        %7491 = vst [vmem:[%s463 + $0x3c] sm:$0xf] %v7427
        %7492 = vst [vmem:[%s463 + $0x40] sm:$0xf] %v7428
        %7493 = vst [vmem:[%s463 + $0x44] sm:$0xf] %v7429
        %7494 = vst [vmem:[%s463 + $0x48] sm:$0xf] %v7430
        %7495 = vst [vmem:[%s463 + $0x4c] sm:$0xf] %v7431
        %7496 = vst [vmem:[%s463 + $0x50] sm:$0xf] %v7432
        %7497 = vst [vmem:[%s463 + $0x54] sm:$0xf] %v7433
        %7498 = vst [vmem:[%s463 + $0x58] sm:$0xf] %v7434
        %7499 = vst [vmem:[%s463 + $0x5c] sm:$0xf] %v7435
        %7500 = vst [vmem:[%s463 + $0x60] sm:$0xf] %v7436
        %7501 = vst [vmem:[%s463 + $0x64] sm:$0xf] %v7437
        %7502 = vst [vmem:[%s463 + $0x68] sm:$0xf] %v7438
        %7503 = vst [vmem:[%s463 + $0x6c] sm:$0xf] %v7439
        %7504 = vst [vmem:[%s463 + $0x70] sm:$0xf] %v7440
        %7505 = vst [vmem:[%s463 + $0x74] sm:$0xf] %v7441
        %7506 = vst [vmem:[%s463 + $0x78] sm:$0xf] %v7442
        %7507 = vst [vmem:[%s463 + $0x7c] sm:$0xf] %v7443
        %s7508 = sand.u32 %s315, 1
        %s7509 = scalar_lea.sflag [#allocation6], %s7508
        %s7510 = sand.u32 %s315, 1
        %s7511 = smul.addr %s7510, 128
        %s7512 = scalar_lea.vmem [#allocation9], %s7511
        // Predicated region
        $region81: #{tpu_custom_call.1} parent=71 // pred_check
          %p7513 = pneg %p325
        $region82: #{tpu_custom_call.1} parent=71 // pred_check_branch
          %7515 = sbr.rel (%p7513) target = $region84
        $region83: #{tpu_custom_call.1} parent=71 // pred_region
          %s7517 = ssub.s32 2048, 2048
          %7518 = vsyncadd %s7509, %s7517
          %s7519 = smul.addr %s29, 32
          %s7520 = smul.addr %s7519, 64
          %s7521 = scalar_lea.hbm %s13, %s7520
          %s7522 = sshll.u32 %s7512, 4
          %s7523 = int_to_ptr.vmem [resolvable:$true] %s7522
          %7528 = dma.vmem_to_hbm [thread:$0]  %s7523, 2048, %s7521, %s7509, 64, 64, 4
        $region84: #{tpu_custom_call.1} parent=71 // pred_fallthru
          _
      $region72: #{tpu_custom_call.1} parent=5 // pred_fallthru
        _
      %p7529 = scmp.le.s32.totalorder 2, %s24
      // Predicated region
      $region85: #{tpu_custom_call.1} parent=5 // pred_check
        %p7530 = pneg %p7529
      $region86: #{tpu_custom_call.1} parent=5 // pred_check_branch
        %7532 = sbr.rel (%p7530) target = $region88
      $region87: #{tpu_custom_call.1} parent=5 // pred_region
        %s7533 = ssub.s32 %s24, 2
        // Predicated region
        $region89: #{tpu_custom_call.1} parent=87 // pred_check
          %p7534 = pneg %p331
        $region90: #{tpu_custom_call.1} parent=87 // pred_check_branch
          %7536 = sbr.rel (%p7534) target = $region92
        $region91: #{tpu_custom_call.1} parent=87 // pred_region
          %s7537 = sand.u32 %s316, 1
          %s7538 = scalar_lea.sflag [#allocation6], %s7537
          %s7539 = sand.u32 %s316, 1
          %s7540 = smul.addr %s7539, 128
          %s7541 = scalar_lea.vmem [#allocation9], %s7540
          %7542 = dma.done %s7538, 2048
        $region92: #{tpu_custom_call.1} parent=87 // pred_fallthru
          _
      $region88: #{tpu_custom_call.1} parent=5 // pred_fallthru
        _
    $region6: #{tpu_custom_call.1} parent=1 // loop_footer
      %s28 = sadd.s32 1, %s24
    $region7: #{tpu_custom_call.1} parent=1 // loop_footer_branch
      %23 = sbr.rel target = $region3
    $region8: #{tpu_custom_call.1} parent=1 // loop_exit
      _
    %7543 = vsyncpa [#allocation5], 1
    %s7544 = scalar_lea.sflag [#allocation5], 1
    %7545 = vsyncpa %s7544, 1
    %7546 = vsyncpa [#allocation8], 1
    %7547 = vsyncpa [#allocation6], 1
    %s7548 = scalar_lea.sflag [#allocation6], 1
    %7549 = vsyncpa %s7548, 1

</llo_original>
